<compile_context>
chip_gen: v7x
topology: tpu7x:2x2x1
jax: 0.10.0
libtpu: 0.0.40
codegen_flags: <defaults>
</compile_context>

<pallas_src>
import jax
import jax.numpy as jnp
from jax import lax
from jax.experimental import pallas as pl
from jax.experimental.pallas import tpu as pltpu

BN_EPS = 1e-5


def _basic_block_kernel(xpad_ref, w1_ref, s1_ref, b1_ref,
                        w2_ref, s2_ref, b2_ref, out_ref, midpad_ref):
    # xpad_ref : (1, H+2, W+2, Cin)   zero-padded input image
    # w1_ref   : (9*Cin, Cout)        conv1 weights, (ky,kx,ci) flattened
    # w2_ref   : (9*Cout, Cout)       conv2 weights
    # s*/b*    : (1, C)               folded BatchNorm scale / bias
    # out_ref  : (1, H, W, Cout)
    # midpad_ref : VMEM scratch (H+2, W+2, Cout) padded intermediate
    _, Hp, Wp, Cin = xpad_ref.shape
    H, W = Hp - 2, Wp - 2
    Cout = out_ref.shape[3]

    s1 = s1_ref[...]
    b1 = b1_ref[...]
    s2 = s2_ref[...]
    b2 = b2_ref[...]

    # ---- conv1 (3x3, stride 1) on the MXU as 9 shifted matmuls ----
    acc1 = jnp.zeros((H * W, Cout), jnp.float32)
    for ky in range(3):
        for kx in range(3):
            k = ky * 3 + kx
            patch = xpad_ref[0, ky:ky + H, kx:kx + W, :]          # (H, W, Cin)
            acc1 = acc1 + jnp.dot(
                patch.reshape(H * W, Cin),
                w1_ref[k * Cin:(k + 1) * Cin, :],
                preferred_element_type=jnp.float32)

    # bn1 (folded) + relu
    mid = jnp.maximum(acc1 * s1 + b1, 0.0)                        # (H*W, Cout)

    # ---- zero-pad the intermediate into VMEM scratch ----
    midpad_ref[...] = jnp.zeros_like(midpad_ref)
    midpad_ref[1:H + 1, 1:W + 1, :] = mid.reshape(H, W, Cout)

    # ---- conv2 (3x3, stride 1) ----
    acc2 = jnp.zeros((H * W, Cout), jnp.float32)
    for ky in range(3):
        for kx in range(3):
            k = ky * 3 + kx
            patch = midpad_ref[ky:ky + H, kx:kx + W, :]           # (H, W, Cout)
            acc2 = acc2 + jnp.dot(
                patch.reshape(H * W, Cout),
                w2_ref[k * Cout:(k + 1) * Cout, :],
                preferred_element_type=jnp.float32)

    # bn2 (folded) + residual add + relu
    identity = xpad_ref[0, 1:H + 1, 1:W + 1, :].reshape(H * W, Cin)
    y = jnp.maximum(acc2 * s2 + b2 + identity, 0.0)
    out_ref[0] = y.reshape(H, W, Cout).astype(out_ref.dtype)


def basic_block(x, w1, bn1, w2, bn2, *, eps=BN_EPS):
    """BasicBlock forward.

    x  : (N, H, W, C)  float32, NHWC
    w1 : (3, 3, Cin, Cout) HWIO conv1 weight;  w2 : (3, 3, Cout, Cout)
    bn1, bn2 : tuples (gamma, beta, running_mean, running_var), each (C,)
    """
    N, H, W, Cin = x.shape
    Cout = w1.shape[-1]
    assert w1.shape == (3, 3, Cin, Cout)
    assert Cin == Cout, "stride=1 / downsample=None path needs inplanes == planes"

    xpad = jnp.pad(x.astype(jnp.float32), ((0, 0), (1, 1), (1, 1), (0, 0)))

    def fold(bn, c):
        gamma, beta, mean, var = (a.astype(jnp.float32).reshape(1, c) for a in bn)
        scale = gamma / jnp.sqrt(var + eps)
        bias = beta - mean * scale
        return scale, bias

    s1, b1 = fold(bn1, Cout)
    s2, b2 = fold(bn2, Cout)
    w1_2d = w1.astype(jnp.float32).reshape(9 * Cin, Cout)
    w2_2d = w2.astype(jnp.float32).reshape(9 * Cout, Cout)

    out = pl.pallas_call(
        _basic_block_kernel,
        out_shape=jax.ShapeDtypeStruct((N, H, W, Cout), x.dtype),
        grid_spec=pltpu.PrefetchScalarGridSpec(
            num_scalar_prefetch=0,
            grid=(N,),
            in_specs=[
                pl.BlockSpec((1, H + 2, W + 2, Cin), lambda n: (n, 0, 0, 0)),
                pl.BlockSpec((9 * Cin, Cout), lambda n: (0, 0)),
                pl.BlockSpec((1, Cout), lambda n: (0, 0)),
                pl.BlockSpec((1, Cout), lambda n: (0, 0)),
                pl.BlockSpec((9 * Cout, Cout), lambda n: (0, 0)),
                pl.BlockSpec((1, Cout), lambda n: (0, 0)),
                pl.BlockSpec((1, Cout), lambda n: (0, 0)),
            ],
            out_specs=pl.BlockSpec((1, H, W, Cout), lambda n: (n, 0, 0, 0)),
            scratch_shapes=[pltpu.VMEM((H + 2, W + 2, Cout), jnp.float32)],
        ),
        compiler_params=pltpu.CompilerParams(
            dimension_semantics=("parallel",)),
    )(xpad, w1_2d, s1, b1, w2_2d, s2, b2)
    return out


def _reference(x, w1, bn1, w2, bn2, eps=BN_EPS):
    # pure-JAX reference mirroring the PyTorch module (eval-mode BN)
    dn = ('NHWC', 'HWIO', 'NHWC')

    def bn(y, params):
        gamma, beta, mean, var = params
        return (y - mean) / jnp.sqrt(var + eps) * gamma + beta

    out = lax.conv_general_dilated(x, w1, (1, 1), ((1, 1), (1, 1)),
                                   dimension_numbers=dn)
    out = jnp.maximum(bn(out, bn1), 0.0)
    out = lax.conv_general_dilated(out, w2, (1, 1), ((1, 1), (1, 1)),
                                   dimension_numbers=dn)
    out = jnp.maximum(bn(out, bn2) + x, 0.0)
    return out


if __name__ == "__main__":
    key = jax.random.PRNGKey(0)
    N, H, W, C = 2, 16, 16, 8   # batch=2, inplanes=planes=8, 16x16 spatial

    ks = jax.random.split(key, 11)
    x = jax.random.normal(ks[0], (N, H, W, C), jnp.float32)
    w1 = jax.random.normal(ks[1], (3, 3, C, C), jnp.float32) * 0.1
    w2 = jax.random.normal(ks[2], (3, 3, C, C), jnp.float32) * 0.1
    bn1 = (jax.random.uniform(ks[3], (C,), jnp.float32, 0.5, 1.5),   # gamma
           jax.random.normal(ks[4], (C,), jnp.float32) * 0.1,        # beta
           jax.random.normal(ks[5], (C,), jnp.float32) * 0.1,        # running_mean
           jax.random.uniform(ks[6], (C,), jnp.float32, 0.5, 1.5))   # running_var
    bn2 = (jax.random.uniform(ks[7], (C,), jnp.float32, 0.5, 1.5),
           jax.random.normal(ks[8], (C,), jnp.float32) * 0.1,
           jax.random.normal(ks[9], (C,), jnp.float32) * 0.1,
           jax.random.uniform(ks[10], (C,), jnp.float32, 0.5, 1.5))

    out = basic_block(x, w1, bn1, w2, bn2)
    out = jax.block_until_ready(out)

    ref = _reference(x, w1, bn1, w2, bn2)
    assert out.shape == ref.shape, (out.shape, ref.shape)
    assert jnp.allclose(out, ref, rtol=1e-2, atol=1e-2), (
        "max abs err", float(jnp.max(jnp.abs(out - ref))))

    print("KERNEL_OK")
</pallas_src>

<mosaic_0001>
module attributes {stable_mosaic.version = 11 : i64} {
  func.func @_basic_block_kernel(%arg0: i32, %arg1: memref<1x18x18x8xf32, #tpu.memory_space<vmem>>, %arg2: memref<72x8xf32, #tpu.memory_space<vmem>>, %arg3: memref<1x8xf32, #tpu.memory_space<vmem>>, %arg4: memref<1x8xf32, #tpu.memory_space<vmem>>, %arg5: memref<72x8xf32, #tpu.memory_space<vmem>>, %arg6: memref<1x8xf32, #tpu.memory_space<vmem>>, %arg7: memref<1x8xf32, #tpu.memory_space<vmem>>, %arg8: memref<1x16x16x8xf32, #tpu.memory_space<vmem>>, %arg9: memref<18x18x8xf32, #tpu.memory_space<vmem>>) attributes {dimension_semantics = [#tpu.dimension_semantics<parallel>], iteration_bounds = array<i64: 2>, scalar_prefetch = 0 : i64, scratch_operands = 1 : i64, tpu.core_type = #tpu.core_type<tc>, window_params = [{transform_indices = @transform_0, window_bounds = array<i64: 1, 18, 18, 8>}, {pipeline_mode = #tpu.pipeline_mode<synchronous>, transform_indices = @transform_1, window_bounds = array<i64: 72, 8>}, {pipeline_mode = #tpu.pipeline_mode<synchronous>, transform_indices = @transform_2, window_bounds = array<i64: 1, 8>}, {pipeline_mode = #tpu.pipeline_mode<synchronous>, transform_indices = @transform_3, window_bounds = array<i64: 1, 8>}, {pipeline_mode = #tpu.pipeline_mode<synchronous>, transform_indices = @transform_4, window_bounds = array<i64: 72, 8>}, {pipeline_mode = #tpu.pipeline_mode<synchronous>, transform_indices = @transform_5, window_bounds = array<i64: 1, 8>}, {pipeline_mode = #tpu.pipeline_mode<synchronous>, transform_indices = @transform_6, window_bounds = array<i64: 1, 8>}, {transform_indices = @transform_7, window_bounds = array<i64: 1, 16, 16, 8>}]} {
    %c0 = arith.constant 0 : index
    %c0_0 = arith.constant 0 : index
    %0 = vector.load %arg3[%c0, %c0_0] : memref<1x8xf32, #tpu.memory_space<vmem>>, vector<1x8xf32>
    %c0_1 = arith.constant 0 : index
    %c0_2 = arith.constant 0 : index
    %1 = vector.load %arg4[%c0_1, %c0_2] : memref<1x8xf32, #tpu.memory_space<vmem>>, vector<1x8xf32>
    %c0_3 = arith.constant 0 : index
    %c0_4 = arith.constant 0 : index
    %2 = vector.load %arg6[%c0_3, %c0_4] : memref<1x8xf32, #tpu.memory_space<vmem>>, vector<1x8xf32>
    %c0_5 = arith.constant 0 : index
    %c0_6 = arith.constant 0 : index
    %3 = vector.load %arg7[%c0_5, %c0_6] : memref<1x8xf32, #tpu.memory_space<vmem>>, vector<1x8xf32>
    %cst = arith.constant 0.000000e+00 : f32
    %4 = vector.broadcast %cst : f32 to vector<256x8xf32>
    %c0_7 = arith.constant 0 : index
    %c0_8 = arith.constant 0 : index
    %c0_9 = arith.constant 0 : index
    %c0_10 = arith.constant 0 : index
    %5 = vector.load %arg1[%c0_7, %c0_8, %c0_9, %c0_10] : memref<1x18x18x8xf32, #tpu.memory_space<vmem>>, vector<1x16x16x8xf32>
    %6 = vector.shape_cast %5 : vector<1x16x16x8xf32> to vector<16x16x8xf32>
    %7 = vector.shape_cast %6 : vector<16x16x8xf32> to vector<256x8xf32>
    %c0_11 = arith.constant 0 : index
    %c0_12 = arith.constant 0 : index
    %8 = vector.load %arg2[%c0_11, %c0_12] : memref<72x8xf32, #tpu.memory_space<vmem>>, vector<8x8xf32>
    %cst_13 = arith.constant dense<0.000000e+00> : vector<256x8xf32>
    %9 = tpu.matmul %7, %8, %cst_13 {dimension_numbers = #tpu.dot_dimension_numbers<[1], [0], [0], [1], [0, 0, 1, 1], [], []>} : vector<256x8xf32>, vector<8x8xf32>, vector<256x8xf32> -> vector<256x8xf32>
    %10 = arith.addf %4, %9 : vector<256x8xf32>
    %c0_14 = arith.constant 0 : index
    %c0_15 = arith.constant 0 : index
    %c1 = arith.constant 1 : index
    %c0_16 = arith.constant 0 : index
    %11 = vector.load %arg1[%c0_14, %c0_15, %c1, %c0_16] : memref<1x18x18x8xf32, #tpu.memory_space<vmem>>, vector<1x16x16x8xf32>
    %12 = vector.shape_cast %11 : vector<1x16x16x8xf32> to vector<16x16x8xf32>
    %13 = vector.shape_cast %12 : vector<16x16x8xf32> to vector<256x8xf32>
    %c8 = arith.constant 8 : index
    %c0_17 = arith.constant 0 : index
    %14 = vector.load %arg2[%c8, %c0_17] : memref<72x8xf32, #tpu.memory_space<vmem>>, vector<8x8xf32>
    %cst_18 = arith.constant dense<0.000000e+00> : vector<256x8xf32>
    %15 = tpu.matmul %13, %14, %cst_18 {dimension_numbers = #tpu.dot_dimension_numbers<[1], [0], [0], [1], [0, 0, 1, 1], [], []>} : vector<256x8xf32>, vector<8x8xf32>, vector<256x8xf32> -> vector<256x8xf32>
    %16 = arith.addf %10, %15 : vector<256x8xf32>
    %c0_19 = arith.constant 0 : index
    %c0_20 = arith.constant 0 : index
    %c2 = arith.constant 2 : index
    %c0_21 = arith.constant 0 : index
    %17 = vector.load %arg1[%c0_19, %c0_20, %c2, %c0_21] : memref<1x18x18x8xf32, #tpu.memory_space<vmem>>, vector<1x16x16x8xf32>
    %18 = vector.shape_cast %17 : vector<1x16x16x8xf32> to vector<16x16x8xf32>
    %19 = vector.shape_cast %18 : vector<16x16x8xf32> to vector<256x8xf32>
    %c16 = arith.constant 16 : index
    %c0_22 = arith.constant 0 : index
    %20 = vector.load %arg2[%c16, %c0_22] : memref<72x8xf32, #tpu.memory_space<vmem>>, vector<8x8xf32>
    %cst_23 = arith.constant dense<0.000000e+00> : vector<256x8xf32>
    %21 = tpu.matmul %19, %20, %cst_23 {dimension_numbers = #tpu.dot_dimension_numbers<[1], [0], [0], [1], [0, 0, 1, 1], [], []>} : vector<256x8xf32>, vector<8x8xf32>, vector<256x8xf32> -> vector<256x8xf32>
    %22 = arith.addf %16, %21 : vector<256x8xf32>
    %c0_24 = arith.constant 0 : index
    %c1_25 = arith.constant 1 : index
    %c0_26 = arith.constant 0 : index
    %c0_27 = arith.constant 0 : index
    %23 = vector.load %arg1[%c0_24, %c1_25, %c0_26, %c0_27] : memref<1x18x18x8xf32, #tpu.memory_space<vmem>>, vector<1x16x16x8xf32>
    %24 = vector.shape_cast %23 : vector<1x16x16x8xf32> to vector<16x16x8xf32>
    %25 = vector.shape_cast %24 : vector<16x16x8xf32> to vector<256x8xf32>
    %c24 = arith.constant 24 : index
    %c0_28 = arith.constant 0 : index
    %26 = vector.load %arg2[%c24, %c0_28] : memref<72x8xf32, #tpu.memory_space<vmem>>, vector<8x8xf32>
    %cst_29 = arith.constant dense<0.000000e+00> : vector<256x8xf32>
    %27 = tpu.matmul %25, %26, %cst_29 {dimension_numbers = #tpu.dot_dimension_numbers<[1], [0], [0], [1], [0, 0, 1, 1], [], []>} : vector<256x8xf32>, vector<8x8xf32>, vector<256x8xf32> -> vector<256x8xf32>
    %28 = arith.addf %22, %27 : vector<256x8xf32>
    %c0_30 = arith.constant 0 : index
    %c1_31 = arith.constant 1 : index
    %c1_32 = arith.constant 1 : index
    %c0_33 = arith.constant 0 : index
    %29 = vector.load %arg1[%c0_30, %c1_31, %c1_32, %c0_33] : memref<1x18x18x8xf32, #tpu.memory_space<vmem>>, vector<1x16x16x8xf32>
    %30 = vector.shape_cast %29 : vector<1x16x16x8xf32> to vector<16x16x8xf32>
    %31 = vector.shape_cast %30 : vector<16x16x8xf32> to vector<256x8xf32>
    %c32 = arith.constant 32 : index
    %c0_34 = arith.constant 0 : index
    %32 = vector.load %arg2[%c32, %c0_34] : memref<72x8xf32, #tpu.memory_space<vmem>>, vector<8x8xf32>
    %cst_35 = arith.constant dense<0.000000e+00> : vector<256x8xf32>
    %33 = tpu.matmul %31, %32, %cst_35 {dimension_numbers = #tpu.dot_dimension_numbers<[1], [0], [0], [1], [0, 0, 1, 1], [], []>} : vector<256x8xf32>, vector<8x8xf32>, vector<256x8xf32> -> vector<256x8xf32>
    %34 = arith.addf %28, %33 : vector<256x8xf32>
    %c0_36 = arith.constant 0 : index
    %c1_37 = arith.constant 1 : index
    %c2_38 = arith.constant 2 : index
    %c0_39 = arith.constant 0 : index
    %35 = vector.load %arg1[%c0_36, %c1_37, %c2_38, %c0_39] : memref<1x18x18x8xf32, #tpu.memory_space<vmem>>, vector<1x16x16x8xf32>
    %36 = vector.shape_cast %35 : vector<1x16x16x8xf32> to vector<16x16x8xf32>
    %37 = vector.shape_cast %36 : vector<16x16x8xf32> to vector<256x8xf32>
    %c40 = arith.constant 40 : index
    %c0_40 = arith.constant 0 : index
    %38 = vector.load %arg2[%c40, %c0_40] : memref<72x8xf32, #tpu.memory_space<vmem>>, vector<8x8xf32>
    %cst_41 = arith.constant dense<0.000000e+00> : vector<256x8xf32>
    %39 = tpu.matmul %37, %38, %cst_41 {dimension_numbers = #tpu.dot_dimension_numbers<[1], [0], [0], [1], [0, 0, 1, 1], [], []>} : vector<256x8xf32>, vector<8x8xf32>, vector<256x8xf32> -> vector<256x8xf32>
    %40 = arith.addf %34, %39 : vector<256x8xf32>
    %c0_42 = arith.constant 0 : index
    %c2_43 = arith.constant 2 : index
    %c0_44 = arith.constant 0 : index
    %c0_45 = arith.constant 0 : index
    %41 = vector.load %arg1[%c0_42, %c2_43, %c0_44, %c0_45] : memref<1x18x18x8xf32, #tpu.memory_space<vmem>>, vector<1x16x16x8xf32>
    %42 = vector.shape_cast %41 : vector<1x16x16x8xf32> to vector<16x16x8xf32>
    %43 = vector.shape_cast %42 : vector<16x16x8xf32> to vector<256x8xf32>
    %c48 = arith.constant 48 : index
    %c0_46 = arith.constant 0 : index
    %44 = vector.load %arg2[%c48, %c0_46] : memref<72x8xf32, #tpu.memory_space<vmem>>, vector<8x8xf32>
    %cst_47 = arith.constant dense<0.000000e+00> : vector<256x8xf32>
    %45 = tpu.matmul %43, %44, %cst_47 {dimension_numbers = #tpu.dot_dimension_numbers<[1], [0], [0], [1], [0, 0, 1, 1], [], []>} : vector<256x8xf32>, vector<8x8xf32>, vector<256x8xf32> -> vector<256x8xf32>
    %46 = arith.addf %40, %45 : vector<256x8xf32>
    %c0_48 = arith.constant 0 : index
    %c2_49 = arith.constant 2 : index
    %c1_50 = arith.constant 1 : index
    %c0_51 = arith.constant 0 : index
    %47 = vector.load %arg1[%c0_48, %c2_49, %c1_50, %c0_51] : memref<1x18x18x8xf32, #tpu.memory_space<vmem>>, vector<1x16x16x8xf32>
    %48 = vector.shape_cast %47 : vector<1x16x16x8xf32> to vector<16x16x8xf32>
    %49 = vector.shape_cast %48 : vector<16x16x8xf32> to vector<256x8xf32>
    %c56 = arith.constant 56 : index
    %c0_52 = arith.constant 0 : index
    %50 = vector.load %arg2[%c56, %c0_52] : memref<72x8xf32, #tpu.memory_space<vmem>>, vector<8x8xf32>
    %cst_53 = arith.constant dense<0.000000e+00> : vector<256x8xf32>
    %51 = tpu.matmul %49, %50, %cst_53 {dimension_numbers = #tpu.dot_dimension_numbers<[1], [0], [0], [1], [0, 0, 1, 1], [], []>} : vector<256x8xf32>, vector<8x8xf32>, vector<256x8xf32> -> vector<256x8xf32>
    %52 = arith.addf %46, %51 : vector<256x8xf32>
    %c0_54 = arith.constant 0 : index
    %c2_55 = arith.constant 2 : index
    %c2_56 = arith.constant 2 : index
    %c0_57 = arith.constant 0 : index
    %53 = vector.load %arg1[%c0_54, %c2_55, %c2_56, %c0_57] : memref<1x18x18x8xf32, #tpu.memory_space<vmem>>, vector<1x16x16x8xf32>
    %54 = vector.shape_cast %53 : vector<1x16x16x8xf32> to vector<16x16x8xf32>
    %55 = vector.shape_cast %54 : vector<16x16x8xf32> to vector<256x8xf32>
    %c64 = arith.constant 64 : index
    %c0_58 = arith.constant 0 : index
    %56 = vector.load %arg2[%c64, %c0_58] : memref<72x8xf32, #tpu.memory_space<vmem>>, vector<8x8xf32>
    %cst_59 = arith.constant dense<0.000000e+00> : vector<256x8xf32>
    %57 = tpu.matmul %55, %56, %cst_59 {dimension_numbers = #tpu.dot_dimension_numbers<[1], [0], [0], [1], [0, 0, 1, 1], [], []>} : vector<256x8xf32>, vector<8x8xf32>, vector<256x8xf32> -> vector<256x8xf32>
    %58 = arith.addf %52, %57 : vector<256x8xf32>
    %59 = vector.broadcast %0 : vector<1x8xf32> to vector<256x8xf32>
    %60 = arith.mulf %58, %59 : vector<256x8xf32>
    %61 = vector.broadcast %1 : vector<1x8xf32> to vector<256x8xf32>
    %62 = arith.addf %60, %61 : vector<256x8xf32>
    %cst_60 = arith.constant 0.000000e+00 : f32
    %63 = vector.broadcast %cst_60 : f32 to vector<256x8xf32>
    %64 = arith.maximumf %62, %63 : vector<256x8xf32>
    %cst_61 = arith.constant 0.000000e+00 : f32
    %65 = vector.broadcast %cst_61 : f32 to vector<18x18x8xf32>
    %c0_62 = arith.constant 0 : index
    %c0_63 = arith.constant 0 : index
    %c0_64 = arith.constant 0 : index
    %66 = vector.load %arg9[%c0_62, %c0_63, %c0_64] : memref<18x18x8xf32, #tpu.memory_space<vmem>>, vector<18x18x8xf32>
    tpu.vector_store %arg9[%c0_62, %c0_63, %c0_64], %65 {strides = array<i32>} : memref<18x18x8xf32, #tpu.memory_space<vmem>>, vector<18x18x8xf32>,
    %67 = vector.shape_cast %64 : vector<256x8xf32> to vector<16x16x8xf32>
    %c1_65 = arith.constant 1 : index
    %c1_66 = arith.constant 1 : index
    %c0_67 = arith.constant 0 : index
    %68 = vector.load %arg9[%c1_65, %c1_66, %c0_67] : memref<18x18x8xf32, #tpu.memory_space<vmem>>, vector<16x16x8xf32>
    tpu.vector_store %arg9[%c1_65, %c1_66, %c0_67], %67 {strides = array<i32>} : memref<18x18x8xf32, #tpu.memory_space<vmem>>, vector<16x16x8xf32>,
    %cst_68 = arith.constant 0.000000e+00 : f32
    %69 = vector.broadcast %cst_68 : f32 to vector<256x8xf32>
    %c0_69 = arith.constant 0 : index
    %c0_70 = arith.constant 0 : index
    %c0_71 = arith.constant 0 : index
    %70 = vector.load %arg9[%c0_69, %c0_70, %c0_71] : memref<18x18x8xf32, #tpu.memory_space<vmem>>, vector<16x16x8xf32>
    %71 = vector.shape_cast %70 : vector<16x16x8xf32> to vector<256x8xf32>
    %c0_72 = arith.constant 0 : index
    %c0_73 = arith.constant 0 : index
    %72 = vector.load %arg5[%c0_72, %c0_73] : memref<72x8xf32, #tpu.memory_space<vmem>>, vector<8x8xf32>
    %cst_74 = arith.constant dense<0.000000e+00> : vector<256x8xf32>
    %73 = tpu.matmul %71, %72, %cst_74 {dimension_numbers = #tpu.dot_dimension_numbers<[1], [0], [0], [1], [0, 0, 1, 1], [], []>} : vector<256x8xf32>, vector<8x8xf32>, vector<256x8xf32> -> vector<256x8xf32>
    %74 = arith.addf %69, %73 : vector<256x8xf32>
    %c0_75 = arith.constant 0 : index
    %c1_76 = arith.constant 1 : index
    %c0_77 = arith.constant 0 : index
    %75 = vector.load %arg9[%c0_75, %c1_76, %c0_77] : memref<18x18x8xf32, #tpu.memory_space<vmem>>, vector<16x16x8xf32>
    %76 = vector.shape_cast %75 : vector<16x16x8xf32> to vector<256x8xf32>
    %c8_78 = arith.constant 8 : index
    %c0_79 = arith.constant 0 : index
    %77 = vector.load %arg5[%c8_78, %c0_79] : memref<72x8xf32, #tpu.memory_space<vmem>>, vector<8x8xf32>
    %cst_80 = arith.constant dense<0.000000e+00> : vector<256x8xf32>
    %78 = tpu.matmul %76, %77, %cst_80 {dimension_numbers = #tpu.dot_dimension_numbers<[1], [0], [0], [1], [0, 0, 1, 1], [], []>} : vector<256x8xf32>, vector<8x8xf32>, vector<256x8xf32> -> vector<256x8xf32>
    %79 = arith.addf %74, %78 : vector<256x8xf32>
    %c0_81 = arith.constant 0 : index
    %c2_82 = arith.constant 2 : index
    %c0_83 = arith.constant 0 : index
    %80 = vector.load %arg9[%c0_81, %c2_82, %c0_83] : memref<18x18x8xf32, #tpu.memory_space<vmem>>, vector<16x16x8xf32>
    %81 = vector.shape_cast %80 : vector<16x16x8xf32> to vector<256x8xf32>
    %c16_84 = arith.constant 16 : index
    %c0_85 = arith.constant 0 : index
    %82 = vector.load %arg5[%c16_84, %c0_85] : memref<72x8xf32, #tpu.memory_space<vmem>>, vector<8x8xf32>
    %cst_86 = arith.constant dense<0.000000e+00> : vector<256x8xf32>
    %83 = tpu.matmul %81, %82, %cst_86 {dimension_numbers = #tpu.dot_dimension_numbers<[1], [0], [0], [1], [0, 0, 1, 1], [], []>} : vector<256x8xf32>, vector<8x8xf32>, vector<256x8xf32> -> vector<256x8xf32>
    %84 = arith.addf %79, %83 : vector<256x8xf32>
    %c1_87 = arith.constant 1 : index
    %c0_88 = arith.constant 0 : index
    %c0_89 = arith.constant 0 : index
    %85 = vector.load %arg9[%c1_87, %c0_88, %c0_89] : memref<18x18x8xf32, #tpu.memory_space<vmem>>, vector<16x16x8xf32>
    %86 = vector.shape_cast %85 : vector<16x16x8xf32> to vector<256x8xf32>
    %c24_90 = arith.constant 24 : index
    %c0_91 = arith.constant 0 : index
    %87 = vector.load %arg5[%c24_90, %c0_91] : memref<72x8xf32, #tpu.memory_space<vmem>>, vector<8x8xf32>
    %cst_92 = arith.constant dense<0.000000e+00> : vector<256x8xf32>
    %88 = tpu.matmul %86, %87, %cst_92 {dimension_numbers = #tpu.dot_dimension_numbers<[1], [0], [0], [1], [0, 0, 1, 1], [], []>} : vector<256x8xf32>, vector<8x8xf32>, vector<256x8xf32> -> vector<256x8xf32>
    %89 = arith.addf %84, %88 : vector<256x8xf32>
    %c1_93 = arith.constant 1 : index
    %c1_94 = arith.constant 1 : index
    %c0_95 = arith.constant 0 : index
    %90 = vector.load %arg9[%c1_93, %c1_94, %c0_95] : memref<18x18x8xf32, #tpu.memory_space<vmem>>, vector<16x16x8xf32>
    %91 = vector.shape_cast %90 : vector<16x16x8xf32> to vector<256x8xf32>
    %c32_96 = arith.constant 32 : index
    %c0_97 = arith.constant 0 : index
    %92 = vector.load %arg5[%c32_96, %c0_97] : memref<72x8xf32, #tpu.memory_space<vmem>>, vector<8x8xf32>
    %cst_98 = arith.constant dense<0.000000e+00> : vector<256x8xf32>
    %93 = tpu.matmul %91, %92, %cst_98 {dimension_numbers = #tpu.dot_dimension_numbers<[1], [0], [0], [1], [0, 0, 1, 1], [], []>} : vector<256x8xf32>, vector<8x8xf32>, vector<256x8xf32> -> vector<256x8xf32>
    %94 = arith.addf %89, %93 : vector<256x8xf32>
    %c1_99 = arith.constant 1 : index
    %c2_100 = arith.constant 2 : index
    %c0_101 = arith.constant 0 : index
    %95 = vector.load %arg9[%c1_99, %c2_100, %c0_101] : memref<18x18x8xf32, #tpu.memory_space<vmem>>, vector<16x16x8xf32>
    %96 = vector.shape_cast %95 : vector<16x16x8xf32> to vector<256x8xf32>
    %c40_102 = arith.constant 40 : index
    %c0_103 = arith.constant 0 : index
    %97 = vector.load %arg5[%c40_102, %c0_103] : memref<72x8xf32, #tpu.memory_space<vmem>>, vector<8x8xf32>
    %cst_104 = arith.constant dense<0.000000e+00> : vector<256x8xf32>
    %98 = tpu.matmul %96, %97, %cst_104 {dimension_numbers = #tpu.dot_dimension_numbers<[1], [0], [0], [1], [0, 0, 1, 1], [], []>} : vector<256x8xf32>, vector<8x8xf32>, vector<256x8xf32> -> vector<256x8xf32>
    %99 = arith.addf %94, %98 : vector<256x8xf32>
    %c2_105 = arith.constant 2 : index
    %c0_106 = arith.constant 0 : index
    %c0_107 = arith.constant 0 : index
    %100 = vector.load %arg9[%c2_105, %c0_106, %c0_107] : memref<18x18x8xf32, #tpu.memory_space<vmem>>, vector<16x16x8xf32>
    %101 = vector.shape_cast %100 : vector<16x16x8xf32> to vector<256x8xf32>
    %c48_108 = arith.constant 48 : index
    %c0_109 = arith.constant 0 : index
    %102 = vector.load %arg5[%c48_108, %c0_109] : memref<72x8xf32, #tpu.memory_space<vmem>>, vector<8x8xf32>
    %cst_110 = arith.constant dense<0.000000e+00> : vector<256x8xf32>
    %103 = tpu.matmul %101, %102, %cst_110 {dimension_numbers = #tpu.dot_dimension_numbers<[1], [0], [0], [1], [0, 0, 1, 1], [], []>} : vector<256x8xf32>, vector<8x8xf32>, vector<256x8xf32> -> vector<256x8xf32>
    %104 = arith.addf %99, %103 : vector<256x8xf32>
    %c2_111 = arith.constant 2 : index
    %c1_112 = arith.constant 1 : index
    %c0_113 = arith.constant 0 : index
    %105 = vector.load %arg9[%c2_111, %c1_112, %c0_113] : memref<18x18x8xf32, #tpu.memory_space<vmem>>, vector<16x16x8xf32>
    %106 = vector.shape_cast %105 : vector<16x16x8xf32> to vector<256x8xf32>
    %c56_114 = arith.constant 56 : index
    %c0_115 = arith.constant 0 : index
    %107 = vector.load %arg5[%c56_114, %c0_115] : memref<72x8xf32, #tpu.memory_space<vmem>>, vector<8x8xf32>
    %cst_116 = arith.constant dense<0.000000e+00> : vector<256x8xf32>
    %108 = tpu.matmul %106, %107, %cst_116 {dimension_numbers = #tpu.dot_dimension_numbers<[1], [0], [0], [1], [0, 0, 1, 1], [], []>} : vector<256x8xf32>, vector<8x8xf32>, vector<256x8xf32> -> vector<256x8xf32>
    %109 = arith.addf %104, %108 : vector<256x8xf32>
    %c2_117 = arith.constant 2 : index
    %c2_118 = arith.constant 2 : index
    %c0_119 = arith.constant 0 : index
    %110 = vector.load %arg9[%c2_117, %c2_118, %c0_119] : memref<18x18x8xf32, #tpu.memory_space<vmem>>, vector<16x16x8xf32>
    %111 = vector.shape_cast %110 : vector<16x16x8xf32> to vector<256x8xf32>
    %c64_120 = arith.constant 64 : index
    %c0_121 = arith.constant 0 : index
    %112 = vector.load %arg5[%c64_120, %c0_121] : memref<72x8xf32, #tpu.memory_space<vmem>>, vector<8x8xf32>
    %cst_122 = arith.constant dense<0.000000e+00> : vector<256x8xf32>
    %113 = tpu.matmul %111, %112, %cst_122 {dimension_numbers = #tpu.dot_dimension_numbers<[1], [0], [0], [1], [0, 0, 1, 1], [], []>} : vector<256x8xf32>, vector<8x8xf32>, vector<256x8xf32> -> vector<256x8xf32>
    %114 = arith.addf %109, %113 : vector<256x8xf32>
    %c0_123 = arith.constant 0 : index
    %c1_124 = arith.constant 1 : index
    %c1_125 = arith.constant 1 : index
    %c0_126 = arith.constant 0 : index
    %115 = vector.load %arg1[%c0_123, %c1_124, %c1_125, %c0_126] : memref<1x18x18x8xf32, #tpu.memory_space<vmem>>, vector<1x16x16x8xf32>
    %116 = vector.shape_cast %115 : vector<1x16x16x8xf32> to vector<16x16x8xf32>
    %117 = vector.shape_cast %116 : vector<16x16x8xf32> to vector<256x8xf32>
    %118 = vector.broadcast %2 : vector<1x8xf32> to vector<256x8xf32>
    %119 = arith.mulf %114, %118 : vector<256x8xf32>
    %120 = vector.broadcast %3 : vector<1x8xf32> to vector<256x8xf32>
    %121 = arith.addf %119, %120 : vector<256x8xf32>
    %122 = arith.addf %121, %117 : vector<256x8xf32>
    %cst_127 = arith.constant 0.000000e+00 : f32
    %123 = vector.broadcast %cst_127 : f32 to vector<256x8xf32>
    %124 = arith.maximumf %122, %123 : vector<256x8xf32>
    %125 = vector.shape_cast %124 : vector<256x8xf32> to vector<16x16x8xf32>
    %c0_128 = arith.constant 0 : index
    %c0_129 = arith.constant 0 : index
    %c0_130 = arith.constant 0 : index
    %c0_131 = arith.constant 0 : index
    %126 = vector.load %arg8[%c0_128, %c0_129, %c0_130, %c0_131] : memref<1x16x16x8xf32, #tpu.memory_space<vmem>>, vector<1x16x16x8xf32>
    %127 = vector.shape_cast %126 : vector<1x16x16x8xf32> to vector<16x16x8xf32>
    %128 = vector.shape_cast %125 : vector<16x16x8xf32> to vector<1x16x16x8xf32>
    tpu.vector_store %arg8[%c0_128, %c0_129, %c0_130, %c0_131], %128 {strides = array<i32>} : memref<1x16x16x8xf32, #tpu.memory_space<vmem>>, vector<1x16x16x8xf32>,
    return
  }
  func.func @transform_0(%arg0: i32) -> (i32, i32, i32, i32) {
    %c0_i32 = arith.constant 0 : i32
    %c0_i32_0 = arith.constant 0 : i32
    %c0_i32_1 = arith.constant 0 : i32
    %c0_i32_2 = arith.constant 0 : i32
    return %arg0, %c0_i32, %c0_i32_0, %c0_i32_1 : i32, i32, i32, i32
  }
  func.func @transform_1(%arg0: i32) -> (i32, i32) {
    %c0_i32 = arith.constant 0 : i32
    %c0_i32_0 = arith.constant 0 : i32
    %c0_i32_1 = arith.constant 0 : i32
    return %c0_i32, %c0_i32_0 : i32, i32
  }
  func.func @transform_2(%arg0: i32) -> (i32, i32) {
    %c0_i32 = arith.constant 0 : i32
    %c0_i32_0 = arith.constant 0 : i32
    %c0_i32_1 = arith.constant 0 : i32
    return %c0_i32, %c0_i32_0 : i32, i32
  }
  func.func @transform_3(%arg0: i32) -> (i32, i32) {
    %c0_i32 = arith.constant 0 : i32
    %c0_i32_0 = arith.constant 0 : i32
    %c0_i32_1 = arith.constant 0 : i32
    return %c0_i32, %c0_i32_0 : i32, i32
  }
  func.func @transform_4(%arg0: i32) -> (i32, i32) {
    %c0_i32 = arith.constant 0 : i32
    %c0_i32_0 = arith.constant 0 : i32
    %c0_i32_1 = arith.constant 0 : i32
    return %c0_i32, %c0_i32_0 : i32, i32
  }
  func.func @transform_5(%arg0: i32) -> (i32, i32) {
    %c0_i32 = arith.constant 0 : i32
    %c0_i32_0 = arith.constant 0 : i32
    %c0_i32_1 = arith.constant 0 : i32
    return %c0_i32, %c0_i32_0 : i32, i32
  }
  func.func @transform_6(%arg0: i32) -> (i32, i32) {
    %c0_i32 = arith.constant 0 : i32
    %c0_i32_0 = arith.constant 0 : i32
    %c0_i32_1 = arith.constant 0 : i32
    return %c0_i32, %c0_i32_0 : i32, i32
  }
  func.func @transform_7(%arg0: i32) -> (i32, i32, i32, i32) {
    %c0_i32 = arith.constant 0 : i32
    %c0_i32_0 = arith.constant 0 : i32
    %c0_i32_1 = arith.constant 0 : i32
    %c0_i32_2 = arith.constant 0 : i32
    return %arg0, %c0_i32, %c0_i32_0, %c0_i32_1 : i32, i32, i32, i32
  }
}

</mosaic_0001>

<llo_original>
// kernel: tpu_custom_call.1
$region0: #{tpu_custom_call.1}
  #allocation0 [shape = 'u32[]', space=smem, size = 0x4, offset = 0x4, fixed_abs, tag = 'smem constant byte address 0x4 - core index']
  #allocation1 [shape = 'u32[144,128]{1,0:T(1,128)}', space=vmem, size = 0x12000, scoped, tag = 'internal scratch']
  #allocation2 [shape = 'f32[18,18,8]{2,1,0:T(8,128)}', space=vmem, size = 0x36000, scoped, tag = 'scratch operand']
  %s0 = inlined_call_operand.vmem [shape: f32[2,18,18,8], index: 0, kind: input, shape index: {}]
  %s1 = inlined_call_operand.vmem [shape: f32[72,8], index: 1, kind: input, shape index: {}]
  %s2 = inlined_call_operand.vmem [shape: f32[1,8], index: 2, kind: input, shape index: {}]
  %s3 = inlined_call_operand.vmem [shape: f32[1,8], index: 3, kind: input, shape index: {}]
  %s4 = inlined_call_operand.vmem [shape: f32[72,8], index: 4, kind: input, shape index: {}]
  %s5 = inlined_call_operand.vmem [shape: f32[1,8], index: 5, kind: input, shape index: {}]
  %s6 = inlined_call_operand.vmem [shape: f32[1,8], index: 6, kind: input, shape index: {}]
  %s7 = inlined_call_operand.vmem [shape: f32[2,16,16,8], index: 7, kind: output, shape index: {}]
  %s8 = sld [smem:[#allocation0]]
  $region61: #{tpu_custom_call.1} parent=0
    _
  %s10 = ssub.s32 1, %s8
  %s11 = scalar_select 0, %s10, %s8
  loop: start=0, step=1, limit=4
  $region2: #{tpu_custom_call.1} parent=0 // loop_pre_header
    _
  $region3: #{tpu_custom_call.1} parent=0 // loop_header
    %s13 = sphi 0, %s17
    %p14 = scmp.ge.s32.totalorder %s13, 4
    %s23 = sphi 0, %s25
    %s26 = sphi 0, %s23
    %s27 = sphi 0, %s26
    %s43 = sphi 0, %s27
    %s47 = sphi 0, %s47
    %s49 = sphi 0, %s47
    %s50 = sphi 0, %s49
    %s64 = sphi 0, %s50
    %s68 = sphi 0, %s68
    %s70 = sphi 0, %s68
    %s71 = sphi 0, %s70
    %s85 = sphi 0, %s71
    %s89 = sphi 0, %s89
    %s91 = sphi 0, %s89
    %s92 = sphi 0, %s91
    %s106 = sphi 0, %s92
    %s110 = sphi 0, %s110
    %s112 = sphi 0, %s110
    %s113 = sphi 0, %s112
    %s127 = sphi 0, %s113
    %s131 = sphi 0, %s131
    %s133 = sphi 0, %s131
    %s134 = sphi 0, %s133
    %s148 = sphi 0, %s134
    %s152 = sphi 0, %s152
    %s154 = sphi 0, %s152
    %s155 = sphi 0, %s154
    %s169 = sphi 0, %s155
    %s175 = sphi 0, %s177
    %s178 = sphi 0, %s175
    %s179 = sphi 0, %s178
    %s195 = sphi 0, %s179
  $region4: #{tpu_custom_call.1} parent=0 // loop_header_branch
    %16 = sbr.rel (%p14) target = $region8
  $region5: #{tpu_custom_call.1} parent=0 // loop_body
    %s18 = ssub.s32 %s13, 1
    %s19 = ssub.s32 %s13, 2
    %s20 = sadd.s32 %s13, 1
    %s21 = ssub.s32 %s13, %s20
    %p22 = scmp.eq.s32.totalorder %s21, 0
    %s24 = sadd.s32 %s23, 1
    %s25 = scalar_select %p22, %s23, %s24
    %p28 = pneg %p22
    %p29 = scmp.eq.s32.totalorder %s13, 1
    %p30 = por %p28, %p29
    %p31 = scmp.ne.s32.totalorder %s23, %s26
    %p32 = scmp.eq.s32.totalorder %s13, 0
    %p33 = por %p31, %p32
    %p34 = scmp.ne.s32.totalorder %s23, %s26
    %p35 = scmp.eq.s32.totalorder %s18, 1
    %p36 = por %p34, %p35
    %p37 = scmp.ne.s32.totalorder %s26, %s27
    %p38 = scmp.eq.s32.totalorder %s18, 0
    %p39 = por %p37, %p38
    %p40 = scmp.ne.s32.totalorder %s26, %s27
    %p41 = scmp.eq.s32.totalorder %s19, 1
    %p42 = por %p40, %p41
    %p44 = scmp.ne.s32.totalorder %s27, %s43
    %p45 = scmp.eq.s32.totalorder %s19, 0
    %p46 = por %p44, %p45
    %s48 = sadd.s32 %s47, 1
    %p51 = scmp.eq.s32.totalorder %s13, 1
    %p52 = scmp.ne.s32.totalorder %s47, %s49
    %p53 = scmp.eq.s32.totalorder %s13, 0
    %p54 = por %p52, %p53
    %p55 = scmp.ne.s32.totalorder %s47, %s49
    %p56 = scmp.eq.s32.totalorder %s18, 1
    %p57 = por %p55, %p56
    %p58 = scmp.ne.s32.totalorder %s49, %s50
    %p59 = scmp.eq.s32.totalorder %s18, 0
    %p60 = por %p58, %p59
    %p61 = scmp.ne.s32.totalorder %s49, %s50
    %p62 = scmp.eq.s32.totalorder %s19, 1
    %p63 = por %p61, %p62
    %p65 = scmp.ne.s32.totalorder %s50, %s64
    %p66 = scmp.eq.s32.totalorder %s19, 0
    %p67 = por %p65, %p66
    %s69 = sadd.s32 %s68, 1
    %p72 = scmp.eq.s32.totalorder %s13, 1
    %p73 = scmp.ne.s32.totalorder %s68, %s70
    %p74 = scmp.eq.s32.totalorder %s13, 0
    %p75 = por %p73, %p74
    %p76 = scmp.ne.s32.totalorder %s68, %s70
    %p77 = scmp.eq.s32.totalorder %s18, 1
    %p78 = por %p76, %p77
    %p79 = scmp.ne.s32.totalorder %s70, %s71
    %p80 = scmp.eq.s32.totalorder %s18, 0
    %p81 = por %p79, %p80
    %p82 = scmp.ne.s32.totalorder %s70, %s71
    %p83 = scmp.eq.s32.totalorder %s19, 1
    %p84 = por %p82, %p83
    %p86 = scmp.ne.s32.totalorder %s71, %s85
    %p87 = scmp.eq.s32.totalorder %s19, 0
    %p88 = por %p86, %p87
    %s90 = sadd.s32 %s89, 1
    %p93 = scmp.eq.s32.totalorder %s13, 1
    %p94 = scmp.ne.s32.totalorder %s89, %s91
    %p95 = scmp.eq.s32.totalorder %s13, 0
    %p96 = por %p94, %p95
    %p97 = scmp.ne.s32.totalorder %s89, %s91
    %p98 = scmp.eq.s32.totalorder %s18, 1
    %p99 = por %p97, %p98
    %p100 = scmp.ne.s32.totalorder %s91, %s92
    %p101 = scmp.eq.s32.totalorder %s18, 0
    %p102 = por %p100, %p101
    %p103 = scmp.ne.s32.totalorder %s91, %s92
    %p104 = scmp.eq.s32.totalorder %s19, 1
    %p105 = por %p103, %p104
    %p107 = scmp.ne.s32.totalorder %s92, %s106
    %p108 = scmp.eq.s32.totalorder %s19, 0
    %p109 = por %p107, %p108
    %s111 = sadd.s32 %s110, 1
    %p114 = scmp.eq.s32.totalorder %s13, 1
    %p115 = scmp.ne.s32.totalorder %s110, %s112
    %p116 = scmp.eq.s32.totalorder %s13, 0
    %p117 = por %p115, %p116
    %p118 = scmp.ne.s32.totalorder %s110, %s112
    %p119 = scmp.eq.s32.totalorder %s18, 1
    %p120 = por %p118, %p119
    %p121 = scmp.ne.s32.totalorder %s112, %s113
    %p122 = scmp.eq.s32.totalorder %s18, 0
    %p123 = por %p121, %p122
    %p124 = scmp.ne.s32.totalorder %s112, %s113
    %p125 = scmp.eq.s32.totalorder %s19, 1
    %p126 = por %p124, %p125
    %p128 = scmp.ne.s32.totalorder %s113, %s127
    %p129 = scmp.eq.s32.totalorder %s19, 0
    %p130 = por %p128, %p129
    %s132 = sadd.s32 %s131, 1
    %p135 = scmp.eq.s32.totalorder %s13, 1
    %p136 = scmp.ne.s32.totalorder %s131, %s133
    %p137 = scmp.eq.s32.totalorder %s13, 0
    %p138 = por %p136, %p137
    %p139 = scmp.ne.s32.totalorder %s131, %s133
    %p140 = scmp.eq.s32.totalorder %s18, 1
    %p141 = por %p139, %p140
    %p142 = scmp.ne.s32.totalorder %s133, %s134
    %p143 = scmp.eq.s32.totalorder %s18, 0
    %p144 = por %p142, %p143
    %p145 = scmp.ne.s32.totalorder %s133, %s134
    %p146 = scmp.eq.s32.totalorder %s19, 1
    %p147 = por %p145, %p146
    %p149 = scmp.ne.s32.totalorder %s134, %s148
    %p150 = scmp.eq.s32.totalorder %s19, 0
    %p151 = por %p149, %p150
    %s153 = sadd.s32 %s152, 1
    %p156 = scmp.eq.s32.totalorder %s13, 1
    %p157 = scmp.ne.s32.totalorder %s152, %s154
    %p158 = scmp.eq.s32.totalorder %s13, 0
    %p159 = por %p157, %p158
    %p160 = scmp.ne.s32.totalorder %s152, %s154
    %p161 = scmp.eq.s32.totalorder %s18, 1
    %p162 = por %p160, %p161
    %p163 = scmp.ne.s32.totalorder %s154, %s155
    %p164 = scmp.eq.s32.totalorder %s18, 0
    %p165 = por %p163, %p164
    %p166 = scmp.ne.s32.totalorder %s154, %s155
    %p167 = scmp.eq.s32.totalorder %s19, 1
    %p168 = por %p166, %p167
    %p170 = scmp.ne.s32.totalorder %s155, %s169
    %p171 = scmp.eq.s32.totalorder %s19, 0
    %p172 = por %p170, %p171
    %s173 = ssub.s32 %s13, %s20
    %p174 = scmp.eq.s32.totalorder %s173, 0
    %s176 = sadd.s32 %s175, 1
    %s177 = scalar_select %p174, %s175, %s176
    %p180 = pneg %p174
    %p181 = scmp.eq.s32.totalorder %s13, 1
    %p182 = por %p180, %p181
    %p183 = scmp.ne.s32.totalorder %s175, %s178
    %p184 = scmp.eq.s32.totalorder %s13, 0
    %p185 = por %p183, %p184
    %p186 = scmp.ne.s32.totalorder %s175, %s178
    %p187 = scmp.eq.s32.totalorder %s18, 1
    %p188 = por %p186, %p187
    %p189 = scmp.ne.s32.totalorder %s178, %s179
    %p190 = scmp.eq.s32.totalorder %s18, 0
    %p191 = por %p189, %p190
    %p192 = scmp.ne.s32.totalorder %s178, %s179
    %p193 = scmp.eq.s32.totalorder %s19, 1
    %p194 = por %p192, %p193
    %p196 = scmp.ne.s32.totalorder %s179, %s195
    %p197 = scmp.eq.s32.totalorder %s19, 0
    %p198 = por %p196, %p197
    %p199 = scmp.le.s32.totalorder 1, %s13
    %p200 = scmp.lt.s32.totalorder %s13, 3
    %p201 = pnand %p199, %p200
    %p202 = pneg %p201
    // Predicated region
    $region9: #{tpu_custom_call.1} parent=5 // pred_check
      _
    $region10: #{tpu_custom_call.1} parent=5 // pred_check_branch
      %204 = sbr.rel (%p201) target = $region12
    $region11: #{tpu_custom_call.1} parent=5 // pred_region
      %s205 = ssub.s32 %s13, 1
      // Predicated region
      $region13: #{tpu_custom_call.1} parent=11 // pred_check
        %p206 = pneg %p60
      $region14: #{tpu_custom_call.1} parent=11 // pred_check_branch
        %208 = sbr.rel (%p206) target = $region16
      $region15: #{tpu_custom_call.1} parent=11 // pred_region
        _
      $region16: #{tpu_custom_call.1} parent=11 // pred_fallthru
        _
      // Predicated region
      $region17: #{tpu_custom_call.1} parent=11 // pred_check
        %p209 = pneg %p81
      $region18: #{tpu_custom_call.1} parent=11 // pred_check_branch
        %211 = sbr.rel (%p209) target = $region20
      $region19: #{tpu_custom_call.1} parent=11 // pred_region
        _
      $region20: #{tpu_custom_call.1} parent=11 // pred_fallthru
        _
      // Predicated region
      $region21: #{tpu_custom_call.1} parent=11 // pred_check
        %p212 = pneg %p102
      $region22: #{tpu_custom_call.1} parent=11 // pred_check_branch
        %214 = sbr.rel (%p212) target = $region24
      $region23: #{tpu_custom_call.1} parent=11 // pred_region
        _
      $region24: #{tpu_custom_call.1} parent=11 // pred_fallthru
        _
      // Predicated region
      $region25: #{tpu_custom_call.1} parent=11 // pred_check
        %p215 = pneg %p123
      $region26: #{tpu_custom_call.1} parent=11 // pred_check_branch
        %217 = sbr.rel (%p215) target = $region28
      $region27: #{tpu_custom_call.1} parent=11 // pred_region
        _
      $region28: #{tpu_custom_call.1} parent=11 // pred_fallthru
        _
      // Predicated region
      $region29: #{tpu_custom_call.1} parent=11 // pred_check
        %p218 = pneg %p144
      $region30: #{tpu_custom_call.1} parent=11 // pred_check_branch
        %220 = sbr.rel (%p218) target = $region32
      $region31: #{tpu_custom_call.1} parent=11 // pred_region
        _
      $region32: #{tpu_custom_call.1} parent=11 // pred_fallthru
        _
      // Predicated region
      $region33: #{tpu_custom_call.1} parent=11 // pred_check
        %p221 = pneg %p165
      $region34: #{tpu_custom_call.1} parent=11 // pred_check_branch
        %223 = sbr.rel (%p221) target = $region36
      $region35: #{tpu_custom_call.1} parent=11 // pred_region
        _
      $region36: #{tpu_custom_call.1} parent=11 // pred_fallthru
        _
    $region12: #{tpu_custom_call.1} parent=5 // pred_fallthru
      _
    %p224 = scmp.lt.s32.totalorder %s13, 2
    // Predicated region
    $region37: #{tpu_custom_call.1} parent=5 // pred_check
      %p225 = pneg %p224
    $region38: #{tpu_custom_call.1} parent=5 // pred_check_branch
      %227 = sbr.rel (%p225) target = $region40
    $region39: #{tpu_custom_call.1} parent=5 // pred_region
      // Predicated region
      $region41: #{tpu_custom_call.1} parent=39 // pred_check
        %p228 = pneg %p33
      $region42: #{tpu_custom_call.1} parent=39 // pred_check_branch
        %230 = sbr.rel (%p228) target = $region44
      $region43: #{tpu_custom_call.1} parent=39 // pred_region
        %p231 = scmp.lt.s32.totalorder %s13, 1
        %s232 = scalar_select %p231, %s13, 1
        %s233 = smul.addr %s232, 54
        %s234 = smul.addr %s233, 8
        %s235 = scalar_lea.vmem %s0, %s234
      $region44: #{tpu_custom_call.1} parent=39 // pred_fallthru
        _
    $region40: #{tpu_custom_call.1} parent=5 // pred_fallthru
      _
    %p236 = scmp.le.s32.totalorder 1, %s13
    %p237 = scmp.lt.s32.totalorder %s13, 3
    %p238 = pnand %p236, %p237
    %p239 = pneg %p238
    // Predicated region
    $region45: #{tpu_custom_call.1} parent=5 // pred_check
      _
    $region46: #{tpu_custom_call.1} parent=5 // pred_check_branch
      %241 = sbr.rel (%p238) target = $region48
    $region47: #{tpu_custom_call.1} parent=5 // pred_region
      %s242 = ssub.s32 %s13, 1
      %p243 = scmp.lt.s32.totalorder %s18, 1
      %s244 = scalar_select %p243, %s18, 1
      %s245 = smul.addr %s244, 54
      %s246 = smul.addr %s245, 8
      %s247 = scalar_lea.vmem %s0, %s246
      %p248 = pneg %p39
      %p249 = pneg %p36
      %p250 = pneg %p60
      %p251 = pneg %p57
      %p252 = pneg %p81
      %p253 = pneg %p78
      %p254 = pneg %p102
      %p255 = pneg %p99
      %p256 = pneg %p123
      %p257 = pneg %p120
      %p258 = pneg %p144
      %p259 = pneg %p141
      %p260 = pneg %p165
      %p261 = pneg %p162
      %p262 = pneg %p191
      %p263 = pneg %p188
      %p264 = scmp.lt.s32.totalorder %s18, 1
      %s265 = scalar_select %p264, %s18, 1
      %s266 = smul.addr %s265, 32
      %s267 = smul.addr %s266, 8
      %s268 = scalar_lea.vmem %s7, %s267
      %p269 = scmp.lt.s32.totalorder %s18, 1
      %s270 = scalar_select %p269, %s18, 1
      %s271 = smul.addr %s270, 54
      %s272 = smul.addr %s271, 8
      %s273 = scalar_lea.vmem %s0, %s272
      %p274 = scmp.lt.s32.totalorder %s18, 1
      %s275 = scalar_select %p274, %s18, 1
      %s276 = smul.addr %s275, 32
      %s277 = smul.addr %s276, 8
      %s278 = scalar_lea.vmem %s7, %s277
      %v279 = vld [vmem:[%s2] sm:$0x1]
      %v280 = vld [vmem:[%s3] sm:$0x1]
      %v281 = vld [vmem:[%s5] sm:$0x1]
      %v282 = vld [vmem:[%s6] sm:$0x1]
      %v283 = vld [vmem:[%s273] sm:$0xff]
      %v284 = vld [vmem:[%s273 + $0x8] sm:$0xff]
      %v285 = vld [vmem:[%s273 + $0x18] sm:$0xff]
      %v286 = vld [vmem:[%s273 + $0x20] sm:$0xff]
      %v287 = vld [vmem:[%s273 + $0x30] sm:$0xff]
      %v288 = vld [vmem:[%s273 + $0x38] sm:$0xff]
      %v289 = vld [vmem:[%s273 + $0x48] sm:$0xff]
      %v290 = vld [vmem:[%s273 + $0x50] sm:$0xff]
      %v291 = vld [vmem:[%s273 + $0x60] sm:$0xff]
      %v292 = vld [vmem:[%s273 + $0x68] sm:$0xff]
      %v293 = vld [vmem:[%s273 + $0x78] sm:$0xff]
      %v294 = vld [vmem:[%s273 + $0x80] sm:$0xff]
      %v295 = vld [vmem:[%s273 + $0x90] sm:$0xff]
      %v296 = vld [vmem:[%s273 + $0x98] sm:$0xff]
      %v297 = vld [vmem:[%s273 + $0xa8] sm:$0xff]
      %v298 = vld [vmem:[%s273 + $0xb0] sm:$0xff]
      %v299 = vld [vmem:[%s273 + $0xc0] sm:$0xff]
      %v300 = vld [vmem:[%s273 + $0xc8] sm:$0xff]
      %v301 = vld [vmem:[%s273 + $0xd8] sm:$0xff]
      %v302 = vld [vmem:[%s273 + $0xe0] sm:$0xff]
      %v303 = vld [vmem:[%s273 + $0xf0] sm:$0xff]
      %v304 = vld [vmem:[%s273 + $0xf8] sm:$0xff]
      %v305 = vld [vmem:[%s273 + $0x108] sm:$0xff]
      %v306 = vld [vmem:[%s273 + $0x110] sm:$0xff]
      %v307 = vld [vmem:[%s273 + $0x120] sm:$0xff]
      %v308 = vld [vmem:[%s273 + $0x128] sm:$0xff]
      %v309 = vld [vmem:[%s273 + $0x138] sm:$0xff]
      %v310 = vld [vmem:[%s273 + $0x140] sm:$0xff]
      %v311 = vld [vmem:[%s273 + $0x150] sm:$0xff]
      %v312 = vld [vmem:[%s273 + $0x158] sm:$0xff]
      %v313 = vld [vmem:[%s273 + $0x168] sm:$0xff]
      %v314 = vld [vmem:[%s273 + $0x170] sm:$0xff]
      %v315 = vld [vmem:[%s1] sm:$0xff]
      %v316 = vld [vmem:[%s273 + $0x1] sm:$0xff]
      %v317 = vld [vmem:[%s273 + $0x9] sm:$0xff]
      %v318 = vld [vmem:[%s273 + $0x19] sm:$0xff]
      %v319 = vld [vmem:[%s273 + $0x21] sm:$0xff]
      %v320 = vld [vmem:[%s273 + $0x31] sm:$0xff]
      %v321 = vld [vmem:[%s273 + $0x39] sm:$0xff]
      %v322 = vld [vmem:[%s273 + $0x49] sm:$0xff]
      %v323 = vld [vmem:[%s273 + $0x51] sm:$0xff]
      %v324 = vld [vmem:[%s273 + $0x61] sm:$0xff]
      %v325 = vld [vmem:[%s273 + $0x69] sm:$0xff]
      %v326 = vld [vmem:[%s273 + $0x79] sm:$0xff]
      %v327 = vld [vmem:[%s273 + $0x81] sm:$0xff]
      %v328 = vld [vmem:[%s273 + $0x91] sm:$0xff]
      %v329 = vld [vmem:[%s273 + $0x99] sm:$0xff]
      %v330 = vld [vmem:[%s273 + $0xa9] sm:$0xff]
      %v331 = vld [vmem:[%s273 + $0xb1] sm:$0xff]
      %v332 = vld [vmem:[%s273 + $0xc1] sm:$0xff]
      %v333 = vld [vmem:[%s273 + $0xc9] sm:$0xff]
      %v334 = vld [vmem:[%s273 + $0xd9] sm:$0xff]
      %v335 = vld [vmem:[%s273 + $0xe1] sm:$0xff]
      %v336 = vld [vmem:[%s273 + $0xf1] sm:$0xff]
      %v337 = vld [vmem:[%s273 + $0xf9] sm:$0xff]
      %v338 = vld [vmem:[%s273 + $0x109] sm:$0xff]
      %v339 = vld [vmem:[%s273 + $0x111] sm:$0xff]
      %v340 = vld [vmem:[%s273 + $0x121] sm:$0xff]
      %v341 = vld [vmem:[%s273 + $0x129] sm:$0xff]
      %v342 = vld [vmem:[%s273 + $0x139] sm:$0xff]
      %v343 = vld [vmem:[%s273 + $0x141] sm:$0xff]
      %v344 = vld [vmem:[%s273 + $0x151] sm:$0xff]
      %v345 = vld [vmem:[%s273 + $0x159] sm:$0xff]
      %v346 = vld [vmem:[%s273 + $0x169] sm:$0xff]
      %v347 = vld [vmem:[%s273 + $0x171] sm:$0xff]
      %v348 = vld [vmem:[%s1 + $0x8] sm:$0xff]
      %vm349 = vcmask 64512
      %v351 = vsel %vm349, %v316, 0
      %v354 = vsel %vm349, %v317, 0
      %v357 = vsel %vm349, %v318, 0
      %v360 = vsel %vm349, %v319, 0
      %v363 = vsel %vm349, %v320, 0
      %v366 = vsel %vm349, %v321, 0
      %v369 = vsel %vm349, %v322, 0
      %v372 = vsel %vm349, %v323, 0
      %v375 = vsel %vm349, %v324, 0
      %v378 = vsel %vm349, %v325, 0
      %v381 = vsel %vm349, %v326, 0
      %v384 = vsel %vm349, %v327, 0
      %v387 = vsel %vm349, %v328, 0
      %v390 = vsel %vm349, %v329, 0
      %v393 = vsel %vm349, %v330, 0
      %v396 = vsel %vm349, %v331, 0
      %v399 = vsel %vm349, %v332, 0
      %v402 = vsel %vm349, %v333, 0
      %v405 = vsel %vm349, %v334, 0
      %v408 = vsel %vm349, %v335, 0
      %v411 = vsel %vm349, %v336, 0
      %v414 = vsel %vm349, %v337, 0
      %v417 = vsel %vm349, %v338, 0
      %v420 = vsel %vm349, %v339, 0
      %v423 = vsel %vm349, %v340, 0
      %v426 = vsel %vm349, %v341, 0
      %v429 = vsel %vm349, %v342, 0
      %v432 = vsel %vm349, %v343, 0
      %v435 = vsel %vm349, %v344, 0
      %v438 = vsel %vm349, %v345, 0
      %v441 = vsel %vm349, %v346, 0
      %v444 = vsel %vm349, %v347, 0
      %446 = vmatprep.subr.mxu0 0.0
      %447 = vmatpush1.msra.mxu0 %v348
      %448 = vmatprep.subr.mxu0 0.0
      %449 = vmatpush1.msra.mxu0 0.0
      %450 = vmatprep.subr.mxu0 0.0
      %451 = vmatpush1.msra.mxu0 0.0
      %452 = vmatprep.subr.mxu0 0.0
      %453 = vmatpush1.msra.mxu0 0.0
      %454 = vmatprep.subr.mxu0 0.0
      %455 = vmatpush1.msra.mxu0 0.0
      %456 = vmatprep.subr.mxu0 0.0
      %457 = vmatpush1.msra.mxu0 0.0
      %458 = vmatprep.subr.mxu0 0.0
      %459 = vmatpush1.msra.mxu0 0.0
      %460 = vmatprep.subr.mxu0 0.0
      %461 = vmatpush1.msra.mxu0 0.0
      %462 = vmatprep.subr.mxu0 0.0
      %463 = vmatpush1.msra.mxu0 0.0
      %464 = vmatprep.subr.mxu0 0.0
      %465 = vmatpush1.msra.mxu0 0.0
      %466 = vmatprep.subr.mxu0 0.0
      %467 = vmatpush1.msra.mxu0 0.0
      %468 = vmatprep.subr.mxu0 0.0
      %469 = vmatpush1.msra.mxu0 0.0
      %470 = vmatprep.subr.mxu0 0.0
      %471 = vmatpush1.msra.mxu0 0.0
      %472 = vmatprep.subr.mxu0 0.0
      %473 = vmatpush1.msra.mxu0 0.0
      %474 = vmatprep.subr.mxu0 0.0
      %475 = vmatpush1.msra.mxu0 0.0
      %476 = vmatprep.subr.mxu0 0.0
      %477 = vmatpush1.msra.mxu0 0.0
      %478 = vmatprep.subr.mxu0 0.0
      %479 = vmatpush1.msra.mxu0 0.0
      %480 = vmatprep.subr.mxu0 0.0
      %481 = vmatpush1.msra.mxu0 0.0
      %482 = vmatprep.subr.mxu0 0.0
      %483 = vmatpush1.msra.mxu0 0.0
      %484 = vmatprep.subr.mxu0 0.0
      %485 = vmatpush1.msra.mxu0 0.0
      %486 = vmatprep.subr.mxu0 0.0
      %487 = vmatpush1.msra.mxu0 0.0
      %488 = vmatprep.subr.mxu0 0.0
      %489 = vmatpush1.msra.mxu0 0.0
      %490 = vmatprep.subr.mxu0 0.0
      %491 = vmatpush1.msra.mxu0 0.0
      %492 = vmatprep.subr.mxu0 0.0
      %493 = vmatpush1.msra.mxu0 0.0
      %494 = vmatprep.subr.mxu0 0.0
      %495 = vmatpush1.msra.mxu0 0.0
      %496 = vmatprep.subr.mxu0 0.0
      %497 = vmatpush1.msra.mxu0 0.0
      %498 = vmatprep.subr.mxu0 0.0
      %499 = vmatpush1.msra.mxu0 0.0
      %500 = vmatprep.subr.mxu0 0.0
      %501 = vmatpush1.msra.mxu0 0.0
      %502 = vmatprep.subr.mxu0 0.0
      %503 = vmatpush1.msra.mxu0 0.0
      %504 = vmatprep.subr.mxu0 0.0
      %505 = vmatpush1.msra.mxu0 0.0
      %506 = vmatprep.subr.mxu0 0.0
      %507 = vmatpush1.msra.mxu0 0.0
      %508 = vmatprep.subr.mxu0 0.0
      %509 = vmatpush1.msra.mxu0 0.0
      %510 = vmatprep.mubr.f32.mxu0 0.0
      %511 = vmatmul.mubr.f32.gmra.mrb[0].mxu0 %v351
      %v512 = vpop.f32.mrb[0].mxu0
      %v513 = vadd.f32 0.0, %v512
      %v514 = vpop.f32.mrb[0].mxu0
      %515 = vmatprep.mubr.f32.mxu0 0.0
      %516 = vmatmul.mubr.f32.gmra.mrb[0].mxu0 %v354
      %v517 = vpop.f32.mrb[0].mxu0
      %v518 = vadd.f32 0.0, %v517
      %v519 = vpop.f32.mrb[0].mxu0
      %520 = vmatprep.mubr.f32.mxu0 0.0
      %521 = vmatmul.mubr.f32.gmra.mrb[0].mxu0 %v357
      %v522 = vpop.f32.mrb[0].mxu0
      %v523 = vadd.f32 0.0, %v522
      %v524 = vpop.f32.mrb[0].mxu0
      %525 = vmatprep.mubr.f32.mxu0 0.0
      %526 = vmatmul.mubr.f32.gmra.mrb[0].mxu0 %v360
      %v527 = vpop.f32.mrb[0].mxu0
      %v528 = vadd.f32 0.0, %v527
      %v529 = vpop.f32.mrb[0].mxu0
      %530 = vmatprep.mubr.f32.mxu0 0.0
      %531 = vmatmul.mubr.f32.gmra.mrb[0].mxu0 %v363
      %v532 = vpop.f32.mrb[0].mxu0
      %v533 = vadd.f32 0.0, %v532
      %v534 = vpop.f32.mrb[0].mxu0
      %535 = vmatprep.mubr.f32.mxu0 0.0
      %536 = vmatmul.mubr.f32.gmra.mrb[0].mxu0 %v366
      %v537 = vpop.f32.mrb[0].mxu0
      %v538 = vadd.f32 0.0, %v537
      %v539 = vpop.f32.mrb[0].mxu0
      %540 = vmatprep.mubr.f32.mxu0 0.0
      %541 = vmatmul.mubr.f32.gmra.mrb[0].mxu0 %v369
      %v542 = vpop.f32.mrb[0].mxu0
      %v543 = vadd.f32 0.0, %v542
      %v544 = vpop.f32.mrb[0].mxu0
      %545 = vmatprep.mubr.f32.mxu0 0.0
      %546 = vmatmul.mubr.f32.gmra.mrb[0].mxu0 %v372
      %v547 = vpop.f32.mrb[0].mxu0
      %v548 = vadd.f32 0.0, %v547
      %v549 = vpop.f32.mrb[0].mxu0
      %550 = vmatprep.mubr.f32.mxu0 0.0
      %551 = vmatmul.mubr.f32.gmra.mrb[0].mxu0 %v375
      %v552 = vpop.f32.mrb[0].mxu0
      %v553 = vadd.f32 0.0, %v552
      %v554 = vpop.f32.mrb[0].mxu0
      %555 = vmatprep.mubr.f32.mxu0 0.0
      %556 = vmatmul.mubr.f32.gmra.mrb[0].mxu0 %v378
      %v557 = vpop.f32.mrb[0].mxu0
      %v558 = vadd.f32 0.0, %v557
      %v559 = vpop.f32.mrb[0].mxu0
      %560 = vmatprep.mubr.f32.mxu0 0.0
      %561 = vmatmul.mubr.f32.gmra.mrb[0].mxu0 %v381
      %v562 = vpop.f32.mrb[0].mxu0
      %v563 = vadd.f32 0.0, %v562
      %v564 = vpop.f32.mrb[0].mxu0
      %565 = vmatprep.mubr.f32.mxu0 0.0
      %566 = vmatmul.mubr.f32.gmra.mrb[0].mxu0 %v384
      %v567 = vpop.f32.mrb[0].mxu0
      %v568 = vadd.f32 0.0, %v567
      %v569 = vpop.f32.mrb[0].mxu0
      %570 = vmatprep.mubr.f32.mxu0 0.0
      %571 = vmatmul.mubr.f32.gmra.mrb[0].mxu0 %v387
      %v572 = vpop.f32.mrb[0].mxu0
      %v573 = vadd.f32 0.0, %v572
      %v574 = vpop.f32.mrb[0].mxu0
      %575 = vmatprep.mubr.f32.mxu0 0.0
      %576 = vmatmul.mubr.f32.gmra.mrb[0].mxu0 %v390
      %v577 = vpop.f32.mrb[0].mxu0
      %v578 = vadd.f32 0.0, %v577
      %v579 = vpop.f32.mrb[0].mxu0
      %580 = vmatprep.mubr.f32.mxu0 0.0
      %581 = vmatmul.mubr.f32.gmra.mrb[0].mxu0 %v393
      %v582 = vpop.f32.mrb[0].mxu0
      %v583 = vadd.f32 0.0, %v582
      %v584 = vpop.f32.mrb[0].mxu0
      %585 = vmatprep.mubr.f32.mxu0 0.0
      %586 = vmatmul.mubr.f32.gmra.mrb[0].mxu0 %v396
      %v587 = vpop.f32.mrb[0].mxu0
      %v588 = vadd.f32 0.0, %v587
      %v589 = vpop.f32.mrb[0].mxu0
      %590 = vmatprep.mubr.f32.mxu0 0.0
      %591 = vmatmul.mubr.f32.gmra.mrb[0].mxu0 %v399
      %v592 = vpop.f32.mrb[0].mxu0
      %v593 = vadd.f32 0.0, %v592
      %v594 = vpop.f32.mrb[0].mxu0
      %595 = vmatprep.mubr.f32.mxu0 0.0
      %596 = vmatmul.mubr.f32.gmra.mrb[0].mxu0 %v402
      %v597 = vpop.f32.mrb[0].mxu0
      %v598 = vadd.f32 0.0, %v597
      %v599 = vpop.f32.mrb[0].mxu0
      %600 = vmatprep.mubr.f32.mxu0 0.0
      %601 = vmatmul.mubr.f32.gmra.mrb[0].mxu0 %v405
      %v602 = vpop.f32.mrb[0].mxu0
      %v603 = vadd.f32 0.0, %v602
      %v604 = vpop.f32.mrb[0].mxu0
      %605 = vmatprep.mubr.f32.mxu0 0.0
      %606 = vmatmul.mubr.f32.gmra.mrb[0].mxu0 %v408
      %v607 = vpop.f32.mrb[0].mxu0
      %v608 = vadd.f32 0.0, %v607
      %v609 = vpop.f32.mrb[0].mxu0
      %610 = vmatprep.mubr.f32.mxu0 0.0
      %611 = vmatmul.mubr.f32.gmra.mrb[0].mxu0 %v411
      %v612 = vpop.f32.mrb[0].mxu0
      %v613 = vadd.f32 0.0, %v612
      %v614 = vpop.f32.mrb[0].mxu0
      %615 = vmatprep.mubr.f32.mxu0 0.0
      %616 = vmatmul.mubr.f32.gmra.mrb[0].mxu0 %v414
      %v617 = vpop.f32.mrb[0].mxu0
      %v618 = vadd.f32 0.0, %v617
      %v619 = vpop.f32.mrb[0].mxu0
      %620 = vmatprep.mubr.f32.mxu0 0.0
      %621 = vmatmul.mubr.f32.gmra.mrb[0].mxu0 %v417
      %v622 = vpop.f32.mrb[0].mxu0
      %v623 = vadd.f32 0.0, %v622
      %v624 = vpop.f32.mrb[0].mxu0
      %625 = vmatprep.mubr.f32.mxu0 0.0
      %626 = vmatmul.mubr.f32.gmra.mrb[0].mxu0 %v420
      %v627 = vpop.f32.mrb[0].mxu0
      %v628 = vadd.f32 0.0, %v627
      %v629 = vpop.f32.mrb[0].mxu0
      %630 = vmatprep.mubr.f32.mxu0 0.0
      %631 = vmatmul.mubr.f32.gmra.mrb[0].mxu0 %v423
      %v632 = vpop.f32.mrb[0].mxu0
      %v633 = vadd.f32 0.0, %v632
      %v634 = vpop.f32.mrb[0].mxu0
      %635 = vmatprep.mubr.f32.mxu0 0.0
      %636 = vmatmul.mubr.f32.gmra.mrb[0].mxu0 %v426
      %v637 = vpop.f32.mrb[0].mxu0
      %v638 = vadd.f32 0.0, %v637
      %v639 = vpop.f32.mrb[0].mxu0
      %640 = vmatprep.mubr.f32.mxu0 0.0
      %641 = vmatmul.mubr.f32.gmra.mrb[0].mxu0 %v429
      %v642 = vpop.f32.mrb[0].mxu0
      %v643 = vadd.f32 0.0, %v642
      %v644 = vpop.f32.mrb[0].mxu0
      %645 = vmatprep.mubr.f32.mxu0 0.0
      %646 = vmatmul.mubr.f32.gmra.mrb[0].mxu0 %v432
      %v647 = vpop.f32.mrb[0].mxu0
      %v648 = vadd.f32 0.0, %v647
      %v649 = vpop.f32.mrb[0].mxu0
      %650 = vmatprep.mubr.f32.mxu0 0.0
      %651 = vmatmul.mubr.f32.gmra.mrb[0].mxu0 %v435
      %v652 = vpop.f32.mrb[0].mxu0
      %v653 = vadd.f32 0.0, %v652
      %v654 = vpop.f32.mrb[0].mxu0
      %655 = vmatprep.mubr.f32.mxu0 0.0
      %656 = vmatmul.mubr.f32.gmra.mrb[0].mxu0 %v438
      %v657 = vpop.f32.mrb[0].mxu0
      %v658 = vadd.f32 0.0, %v657
      %v659 = vpop.f32.mrb[0].mxu0
      %660 = vmatprep.mubr.f32.mxu0 0.0
      %661 = vmatmul.mubr.f32.gmra.mrb[0].mxu0 %v441
      %v662 = vpop.f32.mrb[0].mxu0
      %v663 = vadd.f32 0.0, %v662
      %v664 = vpop.f32.mrb[0].mxu0
      %665 = vmatprep.mubr.f32.mxu0 0.0
      %666 = vmatmul.mubr.f32.gmra.mrb[0].mxu0 %v444
      %v667 = vpop.f32.mrb[0].mxu0
      %v668 = vadd.f32 0.0, %v667
      %v669 = vpop.f32.mrb[0].mxu0
      %670 = vdwg.mxu0
      %v672 = vsel %vm349, %v283, 0
      %v675 = vsel %vm349, %v284, 0
      %v678 = vsel %vm349, %v285, 0
      %v681 = vsel %vm349, %v286, 0
      %v684 = vsel %vm349, %v287, 0
      %v687 = vsel %vm349, %v288, 0
      %v690 = vsel %vm349, %v289, 0
      %v693 = vsel %vm349, %v290, 0
      %v696 = vsel %vm349, %v291, 0
      %v699 = vsel %vm349, %v292, 0
      %v702 = vsel %vm349, %v293, 0
      %v705 = vsel %vm349, %v294, 0
      %v708 = vsel %vm349, %v295, 0
      %v711 = vsel %vm349, %v296, 0
      %v714 = vsel %vm349, %v297, 0
      %v717 = vsel %vm349, %v298, 0
      %v720 = vsel %vm349, %v299, 0
      %v723 = vsel %vm349, %v300, 0
      %v726 = vsel %vm349, %v301, 0
      %v729 = vsel %vm349, %v302, 0
      %v732 = vsel %vm349, %v303, 0
      %v735 = vsel %vm349, %v304, 0
      %v738 = vsel %vm349, %v305, 0
      %v741 = vsel %vm349, %v306, 0
      %v744 = vsel %vm349, %v307, 0
      %v747 = vsel %vm349, %v308, 0
      %v750 = vsel %vm349, %v309, 0
      %v753 = vsel %vm349, %v310, 0
      %v756 = vsel %vm349, %v311, 0
      %v759 = vsel %vm349, %v312, 0
      %v762 = vsel %vm349, %v313, 0
      %v765 = vsel %vm349, %v314, 0
      %767 = vmatprep.subr.mxu0 0.0
      %768 = vmatpush1.msra.mxu0 %v315
      %769 = vmatprep.subr.mxu0 0.0
      %770 = vmatpush1.msra.mxu0 0.0
      %771 = vmatprep.subr.mxu0 0.0
      %772 = vmatpush1.msra.mxu0 0.0
      %773 = vmatprep.subr.mxu0 0.0
      %774 = vmatpush1.msra.mxu0 0.0
      %775 = vmatprep.subr.mxu0 0.0
      %776 = vmatpush1.msra.mxu0 0.0
      %777 = vmatprep.subr.mxu0 0.0
      %778 = vmatpush1.msra.mxu0 0.0
      %779 = vmatprep.subr.mxu0 0.0
      %780 = vmatpush1.msra.mxu0 0.0
      %781 = vmatprep.subr.mxu0 0.0
      %782 = vmatpush1.msra.mxu0 0.0
      %783 = vmatprep.subr.mxu0 0.0
      %784 = vmatpush1.msra.mxu0 0.0
      %785 = vmatprep.subr.mxu0 0.0
      %786 = vmatpush1.msra.mxu0 0.0
      %787 = vmatprep.subr.mxu0 0.0
      %788 = vmatpush1.msra.mxu0 0.0
      %789 = vmatprep.subr.mxu0 0.0
      %790 = vmatpush1.msra.mxu0 0.0
      %791 = vmatprep.subr.mxu0 0.0
      %792 = vmatpush1.msra.mxu0 0.0
      %793 = vmatprep.subr.mxu0 0.0
      %794 = vmatpush1.msra.mxu0 0.0
      %795 = vmatprep.subr.mxu0 0.0
      %796 = vmatpush1.msra.mxu0 0.0
      %797 = vmatprep.subr.mxu0 0.0
      %798 = vmatpush1.msra.mxu0 0.0
      %799 = vmatprep.subr.mxu0 0.0
      %800 = vmatpush1.msra.mxu0 0.0
      %801 = vmatprep.subr.mxu0 0.0
      %802 = vmatpush1.msra.mxu0 0.0
      %803 = vmatprep.subr.mxu0 0.0
      %804 = vmatpush1.msra.mxu0 0.0
      %805 = vmatprep.subr.mxu0 0.0
      %806 = vmatpush1.msra.mxu0 0.0
      %807 = vmatprep.subr.mxu0 0.0
      %808 = vmatpush1.msra.mxu0 0.0
      %809 = vmatprep.subr.mxu0 0.0
      %810 = vmatpush1.msra.mxu0 0.0
      %811 = vmatprep.subr.mxu0 0.0
      %812 = vmatpush1.msra.mxu0 0.0
      %813 = vmatprep.subr.mxu0 0.0
      %814 = vmatpush1.msra.mxu0 0.0
      %815 = vmatprep.subr.mxu0 0.0
      %816 = vmatpush1.msra.mxu0 0.0
      %817 = vmatprep.subr.mxu0 0.0
      %818 = vmatpush1.msra.mxu0 0.0
      %819 = vmatprep.subr.mxu0 0.0
      %820 = vmatpush1.msra.mxu0 0.0
      %821 = vmatprep.subr.mxu0 0.0
      %822 = vmatpush1.msra.mxu0 0.0
      %823 = vmatprep.subr.mxu0 0.0
      %824 = vmatpush1.msra.mxu0 0.0
      %825 = vmatprep.subr.mxu0 0.0
      %826 = vmatpush1.msra.mxu0 0.0
      %827 = vmatprep.subr.mxu0 0.0
      %828 = vmatpush1.msra.mxu0 0.0
      %829 = vmatprep.subr.mxu0 0.0
      %830 = vmatpush1.msra.mxu0 0.0
      %831 = vmatprep.mubr.f32.mxu0 0.0
      %832 = vmatmul.mubr.f32.gmra.mrb[0].mxu0 %v672
      %v833 = vpop.f32.mrb[0].mxu0
      %v834 = vadd.f32 %v513, %v833
      %v835 = vpop.f32.mrb[0].mxu0
      %836 = vmatprep.mubr.f32.mxu0 0.0
      %837 = vmatmul.mubr.f32.gmra.mrb[0].mxu0 %v675
      %v838 = vpop.f32.mrb[0].mxu0
      %v839 = vadd.f32 %v518, %v838
      %v840 = vpop.f32.mrb[0].mxu0
      %841 = vmatprep.mubr.f32.mxu0 0.0
      %842 = vmatmul.mubr.f32.gmra.mrb[0].mxu0 %v678
      %v843 = vpop.f32.mrb[0].mxu0
      %v844 = vadd.f32 %v523, %v843
      %v845 = vpop.f32.mrb[0].mxu0
      %846 = vmatprep.mubr.f32.mxu0 0.0
      %847 = vmatmul.mubr.f32.gmra.mrb[0].mxu0 %v681
      %v848 = vpop.f32.mrb[0].mxu0
      %v849 = vadd.f32 %v528, %v848
      %v850 = vpop.f32.mrb[0].mxu0
      %851 = vmatprep.mubr.f32.mxu0 0.0
      %852 = vmatmul.mubr.f32.gmra.mrb[0].mxu0 %v684
      %v853 = vpop.f32.mrb[0].mxu0
      %v854 = vadd.f32 %v533, %v853
      %v855 = vpop.f32.mrb[0].mxu0
      %856 = vmatprep.mubr.f32.mxu0 0.0
      %857 = vmatmul.mubr.f32.gmra.mrb[0].mxu0 %v687
      %v858 = vpop.f32.mrb[0].mxu0
      %v859 = vadd.f32 %v538, %v858
      %v860 = vpop.f32.mrb[0].mxu0
      %861 = vmatprep.mubr.f32.mxu0 0.0
      %862 = vmatmul.mubr.f32.gmra.mrb[0].mxu0 %v690
      %v863 = vpop.f32.mrb[0].mxu0
      %v864 = vadd.f32 %v543, %v863
      %v865 = vpop.f32.mrb[0].mxu0
      %866 = vmatprep.mubr.f32.mxu0 0.0
      %867 = vmatmul.mubr.f32.gmra.mrb[0].mxu0 %v693
      %v868 = vpop.f32.mrb[0].mxu0
      %v869 = vadd.f32 %v548, %v868
      %v870 = vpop.f32.mrb[0].mxu0
      %871 = vmatprep.mubr.f32.mxu0 0.0
      %872 = vmatmul.mubr.f32.gmra.mrb[0].mxu0 %v696
      %v873 = vpop.f32.mrb[0].mxu0
      %v874 = vadd.f32 %v553, %v873
      %v875 = vpop.f32.mrb[0].mxu0
      %876 = vmatprep.mubr.f32.mxu0 0.0
      %877 = vmatmul.mubr.f32.gmra.mrb[0].mxu0 %v699
      %v878 = vpop.f32.mrb[0].mxu0
      %v879 = vadd.f32 %v558, %v878
      %v880 = vpop.f32.mrb[0].mxu0
      %881 = vmatprep.mubr.f32.mxu0 0.0
      %882 = vmatmul.mubr.f32.gmra.mrb[0].mxu0 %v702
      %v883 = vpop.f32.mrb[0].mxu0
      %v884 = vadd.f32 %v563, %v883
      %v885 = vpop.f32.mrb[0].mxu0
      %886 = vmatprep.mubr.f32.mxu0 0.0
      %887 = vmatmul.mubr.f32.gmra.mrb[0].mxu0 %v705
      %v888 = vpop.f32.mrb[0].mxu0
      %v889 = vadd.f32 %v568, %v888
      %v890 = vpop.f32.mrb[0].mxu0
      %891 = vmatprep.mubr.f32.mxu0 0.0
      %892 = vmatmul.mubr.f32.gmra.mrb[0].mxu0 %v708
      %v893 = vpop.f32.mrb[0].mxu0
      %v894 = vadd.f32 %v573, %v893
      %v895 = vpop.f32.mrb[0].mxu0
      %896 = vmatprep.mubr.f32.mxu0 0.0
      %897 = vmatmul.mubr.f32.gmra.mrb[0].mxu0 %v711
      %v898 = vpop.f32.mrb[0].mxu0
      %v899 = vadd.f32 %v578, %v898
      %v900 = vpop.f32.mrb[0].mxu0
      %901 = vmatprep.mubr.f32.mxu0 0.0
      %902 = vmatmul.mubr.f32.gmra.mrb[0].mxu0 %v714
      %v903 = vpop.f32.mrb[0].mxu0
      %v904 = vadd.f32 %v583, %v903
      %v905 = vpop.f32.mrb[0].mxu0
      %906 = vmatprep.mubr.f32.mxu0 0.0
      %907 = vmatmul.mubr.f32.gmra.mrb[0].mxu0 %v717
      %v908 = vpop.f32.mrb[0].mxu0
      %v909 = vadd.f32 %v588, %v908
      %v910 = vpop.f32.mrb[0].mxu0
      %911 = vmatprep.mubr.f32.mxu0 0.0
      %912 = vmatmul.mubr.f32.gmra.mrb[0].mxu0 %v720
      %v913 = vpop.f32.mrb[0].mxu0
      %v914 = vadd.f32 %v593, %v913
      %v915 = vpop.f32.mrb[0].mxu0
      %916 = vmatprep.mubr.f32.mxu0 0.0
      %917 = vmatmul.mubr.f32.gmra.mrb[0].mxu0 %v723
      %v918 = vpop.f32.mrb[0].mxu0
      %v919 = vadd.f32 %v598, %v918
      %v920 = vpop.f32.mrb[0].mxu0
      %921 = vmatprep.mubr.f32.mxu0 0.0
      %922 = vmatmul.mubr.f32.gmra.mrb[0].mxu0 %v726
      %v923 = vpop.f32.mrb[0].mxu0
      %v924 = vadd.f32 %v603, %v923
      %v925 = vpop.f32.mrb[0].mxu0
      %926 = vmatprep.mubr.f32.mxu0 0.0
      %927 = vmatmul.mubr.f32.gmra.mrb[0].mxu0 %v729
      %v928 = vpop.f32.mrb[0].mxu0
      %v929 = vadd.f32 %v608, %v928
      %v930 = vpop.f32.mrb[0].mxu0
      %931 = vmatprep.mubr.f32.mxu0 0.0
      %932 = vmatmul.mubr.f32.gmra.mrb[0].mxu0 %v732
      %v933 = vpop.f32.mrb[0].mxu0
      %v934 = vadd.f32 %v613, %v933
      %v935 = vpop.f32.mrb[0].mxu0
      %936 = vmatprep.mubr.f32.mxu0 0.0
      %937 = vmatmul.mubr.f32.gmra.mrb[0].mxu0 %v735
      %v938 = vpop.f32.mrb[0].mxu0
      %v939 = vadd.f32 %v618, %v938
      %v940 = vpop.f32.mrb[0].mxu0
      %941 = vmatprep.mubr.f32.mxu0 0.0
      %942 = vmatmul.mubr.f32.gmra.mrb[0].mxu0 %v738
      %v943 = vpop.f32.mrb[0].mxu0
      %v944 = vadd.f32 %v623, %v943
      %v945 = vpop.f32.mrb[0].mxu0
      %946 = vmatprep.mubr.f32.mxu0 0.0
      %947 = vmatmul.mubr.f32.gmra.mrb[0].mxu0 %v741
      %v948 = vpop.f32.mrb[0].mxu0
      %v949 = vadd.f32 %v628, %v948
      %v950 = vpop.f32.mrb[0].mxu0
      %951 = vmatprep.mubr.f32.mxu0 0.0
      %952 = vmatmul.mubr.f32.gmra.mrb[0].mxu0 %v744
      %v953 = vpop.f32.mrb[0].mxu0
      %v954 = vadd.f32 %v633, %v953
      %v955 = vpop.f32.mrb[0].mxu0
      %956 = vmatprep.mubr.f32.mxu0 0.0
      %957 = vmatmul.mubr.f32.gmra.mrb[0].mxu0 %v747
      %v958 = vpop.f32.mrb[0].mxu0
      %v959 = vadd.f32 %v638, %v958
      %v960 = vpop.f32.mrb[0].mxu0
      %961 = vmatprep.mubr.f32.mxu0 0.0
      %962 = vmatmul.mubr.f32.gmra.mrb[0].mxu0 %v750
      %v963 = vpop.f32.mrb[0].mxu0
      %v964 = vadd.f32 %v643, %v963
      %v965 = vpop.f32.mrb[0].mxu0
      %966 = vmatprep.mubr.f32.mxu0 0.0
      %967 = vmatmul.mubr.f32.gmra.mrb[0].mxu0 %v753
      %v968 = vpop.f32.mrb[0].mxu0
      %v969 = vadd.f32 %v648, %v968
      %v970 = vpop.f32.mrb[0].mxu0
      %971 = vmatprep.mubr.f32.mxu0 0.0
      %972 = vmatmul.mubr.f32.gmra.mrb[0].mxu0 %v756
      %v973 = vpop.f32.mrb[0].mxu0
      %v974 = vadd.f32 %v653, %v973
      %v975 = vpop.f32.mrb[0].mxu0
      %976 = vmatprep.mubr.f32.mxu0 0.0
      %977 = vmatmul.mubr.f32.gmra.mrb[0].mxu0 %v759
      %v978 = vpop.f32.mrb[0].mxu0
      %v979 = vadd.f32 %v658, %v978
      %v980 = vpop.f32.mrb[0].mxu0
      %981 = vmatprep.mubr.f32.mxu0 0.0
      %982 = vmatmul.mubr.f32.gmra.mrb[0].mxu0 %v762
      %v983 = vpop.f32.mrb[0].mxu0
      %v984 = vadd.f32 %v663, %v983
      %v985 = vpop.f32.mrb[0].mxu0
      %986 = vmatprep.mubr.f32.mxu0 0.0
      %987 = vmatmul.mubr.f32.gmra.mrb[0].mxu0 %v765
      %v988 = vpop.f32.mrb[0].mxu0
      %v989 = vadd.f32 %v668, %v988
      %v990 = vpop.f32.mrb[0].mxu0
      %991 = vdwg.mxu0
      %v992 = vld [vmem:[%s273 + $0x2] sm:$0xff]
      %v993 = vld [vmem:[%s273 + $0xa] sm:$0xff]
      %v994 = vld [vmem:[%s273 + $0x1a] sm:$0xff]
      %v995 = vld [vmem:[%s273 + $0x22] sm:$0xff]
      %v996 = vld [vmem:[%s273 + $0x32] sm:$0xff]
      %v997 = vld [vmem:[%s273 + $0x3a] sm:$0xff]
      %v998 = vld [vmem:[%s273 + $0x4a] sm:$0xff]
      %v999 = vld [vmem:[%s273 + $0x52] sm:$0xff]
      %v1000 = vld [vmem:[%s273 + $0x62] sm:$0xff]
      %v1001 = vld [vmem:[%s273 + $0x6a] sm:$0xff]
      %v1002 = vld [vmem:[%s273 + $0x7a] sm:$0xff]
      %v1003 = vld [vmem:[%s273 + $0x82] sm:$0xff]
      %v1004 = vld [vmem:[%s273 + $0x92] sm:$0xff]
      %v1005 = vld [vmem:[%s273 + $0x9a] sm:$0xff]
      %v1006 = vld [vmem:[%s273 + $0xaa] sm:$0xff]
      %v1007 = vld [vmem:[%s273 + $0xb2] sm:$0xff]
      %v1008 = vld [vmem:[%s273 + $0xc2] sm:$0xff]
      %v1009 = vld [vmem:[%s273 + $0xca] sm:$0xff]
      %v1010 = vld [vmem:[%s273 + $0xda] sm:$0xff]
      %v1011 = vld [vmem:[%s273 + $0xe2] sm:$0xff]
      %v1012 = vld [vmem:[%s273 + $0xf2] sm:$0xff]
      %v1013 = vld [vmem:[%s273 + $0xfa] sm:$0xff]
      %v1014 = vld [vmem:[%s273 + $0x10a] sm:$0xff]
      %v1015 = vld [vmem:[%s273 + $0x112] sm:$0xff]
      %v1016 = vld [vmem:[%s273 + $0x122] sm:$0xff]
      %v1017 = vld [vmem:[%s273 + $0x12a] sm:$0xff]
      %v1018 = vld [vmem:[%s273 + $0x13a] sm:$0xff]
      %v1019 = vld [vmem:[%s273 + $0x142] sm:$0xff]
      %v1020 = vld [vmem:[%s273 + $0x152] sm:$0xff]
      %v1021 = vld [vmem:[%s273 + $0x15a] sm:$0xff]
      %v1022 = vld [vmem:[%s273 + $0x16a] sm:$0xff]
      %v1023 = vld [vmem:[%s273 + $0x172] sm:$0xff]
      %v1024 = vld [vmem:[%s1 + $0x10] sm:$0xff]
      %v1026 = vsel %vm349, %v992, 0
      %v1029 = vsel %vm349, %v993, 0
      %v1032 = vsel %vm349, %v994, 0
      %v1035 = vsel %vm349, %v995, 0
      %v1038 = vsel %vm349, %v996, 0
      %v1041 = vsel %vm349, %v997, 0
      %v1044 = vsel %vm349, %v998, 0
      %v1047 = vsel %vm349, %v999, 0
      %v1050 = vsel %vm349, %v1000, 0
      %v1053 = vsel %vm349, %v1001, 0
      %v1056 = vsel %vm349, %v1002, 0
      %v1059 = vsel %vm349, %v1003, 0
      %v1062 = vsel %vm349, %v1004, 0
      %v1065 = vsel %vm349, %v1005, 0
      %v1068 = vsel %vm349, %v1006, 0
      %v1071 = vsel %vm349, %v1007, 0
      %v1074 = vsel %vm349, %v1008, 0
      %v1077 = vsel %vm349, %v1009, 0
      %v1080 = vsel %vm349, %v1010, 0
      %v1083 = vsel %vm349, %v1011, 0
      %v1086 = vsel %vm349, %v1012, 0
      %v1089 = vsel %vm349, %v1013, 0
      %v1092 = vsel %vm349, %v1014, 0
      %v1095 = vsel %vm349, %v1015, 0
      %v1098 = vsel %vm349, %v1016, 0
      %v1101 = vsel %vm349, %v1017, 0
      %v1104 = vsel %vm349, %v1018, 0
      %v1107 = vsel %vm349, %v1019, 0
      %v1110 = vsel %vm349, %v1020, 0
      %v1113 = vsel %vm349, %v1021, 0
      %v1116 = vsel %vm349, %v1022, 0
      %v1119 = vsel %vm349, %v1023, 0
      %1121 = vmatprep.subr.mxu0 0.0
      %1122 = vmatpush1.msra.mxu0 %v1024
      %1123 = vmatprep.subr.mxu0 0.0
      %1124 = vmatpush1.msra.mxu0 0.0
      %1125 = vmatprep.subr.mxu0 0.0
      %1126 = vmatpush1.msra.mxu0 0.0
      %1127 = vmatprep.subr.mxu0 0.0
      %1128 = vmatpush1.msra.mxu0 0.0
      %1129 = vmatprep.subr.mxu0 0.0
      %1130 = vmatpush1.msra.mxu0 0.0
      %1131 = vmatprep.subr.mxu0 0.0
      %1132 = vmatpush1.msra.mxu0 0.0
      %1133 = vmatprep.subr.mxu0 0.0
      %1134 = vmatpush1.msra.mxu0 0.0
      %1135 = vmatprep.subr.mxu0 0.0
      %1136 = vmatpush1.msra.mxu0 0.0
      %1137 = vmatprep.subr.mxu0 0.0
      %1138 = vmatpush1.msra.mxu0 0.0
      %1139 = vmatprep.subr.mxu0 0.0
      %1140 = vmatpush1.msra.mxu0 0.0
      %1141 = vmatprep.subr.mxu0 0.0
      %1142 = vmatpush1.msra.mxu0 0.0
      %1143 = vmatprep.subr.mxu0 0.0
      %1144 = vmatpush1.msra.mxu0 0.0
      %1145 = vmatprep.subr.mxu0 0.0
      %1146 = vmatpush1.msra.mxu0 0.0
      %1147 = vmatprep.subr.mxu0 0.0
      %1148 = vmatpush1.msra.mxu0 0.0
      %1149 = vmatprep.subr.mxu0 0.0
      %1150 = vmatpush1.msra.mxu0 0.0
      %1151 = vmatprep.subr.mxu0 0.0
      %1152 = vmatpush1.msra.mxu0 0.0
      %1153 = vmatprep.subr.mxu0 0.0
      %1154 = vmatpush1.msra.mxu0 0.0
      %1155 = vmatprep.subr.mxu0 0.0
      %1156 = vmatpush1.msra.mxu0 0.0
      %1157 = vmatprep.subr.mxu0 0.0
      %1158 = vmatpush1.msra.mxu0 0.0
      %1159 = vmatprep.subr.mxu0 0.0
      %1160 = vmatpush1.msra.mxu0 0.0
      %1161 = vmatprep.subr.mxu0 0.0
      %1162 = vmatpush1.msra.mxu0 0.0
      %1163 = vmatprep.subr.mxu0 0.0
      %1164 = vmatpush1.msra.mxu0 0.0
      %1165 = vmatprep.subr.mxu0 0.0
      %1166 = vmatpush1.msra.mxu0 0.0
      %1167 = vmatprep.subr.mxu0 0.0
      %1168 = vmatpush1.msra.mxu0 0.0
      %1169 = vmatprep.subr.mxu0 0.0
      %1170 = vmatpush1.msra.mxu0 0.0
      %1171 = vmatprep.subr.mxu0 0.0
      %1172 = vmatpush1.msra.mxu0 0.0
      %1173 = vmatprep.subr.mxu0 0.0
      %1174 = vmatpush1.msra.mxu0 0.0
      %1175 = vmatprep.subr.mxu0 0.0
      %1176 = vmatpush1.msra.mxu0 0.0
      %1177 = vmatprep.subr.mxu0 0.0
      %1178 = vmatpush1.msra.mxu0 0.0
      %1179 = vmatprep.subr.mxu0 0.0
      %1180 = vmatpush1.msra.mxu0 0.0
      %1181 = vmatprep.subr.mxu0 0.0
      %1182 = vmatpush1.msra.mxu0 0.0
      %1183 = vmatprep.subr.mxu0 0.0
      %1184 = vmatpush1.msra.mxu0 0.0
      %1185 = vmatprep.mubr.f32.mxu0 0.0
      %1186 = vmatmul.mubr.f32.gmra.mrb[0].mxu0 %v1026
      %v1187 = vpop.f32.mrb[0].mxu0
      %v1188 = vadd.f32 0.0, %v1187
      %v1189 = vpop.f32.mrb[0].mxu0
      %1190 = vmatprep.mubr.f32.mxu0 0.0
      %1191 = vmatmul.mubr.f32.gmra.mrb[0].mxu0 %v1029
      %v1192 = vpop.f32.mrb[0].mxu0
      %v1193 = vadd.f32 0.0, %v1192
      %v1194 = vpop.f32.mrb[0].mxu0
      %1195 = vmatprep.mubr.f32.mxu0 0.0
      %1196 = vmatmul.mubr.f32.gmra.mrb[0].mxu0 %v1032
      %v1197 = vpop.f32.mrb[0].mxu0
      %v1198 = vadd.f32 0.0, %v1197
      %v1199 = vpop.f32.mrb[0].mxu0
      %1200 = vmatprep.mubr.f32.mxu0 0.0
      %1201 = vmatmul.mubr.f32.gmra.mrb[0].mxu0 %v1035
      %v1202 = vpop.f32.mrb[0].mxu0
      %v1203 = vadd.f32 0.0, %v1202
      %v1204 = vpop.f32.mrb[0].mxu0
      %1205 = vmatprep.mubr.f32.mxu0 0.0
      %1206 = vmatmul.mubr.f32.gmra.mrb[0].mxu0 %v1038
      %v1207 = vpop.f32.mrb[0].mxu0
      %v1208 = vadd.f32 0.0, %v1207
      %v1209 = vpop.f32.mrb[0].mxu0
      %1210 = vmatprep.mubr.f32.mxu0 0.0
      %1211 = vmatmul.mubr.f32.gmra.mrb[0].mxu0 %v1041
      %v1212 = vpop.f32.mrb[0].mxu0
      %v1213 = vadd.f32 0.0, %v1212
      %v1214 = vpop.f32.mrb[0].mxu0
      %1215 = vmatprep.mubr.f32.mxu0 0.0
      %1216 = vmatmul.mubr.f32.gmra.mrb[0].mxu0 %v1044
      %v1217 = vpop.f32.mrb[0].mxu0
      %v1218 = vadd.f32 0.0, %v1217
      %v1219 = vpop.f32.mrb[0].mxu0
      %1220 = vmatprep.mubr.f32.mxu0 0.0
      %1221 = vmatmul.mubr.f32.gmra.mrb[0].mxu0 %v1047
      %v1222 = vpop.f32.mrb[0].mxu0
      %v1223 = vadd.f32 0.0, %v1222
      %v1224 = vpop.f32.mrb[0].mxu0
      %1225 = vmatprep.mubr.f32.mxu0 0.0
      %1226 = vmatmul.mubr.f32.gmra.mrb[0].mxu0 %v1050
      %v1227 = vpop.f32.mrb[0].mxu0
      %v1228 = vadd.f32 0.0, %v1227
      %v1229 = vpop.f32.mrb[0].mxu0
      %1230 = vmatprep.mubr.f32.mxu0 0.0
      %1231 = vmatmul.mubr.f32.gmra.mrb[0].mxu0 %v1053
      %v1232 = vpop.f32.mrb[0].mxu0
      %v1233 = vadd.f32 0.0, %v1232
      %v1234 = vpop.f32.mrb[0].mxu0
      %1235 = vmatprep.mubr.f32.mxu0 0.0
      %1236 = vmatmul.mubr.f32.gmra.mrb[0].mxu0 %v1056
      %v1237 = vpop.f32.mrb[0].mxu0
      %v1238 = vadd.f32 0.0, %v1237
      %v1239 = vpop.f32.mrb[0].mxu0
      %1240 = vmatprep.mubr.f32.mxu0 0.0
      %1241 = vmatmul.mubr.f32.gmra.mrb[0].mxu0 %v1059
      %v1242 = vpop.f32.mrb[0].mxu0
      %v1243 = vadd.f32 0.0, %v1242
      %v1244 = vpop.f32.mrb[0].mxu0
      %1245 = vmatprep.mubr.f32.mxu0 0.0
      %1246 = vmatmul.mubr.f32.gmra.mrb[0].mxu0 %v1062
      %v1247 = vpop.f32.mrb[0].mxu0
      %v1248 = vadd.f32 0.0, %v1247
      %v1249 = vpop.f32.mrb[0].mxu0
      %1250 = vmatprep.mubr.f32.mxu0 0.0
      %1251 = vmatmul.mubr.f32.gmra.mrb[0].mxu0 %v1065
      %v1252 = vpop.f32.mrb[0].mxu0
      %v1253 = vadd.f32 0.0, %v1252
      %v1254 = vpop.f32.mrb[0].mxu0
      %1255 = vmatprep.mubr.f32.mxu0 0.0
      %1256 = vmatmul.mubr.f32.gmra.mrb[0].mxu0 %v1068
      %v1257 = vpop.f32.mrb[0].mxu0
      %v1258 = vadd.f32 0.0, %v1257
      %v1259 = vpop.f32.mrb[0].mxu0
      %1260 = vmatprep.mubr.f32.mxu0 0.0
      %1261 = vmatmul.mubr.f32.gmra.mrb[0].mxu0 %v1071
      %v1262 = vpop.f32.mrb[0].mxu0
      %v1263 = vadd.f32 0.0, %v1262
      %v1264 = vpop.f32.mrb[0].mxu0
      %1265 = vmatprep.mubr.f32.mxu0 0.0
      %1266 = vmatmul.mubr.f32.gmra.mrb[0].mxu0 %v1074
      %v1267 = vpop.f32.mrb[0].mxu0
      %v1268 = vadd.f32 0.0, %v1267
      %v1269 = vpop.f32.mrb[0].mxu0
      %1270 = vmatprep.mubr.f32.mxu0 0.0
      %1271 = vmatmul.mubr.f32.gmra.mrb[0].mxu0 %v1077
      %v1272 = vpop.f32.mrb[0].mxu0
      %v1273 = vadd.f32 0.0, %v1272
      %v1274 = vpop.f32.mrb[0].mxu0
      %1275 = vmatprep.mubr.f32.mxu0 0.0
      %1276 = vmatmul.mubr.f32.gmra.mrb[0].mxu0 %v1080
      %v1277 = vpop.f32.mrb[0].mxu0
      %v1278 = vadd.f32 0.0, %v1277
      %v1279 = vpop.f32.mrb[0].mxu0
      %1280 = vmatprep.mubr.f32.mxu0 0.0
      %1281 = vmatmul.mubr.f32.gmra.mrb[0].mxu0 %v1083
      %v1282 = vpop.f32.mrb[0].mxu0
      %v1283 = vadd.f32 0.0, %v1282
      %v1284 = vpop.f32.mrb[0].mxu0
      %1285 = vmatprep.mubr.f32.mxu0 0.0
      %1286 = vmatmul.mubr.f32.gmra.mrb[0].mxu0 %v1086
      %v1287 = vpop.f32.mrb[0].mxu0
      %v1288 = vadd.f32 0.0, %v1287
      %v1289 = vpop.f32.mrb[0].mxu0
      %1290 = vmatprep.mubr.f32.mxu0 0.0
      %1291 = vmatmul.mubr.f32.gmra.mrb[0].mxu0 %v1089
      %v1292 = vpop.f32.mrb[0].mxu0
      %v1293 = vadd.f32 0.0, %v1292
      %v1294 = vpop.f32.mrb[0].mxu0
      %1295 = vmatprep.mubr.f32.mxu0 0.0
      %1296 = vmatmul.mubr.f32.gmra.mrb[0].mxu0 %v1092
      %v1297 = vpop.f32.mrb[0].mxu0
      %v1298 = vadd.f32 0.0, %v1297
      %v1299 = vpop.f32.mrb[0].mxu0
      %1300 = vmatprep.mubr.f32.mxu0 0.0
      %1301 = vmatmul.mubr.f32.gmra.mrb[0].mxu0 %v1095
      %v1302 = vpop.f32.mrb[0].mxu0
      %v1303 = vadd.f32 0.0, %v1302
      %v1304 = vpop.f32.mrb[0].mxu0
      %1305 = vmatprep.mubr.f32.mxu0 0.0
      %1306 = vmatmul.mubr.f32.gmra.mrb[0].mxu0 %v1098
      %v1307 = vpop.f32.mrb[0].mxu0
      %v1308 = vadd.f32 0.0, %v1307
      %v1309 = vpop.f32.mrb[0].mxu0
      %1310 = vmatprep.mubr.f32.mxu0 0.0
      %1311 = vmatmul.mubr.f32.gmra.mrb[0].mxu0 %v1101
      %v1312 = vpop.f32.mrb[0].mxu0
      %v1313 = vadd.f32 0.0, %v1312
      %v1314 = vpop.f32.mrb[0].mxu0
      %1315 = vmatprep.mubr.f32.mxu0 0.0
      %1316 = vmatmul.mubr.f32.gmra.mrb[0].mxu0 %v1104
      %v1317 = vpop.f32.mrb[0].mxu0
      %v1318 = vadd.f32 0.0, %v1317
      %v1319 = vpop.f32.mrb[0].mxu0
      %1320 = vmatprep.mubr.f32.mxu0 0.0
      %1321 = vmatmul.mubr.f32.gmra.mrb[0].mxu0 %v1107
      %v1322 = vpop.f32.mrb[0].mxu0
      %v1323 = vadd.f32 0.0, %v1322
      %v1324 = vpop.f32.mrb[0].mxu0
      %1325 = vmatprep.mubr.f32.mxu0 0.0
      %1326 = vmatmul.mubr.f32.gmra.mrb[0].mxu0 %v1110
      %v1327 = vpop.f32.mrb[0].mxu0
      %v1328 = vadd.f32 0.0, %v1327
      %v1329 = vpop.f32.mrb[0].mxu0
      %1330 = vmatprep.mubr.f32.mxu0 0.0
      %1331 = vmatmul.mubr.f32.gmra.mrb[0].mxu0 %v1113
      %v1332 = vpop.f32.mrb[0].mxu0
      %v1333 = vadd.f32 0.0, %v1332
      %v1334 = vpop.f32.mrb[0].mxu0
      %1335 = vmatprep.mubr.f32.mxu0 0.0
      %1336 = vmatmul.mubr.f32.gmra.mrb[0].mxu0 %v1116
      %v1337 = vpop.f32.mrb[0].mxu0
      %v1338 = vadd.f32 0.0, %v1337
      %v1339 = vpop.f32.mrb[0].mxu0
      %1340 = vmatprep.mubr.f32.mxu0 0.0
      %1341 = vmatmul.mubr.f32.gmra.mrb[0].mxu0 %v1119
      %v1342 = vpop.f32.mrb[0].mxu0
      %v1343 = vadd.f32 0.0, %v1342
      %v1344 = vpop.f32.mrb[0].mxu0
      %1345 = vdwg.mxu0
      %v1346 = vadd.f32 %v834, %v1188
      %v1347 = vadd.f32 %v839, %v1193
      %v1348 = vadd.f32 %v844, %v1198
      %v1349 = vadd.f32 %v849, %v1203
      %v1350 = vadd.f32 %v854, %v1208
      %v1351 = vadd.f32 %v859, %v1213
      %v1352 = vadd.f32 %v864, %v1218
      %v1353 = vadd.f32 %v869, %v1223
      %v1354 = vadd.f32 %v874, %v1228
      %v1355 = vadd.f32 %v879, %v1233
      %v1356 = vadd.f32 %v884, %v1238
      %v1357 = vadd.f32 %v889, %v1243
      %v1358 = vadd.f32 %v894, %v1248
      %v1359 = vadd.f32 %v899, %v1253
      %v1360 = vadd.f32 %v904, %v1258
      %v1361 = vadd.f32 %v909, %v1263
      %v1362 = vadd.f32 %v914, %v1268
      %v1363 = vadd.f32 %v919, %v1273
      %v1364 = vadd.f32 %v924, %v1278
      %v1365 = vadd.f32 %v929, %v1283
      %v1366 = vadd.f32 %v934, %v1288
      %v1367 = vadd.f32 %v939, %v1293
      %v1368 = vadd.f32 %v944, %v1298
      %v1369 = vadd.f32 %v949, %v1303
      %v1370 = vadd.f32 %v954, %v1308
      %v1371 = vadd.f32 %v959, %v1313
      %v1372 = vadd.f32 %v964, %v1318
      %v1373 = vadd.f32 %v969, %v1323
      %v1374 = vadd.f32 %v974, %v1328
      %v1375 = vadd.f32 %v979, %v1333
      %v1376 = vadd.f32 %v984, %v1338
      %v1377 = vadd.f32 %v989, %v1343
      %s1378 = scalar_lea.vmem %s273, 24
      %v1379 = vld [vmem:[%s1378] sm:$0xff]
      %v1380 = vld [vmem:[%s1378 + $0x8] sm:$0xff]
      %v1381 = vld [vmem:[%s1378 + $0x18] sm:$0xff]
      %v1382 = vld [vmem:[%s1378 + $0x20] sm:$0xff]
      %v1383 = vld [vmem:[%s1378 + $0x30] sm:$0xff]
      %v1384 = vld [vmem:[%s1378 + $0x38] sm:$0xff]
      %v1385 = vld [vmem:[%s1378 + $0x48] sm:$0xff]
      %v1386 = vld [vmem:[%s1378 + $0x50] sm:$0xff]
      %v1387 = vld [vmem:[%s1378 + $0x60] sm:$0xff]
      %v1388 = vld [vmem:[%s1378 + $0x68] sm:$0xff]
      %v1389 = vld [vmem:[%s1378 + $0x78] sm:$0xff]
      %v1390 = vld [vmem:[%s1378 + $0x80] sm:$0xff]
      %v1391 = vld [vmem:[%s1378 + $0x90] sm:$0xff]
      %v1392 = vld [vmem:[%s1378 + $0x98] sm:$0xff]
      %v1393 = vld [vmem:[%s1378 + $0xa8] sm:$0xff]
      %v1394 = vld [vmem:[%s1378 + $0xb0] sm:$0xff]
      %v1395 = vld [vmem:[%s1378 + $0xc0] sm:$0xff]
      %v1396 = vld [vmem:[%s1378 + $0xc8] sm:$0xff]
      %v1397 = vld [vmem:[%s1378 + $0xd8] sm:$0xff]
      %v1398 = vld [vmem:[%s1378 + $0xe0] sm:$0xff]
      %v1399 = vld [vmem:[%s1378 + $0xf0] sm:$0xff]
      %v1400 = vld [vmem:[%s1378 + $0xf8] sm:$0xff]
      %v1401 = vld [vmem:[%s1378 + $0x108] sm:$0xff]
      %v1402 = vld [vmem:[%s1378 + $0x110] sm:$0xff]
      %v1403 = vld [vmem:[%s1378 + $0x120] sm:$0xff]
      %v1404 = vld [vmem:[%s1378 + $0x128] sm:$0xff]
      %v1405 = vld [vmem:[%s1378 + $0x138] sm:$0xff]
      %v1406 = vld [vmem:[%s1378 + $0x140] sm:$0xff]
      %v1407 = vld [vmem:[%s1378 + $0x150] sm:$0xff]
      %v1408 = vld [vmem:[%s1378 + $0x158] sm:$0xff]
      %v1409 = vld [vmem:[%s1378 + $0x168] sm:$0xff]
      %v1410 = vld [vmem:[%s1378 + $0x170] sm:$0xff]
      %v1411 = vld [vmem:[%s1 + $0x18] sm:$0xff]
      %v1413 = vsel %vm349, %v1379, 0
      %v1416 = vsel %vm349, %v1380, 0
      %v1419 = vsel %vm349, %v1381, 0
      %v1422 = vsel %vm349, %v1382, 0
      %v1425 = vsel %vm349, %v1383, 0
      %v1428 = vsel %vm349, %v1384, 0
      %v1431 = vsel %vm349, %v1385, 0
      %v1434 = vsel %vm349, %v1386, 0
      %v1437 = vsel %vm349, %v1387, 0
      %v1440 = vsel %vm349, %v1388, 0
      %v1443 = vsel %vm349, %v1389, 0
      %v1446 = vsel %vm349, %v1390, 0
      %v1449 = vsel %vm349, %v1391, 0
      %v1452 = vsel %vm349, %v1392, 0
      %v1455 = vsel %vm349, %v1393, 0
      %v1458 = vsel %vm349, %v1394, 0
      %v1461 = vsel %vm349, %v1395, 0
      %v1464 = vsel %vm349, %v1396, 0
      %v1467 = vsel %vm349, %v1397, 0
      %v1470 = vsel %vm349, %v1398, 0
      %v1473 = vsel %vm349, %v1399, 0
      %v1476 = vsel %vm349, %v1400, 0
      %v1479 = vsel %vm349, %v1401, 0
      %v1482 = vsel %vm349, %v1402, 0
      %v1485 = vsel %vm349, %v1403, 0
      %v1488 = vsel %vm349, %v1404, 0
      %v1491 = vsel %vm349, %v1405, 0
      %v1494 = vsel %vm349, %v1406, 0
      %v1497 = vsel %vm349, %v1407, 0
      %v1500 = vsel %vm349, %v1408, 0
      %v1503 = vsel %vm349, %v1409, 0
      %v1506 = vsel %vm349, %v1410, 0
      %1508 = vmatprep.subr.mxu0 0.0
      %1509 = vmatpush1.msra.mxu0 %v1411
      %1510 = vmatprep.subr.mxu0 0.0
      %1511 = vmatpush1.msra.mxu0 0.0
      %1512 = vmatprep.subr.mxu0 0.0
      %1513 = vmatpush1.msra.mxu0 0.0
      %1514 = vmatprep.subr.mxu0 0.0
      %1515 = vmatpush1.msra.mxu0 0.0
      %1516 = vmatprep.subr.mxu0 0.0
      %1517 = vmatpush1.msra.mxu0 0.0
      %1518 = vmatprep.subr.mxu0 0.0
      %1519 = vmatpush1.msra.mxu0 0.0
      %1520 = vmatprep.subr.mxu0 0.0
      %1521 = vmatpush1.msra.mxu0 0.0
      %1522 = vmatprep.subr.mxu0 0.0
      %1523 = vmatpush1.msra.mxu0 0.0
      %1524 = vmatprep.subr.mxu0 0.0
      %1525 = vmatpush1.msra.mxu0 0.0
      %1526 = vmatprep.subr.mxu0 0.0
      %1527 = vmatpush1.msra.mxu0 0.0
      %1528 = vmatprep.subr.mxu0 0.0
      %1529 = vmatpush1.msra.mxu0 0.0
      %1530 = vmatprep.subr.mxu0 0.0
      %1531 = vmatpush1.msra.mxu0 0.0
      %1532 = vmatprep.subr.mxu0 0.0
      %1533 = vmatpush1.msra.mxu0 0.0
      %1534 = vmatprep.subr.mxu0 0.0
      %1535 = vmatpush1.msra.mxu0 0.0
      %1536 = vmatprep.subr.mxu0 0.0
      %1537 = vmatpush1.msra.mxu0 0.0
      %1538 = vmatprep.subr.mxu0 0.0
      %1539 = vmatpush1.msra.mxu0 0.0
      %1540 = vmatprep.subr.mxu0 0.0
      %1541 = vmatpush1.msra.mxu0 0.0
      %1542 = vmatprep.subr.mxu0 0.0
      %1543 = vmatpush1.msra.mxu0 0.0
      %1544 = vmatprep.subr.mxu0 0.0
      %1545 = vmatpush1.msra.mxu0 0.0
      %1546 = vmatprep.subr.mxu0 0.0
      %1547 = vmatpush1.msra.mxu0 0.0
      %1548 = vmatprep.subr.mxu0 0.0
      %1549 = vmatpush1.msra.mxu0 0.0
      %1550 = vmatprep.subr.mxu0 0.0
      %1551 = vmatpush1.msra.mxu0 0.0
      %1552 = vmatprep.subr.mxu0 0.0
      %1553 = vmatpush1.msra.mxu0 0.0
      %1554 = vmatprep.subr.mxu0 0.0
      %1555 = vmatpush1.msra.mxu0 0.0
      %1556 = vmatprep.subr.mxu0 0.0
      %1557 = vmatpush1.msra.mxu0 0.0
      %1558 = vmatprep.subr.mxu0 0.0
      %1559 = vmatpush1.msra.mxu0 0.0
      %1560 = vmatprep.subr.mxu0 0.0
      %1561 = vmatpush1.msra.mxu0 0.0
      %1562 = vmatprep.subr.mxu0 0.0
      %1563 = vmatpush1.msra.mxu0 0.0
      %1564 = vmatprep.subr.mxu0 0.0
      %1565 = vmatpush1.msra.mxu0 0.0
      %1566 = vmatprep.subr.mxu0 0.0
      %1567 = vmatpush1.msra.mxu0 0.0
      %1568 = vmatprep.subr.mxu0 0.0
      %1569 = vmatpush1.msra.mxu0 0.0
      %1570 = vmatprep.subr.mxu0 0.0
      %1571 = vmatpush1.msra.mxu0 0.0
      %1572 = vmatprep.mubr.f32.mxu0 0.0
      %1573 = vmatmul.mubr.f32.gmra.mrb[0].mxu0 %v1413
      %v1574 = vpop.f32.mrb[0].mxu0
      %v1575 = vadd.f32 0.0, %v1574
      %v1576 = vpop.f32.mrb[0].mxu0
      %1577 = vmatprep.mubr.f32.mxu0 0.0
      %1578 = vmatmul.mubr.f32.gmra.mrb[0].mxu0 %v1416
      %v1579 = vpop.f32.mrb[0].mxu0
      %v1580 = vadd.f32 0.0, %v1579
      %v1581 = vpop.f32.mrb[0].mxu0
      %1582 = vmatprep.mubr.f32.mxu0 0.0
      %1583 = vmatmul.mubr.f32.gmra.mrb[0].mxu0 %v1419
      %v1584 = vpop.f32.mrb[0].mxu0
      %v1585 = vadd.f32 0.0, %v1584
      %v1586 = vpop.f32.mrb[0].mxu0
      %1587 = vmatprep.mubr.f32.mxu0 0.0
      %1588 = vmatmul.mubr.f32.gmra.mrb[0].mxu0 %v1422
      %v1589 = vpop.f32.mrb[0].mxu0
      %v1590 = vadd.f32 0.0, %v1589
      %v1591 = vpop.f32.mrb[0].mxu0
      %1592 = vmatprep.mubr.f32.mxu0 0.0
      %1593 = vmatmul.mubr.f32.gmra.mrb[0].mxu0 %v1425
      %v1594 = vpop.f32.mrb[0].mxu0
      %v1595 = vadd.f32 0.0, %v1594
      %v1596 = vpop.f32.mrb[0].mxu0
      %1597 = vmatprep.mubr.f32.mxu0 0.0
      %1598 = vmatmul.mubr.f32.gmra.mrb[0].mxu0 %v1428
      %v1599 = vpop.f32.mrb[0].mxu0
      %v1600 = vadd.f32 0.0, %v1599
      %v1601 = vpop.f32.mrb[0].mxu0
      %1602 = vmatprep.mubr.f32.mxu0 0.0
      %1603 = vmatmul.mubr.f32.gmra.mrb[0].mxu0 %v1431
      %v1604 = vpop.f32.mrb[0].mxu0
      %v1605 = vadd.f32 0.0, %v1604
      %v1606 = vpop.f32.mrb[0].mxu0
      %1607 = vmatprep.mubr.f32.mxu0 0.0
      %1608 = vmatmul.mubr.f32.gmra.mrb[0].mxu0 %v1434
      %v1609 = vpop.f32.mrb[0].mxu0
      %v1610 = vadd.f32 0.0, %v1609
      %v1611 = vpop.f32.mrb[0].mxu0
      %1612 = vmatprep.mubr.f32.mxu0 0.0
      %1613 = vmatmul.mubr.f32.gmra.mrb[0].mxu0 %v1437
      %v1614 = vpop.f32.mrb[0].mxu0
      %v1615 = vadd.f32 0.0, %v1614
      %v1616 = vpop.f32.mrb[0].mxu0
      %1617 = vmatprep.mubr.f32.mxu0 0.0
      %1618 = vmatmul.mubr.f32.gmra.mrb[0].mxu0 %v1440
      %v1619 = vpop.f32.mrb[0].mxu0
      %v1620 = vadd.f32 0.0, %v1619
      %v1621 = vpop.f32.mrb[0].mxu0
      %1622 = vmatprep.mubr.f32.mxu0 0.0
      %1623 = vmatmul.mubr.f32.gmra.mrb[0].mxu0 %v1443
      %v1624 = vpop.f32.mrb[0].mxu0
      %v1625 = vadd.f32 0.0, %v1624
      %v1626 = vpop.f32.mrb[0].mxu0
      %1627 = vmatprep.mubr.f32.mxu0 0.0
      %1628 = vmatmul.mubr.f32.gmra.mrb[0].mxu0 %v1446
      %v1629 = vpop.f32.mrb[0].mxu0
      %v1630 = vadd.f32 0.0, %v1629
      %v1631 = vpop.f32.mrb[0].mxu0
      %1632 = vmatprep.mubr.f32.mxu0 0.0
      %1633 = vmatmul.mubr.f32.gmra.mrb[0].mxu0 %v1449
      %v1634 = vpop.f32.mrb[0].mxu0
      %v1635 = vadd.f32 0.0, %v1634
      %v1636 = vpop.f32.mrb[0].mxu0
      %1637 = vmatprep.mubr.f32.mxu0 0.0
      %1638 = vmatmul.mubr.f32.gmra.mrb[0].mxu0 %v1452
      %v1639 = vpop.f32.mrb[0].mxu0
      %v1640 = vadd.f32 0.0, %v1639
      %v1641 = vpop.f32.mrb[0].mxu0
      %1642 = vmatprep.mubr.f32.mxu0 0.0
      %1643 = vmatmul.mubr.f32.gmra.mrb[0].mxu0 %v1455
      %v1644 = vpop.f32.mrb[0].mxu0
      %v1645 = vadd.f32 0.0, %v1644
      %v1646 = vpop.f32.mrb[0].mxu0
      %1647 = vmatprep.mubr.f32.mxu0 0.0
      %1648 = vmatmul.mubr.f32.gmra.mrb[0].mxu0 %v1458
      %v1649 = vpop.f32.mrb[0].mxu0
      %v1650 = vadd.f32 0.0, %v1649
      %v1651 = vpop.f32.mrb[0].mxu0
      %1652 = vmatprep.mubr.f32.mxu0 0.0
      %1653 = vmatmul.mubr.f32.gmra.mrb[0].mxu0 %v1461
      %v1654 = vpop.f32.mrb[0].mxu0
      %v1655 = vadd.f32 0.0, %v1654
      %v1656 = vpop.f32.mrb[0].mxu0
      %1657 = vmatprep.mubr.f32.mxu0 0.0
      %1658 = vmatmul.mubr.f32.gmra.mrb[0].mxu0 %v1464
      %v1659 = vpop.f32.mrb[0].mxu0
      %v1660 = vadd.f32 0.0, %v1659
      %v1661 = vpop.f32.mrb[0].mxu0
      %1662 = vmatprep.mubr.f32.mxu0 0.0
      %1663 = vmatmul.mubr.f32.gmra.mrb[0].mxu0 %v1467
      %v1664 = vpop.f32.mrb[0].mxu0
      %v1665 = vadd.f32 0.0, %v1664
      %v1666 = vpop.f32.mrb[0].mxu0
      %1667 = vmatprep.mubr.f32.mxu0 0.0
      %1668 = vmatmul.mubr.f32.gmra.mrb[0].mxu0 %v1470
      %v1669 = vpop.f32.mrb[0].mxu0
      %v1670 = vadd.f32 0.0, %v1669
      %v1671 = vpop.f32.mrb[0].mxu0
      %1672 = vmatprep.mubr.f32.mxu0 0.0
      %1673 = vmatmul.mubr.f32.gmra.mrb[0].mxu0 %v1473
      %v1674 = vpop.f32.mrb[0].mxu0
      %v1675 = vadd.f32 0.0, %v1674
      %v1676 = vpop.f32.mrb[0].mxu0
      %1677 = vmatprep.mubr.f32.mxu0 0.0
      %1678 = vmatmul.mubr.f32.gmra.mrb[0].mxu0 %v1476
      %v1679 = vpop.f32.mrb[0].mxu0
      %v1680 = vadd.f32 0.0, %v1679
      %v1681 = vpop.f32.mrb[0].mxu0
      %1682 = vmatprep.mubr.f32.mxu0 0.0
      %1683 = vmatmul.mubr.f32.gmra.mrb[0].mxu0 %v1479
      %v1684 = vpop.f32.mrb[0].mxu0
      %v1685 = vadd.f32 0.0, %v1684
      %v1686 = vpop.f32.mrb[0].mxu0
      %1687 = vmatprep.mubr.f32.mxu0 0.0
      %1688 = vmatmul.mubr.f32.gmra.mrb[0].mxu0 %v1482
      %v1689 = vpop.f32.mrb[0].mxu0
      %v1690 = vadd.f32 0.0, %v1689
      %v1691 = vpop.f32.mrb[0].mxu0
      %1692 = vmatprep.mubr.f32.mxu0 0.0
      %1693 = vmatmul.mubr.f32.gmra.mrb[0].mxu0 %v1485
      %v1694 = vpop.f32.mrb[0].mxu0
      %v1695 = vadd.f32 0.0, %v1694
      %v1696 = vpop.f32.mrb[0].mxu0
      %1697 = vmatprep.mubr.f32.mxu0 0.0
      %1698 = vmatmul.mubr.f32.gmra.mrb[0].mxu0 %v1488
      %v1699 = vpop.f32.mrb[0].mxu0
      %v1700 = vadd.f32 0.0, %v1699
      %v1701 = vpop.f32.mrb[0].mxu0
      %1702 = vmatprep.mubr.f32.mxu0 0.0
      %1703 = vmatmul.mubr.f32.gmra.mrb[0].mxu0 %v1491
      %v1704 = vpop.f32.mrb[0].mxu0
      %v1705 = vadd.f32 0.0, %v1704
      %v1706 = vpop.f32.mrb[0].mxu0
      %1707 = vmatprep.mubr.f32.mxu0 0.0
      %1708 = vmatmul.mubr.f32.gmra.mrb[0].mxu0 %v1494
      %v1709 = vpop.f32.mrb[0].mxu0
      %v1710 = vadd.f32 0.0, %v1709
      %v1711 = vpop.f32.mrb[0].mxu0
      %1712 = vmatprep.mubr.f32.mxu0 0.0
      %1713 = vmatmul.mubr.f32.gmra.mrb[0].mxu0 %v1497
      %v1714 = vpop.f32.mrb[0].mxu0
      %v1715 = vadd.f32 0.0, %v1714
      %v1716 = vpop.f32.mrb[0].mxu0
      %1717 = vmatprep.mubr.f32.mxu0 0.0
      %1718 = vmatmul.mubr.f32.gmra.mrb[0].mxu0 %v1500
      %v1719 = vpop.f32.mrb[0].mxu0
      %v1720 = vadd.f32 0.0, %v1719
      %v1721 = vpop.f32.mrb[0].mxu0
      %1722 = vmatprep.mubr.f32.mxu0 0.0
      %1723 = vmatmul.mubr.f32.gmra.mrb[0].mxu0 %v1503
      %v1724 = vpop.f32.mrb[0].mxu0
      %v1725 = vadd.f32 0.0, %v1724
      %v1726 = vpop.f32.mrb[0].mxu0
      %1727 = vmatprep.mubr.f32.mxu0 0.0
      %1728 = vmatmul.mubr.f32.gmra.mrb[0].mxu0 %v1506
      %v1729 = vpop.f32.mrb[0].mxu0
      %v1730 = vadd.f32 0.0, %v1729
      %v1731 = vpop.f32.mrb[0].mxu0
      %1732 = vdwg.mxu0
      %v1733 = vadd.f32 %v1346, %v1575
      %v1734 = vadd.f32 %v1347, %v1580
      %v1735 = vadd.f32 %v1348, %v1585
      %v1736 = vadd.f32 %v1349, %v1590
      %v1737 = vadd.f32 %v1350, %v1595
      %v1738 = vadd.f32 %v1351, %v1600
      %v1739 = vadd.f32 %v1352, %v1605
      %v1740 = vadd.f32 %v1353, %v1610
      %v1741 = vadd.f32 %v1354, %v1615
      %v1742 = vadd.f32 %v1355, %v1620
      %v1743 = vadd.f32 %v1356, %v1625
      %v1744 = vadd.f32 %v1357, %v1630
      %v1745 = vadd.f32 %v1358, %v1635
      %v1746 = vadd.f32 %v1359, %v1640
      %v1747 = vadd.f32 %v1360, %v1645
      %v1748 = vadd.f32 %v1361, %v1650
      %v1749 = vadd.f32 %v1362, %v1655
      %v1750 = vadd.f32 %v1363, %v1660
      %v1751 = vadd.f32 %v1364, %v1665
      %v1752 = vadd.f32 %v1365, %v1670
      %v1753 = vadd.f32 %v1366, %v1675
      %v1754 = vadd.f32 %v1367, %v1680
      %v1755 = vadd.f32 %v1368, %v1685
      %v1756 = vadd.f32 %v1369, %v1690
      %v1757 = vadd.f32 %v1370, %v1695
      %v1758 = vadd.f32 %v1371, %v1700
      %v1759 = vadd.f32 %v1372, %v1705
      %v1760 = vadd.f32 %v1373, %v1710
      %v1761 = vadd.f32 %v1374, %v1715
      %v1762 = vadd.f32 %v1375, %v1720
      %v1763 = vadd.f32 %v1376, %v1725
      %v1764 = vadd.f32 %v1377, %v1730
      %v1765 = vld [vmem:[%s1378 + $0x1] sm:$0xff]
      %v1766 = vld [vmem:[%s1378 + $0x9] sm:$0xff]
      %v1767 = vld [vmem:[%s1378 + $0x19] sm:$0xff]
      %v1768 = vld [vmem:[%s1378 + $0x21] sm:$0xff]
      %v1769 = vld [vmem:[%s1378 + $0x31] sm:$0xff]
      %v1770 = vld [vmem:[%s1378 + $0x39] sm:$0xff]
      %v1771 = vld [vmem:[%s1378 + $0x49] sm:$0xff]
      %v1772 = vld [vmem:[%s1378 + $0x51] sm:$0xff]
      %v1773 = vld [vmem:[%s1378 + $0x61] sm:$0xff]
      %v1774 = vld [vmem:[%s1378 + $0x69] sm:$0xff]
      %v1775 = vld [vmem:[%s1378 + $0x79] sm:$0xff]
      %v1776 = vld [vmem:[%s1378 + $0x81] sm:$0xff]
      %v1777 = vld [vmem:[%s1378 + $0x91] sm:$0xff]
      %v1778 = vld [vmem:[%s1378 + $0x99] sm:$0xff]
      %v1779 = vld [vmem:[%s1378 + $0xa9] sm:$0xff]
      %v1780 = vld [vmem:[%s1378 + $0xb1] sm:$0xff]
      %v1781 = vld [vmem:[%s1378 + $0xc1] sm:$0xff]
      %v1782 = vld [vmem:[%s1378 + $0xc9] sm:$0xff]
      %v1783 = vld [vmem:[%s1378 + $0xd9] sm:$0xff]
      %v1784 = vld [vmem:[%s1378 + $0xe1] sm:$0xff]
      %v1785 = vld [vmem:[%s1378 + $0xf1] sm:$0xff]
      %v1786 = vld [vmem:[%s1378 + $0xf9] sm:$0xff]
      %v1787 = vld [vmem:[%s1378 + $0x109] sm:$0xff]
      %v1788 = vld [vmem:[%s1378 + $0x111] sm:$0xff]
      %v1789 = vld [vmem:[%s1378 + $0x121] sm:$0xff]
      %v1790 = vld [vmem:[%s1378 + $0x129] sm:$0xff]
      %v1791 = vld [vmem:[%s1378 + $0x139] sm:$0xff]
      %v1792 = vld [vmem:[%s1378 + $0x141] sm:$0xff]
      %v1793 = vld [vmem:[%s1378 + $0x151] sm:$0xff]
      %v1794 = vld [vmem:[%s1378 + $0x159] sm:$0xff]
      %v1795 = vld [vmem:[%s1378 + $0x169] sm:$0xff]
      %v1796 = vld [vmem:[%s1378 + $0x171] sm:$0xff]
      %v1797 = vld [vmem:[%s1 + $0x20] sm:$0xff]
      %v1799 = vsel %vm349, %v1765, 0
      %v1802 = vsel %vm349, %v1766, 0
      %v1805 = vsel %vm349, %v1767, 0
      %v1808 = vsel %vm349, %v1768, 0
      %v1811 = vsel %vm349, %v1769, 0
      %v1814 = vsel %vm349, %v1770, 0
      %v1817 = vsel %vm349, %v1771, 0
      %v1820 = vsel %vm349, %v1772, 0
      %v1823 = vsel %vm349, %v1773, 0
      %v1826 = vsel %vm349, %v1774, 0
      %v1829 = vsel %vm349, %v1775, 0
      %v1832 = vsel %vm349, %v1776, 0
      %v1835 = vsel %vm349, %v1777, 0
      %v1838 = vsel %vm349, %v1778, 0
      %v1841 = vsel %vm349, %v1779, 0
      %v1844 = vsel %vm349, %v1780, 0
      %v1847 = vsel %vm349, %v1781, 0
      %v1850 = vsel %vm349, %v1782, 0
      %v1853 = vsel %vm349, %v1783, 0
      %v1856 = vsel %vm349, %v1784, 0
      %v1859 = vsel %vm349, %v1785, 0
      %v1862 = vsel %vm349, %v1786, 0
      %v1865 = vsel %vm349, %v1787, 0
      %v1868 = vsel %vm349, %v1788, 0
      %v1871 = vsel %vm349, %v1789, 0
      %v1874 = vsel %vm349, %v1790, 0
      %v1877 = vsel %vm349, %v1791, 0
      %v1880 = vsel %vm349, %v1792, 0
      %v1883 = vsel %vm349, %v1793, 0
      %v1886 = vsel %vm349, %v1794, 0
      %v1889 = vsel %vm349, %v1795, 0
      %v1892 = vsel %vm349, %v1796, 0
      %1894 = vmatprep.subr.mxu0 0.0
      %1895 = vmatpush1.msra.mxu0 %v1797
      %1896 = vmatprep.subr.mxu0 0.0
      %1897 = vmatpush1.msra.mxu0 0.0
      %1898 = vmatprep.subr.mxu0 0.0
      %1899 = vmatpush1.msra.mxu0 0.0
      %1900 = vmatprep.subr.mxu0 0.0
      %1901 = vmatpush1.msra.mxu0 0.0
      %1902 = vmatprep.subr.mxu0 0.0
      %1903 = vmatpush1.msra.mxu0 0.0
      %1904 = vmatprep.subr.mxu0 0.0
      %1905 = vmatpush1.msra.mxu0 0.0
      %1906 = vmatprep.subr.mxu0 0.0
      %1907 = vmatpush1.msra.mxu0 0.0
      %1908 = vmatprep.subr.mxu0 0.0
      %1909 = vmatpush1.msra.mxu0 0.0
      %1910 = vmatprep.subr.mxu0 0.0
      %1911 = vmatpush1.msra.mxu0 0.0
      %1912 = vmatprep.subr.mxu0 0.0
      %1913 = vmatpush1.msra.mxu0 0.0
      %1914 = vmatprep.subr.mxu0 0.0
      %1915 = vmatpush1.msra.mxu0 0.0
      %1916 = vmatprep.subr.mxu0 0.0
      %1917 = vmatpush1.msra.mxu0 0.0
      %1918 = vmatprep.subr.mxu0 0.0
      %1919 = vmatpush1.msra.mxu0 0.0
      %1920 = vmatprep.subr.mxu0 0.0
      %1921 = vmatpush1.msra.mxu0 0.0
      %1922 = vmatprep.subr.mxu0 0.0
      %1923 = vmatpush1.msra.mxu0 0.0
      %1924 = vmatprep.subr.mxu0 0.0
      %1925 = vmatpush1.msra.mxu0 0.0
      %1926 = vmatprep.subr.mxu0 0.0
      %1927 = vmatpush1.msra.mxu0 0.0
      %1928 = vmatprep.subr.mxu0 0.0
      %1929 = vmatpush1.msra.mxu0 0.0
      %1930 = vmatprep.subr.mxu0 0.0
      %1931 = vmatpush1.msra.mxu0 0.0
      %1932 = vmatprep.subr.mxu0 0.0
      %1933 = vmatpush1.msra.mxu0 0.0
      %1934 = vmatprep.subr.mxu0 0.0
      %1935 = vmatpush1.msra.mxu0 0.0
      %1936 = vmatprep.subr.mxu0 0.0
      %1937 = vmatpush1.msra.mxu0 0.0
      %1938 = vmatprep.subr.mxu0 0.0
      %1939 = vmatpush1.msra.mxu0 0.0
      %1940 = vmatprep.subr.mxu0 0.0
      %1941 = vmatpush1.msra.mxu0 0.0
      %1942 = vmatprep.subr.mxu0 0.0
      %1943 = vmatpush1.msra.mxu0 0.0
      %1944 = vmatprep.subr.mxu0 0.0
      %1945 = vmatpush1.msra.mxu0 0.0
      %1946 = vmatprep.subr.mxu0 0.0
      %1947 = vmatpush1.msra.mxu0 0.0
      %1948 = vmatprep.subr.mxu0 0.0
      %1949 = vmatpush1.msra.mxu0 0.0
      %1950 = vmatprep.subr.mxu0 0.0
      %1951 = vmatpush1.msra.mxu0 0.0
      %1952 = vmatprep.subr.mxu0 0.0
      %1953 = vmatpush1.msra.mxu0 0.0
      %1954 = vmatprep.subr.mxu0 0.0
      %1955 = vmatpush1.msra.mxu0 0.0
      %1956 = vmatprep.subr.mxu0 0.0
      %1957 = vmatpush1.msra.mxu0 0.0
      %1958 = vmatprep.mubr.f32.mxu0 0.0
      %1959 = vmatmul.mubr.f32.gmra.mrb[0].mxu0 %v1799
      %v1960 = vpop.f32.mrb[0].mxu0
      %v1961 = vadd.f32 0.0, %v1960
      %v1962 = vpop.f32.mrb[0].mxu0
      %1963 = vmatprep.mubr.f32.mxu0 0.0
      %1964 = vmatmul.mubr.f32.gmra.mrb[0].mxu0 %v1802
      %v1965 = vpop.f32.mrb[0].mxu0
      %v1966 = vadd.f32 0.0, %v1965
      %v1967 = vpop.f32.mrb[0].mxu0
      %1968 = vmatprep.mubr.f32.mxu0 0.0
      %1969 = vmatmul.mubr.f32.gmra.mrb[0].mxu0 %v1805
      %v1970 = vpop.f32.mrb[0].mxu0
      %v1971 = vadd.f32 0.0, %v1970
      %v1972 = vpop.f32.mrb[0].mxu0
      %1973 = vmatprep.mubr.f32.mxu0 0.0
      %1974 = vmatmul.mubr.f32.gmra.mrb[0].mxu0 %v1808
      %v1975 = vpop.f32.mrb[0].mxu0
      %v1976 = vadd.f32 0.0, %v1975
      %v1977 = vpop.f32.mrb[0].mxu0
      %1978 = vmatprep.mubr.f32.mxu0 0.0
      %1979 = vmatmul.mubr.f32.gmra.mrb[0].mxu0 %v1811
      %v1980 = vpop.f32.mrb[0].mxu0
      %v1981 = vadd.f32 0.0, %v1980
      %v1982 = vpop.f32.mrb[0].mxu0
      %1983 = vmatprep.mubr.f32.mxu0 0.0
      %1984 = vmatmul.mubr.f32.gmra.mrb[0].mxu0 %v1814
      %v1985 = vpop.f32.mrb[0].mxu0
      %v1986 = vadd.f32 0.0, %v1985
      %v1987 = vpop.f32.mrb[0].mxu0
      %1988 = vmatprep.mubr.f32.mxu0 0.0
      %1989 = vmatmul.mubr.f32.gmra.mrb[0].mxu0 %v1817
      %v1990 = vpop.f32.mrb[0].mxu0
      %v1991 = vadd.f32 0.0, %v1990
      %v1992 = vpop.f32.mrb[0].mxu0
      %1993 = vmatprep.mubr.f32.mxu0 0.0
      %1994 = vmatmul.mubr.f32.gmra.mrb[0].mxu0 %v1820
      %v1995 = vpop.f32.mrb[0].mxu0
      %v1996 = vadd.f32 0.0, %v1995
      %v1997 = vpop.f32.mrb[0].mxu0
      %1998 = vmatprep.mubr.f32.mxu0 0.0
      %1999 = vmatmul.mubr.f32.gmra.mrb[0].mxu0 %v1823
      %v2000 = vpop.f32.mrb[0].mxu0
      %v2001 = vadd.f32 0.0, %v2000
      %v2002 = vpop.f32.mrb[0].mxu0
      %2003 = vmatprep.mubr.f32.mxu0 0.0
      %2004 = vmatmul.mubr.f32.gmra.mrb[0].mxu0 %v1826
      %v2005 = vpop.f32.mrb[0].mxu0
      %v2006 = vadd.f32 0.0, %v2005
      %v2007 = vpop.f32.mrb[0].mxu0
      %2008 = vmatprep.mubr.f32.mxu0 0.0
      %2009 = vmatmul.mubr.f32.gmra.mrb[0].mxu0 %v1829
      %v2010 = vpop.f32.mrb[0].mxu0
      %v2011 = vadd.f32 0.0, %v2010
      %v2012 = vpop.f32.mrb[0].mxu0
      %2013 = vmatprep.mubr.f32.mxu0 0.0
      %2014 = vmatmul.mubr.f32.gmra.mrb[0].mxu0 %v1832
      %v2015 = vpop.f32.mrb[0].mxu0
      %v2016 = vadd.f32 0.0, %v2015
      %v2017 = vpop.f32.mrb[0].mxu0
      %2018 = vmatprep.mubr.f32.mxu0 0.0
      %2019 = vmatmul.mubr.f32.gmra.mrb[0].mxu0 %v1835
      %v2020 = vpop.f32.mrb[0].mxu0
      %v2021 = vadd.f32 0.0, %v2020
      %v2022 = vpop.f32.mrb[0].mxu0
      %2023 = vmatprep.mubr.f32.mxu0 0.0
      %2024 = vmatmul.mubr.f32.gmra.mrb[0].mxu0 %v1838
      %v2025 = vpop.f32.mrb[0].mxu0
      %v2026 = vadd.f32 0.0, %v2025
      %v2027 = vpop.f32.mrb[0].mxu0
      %2028 = vmatprep.mubr.f32.mxu0 0.0
      %2029 = vmatmul.mubr.f32.gmra.mrb[0].mxu0 %v1841
      %v2030 = vpop.f32.mrb[0].mxu0
      %v2031 = vadd.f32 0.0, %v2030
      %v2032 = vpop.f32.mrb[0].mxu0
      %2033 = vmatprep.mubr.f32.mxu0 0.0
      %2034 = vmatmul.mubr.f32.gmra.mrb[0].mxu0 %v1844
      %v2035 = vpop.f32.mrb[0].mxu0
      %v2036 = vadd.f32 0.0, %v2035
      %v2037 = vpop.f32.mrb[0].mxu0
      %2038 = vmatprep.mubr.f32.mxu0 0.0
      %2039 = vmatmul.mubr.f32.gmra.mrb[0].mxu0 %v1847
      %v2040 = vpop.f32.mrb[0].mxu0
      %v2041 = vadd.f32 0.0, %v2040
      %v2042 = vpop.f32.mrb[0].mxu0
      %2043 = vmatprep.mubr.f32.mxu0 0.0
      %2044 = vmatmul.mubr.f32.gmra.mrb[0].mxu0 %v1850
      %v2045 = vpop.f32.mrb[0].mxu0
      %v2046 = vadd.f32 0.0, %v2045
      %v2047 = vpop.f32.mrb[0].mxu0
      %2048 = vmatprep.mubr.f32.mxu0 0.0
      %2049 = vmatmul.mubr.f32.gmra.mrb[0].mxu0 %v1853
      %v2050 = vpop.f32.mrb[0].mxu0
      %v2051 = vadd.f32 0.0, %v2050
      %v2052 = vpop.f32.mrb[0].mxu0
      %2053 = vmatprep.mubr.f32.mxu0 0.0
      %2054 = vmatmul.mubr.f32.gmra.mrb[0].mxu0 %v1856
      %v2055 = vpop.f32.mrb[0].mxu0
      %v2056 = vadd.f32 0.0, %v2055
      %v2057 = vpop.f32.mrb[0].mxu0
      %2058 = vmatprep.mubr.f32.mxu0 0.0
      %2059 = vmatmul.mubr.f32.gmra.mrb[0].mxu0 %v1859
      %v2060 = vpop.f32.mrb[0].mxu0
      %v2061 = vadd.f32 0.0, %v2060
      %v2062 = vpop.f32.mrb[0].mxu0
      %2063 = vmatprep.mubr.f32.mxu0 0.0
      %2064 = vmatmul.mubr.f32.gmra.mrb[0].mxu0 %v1862
      %v2065 = vpop.f32.mrb[0].mxu0
      %v2066 = vadd.f32 0.0, %v2065
      %v2067 = vpop.f32.mrb[0].mxu0
      %2068 = vmatprep.mubr.f32.mxu0 0.0
      %2069 = vmatmul.mubr.f32.gmra.mrb[0].mxu0 %v1865
      %v2070 = vpop.f32.mrb[0].mxu0
      %v2071 = vadd.f32 0.0, %v2070
      %v2072 = vpop.f32.mrb[0].mxu0
      %2073 = vmatprep.mubr.f32.mxu0 0.0
      %2074 = vmatmul.mubr.f32.gmra.mrb[0].mxu0 %v1868
      %v2075 = vpop.f32.mrb[0].mxu0
      %v2076 = vadd.f32 0.0, %v2075
      %v2077 = vpop.f32.mrb[0].mxu0
      %2078 = vmatprep.mubr.f32.mxu0 0.0
      %2079 = vmatmul.mubr.f32.gmra.mrb[0].mxu0 %v1871
      %v2080 = vpop.f32.mrb[0].mxu0
      %v2081 = vadd.f32 0.0, %v2080
      %v2082 = vpop.f32.mrb[0].mxu0
      %2083 = vmatprep.mubr.f32.mxu0 0.0
      %2084 = vmatmul.mubr.f32.gmra.mrb[0].mxu0 %v1874
      %v2085 = vpop.f32.mrb[0].mxu0
      %v2086 = vadd.f32 0.0, %v2085
      %v2087 = vpop.f32.mrb[0].mxu0
      %2088 = vmatprep.mubr.f32.mxu0 0.0
      %2089 = vmatmul.mubr.f32.gmra.mrb[0].mxu0 %v1877
      %v2090 = vpop.f32.mrb[0].mxu0
      %v2091 = vadd.f32 0.0, %v2090
      %v2092 = vpop.f32.mrb[0].mxu0
      %2093 = vmatprep.mubr.f32.mxu0 0.0
      %2094 = vmatmul.mubr.f32.gmra.mrb[0].mxu0 %v1880
      %v2095 = vpop.f32.mrb[0].mxu0
      %v2096 = vadd.f32 0.0, %v2095
      %v2097 = vpop.f32.mrb[0].mxu0
      %2098 = vmatprep.mubr.f32.mxu0 0.0
      %2099 = vmatmul.mubr.f32.gmra.mrb[0].mxu0 %v1883
      %v2100 = vpop.f32.mrb[0].mxu0
      %v2101 = vadd.f32 0.0, %v2100
      %v2102 = vpop.f32.mrb[0].mxu0
      %2103 = vmatprep.mubr.f32.mxu0 0.0
      %2104 = vmatmul.mubr.f32.gmra.mrb[0].mxu0 %v1886
      %v2105 = vpop.f32.mrb[0].mxu0
      %v2106 = vadd.f32 0.0, %v2105
      %v2107 = vpop.f32.mrb[0].mxu0
      %2108 = vmatprep.mubr.f32.mxu0 0.0
      %2109 = vmatmul.mubr.f32.gmra.mrb[0].mxu0 %v1889
      %v2110 = vpop.f32.mrb[0].mxu0
      %v2111 = vadd.f32 0.0, %v2110
      %v2112 = vpop.f32.mrb[0].mxu0
      %2113 = vmatprep.mubr.f32.mxu0 0.0
      %2114 = vmatmul.mubr.f32.gmra.mrb[0].mxu0 %v1892
      %v2115 = vpop.f32.mrb[0].mxu0
      %v2116 = vadd.f32 0.0, %v2115
      %v2117 = vpop.f32.mrb[0].mxu0
      %2118 = vdwg.mxu0
      %v2119 = vadd.f32 %v1733, %v1961
      %v2120 = vadd.f32 %v1734, %v1966
      %v2121 = vadd.f32 %v1735, %v1971
      %v2122 = vadd.f32 %v1736, %v1976
      %v2123 = vadd.f32 %v1737, %v1981
      %v2124 = vadd.f32 %v1738, %v1986
      %v2125 = vadd.f32 %v1739, %v1991
      %v2126 = vadd.f32 %v1740, %v1996
      %v2127 = vadd.f32 %v1741, %v2001
      %v2128 = vadd.f32 %v1742, %v2006
      %v2129 = vadd.f32 %v1743, %v2011
      %v2130 = vadd.f32 %v1744, %v2016
      %v2131 = vadd.f32 %v1745, %v2021
      %v2132 = vadd.f32 %v1746, %v2026
      %v2133 = vadd.f32 %v1747, %v2031
      %v2134 = vadd.f32 %v1748, %v2036
      %v2135 = vadd.f32 %v1749, %v2041
      %v2136 = vadd.f32 %v1750, %v2046
      %v2137 = vadd.f32 %v1751, %v2051
      %v2138 = vadd.f32 %v1752, %v2056
      %v2139 = vadd.f32 %v1753, %v2061
      %v2140 = vadd.f32 %v1754, %v2066
      %v2141 = vadd.f32 %v1755, %v2071
      %v2142 = vadd.f32 %v1756, %v2076
      %v2143 = vadd.f32 %v1757, %v2081
      %v2144 = vadd.f32 %v1758, %v2086
      %v2145 = vadd.f32 %v1759, %v2091
      %v2146 = vadd.f32 %v1760, %v2096
      %v2147 = vadd.f32 %v1761, %v2101
      %v2148 = vadd.f32 %v1762, %v2106
      %v2149 = vadd.f32 %v1763, %v2111
      %v2150 = vadd.f32 %v1764, %v2116
      %v2151 = vld [vmem:[%s1378 + $0x2] sm:$0xff]
      %v2152 = vld [vmem:[%s1378 + $0xa] sm:$0xff]
      %v2153 = vld [vmem:[%s1378 + $0x1a] sm:$0xff]
      %v2154 = vld [vmem:[%s1378 + $0x22] sm:$0xff]
      %v2155 = vld [vmem:[%s1378 + $0x32] sm:$0xff]
      %v2156 = vld [vmem:[%s1378 + $0x3a] sm:$0xff]
      %v2157 = vld [vmem:[%s1378 + $0x4a] sm:$0xff]
      %v2158 = vld [vmem:[%s1378 + $0x52] sm:$0xff]
      %v2159 = vld [vmem:[%s1378 + $0x62] sm:$0xff]
      %v2160 = vld [vmem:[%s1378 + $0x6a] sm:$0xff]
      %v2161 = vld [vmem:[%s1378 + $0x7a] sm:$0xff]
      %v2162 = vld [vmem:[%s1378 + $0x82] sm:$0xff]
      %v2163 = vld [vmem:[%s1378 + $0x92] sm:$0xff]
      %v2164 = vld [vmem:[%s1378 + $0x9a] sm:$0xff]
      %v2165 = vld [vmem:[%s1378 + $0xaa] sm:$0xff]
      %v2166 = vld [vmem:[%s1378 + $0xb2] sm:$0xff]
      %v2167 = vld [vmem:[%s1378 + $0xc2] sm:$0xff]
      %v2168 = vld [vmem:[%s1378 + $0xca] sm:$0xff]
      %v2169 = vld [vmem:[%s1378 + $0xda] sm:$0xff]
      %v2170 = vld [vmem:[%s1378 + $0xe2] sm:$0xff]
      %v2171 = vld [vmem:[%s1378 + $0xf2] sm:$0xff]
      %v2172 = vld [vmem:[%s1378 + $0xfa] sm:$0xff]
      %v2173 = vld [vmem:[%s1378 + $0x10a] sm:$0xff]
      %v2174 = vld [vmem:[%s1378 + $0x112] sm:$0xff]
      %v2175 = vld [vmem:[%s1378 + $0x122] sm:$0xff]
      %v2176 = vld [vmem:[%s1378 + $0x12a] sm:$0xff]
      %v2177 = vld [vmem:[%s1378 + $0x13a] sm:$0xff]
      %v2178 = vld [vmem:[%s1378 + $0x142] sm:$0xff]
      %v2179 = vld [vmem:[%s1378 + $0x152] sm:$0xff]
      %v2180 = vld [vmem:[%s1378 + $0x15a] sm:$0xff]
      %v2181 = vld [vmem:[%s1378 + $0x16a] sm:$0xff]
      %v2182 = vld [vmem:[%s1378 + $0x172] sm:$0xff]
      %v2183 = vld [vmem:[%s1 + $0x28] sm:$0xff]
      %v2185 = vsel %vm349, %v2151, 0
      %v2188 = vsel %vm349, %v2152, 0
      %v2191 = vsel %vm349, %v2153, 0
      %v2194 = vsel %vm349, %v2154, 0
      %v2197 = vsel %vm349, %v2155, 0
      %v2200 = vsel %vm349, %v2156, 0
      %v2203 = vsel %vm349, %v2157, 0
      %v2206 = vsel %vm349, %v2158, 0
      %v2209 = vsel %vm349, %v2159, 0
      %v2212 = vsel %vm349, %v2160, 0
      %v2215 = vsel %vm349, %v2161, 0
      %v2218 = vsel %vm349, %v2162, 0
      %v2221 = vsel %vm349, %v2163, 0
      %v2224 = vsel %vm349, %v2164, 0
      %v2227 = vsel %vm349, %v2165, 0
      %v2230 = vsel %vm349, %v2166, 0
      %v2233 = vsel %vm349, %v2167, 0
      %v2236 = vsel %vm349, %v2168, 0
      %v2239 = vsel %vm349, %v2169, 0
      %v2242 = vsel %vm349, %v2170, 0
      %v2245 = vsel %vm349, %v2171, 0
      %v2248 = vsel %vm349, %v2172, 0
      %v2251 = vsel %vm349, %v2173, 0
      %v2254 = vsel %vm349, %v2174, 0
      %v2257 = vsel %vm349, %v2175, 0
      %v2260 = vsel %vm349, %v2176, 0
      %v2263 = vsel %vm349, %v2177, 0
      %v2266 = vsel %vm349, %v2178, 0
      %v2269 = vsel %vm349, %v2179, 0
      %v2272 = vsel %vm349, %v2180, 0
      %v2275 = vsel %vm349, %v2181, 0
      %v2278 = vsel %vm349, %v2182, 0
      %2280 = vmatprep.subr.mxu0 0.0
      %2281 = vmatpush1.msra.mxu0 %v2183
      %2282 = vmatprep.subr.mxu0 0.0
      %2283 = vmatpush1.msra.mxu0 0.0
      %2284 = vmatprep.subr.mxu0 0.0
      %2285 = vmatpush1.msra.mxu0 0.0
      %2286 = vmatprep.subr.mxu0 0.0
      %2287 = vmatpush1.msra.mxu0 0.0
      %2288 = vmatprep.subr.mxu0 0.0
      %2289 = vmatpush1.msra.mxu0 0.0
      %2290 = vmatprep.subr.mxu0 0.0
      %2291 = vmatpush1.msra.mxu0 0.0
      %2292 = vmatprep.subr.mxu0 0.0
      %2293 = vmatpush1.msra.mxu0 0.0
      %2294 = vmatprep.subr.mxu0 0.0
      %2295 = vmatpush1.msra.mxu0 0.0
      %2296 = vmatprep.subr.mxu0 0.0
      %2297 = vmatpush1.msra.mxu0 0.0
      %2298 = vmatprep.subr.mxu0 0.0
      %2299 = vmatpush1.msra.mxu0 0.0
      %2300 = vmatprep.subr.mxu0 0.0
      %2301 = vmatpush1.msra.mxu0 0.0
      %2302 = vmatprep.subr.mxu0 0.0
      %2303 = vmatpush1.msra.mxu0 0.0
      %2304 = vmatprep.subr.mxu0 0.0
      %2305 = vmatpush1.msra.mxu0 0.0
      %2306 = vmatprep.subr.mxu0 0.0
      %2307 = vmatpush1.msra.mxu0 0.0
      %2308 = vmatprep.subr.mxu0 0.0
      %2309 = vmatpush1.msra.mxu0 0.0
      %2310 = vmatprep.subr.mxu0 0.0
      %2311 = vmatpush1.msra.mxu0 0.0
      %2312 = vmatprep.subr.mxu0 0.0
      %2313 = vmatpush1.msra.mxu0 0.0
      %2314 = vmatprep.subr.mxu0 0.0
      %2315 = vmatpush1.msra.mxu0 0.0
      %2316 = vmatprep.subr.mxu0 0.0
      %2317 = vmatpush1.msra.mxu0 0.0
      %2318 = vmatprep.subr.mxu0 0.0
      %2319 = vmatpush1.msra.mxu0 0.0
      %2320 = vmatprep.subr.mxu0 0.0
      %2321 = vmatpush1.msra.mxu0 0.0
      %2322 = vmatprep.subr.mxu0 0.0
      %2323 = vmatpush1.msra.mxu0 0.0
      %2324 = vmatprep.subr.mxu0 0.0
      %2325 = vmatpush1.msra.mxu0 0.0
      %2326 = vmatprep.subr.mxu0 0.0
      %2327 = vmatpush1.msra.mxu0 0.0
      %2328 = vmatprep.subr.mxu0 0.0
      %2329 = vmatpush1.msra.mxu0 0.0
      %2330 = vmatprep.subr.mxu0 0.0
      %2331 = vmatpush1.msra.mxu0 0.0
      %2332 = vmatprep.subr.mxu0 0.0
      %2333 = vmatpush1.msra.mxu0 0.0
      %2334 = vmatprep.subr.mxu0 0.0
      %2335 = vmatpush1.msra.mxu0 0.0
      %2336 = vmatprep.subr.mxu0 0.0
      %2337 = vmatpush1.msra.mxu0 0.0
      %2338 = vmatprep.subr.mxu0 0.0
      %2339 = vmatpush1.msra.mxu0 0.0
      %2340 = vmatprep.subr.mxu0 0.0
      %2341 = vmatpush1.msra.mxu0 0.0
      %2342 = vmatprep.subr.mxu0 0.0
      %2343 = vmatpush1.msra.mxu0 0.0
      %2344 = vmatprep.mubr.f32.mxu0 0.0
      %2345 = vmatmul.mubr.f32.gmra.mrb[0].mxu0 %v2185
      %v2346 = vpop.f32.mrb[0].mxu0
      %v2347 = vadd.f32 0.0, %v2346
      %v2348 = vpop.f32.mrb[0].mxu0
      %2349 = vmatprep.mubr.f32.mxu0 0.0
      %2350 = vmatmul.mubr.f32.gmra.mrb[0].mxu0 %v2188
      %v2351 = vpop.f32.mrb[0].mxu0
      %v2352 = vadd.f32 0.0, %v2351
      %v2353 = vpop.f32.mrb[0].mxu0
      %2354 = vmatprep.mubr.f32.mxu0 0.0
      %2355 = vmatmul.mubr.f32.gmra.mrb[0].mxu0 %v2191
      %v2356 = vpop.f32.mrb[0].mxu0
      %v2357 = vadd.f32 0.0, %v2356
      %v2358 = vpop.f32.mrb[0].mxu0
      %2359 = vmatprep.mubr.f32.mxu0 0.0
      %2360 = vmatmul.mubr.f32.gmra.mrb[0].mxu0 %v2194
      %v2361 = vpop.f32.mrb[0].mxu0
      %v2362 = vadd.f32 0.0, %v2361
      %v2363 = vpop.f32.mrb[0].mxu0
      %2364 = vmatprep.mubr.f32.mxu0 0.0
      %2365 = vmatmul.mubr.f32.gmra.mrb[0].mxu0 %v2197
      %v2366 = vpop.f32.mrb[0].mxu0
      %v2367 = vadd.f32 0.0, %v2366
      %v2368 = vpop.f32.mrb[0].mxu0
      %2369 = vmatprep.mubr.f32.mxu0 0.0
      %2370 = vmatmul.mubr.f32.gmra.mrb[0].mxu0 %v2200
      %v2371 = vpop.f32.mrb[0].mxu0
      %v2372 = vadd.f32 0.0, %v2371
      %v2373 = vpop.f32.mrb[0].mxu0
      %2374 = vmatprep.mubr.f32.mxu0 0.0
      %2375 = vmatmul.mubr.f32.gmra.mrb[0].mxu0 %v2203
      %v2376 = vpop.f32.mrb[0].mxu0
      %v2377 = vadd.f32 0.0, %v2376
      %v2378 = vpop.f32.mrb[0].mxu0
      %2379 = vmatprep.mubr.f32.mxu0 0.0
      %2380 = vmatmul.mubr.f32.gmra.mrb[0].mxu0 %v2206
      %v2381 = vpop.f32.mrb[0].mxu0
      %v2382 = vadd.f32 0.0, %v2381
      %v2383 = vpop.f32.mrb[0].mxu0
      %2384 = vmatprep.mubr.f32.mxu0 0.0
      %2385 = vmatmul.mubr.f32.gmra.mrb[0].mxu0 %v2209
      %v2386 = vpop.f32.mrb[0].mxu0
      %v2387 = vadd.f32 0.0, %v2386
      %v2388 = vpop.f32.mrb[0].mxu0
      %2389 = vmatprep.mubr.f32.mxu0 0.0
      %2390 = vmatmul.mubr.f32.gmra.mrb[0].mxu0 %v2212
      %v2391 = vpop.f32.mrb[0].mxu0
      %v2392 = vadd.f32 0.0, %v2391
      %v2393 = vpop.f32.mrb[0].mxu0
      %2394 = vmatprep.mubr.f32.mxu0 0.0
      %2395 = vmatmul.mubr.f32.gmra.mrb[0].mxu0 %v2215
      %v2396 = vpop.f32.mrb[0].mxu0
      %v2397 = vadd.f32 0.0, %v2396
      %v2398 = vpop.f32.mrb[0].mxu0
      %2399 = vmatprep.mubr.f32.mxu0 0.0
      %2400 = vmatmul.mubr.f32.gmra.mrb[0].mxu0 %v2218
      %v2401 = vpop.f32.mrb[0].mxu0
      %v2402 = vadd.f32 0.0, %v2401
      %v2403 = vpop.f32.mrb[0].mxu0
      %2404 = vmatprep.mubr.f32.mxu0 0.0
      %2405 = vmatmul.mubr.f32.gmra.mrb[0].mxu0 %v2221
      %v2406 = vpop.f32.mrb[0].mxu0
      %v2407 = vadd.f32 0.0, %v2406
      %v2408 = vpop.f32.mrb[0].mxu0
      %2409 = vmatprep.mubr.f32.mxu0 0.0
      %2410 = vmatmul.mubr.f32.gmra.mrb[0].mxu0 %v2224
      %v2411 = vpop.f32.mrb[0].mxu0
      %v2412 = vadd.f32 0.0, %v2411
      %v2413 = vpop.f32.mrb[0].mxu0
      %2414 = vmatprep.mubr.f32.mxu0 0.0
      %2415 = vmatmul.mubr.f32.gmra.mrb[0].mxu0 %v2227
      %v2416 = vpop.f32.mrb[0].mxu0
      %v2417 = vadd.f32 0.0, %v2416
      %v2418 = vpop.f32.mrb[0].mxu0
      %2419 = vmatprep.mubr.f32.mxu0 0.0
      %2420 = vmatmul.mubr.f32.gmra.mrb[0].mxu0 %v2230
      %v2421 = vpop.f32.mrb[0].mxu0
      %v2422 = vadd.f32 0.0, %v2421
      %v2423 = vpop.f32.mrb[0].mxu0
      %2424 = vmatprep.mubr.f32.mxu0 0.0
      %2425 = vmatmul.mubr.f32.gmra.mrb[0].mxu0 %v2233
      %v2426 = vpop.f32.mrb[0].mxu0
      %v2427 = vadd.f32 0.0, %v2426
      %v2428 = vpop.f32.mrb[0].mxu0
      %2429 = vmatprep.mubr.f32.mxu0 0.0
      %2430 = vmatmul.mubr.f32.gmra.mrb[0].mxu0 %v2236
      %v2431 = vpop.f32.mrb[0].mxu0
      %v2432 = vadd.f32 0.0, %v2431
      %v2433 = vpop.f32.mrb[0].mxu0
      %2434 = vmatprep.mubr.f32.mxu0 0.0
      %2435 = vmatmul.mubr.f32.gmra.mrb[0].mxu0 %v2239
      %v2436 = vpop.f32.mrb[0].mxu0
      %v2437 = vadd.f32 0.0, %v2436
      %v2438 = vpop.f32.mrb[0].mxu0
      %2439 = vmatprep.mubr.f32.mxu0 0.0
      %2440 = vmatmul.mubr.f32.gmra.mrb[0].mxu0 %v2242
      %v2441 = vpop.f32.mrb[0].mxu0
      %v2442 = vadd.f32 0.0, %v2441
      %v2443 = vpop.f32.mrb[0].mxu0
      %2444 = vmatprep.mubr.f32.mxu0 0.0
      %2445 = vmatmul.mubr.f32.gmra.mrb[0].mxu0 %v2245
      %v2446 = vpop.f32.mrb[0].mxu0
      %v2447 = vadd.f32 0.0, %v2446
      %v2448 = vpop.f32.mrb[0].mxu0
      %2449 = vmatprep.mubr.f32.mxu0 0.0
      %2450 = vmatmul.mubr.f32.gmra.mrb[0].mxu0 %v2248
      %v2451 = vpop.f32.mrb[0].mxu0
      %v2452 = vadd.f32 0.0, %v2451
      %v2453 = vpop.f32.mrb[0].mxu0
      %2454 = vmatprep.mubr.f32.mxu0 0.0
      %2455 = vmatmul.mubr.f32.gmra.mrb[0].mxu0 %v2251
      %v2456 = vpop.f32.mrb[0].mxu0
      %v2457 = vadd.f32 0.0, %v2456
      %v2458 = vpop.f32.mrb[0].mxu0
      %2459 = vmatprep.mubr.f32.mxu0 0.0
      %2460 = vmatmul.mubr.f32.gmra.mrb[0].mxu0 %v2254
      %v2461 = vpop.f32.mrb[0].mxu0
      %v2462 = vadd.f32 0.0, %v2461
      %v2463 = vpop.f32.mrb[0].mxu0
      %2464 = vmatprep.mubr.f32.mxu0 0.0
      %2465 = vmatmul.mubr.f32.gmra.mrb[0].mxu0 %v2257
      %v2466 = vpop.f32.mrb[0].mxu0
      %v2467 = vadd.f32 0.0, %v2466
      %v2468 = vpop.f32.mrb[0].mxu0
      %2469 = vmatprep.mubr.f32.mxu0 0.0
      %2470 = vmatmul.mubr.f32.gmra.mrb[0].mxu0 %v2260
      %v2471 = vpop.f32.mrb[0].mxu0
      %v2472 = vadd.f32 0.0, %v2471
      %v2473 = vpop.f32.mrb[0].mxu0
      %2474 = vmatprep.mubr.f32.mxu0 0.0
      %2475 = vmatmul.mubr.f32.gmra.mrb[0].mxu0 %v2263
      %v2476 = vpop.f32.mrb[0].mxu0
      %v2477 = vadd.f32 0.0, %v2476
      %v2478 = vpop.f32.mrb[0].mxu0
      %2479 = vmatprep.mubr.f32.mxu0 0.0
      %2480 = vmatmul.mubr.f32.gmra.mrb[0].mxu0 %v2266
      %v2481 = vpop.f32.mrb[0].mxu0
      %v2482 = vadd.f32 0.0, %v2481
      %v2483 = vpop.f32.mrb[0].mxu0
      %2484 = vmatprep.mubr.f32.mxu0 0.0
      %2485 = vmatmul.mubr.f32.gmra.mrb[0].mxu0 %v2269
      %v2486 = vpop.f32.mrb[0].mxu0
      %v2487 = vadd.f32 0.0, %v2486
      %v2488 = vpop.f32.mrb[0].mxu0
      %2489 = vmatprep.mubr.f32.mxu0 0.0
      %2490 = vmatmul.mubr.f32.gmra.mrb[0].mxu0 %v2272
      %v2491 = vpop.f32.mrb[0].mxu0
      %v2492 = vadd.f32 0.0, %v2491
      %v2493 = vpop.f32.mrb[0].mxu0
      %2494 = vmatprep.mubr.f32.mxu0 0.0
      %2495 = vmatmul.mubr.f32.gmra.mrb[0].mxu0 %v2275
      %v2496 = vpop.f32.mrb[0].mxu0
      %v2497 = vadd.f32 0.0, %v2496
      %v2498 = vpop.f32.mrb[0].mxu0
      %2499 = vmatprep.mubr.f32.mxu0 0.0
      %2500 = vmatmul.mubr.f32.gmra.mrb[0].mxu0 %v2278
      %v2501 = vpop.f32.mrb[0].mxu0
      %v2502 = vadd.f32 0.0, %v2501
      %v2503 = vpop.f32.mrb[0].mxu0
      %2504 = vdwg.mxu0
      %v2505 = vadd.f32 %v2119, %v2347
      %v2506 = vadd.f32 %v2120, %v2352
      %v2507 = vadd.f32 %v2121, %v2357
      %v2508 = vadd.f32 %v2122, %v2362
      %v2509 = vadd.f32 %v2123, %v2367
      %v2510 = vadd.f32 %v2124, %v2372
      %v2511 = vadd.f32 %v2125, %v2377
      %v2512 = vadd.f32 %v2126, %v2382
      %v2513 = vadd.f32 %v2127, %v2387
      %v2514 = vadd.f32 %v2128, %v2392
      %v2515 = vadd.f32 %v2129, %v2397
      %v2516 = vadd.f32 %v2130, %v2402
      %v2517 = vadd.f32 %v2131, %v2407
      %v2518 = vadd.f32 %v2132, %v2412
      %v2519 = vadd.f32 %v2133, %v2417
      %v2520 = vadd.f32 %v2134, %v2422
      %v2521 = vadd.f32 %v2135, %v2427
      %v2522 = vadd.f32 %v2136, %v2432
      %v2523 = vadd.f32 %v2137, %v2437
      %v2524 = vadd.f32 %v2138, %v2442
      %v2525 = vadd.f32 %v2139, %v2447
      %v2526 = vadd.f32 %v2140, %v2452
      %v2527 = vadd.f32 %v2141, %v2457
      %v2528 = vadd.f32 %v2142, %v2462
      %v2529 = vadd.f32 %v2143, %v2467
      %v2530 = vadd.f32 %v2144, %v2472
      %v2531 = vadd.f32 %v2145, %v2477
      %v2532 = vadd.f32 %v2146, %v2482
      %v2533 = vadd.f32 %v2147, %v2487
      %v2534 = vadd.f32 %v2148, %v2492
      %v2535 = vadd.f32 %v2149, %v2497
      %v2536 = vadd.f32 %v2150, %v2502
      %s2537 = scalar_lea.vmem %s273, 48
      %v2538 = vld [vmem:[%s2537] sm:$0xff]
      %v2539 = vld [vmem:[%s2537 + $0x8] sm:$0xff]
      %v2540 = vld [vmem:[%s2537 + $0x18] sm:$0xff]
      %v2541 = vld [vmem:[%s2537 + $0x20] sm:$0xff]
      %v2542 = vld [vmem:[%s2537 + $0x30] sm:$0xff]
      %v2543 = vld [vmem:[%s2537 + $0x38] sm:$0xff]
      %v2544 = vld [vmem:[%s2537 + $0x48] sm:$0xff]
      %v2545 = vld [vmem:[%s2537 + $0x50] sm:$0xff]
      %v2546 = vld [vmem:[%s2537 + $0x60] sm:$0xff]
      %v2547 = vld [vmem:[%s2537 + $0x68] sm:$0xff]
      %v2548 = vld [vmem:[%s2537 + $0x78] sm:$0xff]
      %v2549 = vld [vmem:[%s2537 + $0x80] sm:$0xff]
      %v2550 = vld [vmem:[%s2537 + $0x90] sm:$0xff]
      %v2551 = vld [vmem:[%s2537 + $0x98] sm:$0xff]
      %v2552 = vld [vmem:[%s2537 + $0xa8] sm:$0xff]
      %v2553 = vld [vmem:[%s2537 + $0xb0] sm:$0xff]
      %v2554 = vld [vmem:[%s2537 + $0xc0] sm:$0xff]
      %v2555 = vld [vmem:[%s2537 + $0xc8] sm:$0xff]
      %v2556 = vld [vmem:[%s2537 + $0xd8] sm:$0xff]
      %v2557 = vld [vmem:[%s2537 + $0xe0] sm:$0xff]
      %v2558 = vld [vmem:[%s2537 + $0xf0] sm:$0xff]
      %v2559 = vld [vmem:[%s2537 + $0xf8] sm:$0xff]
      %v2560 = vld [vmem:[%s2537 + $0x108] sm:$0xff]
      %v2561 = vld [vmem:[%s2537 + $0x110] sm:$0xff]
      %v2562 = vld [vmem:[%s2537 + $0x120] sm:$0xff]
      %v2563 = vld [vmem:[%s2537 + $0x128] sm:$0xff]
      %v2564 = vld [vmem:[%s2537 + $0x138] sm:$0xff]
      %v2565 = vld [vmem:[%s2537 + $0x140] sm:$0xff]
      %v2566 = vld [vmem:[%s2537 + $0x150] sm:$0xff]
      %v2567 = vld [vmem:[%s2537 + $0x158] sm:$0xff]
      %v2568 = vld [vmem:[%s2537 + $0x168] sm:$0xff]
      %v2569 = vld [vmem:[%s2537 + $0x170] sm:$0xff]
      %v2570 = vld [vmem:[%s1 + $0x30] sm:$0xff]
      %v2572 = vsel %vm349, %v2538, 0
      %v2575 = vsel %vm349, %v2539, 0
      %v2578 = vsel %vm349, %v2540, 0
      %v2581 = vsel %vm349, %v2541, 0
      %v2584 = vsel %vm349, %v2542, 0
      %v2587 = vsel %vm349, %v2543, 0
      %v2590 = vsel %vm349, %v2544, 0
      %v2593 = vsel %vm349, %v2545, 0
      %v2596 = vsel %vm349, %v2546, 0
      %v2599 = vsel %vm349, %v2547, 0
      %v2602 = vsel %vm349, %v2548, 0
      %v2605 = vsel %vm349, %v2549, 0
      %v2608 = vsel %vm349, %v2550, 0
      %v2611 = vsel %vm349, %v2551, 0
      %v2614 = vsel %vm349, %v2552, 0
      %v2617 = vsel %vm349, %v2553, 0
      %v2620 = vsel %vm349, %v2554, 0
      %v2623 = vsel %vm349, %v2555, 0
      %v2626 = vsel %vm349, %v2556, 0
      %v2629 = vsel %vm349, %v2557, 0
      %v2632 = vsel %vm349, %v2558, 0
      %v2635 = vsel %vm349, %v2559, 0
      %v2638 = vsel %vm349, %v2560, 0
      %v2641 = vsel %vm349, %v2561, 0
      %v2644 = vsel %vm349, %v2562, 0
      %v2647 = vsel %vm349, %v2563, 0
      %v2650 = vsel %vm349, %v2564, 0
      %v2653 = vsel %vm349, %v2565, 0
      %v2656 = vsel %vm349, %v2566, 0
      %v2659 = vsel %vm349, %v2567, 0
      %v2662 = vsel %vm349, %v2568, 0
      %v2665 = vsel %vm349, %v2569, 0
      %2667 = vmatprep.subr.mxu0 0.0
      %2668 = vmatpush1.msra.mxu0 %v2570
      %2669 = vmatprep.subr.mxu0 0.0
      %2670 = vmatpush1.msra.mxu0 0.0
      %2671 = vmatprep.subr.mxu0 0.0
      %2672 = vmatpush1.msra.mxu0 0.0
      %2673 = vmatprep.subr.mxu0 0.0
      %2674 = vmatpush1.msra.mxu0 0.0
      %2675 = vmatprep.subr.mxu0 0.0
      %2676 = vmatpush1.msra.mxu0 0.0
      %2677 = vmatprep.subr.mxu0 0.0
      %2678 = vmatpush1.msra.mxu0 0.0
      %2679 = vmatprep.subr.mxu0 0.0
      %2680 = vmatpush1.msra.mxu0 0.0
      %2681 = vmatprep.subr.mxu0 0.0
      %2682 = vmatpush1.msra.mxu0 0.0
      %2683 = vmatprep.subr.mxu0 0.0
      %2684 = vmatpush1.msra.mxu0 0.0
      %2685 = vmatprep.subr.mxu0 0.0
      %2686 = vmatpush1.msra.mxu0 0.0
      %2687 = vmatprep.subr.mxu0 0.0
      %2688 = vmatpush1.msra.mxu0 0.0
      %2689 = vmatprep.subr.mxu0 0.0
      %2690 = vmatpush1.msra.mxu0 0.0
      %2691 = vmatprep.subr.mxu0 0.0
      %2692 = vmatpush1.msra.mxu0 0.0
      %2693 = vmatprep.subr.mxu0 0.0
      %2694 = vmatpush1.msra.mxu0 0.0
      %2695 = vmatprep.subr.mxu0 0.0
      %2696 = vmatpush1.msra.mxu0 0.0
      %2697 = vmatprep.subr.mxu0 0.0
      %2698 = vmatpush1.msra.mxu0 0.0
      %2699 = vmatprep.subr.mxu0 0.0
      %2700 = vmatpush1.msra.mxu0 0.0
      %2701 = vmatprep.subr.mxu0 0.0
      %2702 = vmatpush1.msra.mxu0 0.0
      %2703 = vmatprep.subr.mxu0 0.0
      %2704 = vmatpush1.msra.mxu0 0.0
      %2705 = vmatprep.subr.mxu0 0.0
      %2706 = vmatpush1.msra.mxu0 0.0
      %2707 = vmatprep.subr.mxu0 0.0
      %2708 = vmatpush1.msra.mxu0 0.0
      %2709 = vmatprep.subr.mxu0 0.0
      %2710 = vmatpush1.msra.mxu0 0.0
      %2711 = vmatprep.subr.mxu0 0.0
      %2712 = vmatpush1.msra.mxu0 0.0
      %2713 = vmatprep.subr.mxu0 0.0
      %2714 = vmatpush1.msra.mxu0 0.0
      %2715 = vmatprep.subr.mxu0 0.0
      %2716 = vmatpush1.msra.mxu0 0.0
      %2717 = vmatprep.subr.mxu0 0.0
      %2718 = vmatpush1.msra.mxu0 0.0
      %2719 = vmatprep.subr.mxu0 0.0
      %2720 = vmatpush1.msra.mxu0 0.0
      %2721 = vmatprep.subr.mxu0 0.0
      %2722 = vmatpush1.msra.mxu0 0.0
      %2723 = vmatprep.subr.mxu0 0.0
      %2724 = vmatpush1.msra.mxu0 0.0
      %2725 = vmatprep.subr.mxu0 0.0
      %2726 = vmatpush1.msra.mxu0 0.0
      %2727 = vmatprep.subr.mxu0 0.0
      %2728 = vmatpush1.msra.mxu0 0.0
      %2729 = vmatprep.subr.mxu0 0.0
      %2730 = vmatpush1.msra.mxu0 0.0
      %2731 = vmatprep.mubr.f32.mxu0 0.0
      %2732 = vmatmul.mubr.f32.gmra.mrb[0].mxu0 %v2572
      %v2733 = vpop.f32.mrb[0].mxu0
      %v2734 = vadd.f32 0.0, %v2733
      %v2735 = vpop.f32.mrb[0].mxu0
      %2736 = vmatprep.mubr.f32.mxu0 0.0
      %2737 = vmatmul.mubr.f32.gmra.mrb[0].mxu0 %v2575
      %v2738 = vpop.f32.mrb[0].mxu0
      %v2739 = vadd.f32 0.0, %v2738
      %v2740 = vpop.f32.mrb[0].mxu0
      %2741 = vmatprep.mubr.f32.mxu0 0.0
      %2742 = vmatmul.mubr.f32.gmra.mrb[0].mxu0 %v2578
      %v2743 = vpop.f32.mrb[0].mxu0
      %v2744 = vadd.f32 0.0, %v2743
      %v2745 = vpop.f32.mrb[0].mxu0
      %2746 = vmatprep.mubr.f32.mxu0 0.0
      %2747 = vmatmul.mubr.f32.gmra.mrb[0].mxu0 %v2581
      %v2748 = vpop.f32.mrb[0].mxu0
      %v2749 = vadd.f32 0.0, %v2748
      %v2750 = vpop.f32.mrb[0].mxu0
      %2751 = vmatprep.mubr.f32.mxu0 0.0
      %2752 = vmatmul.mubr.f32.gmra.mrb[0].mxu0 %v2584
      %v2753 = vpop.f32.mrb[0].mxu0
      %v2754 = vadd.f32 0.0, %v2753
      %v2755 = vpop.f32.mrb[0].mxu0
      %2756 = vmatprep.mubr.f32.mxu0 0.0
      %2757 = vmatmul.mubr.f32.gmra.mrb[0].mxu0 %v2587
      %v2758 = vpop.f32.mrb[0].mxu0
      %v2759 = vadd.f32 0.0, %v2758
      %v2760 = vpop.f32.mrb[0].mxu0
      %2761 = vmatprep.mubr.f32.mxu0 0.0
      %2762 = vmatmul.mubr.f32.gmra.mrb[0].mxu0 %v2590
      %v2763 = vpop.f32.mrb[0].mxu0
      %v2764 = vadd.f32 0.0, %v2763
      %v2765 = vpop.f32.mrb[0].mxu0
      %2766 = vmatprep.mubr.f32.mxu0 0.0
      %2767 = vmatmul.mubr.f32.gmra.mrb[0].mxu0 %v2593
      %v2768 = vpop.f32.mrb[0].mxu0
      %v2769 = vadd.f32 0.0, %v2768
      %v2770 = vpop.f32.mrb[0].mxu0
      %2771 = vmatprep.mubr.f32.mxu0 0.0
      %2772 = vmatmul.mubr.f32.gmra.mrb[0].mxu0 %v2596
      %v2773 = vpop.f32.mrb[0].mxu0
      %v2774 = vadd.f32 0.0, %v2773
      %v2775 = vpop.f32.mrb[0].mxu0
      %2776 = vmatprep.mubr.f32.mxu0 0.0
      %2777 = vmatmul.mubr.f32.gmra.mrb[0].mxu0 %v2599
      %v2778 = vpop.f32.mrb[0].mxu0
      %v2779 = vadd.f32 0.0, %v2778
      %v2780 = vpop.f32.mrb[0].mxu0
      %2781 = vmatprep.mubr.f32.mxu0 0.0
      %2782 = vmatmul.mubr.f32.gmra.mrb[0].mxu0 %v2602
      %v2783 = vpop.f32.mrb[0].mxu0
      %v2784 = vadd.f32 0.0, %v2783
      %v2785 = vpop.f32.mrb[0].mxu0
      %2786 = vmatprep.mubr.f32.mxu0 0.0
      %2787 = vmatmul.mubr.f32.gmra.mrb[0].mxu0 %v2605
      %v2788 = vpop.f32.mrb[0].mxu0
      %v2789 = vadd.f32 0.0, %v2788
      %v2790 = vpop.f32.mrb[0].mxu0
      %2791 = vmatprep.mubr.f32.mxu0 0.0
      %2792 = vmatmul.mubr.f32.gmra.mrb[0].mxu0 %v2608
      %v2793 = vpop.f32.mrb[0].mxu0
      %v2794 = vadd.f32 0.0, %v2793
      %v2795 = vpop.f32.mrb[0].mxu0
      %2796 = vmatprep.mubr.f32.mxu0 0.0
      %2797 = vmatmul.mubr.f32.gmra.mrb[0].mxu0 %v2611
      %v2798 = vpop.f32.mrb[0].mxu0
      %v2799 = vadd.f32 0.0, %v2798
      %v2800 = vpop.f32.mrb[0].mxu0
      %2801 = vmatprep.mubr.f32.mxu0 0.0
      %2802 = vmatmul.mubr.f32.gmra.mrb[0].mxu0 %v2614
      %v2803 = vpop.f32.mrb[0].mxu0
      %v2804 = vadd.f32 0.0, %v2803
      %v2805 = vpop.f32.mrb[0].mxu0
      %2806 = vmatprep.mubr.f32.mxu0 0.0
      %2807 = vmatmul.mubr.f32.gmra.mrb[0].mxu0 %v2617
      %v2808 = vpop.f32.mrb[0].mxu0
      %v2809 = vadd.f32 0.0, %v2808
      %v2810 = vpop.f32.mrb[0].mxu0
      %2811 = vmatprep.mubr.f32.mxu0 0.0
      %2812 = vmatmul.mubr.f32.gmra.mrb[0].mxu0 %v2620
      %v2813 = vpop.f32.mrb[0].mxu0
      %v2814 = vadd.f32 0.0, %v2813
      %v2815 = vpop.f32.mrb[0].mxu0
      %2816 = vmatprep.mubr.f32.mxu0 0.0
      %2817 = vmatmul.mubr.f32.gmra.mrb[0].mxu0 %v2623
      %v2818 = vpop.f32.mrb[0].mxu0
      %v2819 = vadd.f32 0.0, %v2818
      %v2820 = vpop.f32.mrb[0].mxu0
      %2821 = vmatprep.mubr.f32.mxu0 0.0
      %2822 = vmatmul.mubr.f32.gmra.mrb[0].mxu0 %v2626
      %v2823 = vpop.f32.mrb[0].mxu0
      %v2824 = vadd.f32 0.0, %v2823
      %v2825 = vpop.f32.mrb[0].mxu0
      %2826 = vmatprep.mubr.f32.mxu0 0.0
      %2827 = vmatmul.mubr.f32.gmra.mrb[0].mxu0 %v2629
      %v2828 = vpop.f32.mrb[0].mxu0
      %v2829 = vadd.f32 0.0, %v2828
      %v2830 = vpop.f32.mrb[0].mxu0
      %2831 = vmatprep.mubr.f32.mxu0 0.0
      %2832 = vmatmul.mubr.f32.gmra.mrb[0].mxu0 %v2632
      %v2833 = vpop.f32.mrb[0].mxu0
      %v2834 = vadd.f32 0.0, %v2833
      %v2835 = vpop.f32.mrb[0].mxu0
      %2836 = vmatprep.mubr.f32.mxu0 0.0
      %2837 = vmatmul.mubr.f32.gmra.mrb[0].mxu0 %v2635
      %v2838 = vpop.f32.mrb[0].mxu0
      %v2839 = vadd.f32 0.0, %v2838
      %v2840 = vpop.f32.mrb[0].mxu0
      %2841 = vmatprep.mubr.f32.mxu0 0.0
      %2842 = vmatmul.mubr.f32.gmra.mrb[0].mxu0 %v2638
      %v2843 = vpop.f32.mrb[0].mxu0
      %v2844 = vadd.f32 0.0, %v2843
      %v2845 = vpop.f32.mrb[0].mxu0
      %2846 = vmatprep.mubr.f32.mxu0 0.0
      %2847 = vmatmul.mubr.f32.gmra.mrb[0].mxu0 %v2641
      %v2848 = vpop.f32.mrb[0].mxu0
      %v2849 = vadd.f32 0.0, %v2848
      %v2850 = vpop.f32.mrb[0].mxu0
      %2851 = vmatprep.mubr.f32.mxu0 0.0
      %2852 = vmatmul.mubr.f32.gmra.mrb[0].mxu0 %v2644
      %v2853 = vpop.f32.mrb[0].mxu0
      %v2854 = vadd.f32 0.0, %v2853
      %v2855 = vpop.f32.mrb[0].mxu0
      %2856 = vmatprep.mubr.f32.mxu0 0.0
      %2857 = vmatmul.mubr.f32.gmra.mrb[0].mxu0 %v2647
      %v2858 = vpop.f32.mrb[0].mxu0
      %v2859 = vadd.f32 0.0, %v2858
      %v2860 = vpop.f32.mrb[0].mxu0
      %2861 = vmatprep.mubr.f32.mxu0 0.0
      %2862 = vmatmul.mubr.f32.gmra.mrb[0].mxu0 %v2650
      %v2863 = vpop.f32.mrb[0].mxu0
      %v2864 = vadd.f32 0.0, %v2863
      %v2865 = vpop.f32.mrb[0].mxu0
      %2866 = vmatprep.mubr.f32.mxu0 0.0
      %2867 = vmatmul.mubr.f32.gmra.mrb[0].mxu0 %v2653
      %v2868 = vpop.f32.mrb[0].mxu0
      %v2869 = vadd.f32 0.0, %v2868
      %v2870 = vpop.f32.mrb[0].mxu0
      %2871 = vmatprep.mubr.f32.mxu0 0.0
      %2872 = vmatmul.mubr.f32.gmra.mrb[0].mxu0 %v2656
      %v2873 = vpop.f32.mrb[0].mxu0
      %v2874 = vadd.f32 0.0, %v2873
      %v2875 = vpop.f32.mrb[0].mxu0
      %2876 = vmatprep.mubr.f32.mxu0 0.0
      %2877 = vmatmul.mubr.f32.gmra.mrb[0].mxu0 %v2659
      %v2878 = vpop.f32.mrb[0].mxu0
      %v2879 = vadd.f32 0.0, %v2878
      %v2880 = vpop.f32.mrb[0].mxu0
      %2881 = vmatprep.mubr.f32.mxu0 0.0
      %2882 = vmatmul.mubr.f32.gmra.mrb[0].mxu0 %v2662
      %v2883 = vpop.f32.mrb[0].mxu0
      %v2884 = vadd.f32 0.0, %v2883
      %v2885 = vpop.f32.mrb[0].mxu0
      %2886 = vmatprep.mubr.f32.mxu0 0.0
      %2887 = vmatmul.mubr.f32.gmra.mrb[0].mxu0 %v2665
      %v2888 = vpop.f32.mrb[0].mxu0
      %v2889 = vadd.f32 0.0, %v2888
      %v2890 = vpop.f32.mrb[0].mxu0
      %2891 = vdwg.mxu0
      %v2892 = vadd.f32 %v2505, %v2734
      %v2893 = vadd.f32 %v2506, %v2739
      %v2894 = vadd.f32 %v2507, %v2744
      %v2895 = vadd.f32 %v2508, %v2749
      %v2896 = vadd.f32 %v2509, %v2754
      %v2897 = vadd.f32 %v2510, %v2759
      %v2898 = vadd.f32 %v2511, %v2764
      %v2899 = vadd.f32 %v2512, %v2769
      %v2900 = vadd.f32 %v2513, %v2774
      %v2901 = vadd.f32 %v2514, %v2779
      %v2902 = vadd.f32 %v2515, %v2784
      %v2903 = vadd.f32 %v2516, %v2789
      %v2904 = vadd.f32 %v2517, %v2794
      %v2905 = vadd.f32 %v2518, %v2799
      %v2906 = vadd.f32 %v2519, %v2804
      %v2907 = vadd.f32 %v2520, %v2809
      %v2908 = vadd.f32 %v2521, %v2814
      %v2909 = vadd.f32 %v2522, %v2819
      %v2910 = vadd.f32 %v2523, %v2824
      %v2911 = vadd.f32 %v2524, %v2829
      %v2912 = vadd.f32 %v2525, %v2834
      %v2913 = vadd.f32 %v2526, %v2839
      %v2914 = vadd.f32 %v2527, %v2844
      %v2915 = vadd.f32 %v2528, %v2849
      %v2916 = vadd.f32 %v2529, %v2854
      %v2917 = vadd.f32 %v2530, %v2859
      %v2918 = vadd.f32 %v2531, %v2864
      %v2919 = vadd.f32 %v2532, %v2869
      %v2920 = vadd.f32 %v2533, %v2874
      %v2921 = vadd.f32 %v2534, %v2879
      %v2922 = vadd.f32 %v2535, %v2884
      %v2923 = vadd.f32 %v2536, %v2889
      %v2924 = vld [vmem:[%s2537 + $0x1] sm:$0xff]
      %v2925 = vld [vmem:[%s2537 + $0x9] sm:$0xff]
      %v2926 = vld [vmem:[%s2537 + $0x19] sm:$0xff]
      %v2927 = vld [vmem:[%s2537 + $0x21] sm:$0xff]
      %v2928 = vld [vmem:[%s2537 + $0x31] sm:$0xff]
      %v2929 = vld [vmem:[%s2537 + $0x39] sm:$0xff]
      %v2930 = vld [vmem:[%s2537 + $0x49] sm:$0xff]
      %v2931 = vld [vmem:[%s2537 + $0x51] sm:$0xff]
      %v2932 = vld [vmem:[%s2537 + $0x61] sm:$0xff]
      %v2933 = vld [vmem:[%s2537 + $0x69] sm:$0xff]
      %v2934 = vld [vmem:[%s2537 + $0x79] sm:$0xff]
      %v2935 = vld [vmem:[%s2537 + $0x81] sm:$0xff]
      %v2936 = vld [vmem:[%s2537 + $0x91] sm:$0xff]
      %v2937 = vld [vmem:[%s2537 + $0x99] sm:$0xff]
      %v2938 = vld [vmem:[%s2537 + $0xa9] sm:$0xff]
      %v2939 = vld [vmem:[%s2537 + $0xb1] sm:$0xff]
      %v2940 = vld [vmem:[%s2537 + $0xc1] sm:$0xff]
      %v2941 = vld [vmem:[%s2537 + $0xc9] sm:$0xff]
      %v2942 = vld [vmem:[%s2537 + $0xd9] sm:$0xff]
      %v2943 = vld [vmem:[%s2537 + $0xe1] sm:$0xff]
      %v2944 = vld [vmem:[%s2537 + $0xf1] sm:$0xff]
      %v2945 = vld [vmem:[%s2537 + $0xf9] sm:$0xff]
      %v2946 = vld [vmem:[%s2537 + $0x109] sm:$0xff]
      %v2947 = vld [vmem:[%s2537 + $0x111] sm:$0xff]
      %v2948 = vld [vmem:[%s2537 + $0x121] sm:$0xff]
      %v2949 = vld [vmem:[%s2537 + $0x129] sm:$0xff]
      %v2950 = vld [vmem:[%s2537 + $0x139] sm:$0xff]
      %v2951 = vld [vmem:[%s2537 + $0x141] sm:$0xff]
      %v2952 = vld [vmem:[%s2537 + $0x151] sm:$0xff]
      %v2953 = vld [vmem:[%s2537 + $0x159] sm:$0xff]
      %v2954 = vld [vmem:[%s2537 + $0x169] sm:$0xff]
      %v2955 = vld [vmem:[%s2537 + $0x171] sm:$0xff]
      %v2956 = vld [vmem:[%s1 + $0x38] sm:$0xff]
      %v2958 = vsel %vm349, %v2924, 0
      %v2961 = vsel %vm349, %v2925, 0
      %v2964 = vsel %vm349, %v2926, 0
      %v2967 = vsel %vm349, %v2927, 0
      %v2970 = vsel %vm349, %v2928, 0
      %v2973 = vsel %vm349, %v2929, 0
      %v2976 = vsel %vm349, %v2930, 0
      %v2979 = vsel %vm349, %v2931, 0
      %v2982 = vsel %vm349, %v2932, 0
      %v2985 = vsel %vm349, %v2933, 0
      %v2988 = vsel %vm349, %v2934, 0
      %v2991 = vsel %vm349, %v2935, 0
      %v2994 = vsel %vm349, %v2936, 0
      %v2997 = vsel %vm349, %v2937, 0
      %v3000 = vsel %vm349, %v2938, 0
      %v3003 = vsel %vm349, %v2939, 0
      %v3006 = vsel %vm349, %v2940, 0
      %v3009 = vsel %vm349, %v2941, 0
      %v3012 = vsel %vm349, %v2942, 0
      %v3015 = vsel %vm349, %v2943, 0
      %v3018 = vsel %vm349, %v2944, 0
      %v3021 = vsel %vm349, %v2945, 0
      %v3024 = vsel %vm349, %v2946, 0
      %v3027 = vsel %vm349, %v2947, 0
      %v3030 = vsel %vm349, %v2948, 0
      %v3033 = vsel %vm349, %v2949, 0
      %v3036 = vsel %vm349, %v2950, 0
      %v3039 = vsel %vm349, %v2951, 0
      %v3042 = vsel %vm349, %v2952, 0
      %v3045 = vsel %vm349, %v2953, 0
      %v3048 = vsel %vm349, %v2954, 0
      %v3051 = vsel %vm349, %v2955, 0
      %3053 = vmatprep.subr.mxu0 0.0
      %3054 = vmatpush1.msra.mxu0 %v2956
      %3055 = vmatprep.subr.mxu0 0.0
      %3056 = vmatpush1.msra.mxu0 0.0
      %3057 = vmatprep.subr.mxu0 0.0
      %3058 = vmatpush1.msra.mxu0 0.0
      %3059 = vmatprep.subr.mxu0 0.0
      %3060 = vmatpush1.msra.mxu0 0.0
      %3061 = vmatprep.subr.mxu0 0.0
      %3062 = vmatpush1.msra.mxu0 0.0
      %3063 = vmatprep.subr.mxu0 0.0
      %3064 = vmatpush1.msra.mxu0 0.0
      %3065 = vmatprep.subr.mxu0 0.0
      %3066 = vmatpush1.msra.mxu0 0.0
      %3067 = vmatprep.subr.mxu0 0.0
      %3068 = vmatpush1.msra.mxu0 0.0
      %3069 = vmatprep.subr.mxu0 0.0
      %3070 = vmatpush1.msra.mxu0 0.0
      %3071 = vmatprep.subr.mxu0 0.0
      %3072 = vmatpush1.msra.mxu0 0.0
      %3073 = vmatprep.subr.mxu0 0.0
      %3074 = vmatpush1.msra.mxu0 0.0
      %3075 = vmatprep.subr.mxu0 0.0
      %3076 = vmatpush1.msra.mxu0 0.0
      %3077 = vmatprep.subr.mxu0 0.0
      %3078 = vmatpush1.msra.mxu0 0.0
      %3079 = vmatprep.subr.mxu0 0.0
      %3080 = vmatpush1.msra.mxu0 0.0
      %3081 = vmatprep.subr.mxu0 0.0
      %3082 = vmatpush1.msra.mxu0 0.0
      %3083 = vmatprep.subr.mxu0 0.0
      %3084 = vmatpush1.msra.mxu0 0.0
      %3085 = vmatprep.subr.mxu0 0.0
      %3086 = vmatpush1.msra.mxu0 0.0
      %3087 = vmatprep.subr.mxu0 0.0
      %3088 = vmatpush1.msra.mxu0 0.0
      %3089 = vmatprep.subr.mxu0 0.0
      %3090 = vmatpush1.msra.mxu0 0.0
      %3091 = vmatprep.subr.mxu0 0.0
      %3092 = vmatpush1.msra.mxu0 0.0
      %3093 = vmatprep.subr.mxu0 0.0
      %3094 = vmatpush1.msra.mxu0 0.0
      %3095 = vmatprep.subr.mxu0 0.0
      %3096 = vmatpush1.msra.mxu0 0.0
      %3097 = vmatprep.subr.mxu0 0.0
      %3098 = vmatpush1.msra.mxu0 0.0
      %3099 = vmatprep.subr.mxu0 0.0
      %3100 = vmatpush1.msra.mxu0 0.0
      %3101 = vmatprep.subr.mxu0 0.0
      %3102 = vmatpush1.msra.mxu0 0.0
      %3103 = vmatprep.subr.mxu0 0.0
      %3104 = vmatpush1.msra.mxu0 0.0
      %3105 = vmatprep.subr.mxu0 0.0
      %3106 = vmatpush1.msra.mxu0 0.0
      %3107 = vmatprep.subr.mxu0 0.0
      %3108 = vmatpush1.msra.mxu0 0.0
      %3109 = vmatprep.subr.mxu0 0.0
      %3110 = vmatpush1.msra.mxu0 0.0
      %3111 = vmatprep.subr.mxu0 0.0
      %3112 = vmatpush1.msra.mxu0 0.0
      %3113 = vmatprep.subr.mxu0 0.0
      %3114 = vmatpush1.msra.mxu0 0.0
      %3115 = vmatprep.subr.mxu0 0.0
      %3116 = vmatpush1.msra.mxu0 0.0
      %3117 = vmatprep.mubr.f32.mxu0 0.0
      %3118 = vmatmul.mubr.f32.gmra.mrb[0].mxu0 %v2958
      %v3119 = vpop.f32.mrb[0].mxu0
      %v3120 = vadd.f32 0.0, %v3119
      %v3121 = vpop.f32.mrb[0].mxu0
      %3122 = vmatprep.mubr.f32.mxu0 0.0
      %3123 = vmatmul.mubr.f32.gmra.mrb[0].mxu0 %v2961
      %v3124 = vpop.f32.mrb[0].mxu0
      %v3125 = vadd.f32 0.0, %v3124
      %v3126 = vpop.f32.mrb[0].mxu0
      %3127 = vmatprep.mubr.f32.mxu0 0.0
      %3128 = vmatmul.mubr.f32.gmra.mrb[0].mxu0 %v2964
      %v3129 = vpop.f32.mrb[0].mxu0
      %v3130 = vadd.f32 0.0, %v3129
      %v3131 = vpop.f32.mrb[0].mxu0
      %3132 = vmatprep.mubr.f32.mxu0 0.0
      %3133 = vmatmul.mubr.f32.gmra.mrb[0].mxu0 %v2967
      %v3134 = vpop.f32.mrb[0].mxu0
      %v3135 = vadd.f32 0.0, %v3134
      %v3136 = vpop.f32.mrb[0].mxu0
      %3137 = vmatprep.mubr.f32.mxu0 0.0
      %3138 = vmatmul.mubr.f32.gmra.mrb[0].mxu0 %v2970
      %v3139 = vpop.f32.mrb[0].mxu0
      %v3140 = vadd.f32 0.0, %v3139
      %v3141 = vpop.f32.mrb[0].mxu0
      %3142 = vmatprep.mubr.f32.mxu0 0.0
      %3143 = vmatmul.mubr.f32.gmra.mrb[0].mxu0 %v2973
      %v3144 = vpop.f32.mrb[0].mxu0
      %v3145 = vadd.f32 0.0, %v3144
      %v3146 = vpop.f32.mrb[0].mxu0
      %3147 = vmatprep.mubr.f32.mxu0 0.0
      %3148 = vmatmul.mubr.f32.gmra.mrb[0].mxu0 %v2976
      %v3149 = vpop.f32.mrb[0].mxu0
      %v3150 = vadd.f32 0.0, %v3149
      %v3151 = vpop.f32.mrb[0].mxu0
      %3152 = vmatprep.mubr.f32.mxu0 0.0
      %3153 = vmatmul.mubr.f32.gmra.mrb[0].mxu0 %v2979
      %v3154 = vpop.f32.mrb[0].mxu0
      %v3155 = vadd.f32 0.0, %v3154
      %v3156 = vpop.f32.mrb[0].mxu0
      %3157 = vmatprep.mubr.f32.mxu0 0.0
      %3158 = vmatmul.mubr.f32.gmra.mrb[0].mxu0 %v2982
      %v3159 = vpop.f32.mrb[0].mxu0
      %v3160 = vadd.f32 0.0, %v3159
      %v3161 = vpop.f32.mrb[0].mxu0
      %3162 = vmatprep.mubr.f32.mxu0 0.0
      %3163 = vmatmul.mubr.f32.gmra.mrb[0].mxu0 %v2985
      %v3164 = vpop.f32.mrb[0].mxu0
      %v3165 = vadd.f32 0.0, %v3164
      %v3166 = vpop.f32.mrb[0].mxu0
      %3167 = vmatprep.mubr.f32.mxu0 0.0
      %3168 = vmatmul.mubr.f32.gmra.mrb[0].mxu0 %v2988
      %v3169 = vpop.f32.mrb[0].mxu0
      %v3170 = vadd.f32 0.0, %v3169
      %v3171 = vpop.f32.mrb[0].mxu0
      %3172 = vmatprep.mubr.f32.mxu0 0.0
      %3173 = vmatmul.mubr.f32.gmra.mrb[0].mxu0 %v2991
      %v3174 = vpop.f32.mrb[0].mxu0
      %v3175 = vadd.f32 0.0, %v3174
      %v3176 = vpop.f32.mrb[0].mxu0
      %3177 = vmatprep.mubr.f32.mxu0 0.0
      %3178 = vmatmul.mubr.f32.gmra.mrb[0].mxu0 %v2994
      %v3179 = vpop.f32.mrb[0].mxu0
      %v3180 = vadd.f32 0.0, %v3179
      %v3181 = vpop.f32.mrb[0].mxu0
      %3182 = vmatprep.mubr.f32.mxu0 0.0
      %3183 = vmatmul.mubr.f32.gmra.mrb[0].mxu0 %v2997
      %v3184 = vpop.f32.mrb[0].mxu0
      %v3185 = vadd.f32 0.0, %v3184
      %v3186 = vpop.f32.mrb[0].mxu0
      %3187 = vmatprep.mubr.f32.mxu0 0.0
      %3188 = vmatmul.mubr.f32.gmra.mrb[0].mxu0 %v3000
      %v3189 = vpop.f32.mrb[0].mxu0
      %v3190 = vadd.f32 0.0, %v3189
      %v3191 = vpop.f32.mrb[0].mxu0
      %3192 = vmatprep.mubr.f32.mxu0 0.0
      %3193 = vmatmul.mubr.f32.gmra.mrb[0].mxu0 %v3003
      %v3194 = vpop.f32.mrb[0].mxu0
      %v3195 = vadd.f32 0.0, %v3194
      %v3196 = vpop.f32.mrb[0].mxu0
      %3197 = vmatprep.mubr.f32.mxu0 0.0
      %3198 = vmatmul.mubr.f32.gmra.mrb[0].mxu0 %v3006
      %v3199 = vpop.f32.mrb[0].mxu0
      %v3200 = vadd.f32 0.0, %v3199
      %v3201 = vpop.f32.mrb[0].mxu0
      %3202 = vmatprep.mubr.f32.mxu0 0.0
      %3203 = vmatmul.mubr.f32.gmra.mrb[0].mxu0 %v3009
      %v3204 = vpop.f32.mrb[0].mxu0
      %v3205 = vadd.f32 0.0, %v3204
      %v3206 = vpop.f32.mrb[0].mxu0
      %3207 = vmatprep.mubr.f32.mxu0 0.0
      %3208 = vmatmul.mubr.f32.gmra.mrb[0].mxu0 %v3012
      %v3209 = vpop.f32.mrb[0].mxu0
      %v3210 = vadd.f32 0.0, %v3209
      %v3211 = vpop.f32.mrb[0].mxu0
      %3212 = vmatprep.mubr.f32.mxu0 0.0
      %3213 = vmatmul.mubr.f32.gmra.mrb[0].mxu0 %v3015
      %v3214 = vpop.f32.mrb[0].mxu0
      %v3215 = vadd.f32 0.0, %v3214
      %v3216 = vpop.f32.mrb[0].mxu0
      %3217 = vmatprep.mubr.f32.mxu0 0.0
      %3218 = vmatmul.mubr.f32.gmra.mrb[0].mxu0 %v3018
      %v3219 = vpop.f32.mrb[0].mxu0
      %v3220 = vadd.f32 0.0, %v3219
      %v3221 = vpop.f32.mrb[0].mxu0
      %3222 = vmatprep.mubr.f32.mxu0 0.0
      %3223 = vmatmul.mubr.f32.gmra.mrb[0].mxu0 %v3021
      %v3224 = vpop.f32.mrb[0].mxu0
      %v3225 = vadd.f32 0.0, %v3224
      %v3226 = vpop.f32.mrb[0].mxu0
      %3227 = vmatprep.mubr.f32.mxu0 0.0
      %3228 = vmatmul.mubr.f32.gmra.mrb[0].mxu0 %v3024
      %v3229 = vpop.f32.mrb[0].mxu0
      %v3230 = vadd.f32 0.0, %v3229
      %v3231 = vpop.f32.mrb[0].mxu0
      %3232 = vmatprep.mubr.f32.mxu0 0.0
      %3233 = vmatmul.mubr.f32.gmra.mrb[0].mxu0 %v3027
      %v3234 = vpop.f32.mrb[0].mxu0
      %v3235 = vadd.f32 0.0, %v3234
      %v3236 = vpop.f32.mrb[0].mxu0
      %3237 = vmatprep.mubr.f32.mxu0 0.0
      %3238 = vmatmul.mubr.f32.gmra.mrb[0].mxu0 %v3030
      %v3239 = vpop.f32.mrb[0].mxu0
      %v3240 = vadd.f32 0.0, %v3239
      %v3241 = vpop.f32.mrb[0].mxu0
      %3242 = vmatprep.mubr.f32.mxu0 0.0
      %3243 = vmatmul.mubr.f32.gmra.mrb[0].mxu0 %v3033
      %v3244 = vpop.f32.mrb[0].mxu0
      %v3245 = vadd.f32 0.0, %v3244
      %v3246 = vpop.f32.mrb[0].mxu0
      %3247 = vmatprep.mubr.f32.mxu0 0.0
      %3248 = vmatmul.mubr.f32.gmra.mrb[0].mxu0 %v3036
      %v3249 = vpop.f32.mrb[0].mxu0
      %v3250 = vadd.f32 0.0, %v3249
      %v3251 = vpop.f32.mrb[0].mxu0
      %3252 = vmatprep.mubr.f32.mxu0 0.0
      %3253 = vmatmul.mubr.f32.gmra.mrb[0].mxu0 %v3039
      %v3254 = vpop.f32.mrb[0].mxu0
      %v3255 = vadd.f32 0.0, %v3254
      %v3256 = vpop.f32.mrb[0].mxu0
      %3257 = vmatprep.mubr.f32.mxu0 0.0
      %3258 = vmatmul.mubr.f32.gmra.mrb[0].mxu0 %v3042
      %v3259 = vpop.f32.mrb[0].mxu0
      %v3260 = vadd.f32 0.0, %v3259
      %v3261 = vpop.f32.mrb[0].mxu0
      %3262 = vmatprep.mubr.f32.mxu0 0.0
      %3263 = vmatmul.mubr.f32.gmra.mrb[0].mxu0 %v3045
      %v3264 = vpop.f32.mrb[0].mxu0
      %v3265 = vadd.f32 0.0, %v3264
      %v3266 = vpop.f32.mrb[0].mxu0
      %3267 = vmatprep.mubr.f32.mxu0 0.0
      %3268 = vmatmul.mubr.f32.gmra.mrb[0].mxu0 %v3048
      %v3269 = vpop.f32.mrb[0].mxu0
      %v3270 = vadd.f32 0.0, %v3269
      %v3271 = vpop.f32.mrb[0].mxu0
      %3272 = vmatprep.mubr.f32.mxu0 0.0
      %3273 = vmatmul.mubr.f32.gmra.mrb[0].mxu0 %v3051
      %v3274 = vpop.f32.mrb[0].mxu0
      %v3275 = vadd.f32 0.0, %v3274
      %v3276 = vpop.f32.mrb[0].mxu0
      %3277 = vdwg.mxu0
      %v3278 = vadd.f32 %v2892, %v3120
      %v3279 = vadd.f32 %v2893, %v3125
      %v3280 = vadd.f32 %v2894, %v3130
      %v3281 = vadd.f32 %v2895, %v3135
      %v3282 = vadd.f32 %v2896, %v3140
      %v3283 = vadd.f32 %v2897, %v3145
      %v3284 = vadd.f32 %v2898, %v3150
      %v3285 = vadd.f32 %v2899, %v3155
      %v3286 = vadd.f32 %v2900, %v3160
      %v3287 = vadd.f32 %v2901, %v3165
      %v3288 = vadd.f32 %v2902, %v3170
      %v3289 = vadd.f32 %v2903, %v3175
      %v3290 = vadd.f32 %v2904, %v3180
      %v3291 = vadd.f32 %v2905, %v3185
      %v3292 = vadd.f32 %v2906, %v3190
      %v3293 = vadd.f32 %v2907, %v3195
      %v3294 = vadd.f32 %v2908, %v3200
      %v3295 = vadd.f32 %v2909, %v3205
      %v3296 = vadd.f32 %v2910, %v3210
      %v3297 = vadd.f32 %v2911, %v3215
      %v3298 = vadd.f32 %v2912, %v3220
      %v3299 = vadd.f32 %v2913, %v3225
      %v3300 = vadd.f32 %v2914, %v3230
      %v3301 = vadd.f32 %v2915, %v3235
      %v3302 = vadd.f32 %v2916, %v3240
      %v3303 = vadd.f32 %v2917, %v3245
      %v3304 = vadd.f32 %v2918, %v3250
      %v3305 = vadd.f32 %v2919, %v3255
      %v3306 = vadd.f32 %v2920, %v3260
      %v3307 = vadd.f32 %v2921, %v3265
      %v3308 = vadd.f32 %v2922, %v3270
      %v3309 = vadd.f32 %v2923, %v3275
      %v3310 = vld [vmem:[%s2537 + $0x2] sm:$0xff]
      %v3311 = vld [vmem:[%s2537 + $0xa] sm:$0xff]
      %v3312 = vld [vmem:[%s2537 + $0x1a] sm:$0xff]
      %v3313 = vld [vmem:[%s2537 + $0x22] sm:$0xff]
      %v3314 = vld [vmem:[%s2537 + $0x32] sm:$0xff]
      %v3315 = vld [vmem:[%s2537 + $0x3a] sm:$0xff]
      %v3316 = vld [vmem:[%s2537 + $0x4a] sm:$0xff]
      %v3317 = vld [vmem:[%s2537 + $0x52] sm:$0xff]
      %v3318 = vld [vmem:[%s2537 + $0x62] sm:$0xff]
      %v3319 = vld [vmem:[%s2537 + $0x6a] sm:$0xff]
      %v3320 = vld [vmem:[%s2537 + $0x7a] sm:$0xff]
      %v3321 = vld [vmem:[%s2537 + $0x82] sm:$0xff]
      %v3322 = vld [vmem:[%s2537 + $0x92] sm:$0xff]
      %v3323 = vld [vmem:[%s2537 + $0x9a] sm:$0xff]
      %v3324 = vld [vmem:[%s2537 + $0xaa] sm:$0xff]
      %v3325 = vld [vmem:[%s2537 + $0xb2] sm:$0xff]
      %v3326 = vld [vmem:[%s2537 + $0xc2] sm:$0xff]
      %v3327 = vld [vmem:[%s2537 + $0xca] sm:$0xff]
      %v3328 = vld [vmem:[%s2537 + $0xda] sm:$0xff]
      %v3329 = vld [vmem:[%s2537 + $0xe2] sm:$0xff]
      %v3330 = vld [vmem:[%s2537 + $0xf2] sm:$0xff]
      %v3331 = vld [vmem:[%s2537 + $0xfa] sm:$0xff]
      %v3332 = vld [vmem:[%s2537 + $0x10a] sm:$0xff]
      %v3333 = vld [vmem:[%s2537 + $0x112] sm:$0xff]
      %v3334 = vld [vmem:[%s2537 + $0x122] sm:$0xff]
      %v3335 = vld [vmem:[%s2537 + $0x12a] sm:$0xff]
      %v3336 = vld [vmem:[%s2537 + $0x13a] sm:$0xff]
      %v3337 = vld [vmem:[%s2537 + $0x142] sm:$0xff]
      %v3338 = vld [vmem:[%s2537 + $0x152] sm:$0xff]
      %v3339 = vld [vmem:[%s2537 + $0x15a] sm:$0xff]
      %v3340 = vld [vmem:[%s2537 + $0x16a] sm:$0xff]
      %v3341 = vld [vmem:[%s2537 + $0x172] sm:$0xff]
      %v3342 = vld [vmem:[%s1 + $0x40] sm:$0xff]
      %v3344 = vsel %vm349, %v3310, 0
      %v3347 = vsel %vm349, %v3311, 0
      %v3350 = vsel %vm349, %v3312, 0
      %v3353 = vsel %vm349, %v3313, 0
      %v3356 = vsel %vm349, %v3314, 0
      %v3359 = vsel %vm349, %v3315, 0
      %v3362 = vsel %vm349, %v3316, 0
      %v3365 = vsel %vm349, %v3317, 0
      %v3368 = vsel %vm349, %v3318, 0
      %v3371 = vsel %vm349, %v3319, 0
      %v3374 = vsel %vm349, %v3320, 0
      %v3377 = vsel %vm349, %v3321, 0
      %v3380 = vsel %vm349, %v3322, 0
      %v3383 = vsel %vm349, %v3323, 0
      %v3386 = vsel %vm349, %v3324, 0
      %v3389 = vsel %vm349, %v3325, 0
      %v3392 = vsel %vm349, %v3326, 0
      %v3395 = vsel %vm349, %v3327, 0
      %v3398 = vsel %vm349, %v3328, 0
      %v3401 = vsel %vm349, %v3329, 0
      %v3404 = vsel %vm349, %v3330, 0
      %v3407 = vsel %vm349, %v3331, 0
      %v3410 = vsel %vm349, %v3332, 0
      %v3413 = vsel %vm349, %v3333, 0
      %v3416 = vsel %vm349, %v3334, 0
      %v3419 = vsel %vm349, %v3335, 0
      %v3422 = vsel %vm349, %v3336, 0
      %v3425 = vsel %vm349, %v3337, 0
      %v3428 = vsel %vm349, %v3338, 0
      %v3431 = vsel %vm349, %v3339, 0
      %v3434 = vsel %vm349, %v3340, 0
      %v3437 = vsel %vm349, %v3341, 0
      %3439 = vmatprep.subr.mxu0 0.0
      %3440 = vmatpush1.msra.mxu0 %v3342
      %3441 = vmatprep.subr.mxu0 0.0
      %3442 = vmatpush1.msra.mxu0 0.0
      %3443 = vmatprep.subr.mxu0 0.0
      %3444 = vmatpush1.msra.mxu0 0.0
      %3445 = vmatprep.subr.mxu0 0.0
      %3446 = vmatpush1.msra.mxu0 0.0
      %3447 = vmatprep.subr.mxu0 0.0
      %3448 = vmatpush1.msra.mxu0 0.0
      %3449 = vmatprep.subr.mxu0 0.0
      %3450 = vmatpush1.msra.mxu0 0.0
      %3451 = vmatprep.subr.mxu0 0.0
      %3452 = vmatpush1.msra.mxu0 0.0
      %3453 = vmatprep.subr.mxu0 0.0
      %3454 = vmatpush1.msra.mxu0 0.0
      %3455 = vmatprep.subr.mxu0 0.0
      %3456 = vmatpush1.msra.mxu0 0.0
      %3457 = vmatprep.subr.mxu0 0.0
      %3458 = vmatpush1.msra.mxu0 0.0
      %3459 = vmatprep.subr.mxu0 0.0
      %3460 = vmatpush1.msra.mxu0 0.0
      %3461 = vmatprep.subr.mxu0 0.0
      %3462 = vmatpush1.msra.mxu0 0.0
      %3463 = vmatprep.subr.mxu0 0.0
      %3464 = vmatpush1.msra.mxu0 0.0
      %3465 = vmatprep.subr.mxu0 0.0
      %3466 = vmatpush1.msra.mxu0 0.0
      %3467 = vmatprep.subr.mxu0 0.0
      %3468 = vmatpush1.msra.mxu0 0.0
      %3469 = vmatprep.subr.mxu0 0.0
      %3470 = vmatpush1.msra.mxu0 0.0
      %3471 = vmatprep.subr.mxu0 0.0
      %3472 = vmatpush1.msra.mxu0 0.0
      %3473 = vmatprep.subr.mxu0 0.0
      %3474 = vmatpush1.msra.mxu0 0.0
      %3475 = vmatprep.subr.mxu0 0.0
      %3476 = vmatpush1.msra.mxu0 0.0
      %3477 = vmatprep.subr.mxu0 0.0
      %3478 = vmatpush1.msra.mxu0 0.0
      %3479 = vmatprep.subr.mxu0 0.0
      %3480 = vmatpush1.msra.mxu0 0.0
      %3481 = vmatprep.subr.mxu0 0.0
      %3482 = vmatpush1.msra.mxu0 0.0
      %3483 = vmatprep.subr.mxu0 0.0
      %3484 = vmatpush1.msra.mxu0 0.0
      %3485 = vmatprep.subr.mxu0 0.0
      %3486 = vmatpush1.msra.mxu0 0.0
      %3487 = vmatprep.subr.mxu0 0.0
      %3488 = vmatpush1.msra.mxu0 0.0
      %3489 = vmatprep.subr.mxu0 0.0
      %3490 = vmatpush1.msra.mxu0 0.0
      %3491 = vmatprep.subr.mxu0 0.0
      %3492 = vmatpush1.msra.mxu0 0.0
      %3493 = vmatprep.subr.mxu0 0.0
      %3494 = vmatpush1.msra.mxu0 0.0
      %3495 = vmatprep.subr.mxu0 0.0
      %3496 = vmatpush1.msra.mxu0 0.0
      %3497 = vmatprep.subr.mxu0 0.0
      %3498 = vmatpush1.msra.mxu0 0.0
      %3499 = vmatprep.subr.mxu0 0.0
      %3500 = vmatpush1.msra.mxu0 0.0
      %3501 = vmatprep.subr.mxu0 0.0
      %3502 = vmatpush1.msra.mxu0 0.0
      %3503 = vmatprep.mubr.f32.mxu0 0.0
      %3504 = vmatmul.mubr.f32.gmra.mrb[0].mxu0 %v3344
      %v3505 = vpop.f32.mrb[0].mxu0
      %v3506 = vadd.f32 0.0, %v3505
      %v3507 = vpop.f32.mrb[0].mxu0
      %3508 = vmatprep.mubr.f32.mxu0 0.0
      %3509 = vmatmul.mubr.f32.gmra.mrb[0].mxu0 %v3347
      %v3510 = vpop.f32.mrb[0].mxu0
      %v3511 = vadd.f32 0.0, %v3510
      %v3512 = vpop.f32.mrb[0].mxu0
      %3513 = vmatprep.mubr.f32.mxu0 0.0
      %3514 = vmatmul.mubr.f32.gmra.mrb[0].mxu0 %v3350
      %v3515 = vpop.f32.mrb[0].mxu0
      %v3516 = vadd.f32 0.0, %v3515
      %v3517 = vpop.f32.mrb[0].mxu0
      %3518 = vmatprep.mubr.f32.mxu0 0.0
      %3519 = vmatmul.mubr.f32.gmra.mrb[0].mxu0 %v3353
      %v3520 = vpop.f32.mrb[0].mxu0
      %v3521 = vadd.f32 0.0, %v3520
      %v3522 = vpop.f32.mrb[0].mxu0
      %3523 = vmatprep.mubr.f32.mxu0 0.0
      %3524 = vmatmul.mubr.f32.gmra.mrb[0].mxu0 %v3356
      %v3525 = vpop.f32.mrb[0].mxu0
      %v3526 = vadd.f32 0.0, %v3525
      %v3527 = vpop.f32.mrb[0].mxu0
      %3528 = vmatprep.mubr.f32.mxu0 0.0
      %3529 = vmatmul.mubr.f32.gmra.mrb[0].mxu0 %v3359
      %v3530 = vpop.f32.mrb[0].mxu0
      %v3531 = vadd.f32 0.0, %v3530
      %v3532 = vpop.f32.mrb[0].mxu0
      %3533 = vmatprep.mubr.f32.mxu0 0.0
      %3534 = vmatmul.mubr.f32.gmra.mrb[0].mxu0 %v3362
      %v3535 = vpop.f32.mrb[0].mxu0
      %v3536 = vadd.f32 0.0, %v3535
      %v3537 = vpop.f32.mrb[0].mxu0
      %3538 = vmatprep.mubr.f32.mxu0 0.0
      %3539 = vmatmul.mubr.f32.gmra.mrb[0].mxu0 %v3365
      %v3540 = vpop.f32.mrb[0].mxu0
      %v3541 = vadd.f32 0.0, %v3540
      %v3542 = vpop.f32.mrb[0].mxu0
      %3543 = vmatprep.mubr.f32.mxu0 0.0
      %3544 = vmatmul.mubr.f32.gmra.mrb[0].mxu0 %v3368
      %v3545 = vpop.f32.mrb[0].mxu0
      %v3546 = vadd.f32 0.0, %v3545
      %v3547 = vpop.f32.mrb[0].mxu0
      %3548 = vmatprep.mubr.f32.mxu0 0.0
      %3549 = vmatmul.mubr.f32.gmra.mrb[0].mxu0 %v3371
      %v3550 = vpop.f32.mrb[0].mxu0
      %v3551 = vadd.f32 0.0, %v3550
      %v3552 = vpop.f32.mrb[0].mxu0
      %3553 = vmatprep.mubr.f32.mxu0 0.0
      %3554 = vmatmul.mubr.f32.gmra.mrb[0].mxu0 %v3374
      %v3555 = vpop.f32.mrb[0].mxu0
      %v3556 = vadd.f32 0.0, %v3555
      %v3557 = vpop.f32.mrb[0].mxu0
      %3558 = vmatprep.mubr.f32.mxu0 0.0
      %3559 = vmatmul.mubr.f32.gmra.mrb[0].mxu0 %v3377
      %v3560 = vpop.f32.mrb[0].mxu0
      %v3561 = vadd.f32 0.0, %v3560
      %v3562 = vpop.f32.mrb[0].mxu0
      %3563 = vmatprep.mubr.f32.mxu0 0.0
      %3564 = vmatmul.mubr.f32.gmra.mrb[0].mxu0 %v3380
      %v3565 = vpop.f32.mrb[0].mxu0
      %v3566 = vadd.f32 0.0, %v3565
      %v3567 = vpop.f32.mrb[0].mxu0
      %3568 = vmatprep.mubr.f32.mxu0 0.0
      %3569 = vmatmul.mubr.f32.gmra.mrb[0].mxu0 %v3383
      %v3570 = vpop.f32.mrb[0].mxu0
      %v3571 = vadd.f32 0.0, %v3570
      %v3572 = vpop.f32.mrb[0].mxu0
      %3573 = vmatprep.mubr.f32.mxu0 0.0
      %3574 = vmatmul.mubr.f32.gmra.mrb[0].mxu0 %v3386
      %v3575 = vpop.f32.mrb[0].mxu0
      %v3576 = vadd.f32 0.0, %v3575
      %v3577 = vpop.f32.mrb[0].mxu0
      %3578 = vmatprep.mubr.f32.mxu0 0.0
      %3579 = vmatmul.mubr.f32.gmra.mrb[0].mxu0 %v3389
      %v3580 = vpop.f32.mrb[0].mxu0
      %v3581 = vadd.f32 0.0, %v3580
      %v3582 = vpop.f32.mrb[0].mxu0
      %3583 = vmatprep.mubr.f32.mxu0 0.0
      %3584 = vmatmul.mubr.f32.gmra.mrb[0].mxu0 %v3392
      %v3585 = vpop.f32.mrb[0].mxu0
      %v3586 = vadd.f32 0.0, %v3585
      %v3587 = vpop.f32.mrb[0].mxu0
      %3588 = vmatprep.mubr.f32.mxu0 0.0
      %3589 = vmatmul.mubr.f32.gmra.mrb[0].mxu0 %v3395
      %v3590 = vpop.f32.mrb[0].mxu0
      %v3591 = vadd.f32 0.0, %v3590
      %v3592 = vpop.f32.mrb[0].mxu0
      %3593 = vmatprep.mubr.f32.mxu0 0.0
      %3594 = vmatmul.mubr.f32.gmra.mrb[0].mxu0 %v3398
      %v3595 = vpop.f32.mrb[0].mxu0
      %v3596 = vadd.f32 0.0, %v3595
      %v3597 = vpop.f32.mrb[0].mxu0
      %3598 = vmatprep.mubr.f32.mxu0 0.0
      %3599 = vmatmul.mubr.f32.gmra.mrb[0].mxu0 %v3401
      %v3600 = vpop.f32.mrb[0].mxu0
      %v3601 = vadd.f32 0.0, %v3600
      %v3602 = vpop.f32.mrb[0].mxu0
      %3603 = vmatprep.mubr.f32.mxu0 0.0
      %3604 = vmatmul.mubr.f32.gmra.mrb[0].mxu0 %v3404
      %v3605 = vpop.f32.mrb[0].mxu0
      %v3606 = vadd.f32 0.0, %v3605
      %v3607 = vpop.f32.mrb[0].mxu0
      %3608 = vmatprep.mubr.f32.mxu0 0.0
      %3609 = vmatmul.mubr.f32.gmra.mrb[0].mxu0 %v3407
      %v3610 = vpop.f32.mrb[0].mxu0
      %v3611 = vadd.f32 0.0, %v3610
      %v3612 = vpop.f32.mrb[0].mxu0
      %3613 = vmatprep.mubr.f32.mxu0 0.0
      %3614 = vmatmul.mubr.f32.gmra.mrb[0].mxu0 %v3410
      %v3615 = vpop.f32.mrb[0].mxu0
      %v3616 = vadd.f32 0.0, %v3615
      %v3617 = vpop.f32.mrb[0].mxu0
      %3618 = vmatprep.mubr.f32.mxu0 0.0
      %3619 = vmatmul.mubr.f32.gmra.mrb[0].mxu0 %v3413
      %v3620 = vpop.f32.mrb[0].mxu0
      %v3621 = vadd.f32 0.0, %v3620
      %v3622 = vpop.f32.mrb[0].mxu0
      %3623 = vmatprep.mubr.f32.mxu0 0.0
      %3624 = vmatmul.mubr.f32.gmra.mrb[0].mxu0 %v3416
      %v3625 = vpop.f32.mrb[0].mxu0
      %v3626 = vadd.f32 0.0, %v3625
      %v3627 = vpop.f32.mrb[0].mxu0
      %3628 = vmatprep.mubr.f32.mxu0 0.0
      %3629 = vmatmul.mubr.f32.gmra.mrb[0].mxu0 %v3419
      %v3630 = vpop.f32.mrb[0].mxu0
      %v3631 = vadd.f32 0.0, %v3630
      %v3632 = vpop.f32.mrb[0].mxu0
      %3633 = vmatprep.mubr.f32.mxu0 0.0
      %3634 = vmatmul.mubr.f32.gmra.mrb[0].mxu0 %v3422
      %v3635 = vpop.f32.mrb[0].mxu0
      %v3636 = vadd.f32 0.0, %v3635
      %v3637 = vpop.f32.mrb[0].mxu0
      %3638 = vmatprep.mubr.f32.mxu0 0.0
      %3639 = vmatmul.mubr.f32.gmra.mrb[0].mxu0 %v3425
      %v3640 = vpop.f32.mrb[0].mxu0
      %v3641 = vadd.f32 0.0, %v3640
      %v3642 = vpop.f32.mrb[0].mxu0
      %3643 = vmatprep.mubr.f32.mxu0 0.0
      %3644 = vmatmul.mubr.f32.gmra.mrb[0].mxu0 %v3428
      %v3645 = vpop.f32.mrb[0].mxu0
      %v3646 = vadd.f32 0.0, %v3645
      %v3647 = vpop.f32.mrb[0].mxu0
      %3648 = vmatprep.mubr.f32.mxu0 0.0
      %3649 = vmatmul.mubr.f32.gmra.mrb[0].mxu0 %v3431
      %v3650 = vpop.f32.mrb[0].mxu0
      %v3651 = vadd.f32 0.0, %v3650
      %v3652 = vpop.f32.mrb[0].mxu0
      %3653 = vmatprep.mubr.f32.mxu0 0.0
      %3654 = vmatmul.mubr.f32.gmra.mrb[0].mxu0 %v3434
      %v3655 = vpop.f32.mrb[0].mxu0
      %v3656 = vadd.f32 0.0, %v3655
      %v3657 = vpop.f32.mrb[0].mxu0
      %3658 = vmatprep.mubr.f32.mxu0 0.0
      %3659 = vmatmul.mubr.f32.gmra.mrb[0].mxu0 %v3437
      %v3660 = vpop.f32.mrb[0].mxu0
      %v3661 = vadd.f32 0.0, %v3660
      %v3662 = vpop.f32.mrb[0].mxu0
      %3663 = vdwg.mxu0
      %v3664 = vadd.f32 %v3278, %v3506
      %v3665 = vadd.f32 %v3279, %v3511
      %v3666 = vadd.f32 %v3280, %v3516
      %v3667 = vadd.f32 %v3281, %v3521
      %v3668 = vadd.f32 %v3282, %v3526
      %v3669 = vadd.f32 %v3283, %v3531
      %v3670 = vadd.f32 %v3284, %v3536
      %v3671 = vadd.f32 %v3285, %v3541
      %v3672 = vadd.f32 %v3286, %v3546
      %v3673 = vadd.f32 %v3287, %v3551
      %v3674 = vadd.f32 %v3288, %v3556
      %v3675 = vadd.f32 %v3289, %v3561
      %v3676 = vadd.f32 %v3290, %v3566
      %v3677 = vadd.f32 %v3291, %v3571
      %v3678 = vadd.f32 %v3292, %v3576
      %v3679 = vadd.f32 %v3293, %v3581
      %v3680 = vadd.f32 %v3294, %v3586
      %v3681 = vadd.f32 %v3295, %v3591
      %v3682 = vadd.f32 %v3296, %v3596
      %v3683 = vadd.f32 %v3297, %v3601
      %v3684 = vadd.f32 %v3298, %v3606
      %v3685 = vadd.f32 %v3299, %v3611
      %v3686 = vadd.f32 %v3300, %v3616
      %v3687 = vadd.f32 %v3301, %v3621
      %v3688 = vadd.f32 %v3302, %v3626
      %v3689 = vadd.f32 %v3303, %v3631
      %v3690 = vadd.f32 %v3304, %v3636
      %v3691 = vadd.f32 %v3305, %v3641
      %v3692 = vadd.f32 %v3306, %v3646
      %v3693 = vadd.f32 %v3307, %v3651
      %v3694 = vadd.f32 %v3308, %v3656
      %v3695 = vadd.f32 %v3309, %v3661
      %v3697 = vlaneseq
      %v3698 = vshrl.u32 %v3697, 7
      %v3699 = vsub.s32 0, %v3698
      %v3700 = vrot.slane %v279, %v3699
      %v3702 = vmul.f32 %v3664, %v3700
      %v3703 = vmul.f32 %v3665, %v3700
      %v3704 = vmul.f32 %v3666, %v3700
      %v3705 = vmul.f32 %v3667, %v3700
      %v3706 = vmul.f32 %v3668, %v3700
      %v3707 = vmul.f32 %v3669, %v3700
      %v3708 = vmul.f32 %v3670, %v3700
      %v3709 = vmul.f32 %v3671, %v3700
      %v3710 = vmul.f32 %v3672, %v3700
      %v3711 = vmul.f32 %v3673, %v3700
      %v3712 = vmul.f32 %v3674, %v3700
      %v3713 = vmul.f32 %v3675, %v3700
      %v3714 = vmul.f32 %v3676, %v3700
      %v3715 = vmul.f32 %v3677, %v3700
      %v3716 = vmul.f32 %v3678, %v3700
      %v3717 = vmul.f32 %v3679, %v3700
      %v3718 = vmul.f32 %v3680, %v3700
      %v3719 = vmul.f32 %v3681, %v3700
      %v3720 = vmul.f32 %v3682, %v3700
      %v3721 = vmul.f32 %v3683, %v3700
      %v3722 = vmul.f32 %v3684, %v3700
      %v3723 = vmul.f32 %v3685, %v3700
      %v3724 = vmul.f32 %v3686, %v3700
      %v3725 = vmul.f32 %v3687, %v3700
      %v3726 = vmul.f32 %v3688, %v3700
      %v3727 = vmul.f32 %v3689, %v3700
      %v3728 = vmul.f32 %v3690, %v3700
      %v3729 = vmul.f32 %v3691, %v3700
      %v3730 = vmul.f32 %v3692, %v3700
      %v3731 = vmul.f32 %v3693, %v3700
      %v3732 = vmul.f32 %v3694, %v3700
      %v3733 = vmul.f32 %v3695, %v3700
      %v3735 = vlaneseq
      %v3736 = vshrl.u32 %v3735, 7
      %v3737 = vsub.s32 0, %v3736
      %v3738 = vrot.slane %v280, %v3737
      %v3740 = vadd.f32 %v3702, %v3738
      %v3741 = vadd.f32 %v3703, %v3738
      %v3742 = vadd.f32 %v3704, %v3738
      %v3743 = vadd.f32 %v3705, %v3738
      %v3744 = vadd.f32 %v3706, %v3738
      %v3745 = vadd.f32 %v3707, %v3738
      %v3746 = vadd.f32 %v3708, %v3738
      %v3747 = vadd.f32 %v3709, %v3738
      %v3748 = vadd.f32 %v3710, %v3738
      %v3749 = vadd.f32 %v3711, %v3738
      %v3750 = vadd.f32 %v3712, %v3738
      %v3751 = vadd.f32 %v3713, %v3738
      %v3752 = vadd.f32 %v3714, %v3738
      %v3753 = vadd.f32 %v3715, %v3738
      %v3754 = vadd.f32 %v3716, %v3738
      %v3755 = vadd.f32 %v3717, %v3738
      %v3756 = vadd.f32 %v3718, %v3738
      %v3757 = vadd.f32 %v3719, %v3738
      %v3758 = vadd.f32 %v3720, %v3738
      %v3759 = vadd.f32 %v3721, %v3738
      %v3760 = vadd.f32 %v3722, %v3738
      %v3761 = vadd.f32 %v3723, %v3738
      %v3762 = vadd.f32 %v3724, %v3738
      %v3763 = vadd.f32 %v3725, %v3738
      %v3764 = vadd.f32 %v3726, %v3738
      %v3765 = vadd.f32 %v3727, %v3738
      %v3766 = vadd.f32 %v3728, %v3738
      %v3767 = vadd.f32 %v3729, %v3738
      %v3768 = vadd.f32 %v3730, %v3738
      %v3769 = vadd.f32 %v3731, %v3738
      %v3770 = vadd.f32 %v3732, %v3738
      %v3771 = vadd.f32 %v3733, %v3738
      %v3772 = vmax.f32 %v3740, 0.0
      %v3773 = vmax.f32 %v3741, 0.0
      %v3774 = vmax.f32 %v3742, 0.0
      %v3775 = vmax.f32 %v3743, 0.0
      %v3776 = vmax.f32 %v3744, 0.0
      %v3777 = vmax.f32 %v3745, 0.0
      %v3778 = vmax.f32 %v3746, 0.0
      %v3779 = vmax.f32 %v3747, 0.0
      %v3780 = vmax.f32 %v3748, 0.0
      %v3781 = vmax.f32 %v3749, 0.0
      %v3782 = vmax.f32 %v3750, 0.0
      %v3783 = vmax.f32 %v3751, 0.0
      %v3784 = vmax.f32 %v3752, 0.0
      %v3785 = vmax.f32 %v3753, 0.0
      %v3786 = vmax.f32 %v3754, 0.0
      %v3787 = vmax.f32 %v3755, 0.0
      %v3788 = vmax.f32 %v3756, 0.0
      %v3789 = vmax.f32 %v3757, 0.0
      %v3790 = vmax.f32 %v3758, 0.0
      %v3791 = vmax.f32 %v3759, 0.0
      %v3792 = vmax.f32 %v3760, 0.0
      %v3793 = vmax.f32 %v3761, 0.0
      %v3794 = vmax.f32 %v3762, 0.0
      %v3795 = vmax.f32 %v3763, 0.0
      %v3796 = vmax.f32 %v3764, 0.0
      %v3797 = vmax.f32 %v3765, 0.0
      %v3798 = vmax.f32 %v3766, 0.0
      %v3799 = vmax.f32 %v3767, 0.0
      %v3800 = vmax.f32 %v3768, 0.0
      %v3801 = vmax.f32 %v3769, 0.0
      %v3802 = vmax.f32 %v3770, 0.0
      %v3803 = vmax.f32 %v3771, 0.0
      %3804 = vst.msk [vmem:[#allocation2] sm:$0xff] %vm349, 0.0
      %3805 = vst.msk [vmem:[#allocation2 + $0x8] sm:$0xff] %vm349, 0.0
      %vm3806 = vcmask 58368
      %3807 = vst.msk [vmem:[#allocation2 + $0x10] sm:$0x3] %vm3806, 0.0
      %3808 = vst.msk [vmem:[#allocation2 + $0x18] sm:$0xff] %vm349, 0.0
      %3809 = vst.msk [vmem:[#allocation2 + $0x20] sm:$0xff] %vm349, 0.0
      %3810 = vst.msk [vmem:[#allocation2 + $0x28] sm:$0x3] %vm3806, 0.0
      %3811 = vst.msk [vmem:[#allocation2 + $0x30] sm:$0xff] %vm349, 0.0
      %3812 = vst.msk [vmem:[#allocation2 + $0x38] sm:$0xff] %vm349, 0.0
      %3813 = vst.msk [vmem:[#allocation2 + $0x40] sm:$0x3] %vm3806, 0.0
      %3814 = vst.msk [vmem:[#allocation2 + $0x48] sm:$0xff] %vm349, 0.0
      %3815 = vst.msk [vmem:[#allocation2 + $0x50] sm:$0xff] %vm349, 0.0
      %3816 = vst.msk [vmem:[#allocation2 + $0x58] sm:$0x3] %vm3806, 0.0
      %3817 = vst.msk [vmem:[#allocation2 + $0x60] sm:$0xff] %vm349, 0.0
      %3818 = vst.msk [vmem:[#allocation2 + $0x68] sm:$0xff] %vm349, 0.0
      %3819 = vst.msk [vmem:[#allocation2 + $0x70] sm:$0x3] %vm3806, 0.0
      %3820 = vst.msk [vmem:[#allocation2 + $0x78] sm:$0xff] %vm349, 0.0
      %3821 = vst.msk [vmem:[#allocation2 + $0x80] sm:$0xff] %vm349, 0.0
      %3822 = vst.msk [vmem:[#allocation2 + $0x88] sm:$0x3] %vm3806, 0.0
      %3823 = vst.msk [vmem:[#allocation2 + $0x90] sm:$0xff] %vm349, 0.0
      %3824 = vst.msk [vmem:[#allocation2 + $0x98] sm:$0xff] %vm349, 0.0
      %3825 = vst.msk [vmem:[#allocation2 + $0xa0] sm:$0x3] %vm3806, 0.0
      %3826 = vst.msk [vmem:[#allocation2 + $0xa8] sm:$0xff] %vm349, 0.0
      %3827 = vst.msk [vmem:[#allocation2 + $0xb0] sm:$0xff] %vm349, 0.0
      %3828 = vst.msk [vmem:[#allocation2 + $0xb8] sm:$0x3] %vm3806, 0.0
      %3829 = vst.msk [vmem:[#allocation2 + $0xc0] sm:$0xff] %vm349, 0.0
      %3830 = vst.msk [vmem:[#allocation2 + $0xc8] sm:$0xff] %vm349, 0.0
      %3831 = vst.msk [vmem:[#allocation2 + $0xd0] sm:$0x3] %vm3806, 0.0
      %3832 = vst.msk [vmem:[#allocation2 + $0xd8] sm:$0xff] %vm349, 0.0
      %3833 = vst.msk [vmem:[#allocation2 + $0xe0] sm:$0xff] %vm349, 0.0
      %3834 = vst.msk [vmem:[#allocation2 + $0xe8] sm:$0x3] %vm3806, 0.0
      %3835 = vst.msk [vmem:[#allocation2 + $0xf0] sm:$0xff] %vm349, 0.0
      %3836 = vst.msk [vmem:[#allocation2 + $0xf8] sm:$0xff] %vm349, 0.0
      %3837 = vst.msk [vmem:[#allocation2 + $0x100] sm:$0x3] %vm3806, 0.0
      %3838 = vst.msk [vmem:[#allocation2 + $0x108] sm:$0xff] %vm349, 0.0
      %3839 = vst.msk [vmem:[#allocation2 + $0x110] sm:$0xff] %vm349, 0.0
      %3840 = vst.msk [vmem:[#allocation2 + $0x118] sm:$0x3] %vm3806, 0.0
      %3841 = vst.msk [vmem:[#allocation2 + $0x120] sm:$0xff] %vm349, 0.0
      %3842 = vst.msk [vmem:[#allocation2 + $0x128] sm:$0xff] %vm349, 0.0
      %3843 = vst.msk [vmem:[#allocation2 + $0x130] sm:$0x3] %vm3806, 0.0
      %3844 = vst.msk [vmem:[#allocation2 + $0x138] sm:$0xff] %vm349, 0.0
      %3845 = vst.msk [vmem:[#allocation2 + $0x140] sm:$0xff] %vm349, 0.0
      %3846 = vst.msk [vmem:[#allocation2 + $0x148] sm:$0x3] %vm3806, 0.0
      %3847 = vst.msk [vmem:[#allocation2 + $0x150] sm:$0xff] %vm349, 0.0
      %3848 = vst.msk [vmem:[#allocation2 + $0x158] sm:$0xff] %vm349, 0.0
      %3849 = vst.msk [vmem:[#allocation2 + $0x160] sm:$0x3] %vm3806, 0.0
      %3850 = vst.msk [vmem:[#allocation2 + $0x168] sm:$0xff] %vm349, 0.0
      %3851 = vst.msk [vmem:[#allocation2 + $0x170] sm:$0xff] %vm349, 0.0
      %3852 = vst.msk [vmem:[#allocation2 + $0x178] sm:$0x3] %vm3806, 0.0
      %3853 = vst.msk [vmem:[#allocation2 + $0x180] sm:$0xff] %vm349, 0.0
      %3854 = vst.msk [vmem:[#allocation2 + $0x188] sm:$0xff] %vm349, 0.0
      %3855 = vst.msk [vmem:[#allocation2 + $0x190] sm:$0x3] %vm3806, 0.0
      %3856 = vst.msk [vmem:[#allocation2 + $0x198] sm:$0xff] %vm349, 0.0
      %3857 = vst.msk [vmem:[#allocation2 + $0x1a0] sm:$0xff] %vm349, 0.0
      %3858 = vst.msk [vmem:[#allocation2 + $0x1a8] sm:$0x3] %vm3806, 0.0
      %s3859 = scalar_lea.vmem [#allocation2], 24
      %3860 = vst.msk [vmem:[%s3859 + $0x1] sm:$0xff] %vm349, %v3772
      %3861 = vst.msk [vmem:[%s3859 + $0x9] sm:$0xff] %vm349, %v3773
      %3862 = vst.msk [vmem:[%s3859 + $0x19] sm:$0xff] %vm349, %v3774
      %3863 = vst.msk [vmem:[%s3859 + $0x21] sm:$0xff] %vm349, %v3775
      %3864 = vst.msk [vmem:[%s3859 + $0x31] sm:$0xff] %vm349, %v3776
      %3865 = vst.msk [vmem:[%s3859 + $0x39] sm:$0xff] %vm349, %v3777
      %3866 = vst.msk [vmem:[%s3859 + $0x49] sm:$0xff] %vm349, %v3778
      %3867 = vst.msk [vmem:[%s3859 + $0x51] sm:$0xff] %vm349, %v3779
      %3868 = vst.msk [vmem:[%s3859 + $0x61] sm:$0xff] %vm349, %v3780
      %3869 = vst.msk [vmem:[%s3859 + $0x69] sm:$0xff] %vm349, %v3781
      %3870 = vst.msk [vmem:[%s3859 + $0x79] sm:$0xff] %vm349, %v3782
      %3871 = vst.msk [vmem:[%s3859 + $0x81] sm:$0xff] %vm349, %v3783
      %3872 = vst.msk [vmem:[%s3859 + $0x91] sm:$0xff] %vm349, %v3784
      %3873 = vst.msk [vmem:[%s3859 + $0x99] sm:$0xff] %vm349, %v3785
      %3874 = vst.msk [vmem:[%s3859 + $0xa9] sm:$0xff] %vm349, %v3786
      %3875 = vst.msk [vmem:[%s3859 + $0xb1] sm:$0xff] %vm349, %v3787
      %3876 = vst.msk [vmem:[%s3859 + $0xc1] sm:$0xff] %vm349, %v3788
      %3877 = vst.msk [vmem:[%s3859 + $0xc9] sm:$0xff] %vm349, %v3789
      %3878 = vst.msk [vmem:[%s3859 + $0xd9] sm:$0xff] %vm349, %v3790
      %3879 = vst.msk [vmem:[%s3859 + $0xe1] sm:$0xff] %vm349, %v3791
      %3880 = vst.msk [vmem:[%s3859 + $0xf1] sm:$0xff] %vm349, %v3792
      %3881 = vst.msk [vmem:[%s3859 + $0xf9] sm:$0xff] %vm349, %v3793
      %3882 = vst.msk [vmem:[%s3859 + $0x109] sm:$0xff] %vm349, %v3794
      %3883 = vst.msk [vmem:[%s3859 + $0x111] sm:$0xff] %vm349, %v3795
      %3884 = vst.msk [vmem:[%s3859 + $0x121] sm:$0xff] %vm349, %v3796
      %3885 = vst.msk [vmem:[%s3859 + $0x129] sm:$0xff] %vm349, %v3797
      %3886 = vst.msk [vmem:[%s3859 + $0x139] sm:$0xff] %vm349, %v3798
      %3887 = vst.msk [vmem:[%s3859 + $0x141] sm:$0xff] %vm349, %v3799
      %3888 = vst.msk [vmem:[%s3859 + $0x151] sm:$0xff] %vm349, %v3800
      %3889 = vst.msk [vmem:[%s3859 + $0x159] sm:$0xff] %vm349, %v3801
      %3890 = vst.msk [vmem:[%s3859 + $0x169] sm:$0xff] %vm349, %v3802
      %3891 = vst.msk [vmem:[%s3859 + $0x171] sm:$0xff] %vm349, %v3803
      %v3892 = vld [vmem:[#allocation2] sm:$0xff]
      %v3893 = vld [vmem:[#allocation2 + $0x8] sm:$0xff]
      %v3894 = vld [vmem:[#allocation2 + $0x18] sm:$0xff]
      %v3895 = vld [vmem:[#allocation2 + $0x20] sm:$0xff]
      %v3896 = vld [vmem:[#allocation2 + $0x30] sm:$0xff]
      %v3897 = vld [vmem:[#allocation2 + $0x38] sm:$0xff]
      %v3898 = vld [vmem:[#allocation2 + $0x48] sm:$0xff]
      %v3899 = vld [vmem:[#allocation2 + $0x50] sm:$0xff]
      %v3900 = vld [vmem:[#allocation2 + $0x60] sm:$0xff]
      %v3901 = vld [vmem:[#allocation2 + $0x68] sm:$0xff]
      %v3902 = vld [vmem:[#allocation2 + $0x78] sm:$0xff]
      %v3903 = vld [vmem:[#allocation2 + $0x80] sm:$0xff]
      %v3904 = vld [vmem:[#allocation2 + $0x90] sm:$0xff]
      %v3905 = vld [vmem:[#allocation2 + $0x98] sm:$0xff]
      %v3906 = vld [vmem:[#allocation2 + $0xa8] sm:$0xff]
      %v3907 = vld [vmem:[#allocation2 + $0xb0] sm:$0xff]
      %v3908 = vld [vmem:[#allocation2 + $0xc0] sm:$0xff]
      %v3909 = vld [vmem:[#allocation2 + $0xc8] sm:$0xff]
      %v3910 = vld [vmem:[#allocation2 + $0xd8] sm:$0xff]
      %v3911 = vld [vmem:[#allocation2 + $0xe0] sm:$0xff]
      %v3912 = vld [vmem:[#allocation2 + $0xf0] sm:$0xff]
      %v3913 = vld [vmem:[#allocation2 + $0xf8] sm:$0xff]
      %v3914 = vld [vmem:[#allocation2 + $0x108] sm:$0xff]
      %v3915 = vld [vmem:[#allocation2 + $0x110] sm:$0xff]
      %v3916 = vld [vmem:[#allocation2 + $0x120] sm:$0xff]
      %v3917 = vld [vmem:[#allocation2 + $0x128] sm:$0xff]
      %v3918 = vld [vmem:[#allocation2 + $0x138] sm:$0xff]
      %v3919 = vld [vmem:[#allocation2 + $0x140] sm:$0xff]
      %v3920 = vld [vmem:[#allocation2 + $0x150] sm:$0xff]
      %v3921 = vld [vmem:[#allocation2 + $0x158] sm:$0xff]
      %v3922 = vld [vmem:[#allocation2 + $0x168] sm:$0xff]
      %v3923 = vld [vmem:[#allocation2 + $0x170] sm:$0xff]
      %v3924 = vld [vmem:[%s4] sm:$0xff]
      %v3925 = vld [vmem:[#allocation2 + $0x1] sm:$0xff]
      %v3926 = vld [vmem:[#allocation2 + $0x9] sm:$0xff]
      %v3927 = vld [vmem:[#allocation2 + $0x19] sm:$0xff]
      %v3928 = vld [vmem:[#allocation2 + $0x21] sm:$0xff]
      %v3929 = vld [vmem:[#allocation2 + $0x31] sm:$0xff]
      %v3930 = vld [vmem:[#allocation2 + $0x39] sm:$0xff]
      %v3931 = vld [vmem:[#allocation2 + $0x49] sm:$0xff]
      %v3932 = vld [vmem:[#allocation2 + $0x51] sm:$0xff]
      %v3933 = vld [vmem:[#allocation2 + $0x61] sm:$0xff]
      %v3934 = vld [vmem:[#allocation2 + $0x69] sm:$0xff]
      %v3935 = vld [vmem:[#allocation2 + $0x79] sm:$0xff]
      %v3936 = vld [vmem:[#allocation2 + $0x81] sm:$0xff]
      %v3937 = vld [vmem:[#allocation2 + $0x91] sm:$0xff]
      %v3938 = vld [vmem:[#allocation2 + $0x99] sm:$0xff]
      %v3939 = vld [vmem:[#allocation2 + $0xa9] sm:$0xff]
      %v3940 = vld [vmem:[#allocation2 + $0xb1] sm:$0xff]
      %v3941 = vld [vmem:[#allocation2 + $0xc1] sm:$0xff]
      %v3942 = vld [vmem:[#allocation2 + $0xc9] sm:$0xff]
      %v3943 = vld [vmem:[#allocation2 + $0xd9] sm:$0xff]
      %v3944 = vld [vmem:[#allocation2 + $0xe1] sm:$0xff]
      %v3945 = vld [vmem:[#allocation2 + $0xf1] sm:$0xff]
      %v3946 = vld [vmem:[#allocation2 + $0xf9] sm:$0xff]
      %v3947 = vld [vmem:[#allocation2 + $0x109] sm:$0xff]
      %v3948 = vld [vmem:[#allocation2 + $0x111] sm:$0xff]
      %v3949 = vld [vmem:[#allocation2 + $0x121] sm:$0xff]
      %v3950 = vld [vmem:[#allocation2 + $0x129] sm:$0xff]
      %v3951 = vld [vmem:[#allocation2 + $0x139] sm:$0xff]
      %v3952 = vld [vmem:[#allocation2 + $0x141] sm:$0xff]
      %v3953 = vld [vmem:[#allocation2 + $0x151] sm:$0xff]
      %v3954 = vld [vmem:[#allocation2 + $0x159] sm:$0xff]
      %v3955 = vld [vmem:[#allocation2 + $0x169] sm:$0xff]
      %v3956 = vld [vmem:[#allocation2 + $0x171] sm:$0xff]
      %v3957 = vld [vmem:[%s4 + $0x8] sm:$0xff]
      %v3959 = vsel %vm349, %v3925, 0
      %v3962 = vsel %vm349, %v3926, 0
      %v3965 = vsel %vm349, %v3927, 0
      %v3968 = vsel %vm349, %v3928, 0
      %v3971 = vsel %vm349, %v3929, 0
      %v3974 = vsel %vm349, %v3930, 0
      %v3977 = vsel %vm349, %v3931, 0
      %v3980 = vsel %vm349, %v3932, 0
      %v3983 = vsel %vm349, %v3933, 0
      %v3986 = vsel %vm349, %v3934, 0
      %v3989 = vsel %vm349, %v3935, 0
      %v3992 = vsel %vm349, %v3936, 0
      %v3995 = vsel %vm349, %v3937, 0
      %v3998 = vsel %vm349, %v3938, 0
      %v4001 = vsel %vm349, %v3939, 0
      %v4004 = vsel %vm349, %v3940, 0
      %v4007 = vsel %vm349, %v3941, 0
      %v4010 = vsel %vm349, %v3942, 0
      %v4013 = vsel %vm349, %v3943, 0
      %v4016 = vsel %vm349, %v3944, 0
      %v4019 = vsel %vm349, %v3945, 0
      %v4022 = vsel %vm349, %v3946, 0
      %v4025 = vsel %vm349, %v3947, 0
      %v4028 = vsel %vm349, %v3948, 0
      %v4031 = vsel %vm349, %v3949, 0
      %v4034 = vsel %vm349, %v3950, 0
      %v4037 = vsel %vm349, %v3951, 0
      %v4040 = vsel %vm349, %v3952, 0
      %v4043 = vsel %vm349, %v3953, 0
      %v4046 = vsel %vm349, %v3954, 0
      %v4049 = vsel %vm349, %v3955, 0
      %v4052 = vsel %vm349, %v3956, 0
      %4054 = vmatprep.subr.mxu0 0.0
      %4055 = vmatpush1.msra.mxu0 %v3957
      %4056 = vmatprep.subr.mxu0 0.0
      %4057 = vmatpush1.msra.mxu0 0.0
      %4058 = vmatprep.subr.mxu0 0.0
      %4059 = vmatpush1.msra.mxu0 0.0
      %4060 = vmatprep.subr.mxu0 0.0
      %4061 = vmatpush1.msra.mxu0 0.0
      %4062 = vmatprep.subr.mxu0 0.0
      %4063 = vmatpush1.msra.mxu0 0.0
      %4064 = vmatprep.subr.mxu0 0.0
      %4065 = vmatpush1.msra.mxu0 0.0
      %4066 = vmatprep.subr.mxu0 0.0
      %4067 = vmatpush1.msra.mxu0 0.0
      %4068 = vmatprep.subr.mxu0 0.0
      %4069 = vmatpush1.msra.mxu0 0.0
      %4070 = vmatprep.subr.mxu0 0.0
      %4071 = vmatpush1.msra.mxu0 0.0
      %4072 = vmatprep.subr.mxu0 0.0
      %4073 = vmatpush1.msra.mxu0 0.0
      %4074 = vmatprep.subr.mxu0 0.0
      %4075 = vmatpush1.msra.mxu0 0.0
      %4076 = vmatprep.subr.mxu0 0.0
      %4077 = vmatpush1.msra.mxu0 0.0
      %4078 = vmatprep.subr.mxu0 0.0
      %4079 = vmatpush1.msra.mxu0 0.0
      %4080 = vmatprep.subr.mxu0 0.0
      %4081 = vmatpush1.msra.mxu0 0.0
      %4082 = vmatprep.subr.mxu0 0.0
      %4083 = vmatpush1.msra.mxu0 0.0
      %4084 = vmatprep.subr.mxu0 0.0
      %4085 = vmatpush1.msra.mxu0 0.0
      %4086 = vmatprep.subr.mxu0 0.0
      %4087 = vmatpush1.msra.mxu0 0.0
      %4088 = vmatprep.subr.mxu0 0.0
      %4089 = vmatpush1.msra.mxu0 0.0
      %4090 = vmatprep.subr.mxu0 0.0
      %4091 = vmatpush1.msra.mxu0 0.0
      %4092 = vmatprep.subr.mxu0 0.0
      %4093 = vmatpush1.msra.mxu0 0.0
      %4094 = vmatprep.subr.mxu0 0.0
      %4095 = vmatpush1.msra.mxu0 0.0
      %4096 = vmatprep.subr.mxu0 0.0
      %4097 = vmatpush1.msra.mxu0 0.0
      %4098 = vmatprep.subr.mxu0 0.0
      %4099 = vmatpush1.msra.mxu0 0.0
      %4100 = vmatprep.subr.mxu0 0.0
      %4101 = vmatpush1.msra.mxu0 0.0
      %4102 = vmatprep.subr.mxu0 0.0
      %4103 = vmatpush1.msra.mxu0 0.0
      %4104 = vmatprep.subr.mxu0 0.0
      %4105 = vmatpush1.msra.mxu0 0.0
      %4106 = vmatprep.subr.mxu0 0.0
      %4107 = vmatpush1.msra.mxu0 0.0
      %4108 = vmatprep.subr.mxu0 0.0
      %4109 = vmatpush1.msra.mxu0 0.0
      %4110 = vmatprep.subr.mxu0 0.0
      %4111 = vmatpush1.msra.mxu0 0.0
      %4112 = vmatprep.subr.mxu0 0.0
      %4113 = vmatpush1.msra.mxu0 0.0
      %4114 = vmatprep.subr.mxu0 0.0
      %4115 = vmatpush1.msra.mxu0 0.0
      %4116 = vmatprep.subr.mxu0 0.0
      %4117 = vmatpush1.msra.mxu0 0.0
      %4118 = vmatprep.mubr.f32.mxu0 0.0
      %4119 = vmatmul.mubr.f32.gmra.mrb[0].mxu0 %v3959
      %v4120 = vpop.f32.mrb[0].mxu0
      %v4121 = vadd.f32 0.0, %v4120
      %v4122 = vpop.f32.mrb[0].mxu0
      %4123 = vmatprep.mubr.f32.mxu0 0.0
      %4124 = vmatmul.mubr.f32.gmra.mrb[0].mxu0 %v3962
      %v4125 = vpop.f32.mrb[0].mxu0
      %v4126 = vadd.f32 0.0, %v4125
      %v4127 = vpop.f32.mrb[0].mxu0
      %4128 = vmatprep.mubr.f32.mxu0 0.0
      %4129 = vmatmul.mubr.f32.gmra.mrb[0].mxu0 %v3965
      %v4130 = vpop.f32.mrb[0].mxu0
      %v4131 = vadd.f32 0.0, %v4130
      %v4132 = vpop.f32.mrb[0].mxu0
      %4133 = vmatprep.mubr.f32.mxu0 0.0
      %4134 = vmatmul.mubr.f32.gmra.mrb[0].mxu0 %v3968
      %v4135 = vpop.f32.mrb[0].mxu0
      %v4136 = vadd.f32 0.0, %v4135
      %v4137 = vpop.f32.mrb[0].mxu0
      %4138 = vmatprep.mubr.f32.mxu0 0.0
      %4139 = vmatmul.mubr.f32.gmra.mrb[0].mxu0 %v3971
      %v4140 = vpop.f32.mrb[0].mxu0
      %v4141 = vadd.f32 0.0, %v4140
      %v4142 = vpop.f32.mrb[0].mxu0
      %4143 = vmatprep.mubr.f32.mxu0 0.0
      %4144 = vmatmul.mubr.f32.gmra.mrb[0].mxu0 %v3974
      %v4145 = vpop.f32.mrb[0].mxu0
      %v4146 = vadd.f32 0.0, %v4145
      %v4147 = vpop.f32.mrb[0].mxu0
      %4148 = vmatprep.mubr.f32.mxu0 0.0
      %4149 = vmatmul.mubr.f32.gmra.mrb[0].mxu0 %v3977
      %v4150 = vpop.f32.mrb[0].mxu0
      %v4151 = vadd.f32 0.0, %v4150
      %v4152 = vpop.f32.mrb[0].mxu0
      %4153 = vmatprep.mubr.f32.mxu0 0.0
      %4154 = vmatmul.mubr.f32.gmra.mrb[0].mxu0 %v3980
      %v4155 = vpop.f32.mrb[0].mxu0
      %v4156 = vadd.f32 0.0, %v4155
      %v4157 = vpop.f32.mrb[0].mxu0
      %4158 = vmatprep.mubr.f32.mxu0 0.0
      %4159 = vmatmul.mubr.f32.gmra.mrb[0].mxu0 %v3983
      %v4160 = vpop.f32.mrb[0].mxu0
      %v4161 = vadd.f32 0.0, %v4160
      %v4162 = vpop.f32.mrb[0].mxu0
      %4163 = vmatprep.mubr.f32.mxu0 0.0
      %4164 = vmatmul.mubr.f32.gmra.mrb[0].mxu0 %v3986
      %v4165 = vpop.f32.mrb[0].mxu0
      %v4166 = vadd.f32 0.0, %v4165
      %v4167 = vpop.f32.mrb[0].mxu0
      %4168 = vmatprep.mubr.f32.mxu0 0.0
      %4169 = vmatmul.mubr.f32.gmra.mrb[0].mxu0 %v3989
      %v4170 = vpop.f32.mrb[0].mxu0
      %v4171 = vadd.f32 0.0, %v4170
      %v4172 = vpop.f32.mrb[0].mxu0
      %4173 = vmatprep.mubr.f32.mxu0 0.0
      %4174 = vmatmul.mubr.f32.gmra.mrb[0].mxu0 %v3992
      %v4175 = vpop.f32.mrb[0].mxu0
      %v4176 = vadd.f32 0.0, %v4175
      %v4177 = vpop.f32.mrb[0].mxu0
      %4178 = vmatprep.mubr.f32.mxu0 0.0
      %4179 = vmatmul.mubr.f32.gmra.mrb[0].mxu0 %v3995
      %v4180 = vpop.f32.mrb[0].mxu0
      %v4181 = vadd.f32 0.0, %v4180
      %v4182 = vpop.f32.mrb[0].mxu0
      %4183 = vmatprep.mubr.f32.mxu0 0.0
      %4184 = vmatmul.mubr.f32.gmra.mrb[0].mxu0 %v3998
      %v4185 = vpop.f32.mrb[0].mxu0
      %v4186 = vadd.f32 0.0, %v4185
      %v4187 = vpop.f32.mrb[0].mxu0
      %4188 = vmatprep.mubr.f32.mxu0 0.0
      %4189 = vmatmul.mubr.f32.gmra.mrb[0].mxu0 %v4001
      %v4190 = vpop.f32.mrb[0].mxu0
      %v4191 = vadd.f32 0.0, %v4190
      %v4192 = vpop.f32.mrb[0].mxu0
      %4193 = vmatprep.mubr.f32.mxu0 0.0
      %4194 = vmatmul.mubr.f32.gmra.mrb[0].mxu0 %v4004
      %v4195 = vpop.f32.mrb[0].mxu0
      %v4196 = vadd.f32 0.0, %v4195
      %v4197 = vpop.f32.mrb[0].mxu0
      %4198 = vmatprep.mubr.f32.mxu0 0.0
      %4199 = vmatmul.mubr.f32.gmra.mrb[0].mxu0 %v4007
      %v4200 = vpop.f32.mrb[0].mxu0
      %v4201 = vadd.f32 0.0, %v4200
      %v4202 = vpop.f32.mrb[0].mxu0
      %4203 = vmatprep.mubr.f32.mxu0 0.0
      %4204 = vmatmul.mubr.f32.gmra.mrb[0].mxu0 %v4010
      %v4205 = vpop.f32.mrb[0].mxu0
      %v4206 = vadd.f32 0.0, %v4205
      %v4207 = vpop.f32.mrb[0].mxu0
      %4208 = vmatprep.mubr.f32.mxu0 0.0
      %4209 = vmatmul.mubr.f32.gmra.mrb[0].mxu0 %v4013
      %v4210 = vpop.f32.mrb[0].mxu0
      %v4211 = vadd.f32 0.0, %v4210
      %v4212 = vpop.f32.mrb[0].mxu0
      %4213 = vmatprep.mubr.f32.mxu0 0.0
      %4214 = vmatmul.mubr.f32.gmra.mrb[0].mxu0 %v4016
      %v4215 = vpop.f32.mrb[0].mxu0
      %v4216 = vadd.f32 0.0, %v4215
      %v4217 = vpop.f32.mrb[0].mxu0
      %4218 = vmatprep.mubr.f32.mxu0 0.0
      %4219 = vmatmul.mubr.f32.gmra.mrb[0].mxu0 %v4019
      %v4220 = vpop.f32.mrb[0].mxu0
      %v4221 = vadd.f32 0.0, %v4220
      %v4222 = vpop.f32.mrb[0].mxu0
      %4223 = vmatprep.mubr.f32.mxu0 0.0
      %4224 = vmatmul.mubr.f32.gmra.mrb[0].mxu0 %v4022
      %v4225 = vpop.f32.mrb[0].mxu0
      %v4226 = vadd.f32 0.0, %v4225
      %v4227 = vpop.f32.mrb[0].mxu0
      %4228 = vmatprep.mubr.f32.mxu0 0.0
      %4229 = vmatmul.mubr.f32.gmra.mrb[0].mxu0 %v4025
      %v4230 = vpop.f32.mrb[0].mxu0
      %v4231 = vadd.f32 0.0, %v4230
      %v4232 = vpop.f32.mrb[0].mxu0
      %4233 = vmatprep.mubr.f32.mxu0 0.0
      %4234 = vmatmul.mubr.f32.gmra.mrb[0].mxu0 %v4028
      %v4235 = vpop.f32.mrb[0].mxu0
      %v4236 = vadd.f32 0.0, %v4235
      %v4237 = vpop.f32.mrb[0].mxu0
      %4238 = vmatprep.mubr.f32.mxu0 0.0
      %4239 = vmatmul.mubr.f32.gmra.mrb[0].mxu0 %v4031
      %v4240 = vpop.f32.mrb[0].mxu0
      %v4241 = vadd.f32 0.0, %v4240
      %v4242 = vpop.f32.mrb[0].mxu0
      %4243 = vmatprep.mubr.f32.mxu0 0.0
      %4244 = vmatmul.mubr.f32.gmra.mrb[0].mxu0 %v4034
      %v4245 = vpop.f32.mrb[0].mxu0
      %v4246 = vadd.f32 0.0, %v4245
      %v4247 = vpop.f32.mrb[0].mxu0
      %4248 = vmatprep.mubr.f32.mxu0 0.0
      %4249 = vmatmul.mubr.f32.gmra.mrb[0].mxu0 %v4037
      %v4250 = vpop.f32.mrb[0].mxu0
      %v4251 = vadd.f32 0.0, %v4250
      %v4252 = vpop.f32.mrb[0].mxu0
      %4253 = vmatprep.mubr.f32.mxu0 0.0
      %4254 = vmatmul.mubr.f32.gmra.mrb[0].mxu0 %v4040
      %v4255 = vpop.f32.mrb[0].mxu0
      %v4256 = vadd.f32 0.0, %v4255
      %v4257 = vpop.f32.mrb[0].mxu0
      %4258 = vmatprep.mubr.f32.mxu0 0.0
      %4259 = vmatmul.mubr.f32.gmra.mrb[0].mxu0 %v4043
      %v4260 = vpop.f32.mrb[0].mxu0
      %v4261 = vadd.f32 0.0, %v4260
      %v4262 = vpop.f32.mrb[0].mxu0
      %4263 = vmatprep.mubr.f32.mxu0 0.0
      %4264 = vmatmul.mubr.f32.gmra.mrb[0].mxu0 %v4046
      %v4265 = vpop.f32.mrb[0].mxu0
      %v4266 = vadd.f32 0.0, %v4265
      %v4267 = vpop.f32.mrb[0].mxu0
      %4268 = vmatprep.mubr.f32.mxu0 0.0
      %4269 = vmatmul.mubr.f32.gmra.mrb[0].mxu0 %v4049
      %v4270 = vpop.f32.mrb[0].mxu0
      %v4271 = vadd.f32 0.0, %v4270
      %v4272 = vpop.f32.mrb[0].mxu0
      %4273 = vmatprep.mubr.f32.mxu0 0.0
      %4274 = vmatmul.mubr.f32.gmra.mrb[0].mxu0 %v4052
      %v4275 = vpop.f32.mrb[0].mxu0
      %v4276 = vadd.f32 0.0, %v4275
      %v4277 = vpop.f32.mrb[0].mxu0
      %4278 = vdwg.mxu0
      %v4280 = vsel %vm349, %v3892, 0
      %v4283 = vsel %vm349, %v3893, 0
      %v4286 = vsel %vm349, %v3894, 0
      %v4289 = vsel %vm349, %v3895, 0
      %v4292 = vsel %vm349, %v3896, 0
      %v4295 = vsel %vm349, %v3897, 0
      %v4298 = vsel %vm349, %v3898, 0
      %v4301 = vsel %vm349, %v3899, 0
      %v4304 = vsel %vm349, %v3900, 0
      %v4307 = vsel %vm349, %v3901, 0
      %v4310 = vsel %vm349, %v3902, 0
      %v4313 = vsel %vm349, %v3903, 0
      %v4316 = vsel %vm349, %v3904, 0
      %v4319 = vsel %vm349, %v3905, 0
      %v4322 = vsel %vm349, %v3906, 0
      %v4325 = vsel %vm349, %v3907, 0
      %v4328 = vsel %vm349, %v3908, 0
      %v4331 = vsel %vm349, %v3909, 0
      %v4334 = vsel %vm349, %v3910, 0
      %v4337 = vsel %vm349, %v3911, 0
      %v4340 = vsel %vm349, %v3912, 0
      %v4343 = vsel %vm349, %v3913, 0
      %v4346 = vsel %vm349, %v3914, 0
      %v4349 = vsel %vm349, %v3915, 0
      %v4352 = vsel %vm349, %v3916, 0
      %v4355 = vsel %vm349, %v3917, 0
      %v4358 = vsel %vm349, %v3918, 0
      %v4361 = vsel %vm349, %v3919, 0
      %v4364 = vsel %vm349, %v3920, 0
      %v4367 = vsel %vm349, %v3921, 0
      %v4370 = vsel %vm349, %v3922, 0
      %v4373 = vsel %vm349, %v3923, 0
      %4375 = vmatprep.subr.mxu0 0.0
      %4376 = vmatpush1.msra.mxu0 %v3924
      %4377 = vmatprep.subr.mxu0 0.0
      %4378 = vmatpush1.msra.mxu0 0.0
      %4379 = vmatprep.subr.mxu0 0.0
      %4380 = vmatpush1.msra.mxu0 0.0
      %4381 = vmatprep.subr.mxu0 0.0
      %4382 = vmatpush1.msra.mxu0 0.0
      %4383 = vmatprep.subr.mxu0 0.0
      %4384 = vmatpush1.msra.mxu0 0.0
      %4385 = vmatprep.subr.mxu0 0.0
      %4386 = vmatpush1.msra.mxu0 0.0
      %4387 = vmatprep.subr.mxu0 0.0
      %4388 = vmatpush1.msra.mxu0 0.0
      %4389 = vmatprep.subr.mxu0 0.0
      %4390 = vmatpush1.msra.mxu0 0.0
      %4391 = vmatprep.subr.mxu0 0.0
      %4392 = vmatpush1.msra.mxu0 0.0
      %4393 = vmatprep.subr.mxu0 0.0
      %4394 = vmatpush1.msra.mxu0 0.0
      %4395 = vmatprep.subr.mxu0 0.0
      %4396 = vmatpush1.msra.mxu0 0.0
      %4397 = vmatprep.subr.mxu0 0.0
      %4398 = vmatpush1.msra.mxu0 0.0
      %4399 = vmatprep.subr.mxu0 0.0
      %4400 = vmatpush1.msra.mxu0 0.0
      %4401 = vmatprep.subr.mxu0 0.0
      %4402 = vmatpush1.msra.mxu0 0.0
      %4403 = vmatprep.subr.mxu0 0.0
      %4404 = vmatpush1.msra.mxu0 0.0
      %4405 = vmatprep.subr.mxu0 0.0
      %4406 = vmatpush1.msra.mxu0 0.0
      %4407 = vmatprep.subr.mxu0 0.0
      %4408 = vmatpush1.msra.mxu0 0.0
      %4409 = vmatprep.subr.mxu0 0.0
      %4410 = vmatpush1.msra.mxu0 0.0
      %4411 = vmatprep.subr.mxu0 0.0
      %4412 = vmatpush1.msra.mxu0 0.0
      %4413 = vmatprep.subr.mxu0 0.0
      %4414 = vmatpush1.msra.mxu0 0.0
      %4415 = vmatprep.subr.mxu0 0.0
      %4416 = vmatpush1.msra.mxu0 0.0
      %4417 = vmatprep.subr.mxu0 0.0
      %4418 = vmatpush1.msra.mxu0 0.0
      %4419 = vmatprep.subr.mxu0 0.0
      %4420 = vmatpush1.msra.mxu0 0.0
      %4421 = vmatprep.subr.mxu0 0.0
      %4422 = vmatpush1.msra.mxu0 0.0
      %4423 = vmatprep.subr.mxu0 0.0
      %4424 = vmatpush1.msra.mxu0 0.0
      %4425 = vmatprep.subr.mxu0 0.0
      %4426 = vmatpush1.msra.mxu0 0.0
      %4427 = vmatprep.subr.mxu0 0.0
      %4428 = vmatpush1.msra.mxu0 0.0
      %4429 = vmatprep.subr.mxu0 0.0
      %4430 = vmatpush1.msra.mxu0 0.0
      %4431 = vmatprep.subr.mxu0 0.0
      %4432 = vmatpush1.msra.mxu0 0.0
      %4433 = vmatprep.subr.mxu0 0.0
      %4434 = vmatpush1.msra.mxu0 0.0
      %4435 = vmatprep.subr.mxu0 0.0
      %4436 = vmatpush1.msra.mxu0 0.0
      %4437 = vmatprep.subr.mxu0 0.0
      %4438 = vmatpush1.msra.mxu0 0.0
      %4439 = vmatprep.mubr.f32.mxu0 0.0
      %4440 = vmatmul.mubr.f32.gmra.mrb[0].mxu0 %v4280
      %v4441 = vpop.f32.mrb[0].mxu0
      %v4442 = vadd.f32 %v4121, %v4441
      %v4443 = vpop.f32.mrb[0].mxu0
      %4444 = vmatprep.mubr.f32.mxu0 0.0
      %4445 = vmatmul.mubr.f32.gmra.mrb[0].mxu0 %v4283
      %v4446 = vpop.f32.mrb[0].mxu0
      %v4447 = vadd.f32 %v4126, %v4446
      %v4448 = vpop.f32.mrb[0].mxu0
      %4449 = vmatprep.mubr.f32.mxu0 0.0
      %4450 = vmatmul.mubr.f32.gmra.mrb[0].mxu0 %v4286
      %v4451 = vpop.f32.mrb[0].mxu0
      %v4452 = vadd.f32 %v4131, %v4451
      %v4453 = vpop.f32.mrb[0].mxu0
      %4454 = vmatprep.mubr.f32.mxu0 0.0
      %4455 = vmatmul.mubr.f32.gmra.mrb[0].mxu0 %v4289
      %v4456 = vpop.f32.mrb[0].mxu0
      %v4457 = vadd.f32 %v4136, %v4456
      %v4458 = vpop.f32.mrb[0].mxu0
      %4459 = vmatprep.mubr.f32.mxu0 0.0
      %4460 = vmatmul.mubr.f32.gmra.mrb[0].mxu0 %v4292
      %v4461 = vpop.f32.mrb[0].mxu0
      %v4462 = vadd.f32 %v4141, %v4461
      %v4463 = vpop.f32.mrb[0].mxu0
      %4464 = vmatprep.mubr.f32.mxu0 0.0
      %4465 = vmatmul.mubr.f32.gmra.mrb[0].mxu0 %v4295
      %v4466 = vpop.f32.mrb[0].mxu0
      %v4467 = vadd.f32 %v4146, %v4466
      %v4468 = vpop.f32.mrb[0].mxu0
      %4469 = vmatprep.mubr.f32.mxu0 0.0
      %4470 = vmatmul.mubr.f32.gmra.mrb[0].mxu0 %v4298
      %v4471 = vpop.f32.mrb[0].mxu0
      %v4472 = vadd.f32 %v4151, %v4471
      %v4473 = vpop.f32.mrb[0].mxu0
      %4474 = vmatprep.mubr.f32.mxu0 0.0
      %4475 = vmatmul.mubr.f32.gmra.mrb[0].mxu0 %v4301
      %v4476 = vpop.f32.mrb[0].mxu0
      %v4477 = vadd.f32 %v4156, %v4476
      %v4478 = vpop.f32.mrb[0].mxu0
      %4479 = vmatprep.mubr.f32.mxu0 0.0
      %4480 = vmatmul.mubr.f32.gmra.mrb[0].mxu0 %v4304
      %v4481 = vpop.f32.mrb[0].mxu0
      %v4482 = vadd.f32 %v4161, %v4481
      %v4483 = vpop.f32.mrb[0].mxu0
      %4484 = vmatprep.mubr.f32.mxu0 0.0
      %4485 = vmatmul.mubr.f32.gmra.mrb[0].mxu0 %v4307
      %v4486 = vpop.f32.mrb[0].mxu0
      %v4487 = vadd.f32 %v4166, %v4486
      %v4488 = vpop.f32.mrb[0].mxu0
      %4489 = vmatprep.mubr.f32.mxu0 0.0
      %4490 = vmatmul.mubr.f32.gmra.mrb[0].mxu0 %v4310
      %v4491 = vpop.f32.mrb[0].mxu0
      %v4492 = vadd.f32 %v4171, %v4491
      %v4493 = vpop.f32.mrb[0].mxu0
      %4494 = vmatprep.mubr.f32.mxu0 0.0
      %4495 = vmatmul.mubr.f32.gmra.mrb[0].mxu0 %v4313
      %v4496 = vpop.f32.mrb[0].mxu0
      %v4497 = vadd.f32 %v4176, %v4496
      %v4498 = vpop.f32.mrb[0].mxu0
      %4499 = vmatprep.mubr.f32.mxu0 0.0
      %4500 = vmatmul.mubr.f32.gmra.mrb[0].mxu0 %v4316
      %v4501 = vpop.f32.mrb[0].mxu0
      %v4502 = vadd.f32 %v4181, %v4501
      %v4503 = vpop.f32.mrb[0].mxu0
      %4504 = vmatprep.mubr.f32.mxu0 0.0
      %4505 = vmatmul.mubr.f32.gmra.mrb[0].mxu0 %v4319
      %v4506 = vpop.f32.mrb[0].mxu0
      %v4507 = vadd.f32 %v4186, %v4506
      %v4508 = vpop.f32.mrb[0].mxu0
      %4509 = vmatprep.mubr.f32.mxu0 0.0
      %4510 = vmatmul.mubr.f32.gmra.mrb[0].mxu0 %v4322
      %v4511 = vpop.f32.mrb[0].mxu0
      %v4512 = vadd.f32 %v4191, %v4511
      %v4513 = vpop.f32.mrb[0].mxu0
      %4514 = vmatprep.mubr.f32.mxu0 0.0
      %4515 = vmatmul.mubr.f32.gmra.mrb[0].mxu0 %v4325
      %v4516 = vpop.f32.mrb[0].mxu0
      %v4517 = vadd.f32 %v4196, %v4516
      %v4518 = vpop.f32.mrb[0].mxu0
      %4519 = vmatprep.mubr.f32.mxu0 0.0
      %4520 = vmatmul.mubr.f32.gmra.mrb[0].mxu0 %v4328
      %v4521 = vpop.f32.mrb[0].mxu0
      %v4522 = vadd.f32 %v4201, %v4521
      %v4523 = vpop.f32.mrb[0].mxu0
      %4524 = vmatprep.mubr.f32.mxu0 0.0
      %4525 = vmatmul.mubr.f32.gmra.mrb[0].mxu0 %v4331
      %v4526 = vpop.f32.mrb[0].mxu0
      %v4527 = vadd.f32 %v4206, %v4526
      %v4528 = vpop.f32.mrb[0].mxu0
      %4529 = vmatprep.mubr.f32.mxu0 0.0
      %4530 = vmatmul.mubr.f32.gmra.mrb[0].mxu0 %v4334
      %v4531 = vpop.f32.mrb[0].mxu0
      %v4532 = vadd.f32 %v4211, %v4531
      %v4533 = vpop.f32.mrb[0].mxu0
      %4534 = vmatprep.mubr.f32.mxu0 0.0
      %4535 = vmatmul.mubr.f32.gmra.mrb[0].mxu0 %v4337
      %v4536 = vpop.f32.mrb[0].mxu0
      %v4537 = vadd.f32 %v4216, %v4536
      %v4538 = vpop.f32.mrb[0].mxu0
      %4539 = vmatprep.mubr.f32.mxu0 0.0
      %4540 = vmatmul.mubr.f32.gmra.mrb[0].mxu0 %v4340
      %v4541 = vpop.f32.mrb[0].mxu0
      %v4542 = vadd.f32 %v4221, %v4541
      %v4543 = vpop.f32.mrb[0].mxu0
      %4544 = vmatprep.mubr.f32.mxu0 0.0
      %4545 = vmatmul.mubr.f32.gmra.mrb[0].mxu0 %v4343
      %v4546 = vpop.f32.mrb[0].mxu0
      %v4547 = vadd.f32 %v4226, %v4546
      %v4548 = vpop.f32.mrb[0].mxu0
      %4549 = vmatprep.mubr.f32.mxu0 0.0
      %4550 = vmatmul.mubr.f32.gmra.mrb[0].mxu0 %v4346
      %v4551 = vpop.f32.mrb[0].mxu0
      %v4552 = vadd.f32 %v4231, %v4551
      %v4553 = vpop.f32.mrb[0].mxu0
      %4554 = vmatprep.mubr.f32.mxu0 0.0
      %4555 = vmatmul.mubr.f32.gmra.mrb[0].mxu0 %v4349
      %v4556 = vpop.f32.mrb[0].mxu0
      %v4557 = vadd.f32 %v4236, %v4556
      %v4558 = vpop.f32.mrb[0].mxu0
      %4559 = vmatprep.mubr.f32.mxu0 0.0
      %4560 = vmatmul.mubr.f32.gmra.mrb[0].mxu0 %v4352
      %v4561 = vpop.f32.mrb[0].mxu0
      %v4562 = vadd.f32 %v4241, %v4561
      %v4563 = vpop.f32.mrb[0].mxu0
      %4564 = vmatprep.mubr.f32.mxu0 0.0
      %4565 = vmatmul.mubr.f32.gmra.mrb[0].mxu0 %v4355
      %v4566 = vpop.f32.mrb[0].mxu0
      %v4567 = vadd.f32 %v4246, %v4566
      %v4568 = vpop.f32.mrb[0].mxu0
      %4569 = vmatprep.mubr.f32.mxu0 0.0
      %4570 = vmatmul.mubr.f32.gmra.mrb[0].mxu0 %v4358
      %v4571 = vpop.f32.mrb[0].mxu0
      %v4572 = vadd.f32 %v4251, %v4571
      %v4573 = vpop.f32.mrb[0].mxu0
      %4574 = vmatprep.mubr.f32.mxu0 0.0
      %4575 = vmatmul.mubr.f32.gmra.mrb[0].mxu0 %v4361
      %v4576 = vpop.f32.mrb[0].mxu0
      %v4577 = vadd.f32 %v4256, %v4576
      %v4578 = vpop.f32.mrb[0].mxu0
      %4579 = vmatprep.mubr.f32.mxu0 0.0
      %4580 = vmatmul.mubr.f32.gmra.mrb[0].mxu0 %v4364
      %v4581 = vpop.f32.mrb[0].mxu0
      %v4582 = vadd.f32 %v4261, %v4581
      %v4583 = vpop.f32.mrb[0].mxu0
      %4584 = vmatprep.mubr.f32.mxu0 0.0
      %4585 = vmatmul.mubr.f32.gmra.mrb[0].mxu0 %v4367
      %v4586 = vpop.f32.mrb[0].mxu0
      %v4587 = vadd.f32 %v4266, %v4586
      %v4588 = vpop.f32.mrb[0].mxu0
      %4589 = vmatprep.mubr.f32.mxu0 0.0
      %4590 = vmatmul.mubr.f32.gmra.mrb[0].mxu0 %v4370
      %v4591 = vpop.f32.mrb[0].mxu0
      %v4592 = vadd.f32 %v4271, %v4591
      %v4593 = vpop.f32.mrb[0].mxu0
      %4594 = vmatprep.mubr.f32.mxu0 0.0
      %4595 = vmatmul.mubr.f32.gmra.mrb[0].mxu0 %v4373
      %v4596 = vpop.f32.mrb[0].mxu0
      %v4597 = vadd.f32 %v4276, %v4596
      %v4598 = vpop.f32.mrb[0].mxu0
      %4599 = vdwg.mxu0
      %v4600 = vld [vmem:[#allocation2 + $0x2] sm:$0xff]
      %v4601 = vld [vmem:[#allocation2 + $0xa] sm:$0xff]
      %v4602 = vld [vmem:[#allocation2 + $0x1a] sm:$0xff]
      %v4603 = vld [vmem:[#allocation2 + $0x22] sm:$0xff]
      %v4604 = vld [vmem:[#allocation2 + $0x32] sm:$0xff]
      %v4605 = vld [vmem:[#allocation2 + $0x3a] sm:$0xff]
      %v4606 = vld [vmem:[#allocation2 + $0x4a] sm:$0xff]
      %v4607 = vld [vmem:[#allocation2 + $0x52] sm:$0xff]
      %v4608 = vld [vmem:[#allocation2 + $0x62] sm:$0xff]
      %v4609 = vld [vmem:[#allocation2 + $0x6a] sm:$0xff]
      %v4610 = vld [vmem:[#allocation2 + $0x7a] sm:$0xff]
      %v4611 = vld [vmem:[#allocation2 + $0x82] sm:$0xff]
      %v4612 = vld [vmem:[#allocation2 + $0x92] sm:$0xff]
      %v4613 = vld [vmem:[#allocation2 + $0x9a] sm:$0xff]
      %v4614 = vld [vmem:[#allocation2 + $0xaa] sm:$0xff]
      %v4615 = vld [vmem:[#allocation2 + $0xb2] sm:$0xff]
      %v4616 = vld [vmem:[#allocation2 + $0xc2] sm:$0xff]
      %v4617 = vld [vmem:[#allocation2 + $0xca] sm:$0xff]
      %v4618 = vld [vmem:[#allocation2 + $0xda] sm:$0xff]
      %v4619 = vld [vmem:[#allocation2 + $0xe2] sm:$0xff]
      %v4620 = vld [vmem:[#allocation2 + $0xf2] sm:$0xff]
      %v4621 = vld [vmem:[#allocation2 + $0xfa] sm:$0xff]
      %v4622 = vld [vmem:[#allocation2 + $0x10a] sm:$0xff]
      %v4623 = vld [vmem:[#allocation2 + $0x112] sm:$0xff]
      %v4624 = vld [vmem:[#allocation2 + $0x122] sm:$0xff]
      %v4625 = vld [vmem:[#allocation2 + $0x12a] sm:$0xff]
      %v4626 = vld [vmem:[#allocation2 + $0x13a] sm:$0xff]
      %v4627 = vld [vmem:[#allocation2 + $0x142] sm:$0xff]
      %v4628 = vld [vmem:[#allocation2 + $0x152] sm:$0xff]
      %v4629 = vld [vmem:[#allocation2 + $0x15a] sm:$0xff]
      %v4630 = vld [vmem:[#allocation2 + $0x16a] sm:$0xff]
      %v4631 = vld [vmem:[#allocation2 + $0x172] sm:$0xff]
      %v4632 = vld [vmem:[%s4 + $0x10] sm:$0xff]
      %v4634 = vsel %vm349, %v4600, 0
      %v4637 = vsel %vm349, %v4601, 0
      %v4640 = vsel %vm349, %v4602, 0
      %v4643 = vsel %vm349, %v4603, 0
      %v4646 = vsel %vm349, %v4604, 0
      %v4649 = vsel %vm349, %v4605, 0
      %v4652 = vsel %vm349, %v4606, 0
      %v4655 = vsel %vm349, %v4607, 0
      %v4658 = vsel %vm349, %v4608, 0
      %v4661 = vsel %vm349, %v4609, 0
      %v4664 = vsel %vm349, %v4610, 0
      %v4667 = vsel %vm349, %v4611, 0
      %v4670 = vsel %vm349, %v4612, 0
      %v4673 = vsel %vm349, %v4613, 0
      %v4676 = vsel %vm349, %v4614, 0
      %v4679 = vsel %vm349, %v4615, 0
      %v4682 = vsel %vm349, %v4616, 0
      %v4685 = vsel %vm349, %v4617, 0
      %v4688 = vsel %vm349, %v4618, 0
      %v4691 = vsel %vm349, %v4619, 0
      %v4694 = vsel %vm349, %v4620, 0
      %v4697 = vsel %vm349, %v4621, 0
      %v4700 = vsel %vm349, %v4622, 0
      %v4703 = vsel %vm349, %v4623, 0
      %v4706 = vsel %vm349, %v4624, 0
      %v4709 = vsel %vm349, %v4625, 0
      %v4712 = vsel %vm349, %v4626, 0
      %v4715 = vsel %vm349, %v4627, 0
      %v4718 = vsel %vm349, %v4628, 0
      %v4721 = vsel %vm349, %v4629, 0
      %v4724 = vsel %vm349, %v4630, 0
      %v4727 = vsel %vm349, %v4631, 0
      %4729 = vmatprep.subr.mxu0 0.0
      %4730 = vmatpush1.msra.mxu0 %v4632
      %4731 = vmatprep.subr.mxu0 0.0
      %4732 = vmatpush1.msra.mxu0 0.0
      %4733 = vmatprep.subr.mxu0 0.0
      %4734 = vmatpush1.msra.mxu0 0.0
      %4735 = vmatprep.subr.mxu0 0.0
      %4736 = vmatpush1.msra.mxu0 0.0
      %4737 = vmatprep.subr.mxu0 0.0
      %4738 = vmatpush1.msra.mxu0 0.0
      %4739 = vmatprep.subr.mxu0 0.0
      %4740 = vmatpush1.msra.mxu0 0.0
      %4741 = vmatprep.subr.mxu0 0.0
      %4742 = vmatpush1.msra.mxu0 0.0
      %4743 = vmatprep.subr.mxu0 0.0
      %4744 = vmatpush1.msra.mxu0 0.0
      %4745 = vmatprep.subr.mxu0 0.0
      %4746 = vmatpush1.msra.mxu0 0.0
      %4747 = vmatprep.subr.mxu0 0.0
      %4748 = vmatpush1.msra.mxu0 0.0
      %4749 = vmatprep.subr.mxu0 0.0
      %4750 = vmatpush1.msra.mxu0 0.0
      %4751 = vmatprep.subr.mxu0 0.0
      %4752 = vmatpush1.msra.mxu0 0.0
      %4753 = vmatprep.subr.mxu0 0.0
      %4754 = vmatpush1.msra.mxu0 0.0
      %4755 = vmatprep.subr.mxu0 0.0
      %4756 = vmatpush1.msra.mxu0 0.0
      %4757 = vmatprep.subr.mxu0 0.0
      %4758 = vmatpush1.msra.mxu0 0.0
      %4759 = vmatprep.subr.mxu0 0.0
      %4760 = vmatpush1.msra.mxu0 0.0
      %4761 = vmatprep.subr.mxu0 0.0
      %4762 = vmatpush1.msra.mxu0 0.0
      %4763 = vmatprep.subr.mxu0 0.0
      %4764 = vmatpush1.msra.mxu0 0.0
      %4765 = vmatprep.subr.mxu0 0.0
      %4766 = vmatpush1.msra.mxu0 0.0
      %4767 = vmatprep.subr.mxu0 0.0
      %4768 = vmatpush1.msra.mxu0 0.0
      %4769 = vmatprep.subr.mxu0 0.0
      %4770 = vmatpush1.msra.mxu0 0.0
      %4771 = vmatprep.subr.mxu0 0.0
      %4772 = vmatpush1.msra.mxu0 0.0
      %4773 = vmatprep.subr.mxu0 0.0
      %4774 = vmatpush1.msra.mxu0 0.0
      %4775 = vmatprep.subr.mxu0 0.0
      %4776 = vmatpush1.msra.mxu0 0.0
      %4777 = vmatprep.subr.mxu0 0.0
      %4778 = vmatpush1.msra.mxu0 0.0
      %4779 = vmatprep.subr.mxu0 0.0
      %4780 = vmatpush1.msra.mxu0 0.0
      %4781 = vmatprep.subr.mxu0 0.0
      %4782 = vmatpush1.msra.mxu0 0.0
      %4783 = vmatprep.subr.mxu0 0.0
      %4784 = vmatpush1.msra.mxu0 0.0
      %4785 = vmatprep.subr.mxu0 0.0
      %4786 = vmatpush1.msra.mxu0 0.0
      %4787 = vmatprep.subr.mxu0 0.0
      %4788 = vmatpush1.msra.mxu0 0.0
      %4789 = vmatprep.subr.mxu0 0.0
      %4790 = vmatpush1.msra.mxu0 0.0
      %4791 = vmatprep.subr.mxu0 0.0
      %4792 = vmatpush1.msra.mxu0 0.0
      %4793 = vmatprep.mubr.f32.mxu0 0.0
      %4794 = vmatmul.mubr.f32.gmra.mrb[0].mxu0 %v4634
      %v4795 = vpop.f32.mrb[0].mxu0
      %v4796 = vadd.f32 0.0, %v4795
      %v4797 = vpop.f32.mrb[0].mxu0
      %4798 = vmatprep.mubr.f32.mxu0 0.0
      %4799 = vmatmul.mubr.f32.gmra.mrb[0].mxu0 %v4637
      %v4800 = vpop.f32.mrb[0].mxu0
      %v4801 = vadd.f32 0.0, %v4800
      %v4802 = vpop.f32.mrb[0].mxu0
      %4803 = vmatprep.mubr.f32.mxu0 0.0
      %4804 = vmatmul.mubr.f32.gmra.mrb[0].mxu0 %v4640
      %v4805 = vpop.f32.mrb[0].mxu0
      %v4806 = vadd.f32 0.0, %v4805
      %v4807 = vpop.f32.mrb[0].mxu0
      %4808 = vmatprep.mubr.f32.mxu0 0.0
      %4809 = vmatmul.mubr.f32.gmra.mrb[0].mxu0 %v4643
      %v4810 = vpop.f32.mrb[0].mxu0
      %v4811 = vadd.f32 0.0, %v4810
      %v4812 = vpop.f32.mrb[0].mxu0
      %4813 = vmatprep.mubr.f32.mxu0 0.0
      %4814 = vmatmul.mubr.f32.gmra.mrb[0].mxu0 %v4646
      %v4815 = vpop.f32.mrb[0].mxu0
      %v4816 = vadd.f32 0.0, %v4815
      %v4817 = vpop.f32.mrb[0].mxu0
      %4818 = vmatprep.mubr.f32.mxu0 0.0
      %4819 = vmatmul.mubr.f32.gmra.mrb[0].mxu0 %v4649
      %v4820 = vpop.f32.mrb[0].mxu0
      %v4821 = vadd.f32 0.0, %v4820
      %v4822 = vpop.f32.mrb[0].mxu0
      %4823 = vmatprep.mubr.f32.mxu0 0.0
      %4824 = vmatmul.mubr.f32.gmra.mrb[0].mxu0 %v4652
      %v4825 = vpop.f32.mrb[0].mxu0
      %v4826 = vadd.f32 0.0, %v4825
      %v4827 = vpop.f32.mrb[0].mxu0
      %4828 = vmatprep.mubr.f32.mxu0 0.0
      %4829 = vmatmul.mubr.f32.gmra.mrb[0].mxu0 %v4655
      %v4830 = vpop.f32.mrb[0].mxu0
      %v4831 = vadd.f32 0.0, %v4830
      %v4832 = vpop.f32.mrb[0].mxu0
      %4833 = vmatprep.mubr.f32.mxu0 0.0
      %4834 = vmatmul.mubr.f32.gmra.mrb[0].mxu0 %v4658
      %v4835 = vpop.f32.mrb[0].mxu0
      %v4836 = vadd.f32 0.0, %v4835
      %v4837 = vpop.f32.mrb[0].mxu0
      %4838 = vmatprep.mubr.f32.mxu0 0.0
      %4839 = vmatmul.mubr.f32.gmra.mrb[0].mxu0 %v4661
      %v4840 = vpop.f32.mrb[0].mxu0
      %v4841 = vadd.f32 0.0, %v4840
      %v4842 = vpop.f32.mrb[0].mxu0
      %4843 = vmatprep.mubr.f32.mxu0 0.0
      %4844 = vmatmul.mubr.f32.gmra.mrb[0].mxu0 %v4664
      %v4845 = vpop.f32.mrb[0].mxu0
      %v4846 = vadd.f32 0.0, %v4845
      %v4847 = vpop.f32.mrb[0].mxu0
      %4848 = vmatprep.mubr.f32.mxu0 0.0
      %4849 = vmatmul.mubr.f32.gmra.mrb[0].mxu0 %v4667
      %v4850 = vpop.f32.mrb[0].mxu0
      %v4851 = vadd.f32 0.0, %v4850
      %v4852 = vpop.f32.mrb[0].mxu0
      %4853 = vmatprep.mubr.f32.mxu0 0.0
      %4854 = vmatmul.mubr.f32.gmra.mrb[0].mxu0 %v4670
      %v4855 = vpop.f32.mrb[0].mxu0
      %v4856 = vadd.f32 0.0, %v4855
      %v4857 = vpop.f32.mrb[0].mxu0
      %4858 = vmatprep.mubr.f32.mxu0 0.0
      %4859 = vmatmul.mubr.f32.gmra.mrb[0].mxu0 %v4673
      %v4860 = vpop.f32.mrb[0].mxu0
      %v4861 = vadd.f32 0.0, %v4860
      %v4862 = vpop.f32.mrb[0].mxu0
      %4863 = vmatprep.mubr.f32.mxu0 0.0
      %4864 = vmatmul.mubr.f32.gmra.mrb[0].mxu0 %v4676
      %v4865 = vpop.f32.mrb[0].mxu0
      %v4866 = vadd.f32 0.0, %v4865
      %v4867 = vpop.f32.mrb[0].mxu0
      %4868 = vmatprep.mubr.f32.mxu0 0.0
      %4869 = vmatmul.mubr.f32.gmra.mrb[0].mxu0 %v4679
      %v4870 = vpop.f32.mrb[0].mxu0
      %v4871 = vadd.f32 0.0, %v4870
      %v4872 = vpop.f32.mrb[0].mxu0
      %4873 = vmatprep.mubr.f32.mxu0 0.0
      %4874 = vmatmul.mubr.f32.gmra.mrb[0].mxu0 %v4682
      %v4875 = vpop.f32.mrb[0].mxu0
      %v4876 = vadd.f32 0.0, %v4875
      %v4877 = vpop.f32.mrb[0].mxu0
      %4878 = vmatprep.mubr.f32.mxu0 0.0
      %4879 = vmatmul.mubr.f32.gmra.mrb[0].mxu0 %v4685
      %v4880 = vpop.f32.mrb[0].mxu0
      %v4881 = vadd.f32 0.0, %v4880
      %v4882 = vpop.f32.mrb[0].mxu0
      %4883 = vmatprep.mubr.f32.mxu0 0.0
      %4884 = vmatmul.mubr.f32.gmra.mrb[0].mxu0 %v4688
      %v4885 = vpop.f32.mrb[0].mxu0
      %v4886 = vadd.f32 0.0, %v4885
      %v4887 = vpop.f32.mrb[0].mxu0
      %4888 = vmatprep.mubr.f32.mxu0 0.0
      %4889 = vmatmul.mubr.f32.gmra.mrb[0].mxu0 %v4691
      %v4890 = vpop.f32.mrb[0].mxu0
      %v4891 = vadd.f32 0.0, %v4890
      %v4892 = vpop.f32.mrb[0].mxu0
      %4893 = vmatprep.mubr.f32.mxu0 0.0
      %4894 = vmatmul.mubr.f32.gmra.mrb[0].mxu0 %v4694
      %v4895 = vpop.f32.mrb[0].mxu0
      %v4896 = vadd.f32 0.0, %v4895
      %v4897 = vpop.f32.mrb[0].mxu0
      %4898 = vmatprep.mubr.f32.mxu0 0.0
      %4899 = vmatmul.mubr.f32.gmra.mrb[0].mxu0 %v4697
      %v4900 = vpop.f32.mrb[0].mxu0
      %v4901 = vadd.f32 0.0, %v4900
      %v4902 = vpop.f32.mrb[0].mxu0
      %4903 = vmatprep.mubr.f32.mxu0 0.0
      %4904 = vmatmul.mubr.f32.gmra.mrb[0].mxu0 %v4700
      %v4905 = vpop.f32.mrb[0].mxu0
      %v4906 = vadd.f32 0.0, %v4905
      %v4907 = vpop.f32.mrb[0].mxu0
      %4908 = vmatprep.mubr.f32.mxu0 0.0
      %4909 = vmatmul.mubr.f32.gmra.mrb[0].mxu0 %v4703
      %v4910 = vpop.f32.mrb[0].mxu0
      %v4911 = vadd.f32 0.0, %v4910
      %v4912 = vpop.f32.mrb[0].mxu0
      %4913 = vmatprep.mubr.f32.mxu0 0.0
      %4914 = vmatmul.mubr.f32.gmra.mrb[0].mxu0 %v4706
      %v4915 = vpop.f32.mrb[0].mxu0
      %v4916 = vadd.f32 0.0, %v4915
      %v4917 = vpop.f32.mrb[0].mxu0
      %4918 = vmatprep.mubr.f32.mxu0 0.0
      %4919 = vmatmul.mubr.f32.gmra.mrb[0].mxu0 %v4709
      %v4920 = vpop.f32.mrb[0].mxu0
      %v4921 = vadd.f32 0.0, %v4920
      %v4922 = vpop.f32.mrb[0].mxu0
      %4923 = vmatprep.mubr.f32.mxu0 0.0
      %4924 = vmatmul.mubr.f32.gmra.mrb[0].mxu0 %v4712
      %v4925 = vpop.f32.mrb[0].mxu0
      %v4926 = vadd.f32 0.0, %v4925
      %v4927 = vpop.f32.mrb[0].mxu0
      %4928 = vmatprep.mubr.f32.mxu0 0.0
      %4929 = vmatmul.mubr.f32.gmra.mrb[0].mxu0 %v4715
      %v4930 = vpop.f32.mrb[0].mxu0
      %v4931 = vadd.f32 0.0, %v4930
      %v4932 = vpop.f32.mrb[0].mxu0
      %4933 = vmatprep.mubr.f32.mxu0 0.0
      %4934 = vmatmul.mubr.f32.gmra.mrb[0].mxu0 %v4718
      %v4935 = vpop.f32.mrb[0].mxu0
      %v4936 = vadd.f32 0.0, %v4935
      %v4937 = vpop.f32.mrb[0].mxu0
      %4938 = vmatprep.mubr.f32.mxu0 0.0
      %4939 = vmatmul.mubr.f32.gmra.mrb[0].mxu0 %v4721
      %v4940 = vpop.f32.mrb[0].mxu0
      %v4941 = vadd.f32 0.0, %v4940
      %v4942 = vpop.f32.mrb[0].mxu0
      %4943 = vmatprep.mubr.f32.mxu0 0.0
      %4944 = vmatmul.mubr.f32.gmra.mrb[0].mxu0 %v4724
      %v4945 = vpop.f32.mrb[0].mxu0
      %v4946 = vadd.f32 0.0, %v4945
      %v4947 = vpop.f32.mrb[0].mxu0
      %4948 = vmatprep.mubr.f32.mxu0 0.0
      %4949 = vmatmul.mubr.f32.gmra.mrb[0].mxu0 %v4727
      %v4950 = vpop.f32.mrb[0].mxu0
      %v4951 = vadd.f32 0.0, %v4950
      %v4952 = vpop.f32.mrb[0].mxu0
      %4953 = vdwg.mxu0
      %v4954 = vadd.f32 %v4442, %v4796
      %v4955 = vadd.f32 %v4447, %v4801
      %v4956 = vadd.f32 %v4452, %v4806
      %v4957 = vadd.f32 %v4457, %v4811
      %v4958 = vadd.f32 %v4462, %v4816
      %v4959 = vadd.f32 %v4467, %v4821
      %v4960 = vadd.f32 %v4472, %v4826
      %v4961 = vadd.f32 %v4477, %v4831
      %v4962 = vadd.f32 %v4482, %v4836
      %v4963 = vadd.f32 %v4487, %v4841
      %v4964 = vadd.f32 %v4492, %v4846
      %v4965 = vadd.f32 %v4497, %v4851
      %v4966 = vadd.f32 %v4502, %v4856
      %v4967 = vadd.f32 %v4507, %v4861
      %v4968 = vadd.f32 %v4512, %v4866
      %v4969 = vadd.f32 %v4517, %v4871
      %v4970 = vadd.f32 %v4522, %v4876
      %v4971 = vadd.f32 %v4527, %v4881
      %v4972 = vadd.f32 %v4532, %v4886
      %v4973 = vadd.f32 %v4537, %v4891
      %v4974 = vadd.f32 %v4542, %v4896
      %v4975 = vadd.f32 %v4547, %v4901
      %v4976 = vadd.f32 %v4552, %v4906
      %v4977 = vadd.f32 %v4557, %v4911
      %v4978 = vadd.f32 %v4562, %v4916
      %v4979 = vadd.f32 %v4567, %v4921
      %v4980 = vadd.f32 %v4572, %v4926
      %v4981 = vadd.f32 %v4577, %v4931
      %v4982 = vadd.f32 %v4582, %v4936
      %v4983 = vadd.f32 %v4587, %v4941
      %v4984 = vadd.f32 %v4592, %v4946
      %v4985 = vadd.f32 %v4597, %v4951
      %v4986 = vld [vmem:[%s3859] sm:$0xff]
      %v4987 = vld [vmem:[%s3859 + $0x8] sm:$0xff]
      %v4988 = vld [vmem:[%s3859 + $0x18] sm:$0xff]
      %v4989 = vld [vmem:[%s3859 + $0x20] sm:$0xff]
      %v4990 = vld [vmem:[%s3859 + $0x30] sm:$0xff]
      %v4991 = vld [vmem:[%s3859 + $0x38] sm:$0xff]
      %v4992 = vld [vmem:[%s3859 + $0x48] sm:$0xff]
      %v4993 = vld [vmem:[%s3859 + $0x50] sm:$0xff]
      %v4994 = vld [vmem:[%s3859 + $0x60] sm:$0xff]
      %v4995 = vld [vmem:[%s3859 + $0x68] sm:$0xff]
      %v4996 = vld [vmem:[%s3859 + $0x78] sm:$0xff]
      %v4997 = vld [vmem:[%s3859 + $0x80] sm:$0xff]
      %v4998 = vld [vmem:[%s3859 + $0x90] sm:$0xff]
      %v4999 = vld [vmem:[%s3859 + $0x98] sm:$0xff]
      %v5000 = vld [vmem:[%s3859 + $0xa8] sm:$0xff]
      %v5001 = vld [vmem:[%s3859 + $0xb0] sm:$0xff]
      %v5002 = vld [vmem:[%s3859 + $0xc0] sm:$0xff]
      %v5003 = vld [vmem:[%s3859 + $0xc8] sm:$0xff]
      %v5004 = vld [vmem:[%s3859 + $0xd8] sm:$0xff]
      %v5005 = vld [vmem:[%s3859 + $0xe0] sm:$0xff]
      %v5006 = vld [vmem:[%s3859 + $0xf0] sm:$0xff]
      %v5007 = vld [vmem:[%s3859 + $0xf8] sm:$0xff]
      %v5008 = vld [vmem:[%s3859 + $0x108] sm:$0xff]
      %v5009 = vld [vmem:[%s3859 + $0x110] sm:$0xff]
      %v5010 = vld [vmem:[%s3859 + $0x120] sm:$0xff]
      %v5011 = vld [vmem:[%s3859 + $0x128] sm:$0xff]
      %v5012 = vld [vmem:[%s3859 + $0x138] sm:$0xff]
      %v5013 = vld [vmem:[%s3859 + $0x140] sm:$0xff]
      %v5014 = vld [vmem:[%s3859 + $0x150] sm:$0xff]
      %v5015 = vld [vmem:[%s3859 + $0x158] sm:$0xff]
      %v5016 = vld [vmem:[%s3859 + $0x168] sm:$0xff]
      %v5017 = vld [vmem:[%s3859 + $0x170] sm:$0xff]
      %v5018 = vld [vmem:[%s4 + $0x18] sm:$0xff]
      %v5020 = vsel %vm349, %v4986, 0
      %v5023 = vsel %vm349, %v4987, 0
      %v5026 = vsel %vm349, %v4988, 0
      %v5029 = vsel %vm349, %v4989, 0
      %v5032 = vsel %vm349, %v4990, 0
      %v5035 = vsel %vm349, %v4991, 0
      %v5038 = vsel %vm349, %v4992, 0
      %v5041 = vsel %vm349, %v4993, 0
      %v5044 = vsel %vm349, %v4994, 0
      %v5047 = vsel %vm349, %v4995, 0
      %v5050 = vsel %vm349, %v4996, 0
      %v5053 = vsel %vm349, %v4997, 0
      %v5056 = vsel %vm349, %v4998, 0
      %v5059 = vsel %vm349, %v4999, 0
      %v5062 = vsel %vm349, %v5000, 0
      %v5065 = vsel %vm349, %v5001, 0
      %v5068 = vsel %vm349, %v5002, 0
      %v5071 = vsel %vm349, %v5003, 0
      %v5074 = vsel %vm349, %v5004, 0
      %v5077 = vsel %vm349, %v5005, 0
      %v5080 = vsel %vm349, %v5006, 0
      %v5083 = vsel %vm349, %v5007, 0
      %v5086 = vsel %vm349, %v5008, 0
      %v5089 = vsel %vm349, %v5009, 0
      %v5092 = vsel %vm349, %v5010, 0
      %v5095 = vsel %vm349, %v5011, 0
      %v5098 = vsel %vm349, %v5012, 0
      %v5101 = vsel %vm349, %v5013, 0
      %v5104 = vsel %vm349, %v5014, 0
      %v5107 = vsel %vm349, %v5015, 0
      %v5110 = vsel %vm349, %v5016, 0
      %v5113 = vsel %vm349, %v5017, 0
      %5115 = vmatprep.subr.mxu0 0.0
      %5116 = vmatpush1.msra.mxu0 %v5018
      %5117 = vmatprep.subr.mxu0 0.0
      %5118 = vmatpush1.msra.mxu0 0.0
      %5119 = vmatprep.subr.mxu0 0.0
      %5120 = vmatpush1.msra.mxu0 0.0
      %5121 = vmatprep.subr.mxu0 0.0
      %5122 = vmatpush1.msra.mxu0 0.0
      %5123 = vmatprep.subr.mxu0 0.0
      %5124 = vmatpush1.msra.mxu0 0.0
      %5125 = vmatprep.subr.mxu0 0.0
      %5126 = vmatpush1.msra.mxu0 0.0
      %5127 = vmatprep.subr.mxu0 0.0
      %5128 = vmatpush1.msra.mxu0 0.0
      %5129 = vmatprep.subr.mxu0 0.0
      %5130 = vmatpush1.msra.mxu0 0.0
      %5131 = vmatprep.subr.mxu0 0.0
      %5132 = vmatpush1.msra.mxu0 0.0
      %5133 = vmatprep.subr.mxu0 0.0
      %5134 = vmatpush1.msra.mxu0 0.0
      %5135 = vmatprep.subr.mxu0 0.0
      %5136 = vmatpush1.msra.mxu0 0.0
      %5137 = vmatprep.subr.mxu0 0.0
      %5138 = vmatpush1.msra.mxu0 0.0
      %5139 = vmatprep.subr.mxu0 0.0
      %5140 = vmatpush1.msra.mxu0 0.0
      %5141 = vmatprep.subr.mxu0 0.0
      %5142 = vmatpush1.msra.mxu0 0.0
      %5143 = vmatprep.subr.mxu0 0.0
      %5144 = vmatpush1.msra.mxu0 0.0
      %5145 = vmatprep.subr.mxu0 0.0
      %5146 = vmatpush1.msra.mxu0 0.0
      %5147 = vmatprep.subr.mxu0 0.0
      %5148 = vmatpush1.msra.mxu0 0.0
      %5149 = vmatprep.subr.mxu0 0.0
      %5150 = vmatpush1.msra.mxu0 0.0
      %5151 = vmatprep.subr.mxu0 0.0
      %5152 = vmatpush1.msra.mxu0 0.0
      %5153 = vmatprep.subr.mxu0 0.0
      %5154 = vmatpush1.msra.mxu0 0.0
      %5155 = vmatprep.subr.mxu0 0.0
      %5156 = vmatpush1.msra.mxu0 0.0
      %5157 = vmatprep.subr.mxu0 0.0
      %5158 = vmatpush1.msra.mxu0 0.0
      %5159 = vmatprep.subr.mxu0 0.0
      %5160 = vmatpush1.msra.mxu0 0.0
      %5161 = vmatprep.subr.mxu0 0.0
      %5162 = vmatpush1.msra.mxu0 0.0
      %5163 = vmatprep.subr.mxu0 0.0
      %5164 = vmatpush1.msra.mxu0 0.0
      %5165 = vmatprep.subr.mxu0 0.0
      %5166 = vmatpush1.msra.mxu0 0.0
      %5167 = vmatprep.subr.mxu0 0.0
      %5168 = vmatpush1.msra.mxu0 0.0
      %5169 = vmatprep.subr.mxu0 0.0
      %5170 = vmatpush1.msra.mxu0 0.0
      %5171 = vmatprep.subr.mxu0 0.0
      %5172 = vmatpush1.msra.mxu0 0.0
      %5173 = vmatprep.subr.mxu0 0.0
      %5174 = vmatpush1.msra.mxu0 0.0
      %5175 = vmatprep.subr.mxu0 0.0
      %5176 = vmatpush1.msra.mxu0 0.0
      %5177 = vmatprep.subr.mxu0 0.0
      %5178 = vmatpush1.msra.mxu0 0.0
      %5179 = vmatprep.mubr.f32.mxu0 0.0
      %5180 = vmatmul.mubr.f32.gmra.mrb[0].mxu0 %v5020
      %v5181 = vpop.f32.mrb[0].mxu0
      %v5182 = vadd.f32 0.0, %v5181
      %v5183 = vpop.f32.mrb[0].mxu0
      %5184 = vmatprep.mubr.f32.mxu0 0.0
      %5185 = vmatmul.mubr.f32.gmra.mrb[0].mxu0 %v5023
      %v5186 = vpop.f32.mrb[0].mxu0
      %v5187 = vadd.f32 0.0, %v5186
      %v5188 = vpop.f32.mrb[0].mxu0
      %5189 = vmatprep.mubr.f32.mxu0 0.0
      %5190 = vmatmul.mubr.f32.gmra.mrb[0].mxu0 %v5026
      %v5191 = vpop.f32.mrb[0].mxu0
      %v5192 = vadd.f32 0.0, %v5191
      %v5193 = vpop.f32.mrb[0].mxu0
      %5194 = vmatprep.mubr.f32.mxu0 0.0
      %5195 = vmatmul.mubr.f32.gmra.mrb[0].mxu0 %v5029
      %v5196 = vpop.f32.mrb[0].mxu0
      %v5197 = vadd.f32 0.0, %v5196
      %v5198 = vpop.f32.mrb[0].mxu0
      %5199 = vmatprep.mubr.f32.mxu0 0.0
      %5200 = vmatmul.mubr.f32.gmra.mrb[0].mxu0 %v5032
      %v5201 = vpop.f32.mrb[0].mxu0
      %v5202 = vadd.f32 0.0, %v5201
      %v5203 = vpop.f32.mrb[0].mxu0
      %5204 = vmatprep.mubr.f32.mxu0 0.0
      %5205 = vmatmul.mubr.f32.gmra.mrb[0].mxu0 %v5035
      %v5206 = vpop.f32.mrb[0].mxu0
      %v5207 = vadd.f32 0.0, %v5206
      %v5208 = vpop.f32.mrb[0].mxu0
      %5209 = vmatprep.mubr.f32.mxu0 0.0
      %5210 = vmatmul.mubr.f32.gmra.mrb[0].mxu0 %v5038
      %v5211 = vpop.f32.mrb[0].mxu0
      %v5212 = vadd.f32 0.0, %v5211
      %v5213 = vpop.f32.mrb[0].mxu0
      %5214 = vmatprep.mubr.f32.mxu0 0.0
      %5215 = vmatmul.mubr.f32.gmra.mrb[0].mxu0 %v5041
      %v5216 = vpop.f32.mrb[0].mxu0
      %v5217 = vadd.f32 0.0, %v5216
      %v5218 = vpop.f32.mrb[0].mxu0
      %5219 = vmatprep.mubr.f32.mxu0 0.0
      %5220 = vmatmul.mubr.f32.gmra.mrb[0].mxu0 %v5044
      %v5221 = vpop.f32.mrb[0].mxu0
      %v5222 = vadd.f32 0.0, %v5221
      %v5223 = vpop.f32.mrb[0].mxu0
      %5224 = vmatprep.mubr.f32.mxu0 0.0
      %5225 = vmatmul.mubr.f32.gmra.mrb[0].mxu0 %v5047
      %v5226 = vpop.f32.mrb[0].mxu0
      %v5227 = vadd.f32 0.0, %v5226
      %v5228 = vpop.f32.mrb[0].mxu0
      %5229 = vmatprep.mubr.f32.mxu0 0.0
      %5230 = vmatmul.mubr.f32.gmra.mrb[0].mxu0 %v5050
      %v5231 = vpop.f32.mrb[0].mxu0
      %v5232 = vadd.f32 0.0, %v5231
      %v5233 = vpop.f32.mrb[0].mxu0
      %5234 = vmatprep.mubr.f32.mxu0 0.0
      %5235 = vmatmul.mubr.f32.gmra.mrb[0].mxu0 %v5053
      %v5236 = vpop.f32.mrb[0].mxu0
      %v5237 = vadd.f32 0.0, %v5236
      %v5238 = vpop.f32.mrb[0].mxu0
      %5239 = vmatprep.mubr.f32.mxu0 0.0
      %5240 = vmatmul.mubr.f32.gmra.mrb[0].mxu0 %v5056
      %v5241 = vpop.f32.mrb[0].mxu0
      %v5242 = vadd.f32 0.0, %v5241
      %v5243 = vpop.f32.mrb[0].mxu0
      %5244 = vmatprep.mubr.f32.mxu0 0.0
      %5245 = vmatmul.mubr.f32.gmra.mrb[0].mxu0 %v5059
      %v5246 = vpop.f32.mrb[0].mxu0
      %v5247 = vadd.f32 0.0, %v5246
      %v5248 = vpop.f32.mrb[0].mxu0
      %5249 = vmatprep.mubr.f32.mxu0 0.0
      %5250 = vmatmul.mubr.f32.gmra.mrb[0].mxu0 %v5062
      %v5251 = vpop.f32.mrb[0].mxu0
      %v5252 = vadd.f32 0.0, %v5251
      %v5253 = vpop.f32.mrb[0].mxu0
      %5254 = vmatprep.mubr.f32.mxu0 0.0
      %5255 = vmatmul.mubr.f32.gmra.mrb[0].mxu0 %v5065
      %v5256 = vpop.f32.mrb[0].mxu0
      %v5257 = vadd.f32 0.0, %v5256
      %v5258 = vpop.f32.mrb[0].mxu0
      %5259 = vmatprep.mubr.f32.mxu0 0.0
      %5260 = vmatmul.mubr.f32.gmra.mrb[0].mxu0 %v5068
      %v5261 = vpop.f32.mrb[0].mxu0
      %v5262 = vadd.f32 0.0, %v5261
      %v5263 = vpop.f32.mrb[0].mxu0
      %5264 = vmatprep.mubr.f32.mxu0 0.0
      %5265 = vmatmul.mubr.f32.gmra.mrb[0].mxu0 %v5071
      %v5266 = vpop.f32.mrb[0].mxu0
      %v5267 = vadd.f32 0.0, %v5266
      %v5268 = vpop.f32.mrb[0].mxu0
      %5269 = vmatprep.mubr.f32.mxu0 0.0
      %5270 = vmatmul.mubr.f32.gmra.mrb[0].mxu0 %v5074
      %v5271 = vpop.f32.mrb[0].mxu0
      %v5272 = vadd.f32 0.0, %v5271
      %v5273 = vpop.f32.mrb[0].mxu0
      %5274 = vmatprep.mubr.f32.mxu0 0.0
      %5275 = vmatmul.mubr.f32.gmra.mrb[0].mxu0 %v5077
      %v5276 = vpop.f32.mrb[0].mxu0
      %v5277 = vadd.f32 0.0, %v5276
      %v5278 = vpop.f32.mrb[0].mxu0
      %5279 = vmatprep.mubr.f32.mxu0 0.0
      %5280 = vmatmul.mubr.f32.gmra.mrb[0].mxu0 %v5080
      %v5281 = vpop.f32.mrb[0].mxu0
      %v5282 = vadd.f32 0.0, %v5281
      %v5283 = vpop.f32.mrb[0].mxu0
      %5284 = vmatprep.mubr.f32.mxu0 0.0
      %5285 = vmatmul.mubr.f32.gmra.mrb[0].mxu0 %v5083
      %v5286 = vpop.f32.mrb[0].mxu0
      %v5287 = vadd.f32 0.0, %v5286
      %v5288 = vpop.f32.mrb[0].mxu0
      %5289 = vmatprep.mubr.f32.mxu0 0.0
      %5290 = vmatmul.mubr.f32.gmra.mrb[0].mxu0 %v5086
      %v5291 = vpop.f32.mrb[0].mxu0
      %v5292 = vadd.f32 0.0, %v5291
      %v5293 = vpop.f32.mrb[0].mxu0
      %5294 = vmatprep.mubr.f32.mxu0 0.0
      %5295 = vmatmul.mubr.f32.gmra.mrb[0].mxu0 %v5089
      %v5296 = vpop.f32.mrb[0].mxu0
      %v5297 = vadd.f32 0.0, %v5296
      %v5298 = vpop.f32.mrb[0].mxu0
      %5299 = vmatprep.mubr.f32.mxu0 0.0
      %5300 = vmatmul.mubr.f32.gmra.mrb[0].mxu0 %v5092
      %v5301 = vpop.f32.mrb[0].mxu0
      %v5302 = vadd.f32 0.0, %v5301
      %v5303 = vpop.f32.mrb[0].mxu0
      %5304 = vmatprep.mubr.f32.mxu0 0.0
      %5305 = vmatmul.mubr.f32.gmra.mrb[0].mxu0 %v5095
      %v5306 = vpop.f32.mrb[0].mxu0
      %v5307 = vadd.f32 0.0, %v5306
      %v5308 = vpop.f32.mrb[0].mxu0
      %5309 = vmatprep.mubr.f32.mxu0 0.0
      %5310 = vmatmul.mubr.f32.gmra.mrb[0].mxu0 %v5098
      %v5311 = vpop.f32.mrb[0].mxu0
      %v5312 = vadd.f32 0.0, %v5311
      %v5313 = vpop.f32.mrb[0].mxu0
      %5314 = vmatprep.mubr.f32.mxu0 0.0
      %5315 = vmatmul.mubr.f32.gmra.mrb[0].mxu0 %v5101
      %v5316 = vpop.f32.mrb[0].mxu0
      %v5317 = vadd.f32 0.0, %v5316
      %v5318 = vpop.f32.mrb[0].mxu0
      %5319 = vmatprep.mubr.f32.mxu0 0.0
      %5320 = vmatmul.mubr.f32.gmra.mrb[0].mxu0 %v5104
      %v5321 = vpop.f32.mrb[0].mxu0
      %v5322 = vadd.f32 0.0, %v5321
      %v5323 = vpop.f32.mrb[0].mxu0
      %5324 = vmatprep.mubr.f32.mxu0 0.0
      %5325 = vmatmul.mubr.f32.gmra.mrb[0].mxu0 %v5107
      %v5326 = vpop.f32.mrb[0].mxu0
      %v5327 = vadd.f32 0.0, %v5326
      %v5328 = vpop.f32.mrb[0].mxu0
      %5329 = vmatprep.mubr.f32.mxu0 0.0
      %5330 = vmatmul.mubr.f32.gmra.mrb[0].mxu0 %v5110
      %v5331 = vpop.f32.mrb[0].mxu0
      %v5332 = vadd.f32 0.0, %v5331
      %v5333 = vpop.f32.mrb[0].mxu0
      %5334 = vmatprep.mubr.f32.mxu0 0.0
      %5335 = vmatmul.mubr.f32.gmra.mrb[0].mxu0 %v5113
      %v5336 = vpop.f32.mrb[0].mxu0
      %v5337 = vadd.f32 0.0, %v5336
      %v5338 = vpop.f32.mrb[0].mxu0
      %5339 = vdwg.mxu0
      %v5340 = vadd.f32 %v4954, %v5182
      %v5341 = vadd.f32 %v4955, %v5187
      %v5342 = vadd.f32 %v4956, %v5192
      %v5343 = vadd.f32 %v4957, %v5197
      %v5344 = vadd.f32 %v4958, %v5202
      %v5345 = vadd.f32 %v4959, %v5207
      %v5346 = vadd.f32 %v4960, %v5212
      %v5347 = vadd.f32 %v4961, %v5217
      %v5348 = vadd.f32 %v4962, %v5222
      %v5349 = vadd.f32 %v4963, %v5227
      %v5350 = vadd.f32 %v4964, %v5232
      %v5351 = vadd.f32 %v4965, %v5237
      %v5352 = vadd.f32 %v4966, %v5242
      %v5353 = vadd.f32 %v4967, %v5247
      %v5354 = vadd.f32 %v4968, %v5252
      %v5355 = vadd.f32 %v4969, %v5257
      %v5356 = vadd.f32 %v4970, %v5262
      %v5357 = vadd.f32 %v4971, %v5267
      %v5358 = vadd.f32 %v4972, %v5272
      %v5359 = vadd.f32 %v4973, %v5277
      %v5360 = vadd.f32 %v4974, %v5282
      %v5361 = vadd.f32 %v4975, %v5287
      %v5362 = vadd.f32 %v4976, %v5292
      %v5363 = vadd.f32 %v4977, %v5297
      %v5364 = vadd.f32 %v4978, %v5302
      %v5365 = vadd.f32 %v4979, %v5307
      %v5366 = vadd.f32 %v4980, %v5312
      %v5367 = vadd.f32 %v4981, %v5317
      %v5368 = vadd.f32 %v4982, %v5322
      %v5369 = vadd.f32 %v4983, %v5327
      %v5370 = vadd.f32 %v4984, %v5332
      %v5371 = vadd.f32 %v4985, %v5337
      %v5372 = vld [vmem:[%s3859 + $0x1] sm:$0xff]
      %v5373 = vld [vmem:[%s3859 + $0x9] sm:$0xff]
      %v5374 = vld [vmem:[%s3859 + $0x19] sm:$0xff]
      %v5375 = vld [vmem:[%s3859 + $0x21] sm:$0xff]
      %v5376 = vld [vmem:[%s3859 + $0x31] sm:$0xff]
      %v5377 = vld [vmem:[%s3859 + $0x39] sm:$0xff]
      %v5378 = vld [vmem:[%s3859 + $0x49] sm:$0xff]
      %v5379 = vld [vmem:[%s3859 + $0x51] sm:$0xff]
      %v5380 = vld [vmem:[%s3859 + $0x61] sm:$0xff]
      %v5381 = vld [vmem:[%s3859 + $0x69] sm:$0xff]
      %v5382 = vld [vmem:[%s3859 + $0x79] sm:$0xff]
      %v5383 = vld [vmem:[%s3859 + $0x81] sm:$0xff]
      %v5384 = vld [vmem:[%s3859 + $0x91] sm:$0xff]
      %v5385 = vld [vmem:[%s3859 + $0x99] sm:$0xff]
      %v5386 = vld [vmem:[%s3859 + $0xa9] sm:$0xff]
      %v5387 = vld [vmem:[%s3859 + $0xb1] sm:$0xff]
      %v5388 = vld [vmem:[%s3859 + $0xc1] sm:$0xff]
      %v5389 = vld [vmem:[%s3859 + $0xc9] sm:$0xff]
      %v5390 = vld [vmem:[%s3859 + $0xd9] sm:$0xff]
      %v5391 = vld [vmem:[%s3859 + $0xe1] sm:$0xff]
      %v5392 = vld [vmem:[%s3859 + $0xf1] sm:$0xff]
      %v5393 = vld [vmem:[%s3859 + $0xf9] sm:$0xff]
      %v5394 = vld [vmem:[%s3859 + $0x109] sm:$0xff]
      %v5395 = vld [vmem:[%s3859 + $0x111] sm:$0xff]
      %v5396 = vld [vmem:[%s3859 + $0x121] sm:$0xff]
      %v5397 = vld [vmem:[%s3859 + $0x129] sm:$0xff]
      %v5398 = vld [vmem:[%s3859 + $0x139] sm:$0xff]
      %v5399 = vld [vmem:[%s3859 + $0x141] sm:$0xff]
      %v5400 = vld [vmem:[%s3859 + $0x151] sm:$0xff]
      %v5401 = vld [vmem:[%s3859 + $0x159] sm:$0xff]
      %v5402 = vld [vmem:[%s3859 + $0x169] sm:$0xff]
      %v5403 = vld [vmem:[%s3859 + $0x171] sm:$0xff]
      %v5404 = vld [vmem:[%s4 + $0x20] sm:$0xff]
      %v5406 = vsel %vm349, %v5372, 0
      %v5409 = vsel %vm349, %v5373, 0
      %v5412 = vsel %vm349, %v5374, 0
      %v5415 = vsel %vm349, %v5375, 0
      %v5418 = vsel %vm349, %v5376, 0
      %v5421 = vsel %vm349, %v5377, 0
      %v5424 = vsel %vm349, %v5378, 0
      %v5427 = vsel %vm349, %v5379, 0
      %v5430 = vsel %vm349, %v5380, 0
      %v5433 = vsel %vm349, %v5381, 0
      %v5436 = vsel %vm349, %v5382, 0
      %v5439 = vsel %vm349, %v5383, 0
      %v5442 = vsel %vm349, %v5384, 0
      %v5445 = vsel %vm349, %v5385, 0
      %v5448 = vsel %vm349, %v5386, 0
      %v5451 = vsel %vm349, %v5387, 0
      %v5454 = vsel %vm349, %v5388, 0
      %v5457 = vsel %vm349, %v5389, 0
      %v5460 = vsel %vm349, %v5390, 0
      %v5463 = vsel %vm349, %v5391, 0
      %v5466 = vsel %vm349, %v5392, 0
      %v5469 = vsel %vm349, %v5393, 0
      %v5472 = vsel %vm349, %v5394, 0
      %v5475 = vsel %vm349, %v5395, 0
      %v5478 = vsel %vm349, %v5396, 0
      %v5481 = vsel %vm349, %v5397, 0
      %v5484 = vsel %vm349, %v5398, 0
      %v5487 = vsel %vm349, %v5399, 0
      %v5490 = vsel %vm349, %v5400, 0
      %v5493 = vsel %vm349, %v5401, 0
      %v5496 = vsel %vm349, %v5402, 0
      %v5499 = vsel %vm349, %v5403, 0
      %5501 = vmatprep.subr.mxu0 0.0
      %5502 = vmatpush1.msra.mxu0 %v5404
      %5503 = vmatprep.subr.mxu0 0.0
      %5504 = vmatpush1.msra.mxu0 0.0
      %5505 = vmatprep.subr.mxu0 0.0
      %5506 = vmatpush1.msra.mxu0 0.0
      %5507 = vmatprep.subr.mxu0 0.0
      %5508 = vmatpush1.msra.mxu0 0.0
      %5509 = vmatprep.subr.mxu0 0.0
      %5510 = vmatpush1.msra.mxu0 0.0
      %5511 = vmatprep.subr.mxu0 0.0
      %5512 = vmatpush1.msra.mxu0 0.0
      %5513 = vmatprep.subr.mxu0 0.0
      %5514 = vmatpush1.msra.mxu0 0.0
      %5515 = vmatprep.subr.mxu0 0.0
      %5516 = vmatpush1.msra.mxu0 0.0
      %5517 = vmatprep.subr.mxu0 0.0
      %5518 = vmatpush1.msra.mxu0 0.0
      %5519 = vmatprep.subr.mxu0 0.0
      %5520 = vmatpush1.msra.mxu0 0.0
      %5521 = vmatprep.subr.mxu0 0.0
      %5522 = vmatpush1.msra.mxu0 0.0
      %5523 = vmatprep.subr.mxu0 0.0
      %5524 = vmatpush1.msra.mxu0 0.0
      %5525 = vmatprep.subr.mxu0 0.0
      %5526 = vmatpush1.msra.mxu0 0.0
      %5527 = vmatprep.subr.mxu0 0.0
      %5528 = vmatpush1.msra.mxu0 0.0
      %5529 = vmatprep.subr.mxu0 0.0
      %5530 = vmatpush1.msra.mxu0 0.0
      %5531 = vmatprep.subr.mxu0 0.0
      %5532 = vmatpush1.msra.mxu0 0.0
      %5533 = vmatprep.subr.mxu0 0.0
      %5534 = vmatpush1.msra.mxu0 0.0
      %5535 = vmatprep.subr.mxu0 0.0
      %5536 = vmatpush1.msra.mxu0 0.0
      %5537 = vmatprep.subr.mxu0 0.0
      %5538 = vmatpush1.msra.mxu0 0.0
      %5539 = vmatprep.subr.mxu0 0.0
      %5540 = vmatpush1.msra.mxu0 0.0
      %5541 = vmatprep.subr.mxu0 0.0
      %5542 = vmatpush1.msra.mxu0 0.0
      %5543 = vmatprep.subr.mxu0 0.0
      %5544 = vmatpush1.msra.mxu0 0.0
      %5545 = vmatprep.subr.mxu0 0.0
      %5546 = vmatpush1.msra.mxu0 0.0
      %5547 = vmatprep.subr.mxu0 0.0
      %5548 = vmatpush1.msra.mxu0 0.0
      %5549 = vmatprep.subr.mxu0 0.0
      %5550 = vmatpush1.msra.mxu0 0.0
      %5551 = vmatprep.subr.mxu0 0.0
      %5552 = vmatpush1.msra.mxu0 0.0
      %5553 = vmatprep.subr.mxu0 0.0
      %5554 = vmatpush1.msra.mxu0 0.0
      %5555 = vmatprep.subr.mxu0 0.0
      %5556 = vmatpush1.msra.mxu0 0.0
      %5557 = vmatprep.subr.mxu0 0.0
      %5558 = vmatpush1.msra.mxu0 0.0
      %5559 = vmatprep.subr.mxu0 0.0
      %5560 = vmatpush1.msra.mxu0 0.0
      %5561 = vmatprep.subr.mxu0 0.0
      %5562 = vmatpush1.msra.mxu0 0.0
      %5563 = vmatprep.subr.mxu0 0.0
      %5564 = vmatpush1.msra.mxu0 0.0
      %5565 = vmatprep.mubr.f32.mxu0 0.0
      %5566 = vmatmul.mubr.f32.gmra.mrb[0].mxu0 %v5406
      %v5567 = vpop.f32.mrb[0].mxu0
      %v5568 = vadd.f32 0.0, %v5567
      %v5569 = vpop.f32.mrb[0].mxu0
      %5570 = vmatprep.mubr.f32.mxu0 0.0
      %5571 = vmatmul.mubr.f32.gmra.mrb[0].mxu0 %v5409
      %v5572 = vpop.f32.mrb[0].mxu0
      %v5573 = vadd.f32 0.0, %v5572
      %v5574 = vpop.f32.mrb[0].mxu0
      %5575 = vmatprep.mubr.f32.mxu0 0.0
      %5576 = vmatmul.mubr.f32.gmra.mrb[0].mxu0 %v5412
      %v5577 = vpop.f32.mrb[0].mxu0
      %v5578 = vadd.f32 0.0, %v5577
      %v5579 = vpop.f32.mrb[0].mxu0
      %5580 = vmatprep.mubr.f32.mxu0 0.0
      %5581 = vmatmul.mubr.f32.gmra.mrb[0].mxu0 %v5415
      %v5582 = vpop.f32.mrb[0].mxu0
      %v5583 = vadd.f32 0.0, %v5582
      %v5584 = vpop.f32.mrb[0].mxu0
      %5585 = vmatprep.mubr.f32.mxu0 0.0
      %5586 = vmatmul.mubr.f32.gmra.mrb[0].mxu0 %v5418
      %v5587 = vpop.f32.mrb[0].mxu0
      %v5588 = vadd.f32 0.0, %v5587
      %v5589 = vpop.f32.mrb[0].mxu0
      %5590 = vmatprep.mubr.f32.mxu0 0.0
      %5591 = vmatmul.mubr.f32.gmra.mrb[0].mxu0 %v5421
      %v5592 = vpop.f32.mrb[0].mxu0
      %v5593 = vadd.f32 0.0, %v5592
      %v5594 = vpop.f32.mrb[0].mxu0
      %5595 = vmatprep.mubr.f32.mxu0 0.0
      %5596 = vmatmul.mubr.f32.gmra.mrb[0].mxu0 %v5424
      %v5597 = vpop.f32.mrb[0].mxu0
      %v5598 = vadd.f32 0.0, %v5597
      %v5599 = vpop.f32.mrb[0].mxu0
      %5600 = vmatprep.mubr.f32.mxu0 0.0
      %5601 = vmatmul.mubr.f32.gmra.mrb[0].mxu0 %v5427
      %v5602 = vpop.f32.mrb[0].mxu0
      %v5603 = vadd.f32 0.0, %v5602
      %v5604 = vpop.f32.mrb[0].mxu0
      %5605 = vmatprep.mubr.f32.mxu0 0.0
      %5606 = vmatmul.mubr.f32.gmra.mrb[0].mxu0 %v5430
      %v5607 = vpop.f32.mrb[0].mxu0
      %v5608 = vadd.f32 0.0, %v5607
      %v5609 = vpop.f32.mrb[0].mxu0
      %5610 = vmatprep.mubr.f32.mxu0 0.0
      %5611 = vmatmul.mubr.f32.gmra.mrb[0].mxu0 %v5433
      %v5612 = vpop.f32.mrb[0].mxu0
      %v5613 = vadd.f32 0.0, %v5612
      %v5614 = vpop.f32.mrb[0].mxu0
      %5615 = vmatprep.mubr.f32.mxu0 0.0
      %5616 = vmatmul.mubr.f32.gmra.mrb[0].mxu0 %v5436
      %v5617 = vpop.f32.mrb[0].mxu0
      %v5618 = vadd.f32 0.0, %v5617
      %v5619 = vpop.f32.mrb[0].mxu0
      %5620 = vmatprep.mubr.f32.mxu0 0.0
      %5621 = vmatmul.mubr.f32.gmra.mrb[0].mxu0 %v5439
      %v5622 = vpop.f32.mrb[0].mxu0
      %v5623 = vadd.f32 0.0, %v5622
      %v5624 = vpop.f32.mrb[0].mxu0
      %5625 = vmatprep.mubr.f32.mxu0 0.0
      %5626 = vmatmul.mubr.f32.gmra.mrb[0].mxu0 %v5442
      %v5627 = vpop.f32.mrb[0].mxu0
      %v5628 = vadd.f32 0.0, %v5627
      %v5629 = vpop.f32.mrb[0].mxu0
      %5630 = vmatprep.mubr.f32.mxu0 0.0
      %5631 = vmatmul.mubr.f32.gmra.mrb[0].mxu0 %v5445
      %v5632 = vpop.f32.mrb[0].mxu0
      %v5633 = vadd.f32 0.0, %v5632
      %v5634 = vpop.f32.mrb[0].mxu0
      %5635 = vmatprep.mubr.f32.mxu0 0.0
      %5636 = vmatmul.mubr.f32.gmra.mrb[0].mxu0 %v5448
      %v5637 = vpop.f32.mrb[0].mxu0
      %v5638 = vadd.f32 0.0, %v5637
      %v5639 = vpop.f32.mrb[0].mxu0
      %5640 = vmatprep.mubr.f32.mxu0 0.0
      %5641 = vmatmul.mubr.f32.gmra.mrb[0].mxu0 %v5451
      %v5642 = vpop.f32.mrb[0].mxu0
      %v5643 = vadd.f32 0.0, %v5642
      %v5644 = vpop.f32.mrb[0].mxu0
      %5645 = vmatprep.mubr.f32.mxu0 0.0
      %5646 = vmatmul.mubr.f32.gmra.mrb[0].mxu0 %v5454
      %v5647 = vpop.f32.mrb[0].mxu0
      %v5648 = vadd.f32 0.0, %v5647
      %v5649 = vpop.f32.mrb[0].mxu0
      %5650 = vmatprep.mubr.f32.mxu0 0.0
      %5651 = vmatmul.mubr.f32.gmra.mrb[0].mxu0 %v5457
      %v5652 = vpop.f32.mrb[0].mxu0
      %v5653 = vadd.f32 0.0, %v5652
      %v5654 = vpop.f32.mrb[0].mxu0
      %5655 = vmatprep.mubr.f32.mxu0 0.0
      %5656 = vmatmul.mubr.f32.gmra.mrb[0].mxu0 %v5460
      %v5657 = vpop.f32.mrb[0].mxu0
      %v5658 = vadd.f32 0.0, %v5657
      %v5659 = vpop.f32.mrb[0].mxu0
      %5660 = vmatprep.mubr.f32.mxu0 0.0
      %5661 = vmatmul.mubr.f32.gmra.mrb[0].mxu0 %v5463
      %v5662 = vpop.f32.mrb[0].mxu0
      %v5663 = vadd.f32 0.0, %v5662
      %v5664 = vpop.f32.mrb[0].mxu0
      %5665 = vmatprep.mubr.f32.mxu0 0.0
      %5666 = vmatmul.mubr.f32.gmra.mrb[0].mxu0 %v5466
      %v5667 = vpop.f32.mrb[0].mxu0
      %v5668 = vadd.f32 0.0, %v5667
      %v5669 = vpop.f32.mrb[0].mxu0
      %5670 = vmatprep.mubr.f32.mxu0 0.0
      %5671 = vmatmul.mubr.f32.gmra.mrb[0].mxu0 %v5469
      %v5672 = vpop.f32.mrb[0].mxu0
      %v5673 = vadd.f32 0.0, %v5672
      %v5674 = vpop.f32.mrb[0].mxu0
      %5675 = vmatprep.mubr.f32.mxu0 0.0
      %5676 = vmatmul.mubr.f32.gmra.mrb[0].mxu0 %v5472
      %v5677 = vpop.f32.mrb[0].mxu0
      %v5678 = vadd.f32 0.0, %v5677
      %v5679 = vpop.f32.mrb[0].mxu0
      %5680 = vmatprep.mubr.f32.mxu0 0.0
      %5681 = vmatmul.mubr.f32.gmra.mrb[0].mxu0 %v5475
      %v5682 = vpop.f32.mrb[0].mxu0
      %v5683 = vadd.f32 0.0, %v5682
      %v5684 = vpop.f32.mrb[0].mxu0
      %5685 = vmatprep.mubr.f32.mxu0 0.0
      %5686 = vmatmul.mubr.f32.gmra.mrb[0].mxu0 %v5478
      %v5687 = vpop.f32.mrb[0].mxu0
      %v5688 = vadd.f32 0.0, %v5687
      %v5689 = vpop.f32.mrb[0].mxu0
      %5690 = vmatprep.mubr.f32.mxu0 0.0
      %5691 = vmatmul.mubr.f32.gmra.mrb[0].mxu0 %v5481
      %v5692 = vpop.f32.mrb[0].mxu0
      %v5693 = vadd.f32 0.0, %v5692
      %v5694 = vpop.f32.mrb[0].mxu0
      %5695 = vmatprep.mubr.f32.mxu0 0.0
      %5696 = vmatmul.mubr.f32.gmra.mrb[0].mxu0 %v5484
      %v5697 = vpop.f32.mrb[0].mxu0
      %v5698 = vadd.f32 0.0, %v5697
      %v5699 = vpop.f32.mrb[0].mxu0
      %5700 = vmatprep.mubr.f32.mxu0 0.0
      %5701 = vmatmul.mubr.f32.gmra.mrb[0].mxu0 %v5487
      %v5702 = vpop.f32.mrb[0].mxu0
      %v5703 = vadd.f32 0.0, %v5702
      %v5704 = vpop.f32.mrb[0].mxu0
      %5705 = vmatprep.mubr.f32.mxu0 0.0
      %5706 = vmatmul.mubr.f32.gmra.mrb[0].mxu0 %v5490
      %v5707 = vpop.f32.mrb[0].mxu0
      %v5708 = vadd.f32 0.0, %v5707
      %v5709 = vpop.f32.mrb[0].mxu0
      %5710 = vmatprep.mubr.f32.mxu0 0.0
      %5711 = vmatmul.mubr.f32.gmra.mrb[0].mxu0 %v5493
      %v5712 = vpop.f32.mrb[0].mxu0
      %v5713 = vadd.f32 0.0, %v5712
      %v5714 = vpop.f32.mrb[0].mxu0
      %5715 = vmatprep.mubr.f32.mxu0 0.0
      %5716 = vmatmul.mubr.f32.gmra.mrb[0].mxu0 %v5496
      %v5717 = vpop.f32.mrb[0].mxu0
      %v5718 = vadd.f32 0.0, %v5717
      %v5719 = vpop.f32.mrb[0].mxu0
      %5720 = vmatprep.mubr.f32.mxu0 0.0
      %5721 = vmatmul.mubr.f32.gmra.mrb[0].mxu0 %v5499
      %v5722 = vpop.f32.mrb[0].mxu0
      %v5723 = vadd.f32 0.0, %v5722
      %v5724 = vpop.f32.mrb[0].mxu0
      %5725 = vdwg.mxu0
      %v5726 = vadd.f32 %v5340, %v5568
      %v5727 = vadd.f32 %v5341, %v5573
      %v5728 = vadd.f32 %v5342, %v5578
      %v5729 = vadd.f32 %v5343, %v5583
      %v5730 = vadd.f32 %v5344, %v5588
      %v5731 = vadd.f32 %v5345, %v5593
      %v5732 = vadd.f32 %v5346, %v5598
      %v5733 = vadd.f32 %v5347, %v5603
      %v5734 = vadd.f32 %v5348, %v5608
      %v5735 = vadd.f32 %v5349, %v5613
      %v5736 = vadd.f32 %v5350, %v5618
      %v5737 = vadd.f32 %v5351, %v5623
      %v5738 = vadd.f32 %v5352, %v5628
      %v5739 = vadd.f32 %v5353, %v5633
      %v5740 = vadd.f32 %v5354, %v5638
      %v5741 = vadd.f32 %v5355, %v5643
      %v5742 = vadd.f32 %v5356, %v5648
      %v5743 = vadd.f32 %v5357, %v5653
      %v5744 = vadd.f32 %v5358, %v5658
      %v5745 = vadd.f32 %v5359, %v5663
      %v5746 = vadd.f32 %v5360, %v5668
      %v5747 = vadd.f32 %v5361, %v5673
      %v5748 = vadd.f32 %v5362, %v5678
      %v5749 = vadd.f32 %v5363, %v5683
      %v5750 = vadd.f32 %v5364, %v5688
      %v5751 = vadd.f32 %v5365, %v5693
      %v5752 = vadd.f32 %v5366, %v5698
      %v5753 = vadd.f32 %v5367, %v5703
      %v5754 = vadd.f32 %v5368, %v5708
      %v5755 = vadd.f32 %v5369, %v5713
      %v5756 = vadd.f32 %v5370, %v5718
      %v5757 = vadd.f32 %v5371, %v5723
      %v5758 = vld [vmem:[%s3859 + $0x2] sm:$0xff]
      %v5759 = vld [vmem:[%s3859 + $0xa] sm:$0xff]
      %v5760 = vld [vmem:[%s3859 + $0x1a] sm:$0xff]
      %v5761 = vld [vmem:[%s3859 + $0x22] sm:$0xff]
      %v5762 = vld [vmem:[%s3859 + $0x32] sm:$0xff]
      %v5763 = vld [vmem:[%s3859 + $0x3a] sm:$0xff]
      %v5764 = vld [vmem:[%s3859 + $0x4a] sm:$0xff]
      %v5765 = vld [vmem:[%s3859 + $0x52] sm:$0xff]
      %v5766 = vld [vmem:[%s3859 + $0x62] sm:$0xff]
      %v5767 = vld [vmem:[%s3859 + $0x6a] sm:$0xff]
      %v5768 = vld [vmem:[%s3859 + $0x7a] sm:$0xff]
      %v5769 = vld [vmem:[%s3859 + $0x82] sm:$0xff]
      %v5770 = vld [vmem:[%s3859 + $0x92] sm:$0xff]
      %v5771 = vld [vmem:[%s3859 + $0x9a] sm:$0xff]
      %v5772 = vld [vmem:[%s3859 + $0xaa] sm:$0xff]
      %v5773 = vld [vmem:[%s3859 + $0xb2] sm:$0xff]
      %v5774 = vld [vmem:[%s3859 + $0xc2] sm:$0xff]
      %v5775 = vld [vmem:[%s3859 + $0xca] sm:$0xff]
      %v5776 = vld [vmem:[%s3859 + $0xda] sm:$0xff]
      %v5777 = vld [vmem:[%s3859 + $0xe2] sm:$0xff]
      %v5778 = vld [vmem:[%s3859 + $0xf2] sm:$0xff]
      %v5779 = vld [vmem:[%s3859 + $0xfa] sm:$0xff]
      %v5780 = vld [vmem:[%s3859 + $0x10a] sm:$0xff]
      %v5781 = vld [vmem:[%s3859 + $0x112] sm:$0xff]
      %v5782 = vld [vmem:[%s3859 + $0x122] sm:$0xff]
      %v5783 = vld [vmem:[%s3859 + $0x12a] sm:$0xff]
      %v5784 = vld [vmem:[%s3859 + $0x13a] sm:$0xff]
      %v5785 = vld [vmem:[%s3859 + $0x142] sm:$0xff]
      %v5786 = vld [vmem:[%s3859 + $0x152] sm:$0xff]
      %v5787 = vld [vmem:[%s3859 + $0x15a] sm:$0xff]
      %v5788 = vld [vmem:[%s3859 + $0x16a] sm:$0xff]
      %v5789 = vld [vmem:[%s3859 + $0x172] sm:$0xff]
      %v5790 = vld [vmem:[%s4 + $0x28] sm:$0xff]
      %v5792 = vsel %vm349, %v5758, 0
      %v5795 = vsel %vm349, %v5759, 0
      %v5798 = vsel %vm349, %v5760, 0
      %v5801 = vsel %vm349, %v5761, 0
      %v5804 = vsel %vm349, %v5762, 0
      %v5807 = vsel %vm349, %v5763, 0
      %v5810 = vsel %vm349, %v5764, 0
      %v5813 = vsel %vm349, %v5765, 0
      %v5816 = vsel %vm349, %v5766, 0
      %v5819 = vsel %vm349, %v5767, 0
      %v5822 = vsel %vm349, %v5768, 0
      %v5825 = vsel %vm349, %v5769, 0
      %v5828 = vsel %vm349, %v5770, 0
      %v5831 = vsel %vm349, %v5771, 0
      %v5834 = vsel %vm349, %v5772, 0
      %v5837 = vsel %vm349, %v5773, 0
      %v5840 = vsel %vm349, %v5774, 0
      %v5843 = vsel %vm349, %v5775, 0
      %v5846 = vsel %vm349, %v5776, 0
      %v5849 = vsel %vm349, %v5777, 0
      %v5852 = vsel %vm349, %v5778, 0
      %v5855 = vsel %vm349, %v5779, 0
      %v5858 = vsel %vm349, %v5780, 0
      %v5861 = vsel %vm349, %v5781, 0
      %v5864 = vsel %vm349, %v5782, 0
      %v5867 = vsel %vm349, %v5783, 0
      %v5870 = vsel %vm349, %v5784, 0
      %v5873 = vsel %vm349, %v5785, 0
      %v5876 = vsel %vm349, %v5786, 0
      %v5879 = vsel %vm349, %v5787, 0
      %v5882 = vsel %vm349, %v5788, 0
      %v5885 = vsel %vm349, %v5789, 0
      %5887 = vmatprep.subr.mxu0 0.0
      %5888 = vmatpush1.msra.mxu0 %v5790
      %5889 = vmatprep.subr.mxu0 0.0
      %5890 = vmatpush1.msra.mxu0 0.0
      %5891 = vmatprep.subr.mxu0 0.0
      %5892 = vmatpush1.msra.mxu0 0.0
      %5893 = vmatprep.subr.mxu0 0.0
      %5894 = vmatpush1.msra.mxu0 0.0
      %5895 = vmatprep.subr.mxu0 0.0
      %5896 = vmatpush1.msra.mxu0 0.0
      %5897 = vmatprep.subr.mxu0 0.0
      %5898 = vmatpush1.msra.mxu0 0.0
      %5899 = vmatprep.subr.mxu0 0.0
      %5900 = vmatpush1.msra.mxu0 0.0
      %5901 = vmatprep.subr.mxu0 0.0
      %5902 = vmatpush1.msra.mxu0 0.0
      %5903 = vmatprep.subr.mxu0 0.0
      %5904 = vmatpush1.msra.mxu0 0.0
      %5905 = vmatprep.subr.mxu0 0.0
      %5906 = vmatpush1.msra.mxu0 0.0
      %5907 = vmatprep.subr.mxu0 0.0
      %5908 = vmatpush1.msra.mxu0 0.0
      %5909 = vmatprep.subr.mxu0 0.0
      %5910 = vmatpush1.msra.mxu0 0.0
      %5911 = vmatprep.subr.mxu0 0.0
      %5912 = vmatpush1.msra.mxu0 0.0
      %5913 = vmatprep.subr.mxu0 0.0
      %5914 = vmatpush1.msra.mxu0 0.0
      %5915 = vmatprep.subr.mxu0 0.0
      %5916 = vmatpush1.msra.mxu0 0.0
      %5917 = vmatprep.subr.mxu0 0.0
      %5918 = vmatpush1.msra.mxu0 0.0
      %5919 = vmatprep.subr.mxu0 0.0
      %5920 = vmatpush1.msra.mxu0 0.0
      %5921 = vmatprep.subr.mxu0 0.0
      %5922 = vmatpush1.msra.mxu0 0.0
      %5923 = vmatprep.subr.mxu0 0.0
      %5924 = vmatpush1.msra.mxu0 0.0
      %5925 = vmatprep.subr.mxu0 0.0
      %5926 = vmatpush1.msra.mxu0 0.0
      %5927 = vmatprep.subr.mxu0 0.0
      %5928 = vmatpush1.msra.mxu0 0.0
      %5929 = vmatprep.subr.mxu0 0.0
      %5930 = vmatpush1.msra.mxu0 0.0
      %5931 = vmatprep.subr.mxu0 0.0
      %5932 = vmatpush1.msra.mxu0 0.0
      %5933 = vmatprep.subr.mxu0 0.0
      %5934 = vmatpush1.msra.mxu0 0.0
      %5935 = vmatprep.subr.mxu0 0.0
      %5936 = vmatpush1.msra.mxu0 0.0
      %5937 = vmatprep.subr.mxu0 0.0
      %5938 = vmatpush1.msra.mxu0 0.0
      %5939 = vmatprep.subr.mxu0 0.0
      %5940 = vmatpush1.msra.mxu0 0.0
      %5941 = vmatprep.subr.mxu0 0.0
      %5942 = vmatpush1.msra.mxu0 0.0
      %5943 = vmatprep.subr.mxu0 0.0
      %5944 = vmatpush1.msra.mxu0 0.0
      %5945 = vmatprep.subr.mxu0 0.0
      %5946 = vmatpush1.msra.mxu0 0.0
      %5947 = vmatprep.subr.mxu0 0.0
      %5948 = vmatpush1.msra.mxu0 0.0
      %5949 = vmatprep.subr.mxu0 0.0
      %5950 = vmatpush1.msra.mxu0 0.0
      %5951 = vmatprep.mubr.f32.mxu0 0.0
      %5952 = vmatmul.mubr.f32.gmra.mrb[0].mxu0 %v5792
      %v5953 = vpop.f32.mrb[0].mxu0
      %v5954 = vadd.f32 0.0, %v5953
      %v5955 = vpop.f32.mrb[0].mxu0
      %5956 = vmatprep.mubr.f32.mxu0 0.0
      %5957 = vmatmul.mubr.f32.gmra.mrb[0].mxu0 %v5795
      %v5958 = vpop.f32.mrb[0].mxu0
      %v5959 = vadd.f32 0.0, %v5958
      %v5960 = vpop.f32.mrb[0].mxu0
      %5961 = vmatprep.mubr.f32.mxu0 0.0
      %5962 = vmatmul.mubr.f32.gmra.mrb[0].mxu0 %v5798
      %v5963 = vpop.f32.mrb[0].mxu0
      %v5964 = vadd.f32 0.0, %v5963
      %v5965 = vpop.f32.mrb[0].mxu0
      %5966 = vmatprep.mubr.f32.mxu0 0.0
      %5967 = vmatmul.mubr.f32.gmra.mrb[0].mxu0 %v5801
      %v5968 = vpop.f32.mrb[0].mxu0
      %v5969 = vadd.f32 0.0, %v5968
      %v5970 = vpop.f32.mrb[0].mxu0
      %5971 = vmatprep.mubr.f32.mxu0 0.0
      %5972 = vmatmul.mubr.f32.gmra.mrb[0].mxu0 %v5804
      %v5973 = vpop.f32.mrb[0].mxu0
      %v5974 = vadd.f32 0.0, %v5973
      %v5975 = vpop.f32.mrb[0].mxu0
      %5976 = vmatprep.mubr.f32.mxu0 0.0
      %5977 = vmatmul.mubr.f32.gmra.mrb[0].mxu0 %v5807
      %v5978 = vpop.f32.mrb[0].mxu0
      %v5979 = vadd.f32 0.0, %v5978
      %v5980 = vpop.f32.mrb[0].mxu0
      %5981 = vmatprep.mubr.f32.mxu0 0.0
      %5982 = vmatmul.mubr.f32.gmra.mrb[0].mxu0 %v5810
      %v5983 = vpop.f32.mrb[0].mxu0
      %v5984 = vadd.f32 0.0, %v5983
      %v5985 = vpop.f32.mrb[0].mxu0
      %5986 = vmatprep.mubr.f32.mxu0 0.0
      %5987 = vmatmul.mubr.f32.gmra.mrb[0].mxu0 %v5813
      %v5988 = vpop.f32.mrb[0].mxu0
      %v5989 = vadd.f32 0.0, %v5988
      %v5990 = vpop.f32.mrb[0].mxu0
      %5991 = vmatprep.mubr.f32.mxu0 0.0
      %5992 = vmatmul.mubr.f32.gmra.mrb[0].mxu0 %v5816
      %v5993 = vpop.f32.mrb[0].mxu0
      %v5994 = vadd.f32 0.0, %v5993
      %v5995 = vpop.f32.mrb[0].mxu0
      %5996 = vmatprep.mubr.f32.mxu0 0.0
      %5997 = vmatmul.mubr.f32.gmra.mrb[0].mxu0 %v5819
      %v5998 = vpop.f32.mrb[0].mxu0
      %v5999 = vadd.f32 0.0, %v5998
      %v6000 = vpop.f32.mrb[0].mxu0
      %6001 = vmatprep.mubr.f32.mxu0 0.0
      %6002 = vmatmul.mubr.f32.gmra.mrb[0].mxu0 %v5822
      %v6003 = vpop.f32.mrb[0].mxu0
      %v6004 = vadd.f32 0.0, %v6003
      %v6005 = vpop.f32.mrb[0].mxu0
      %6006 = vmatprep.mubr.f32.mxu0 0.0
      %6007 = vmatmul.mubr.f32.gmra.mrb[0].mxu0 %v5825
      %v6008 = vpop.f32.mrb[0].mxu0
      %v6009 = vadd.f32 0.0, %v6008
      %v6010 = vpop.f32.mrb[0].mxu0
      %6011 = vmatprep.mubr.f32.mxu0 0.0
      %6012 = vmatmul.mubr.f32.gmra.mrb[0].mxu0 %v5828
      %v6013 = vpop.f32.mrb[0].mxu0
      %v6014 = vadd.f32 0.0, %v6013
      %v6015 = vpop.f32.mrb[0].mxu0
      %6016 = vmatprep.mubr.f32.mxu0 0.0
      %6017 = vmatmul.mubr.f32.gmra.mrb[0].mxu0 %v5831
      %v6018 = vpop.f32.mrb[0].mxu0
      %v6019 = vadd.f32 0.0, %v6018
      %v6020 = vpop.f32.mrb[0].mxu0
      %6021 = vmatprep.mubr.f32.mxu0 0.0
      %6022 = vmatmul.mubr.f32.gmra.mrb[0].mxu0 %v5834
      %v6023 = vpop.f32.mrb[0].mxu0
      %v6024 = vadd.f32 0.0, %v6023
      %v6025 = vpop.f32.mrb[0].mxu0
      %6026 = vmatprep.mubr.f32.mxu0 0.0
      %6027 = vmatmul.mubr.f32.gmra.mrb[0].mxu0 %v5837
      %v6028 = vpop.f32.mrb[0].mxu0
      %v6029 = vadd.f32 0.0, %v6028
      %v6030 = vpop.f32.mrb[0].mxu0
      %6031 = vmatprep.mubr.f32.mxu0 0.0
      %6032 = vmatmul.mubr.f32.gmra.mrb[0].mxu0 %v5840
      %v6033 = vpop.f32.mrb[0].mxu0
      %v6034 = vadd.f32 0.0, %v6033
      %v6035 = vpop.f32.mrb[0].mxu0
      %6036 = vmatprep.mubr.f32.mxu0 0.0
      %6037 = vmatmul.mubr.f32.gmra.mrb[0].mxu0 %v5843
      %v6038 = vpop.f32.mrb[0].mxu0
      %v6039 = vadd.f32 0.0, %v6038
      %v6040 = vpop.f32.mrb[0].mxu0
      %6041 = vmatprep.mubr.f32.mxu0 0.0
      %6042 = vmatmul.mubr.f32.gmra.mrb[0].mxu0 %v5846
      %v6043 = vpop.f32.mrb[0].mxu0
      %v6044 = vadd.f32 0.0, %v6043
      %v6045 = vpop.f32.mrb[0].mxu0
      %6046 = vmatprep.mubr.f32.mxu0 0.0
      %6047 = vmatmul.mubr.f32.gmra.mrb[0].mxu0 %v5849
      %v6048 = vpop.f32.mrb[0].mxu0
      %v6049 = vadd.f32 0.0, %v6048
      %v6050 = vpop.f32.mrb[0].mxu0
      %6051 = vmatprep.mubr.f32.mxu0 0.0
      %6052 = vmatmul.mubr.f32.gmra.mrb[0].mxu0 %v5852
      %v6053 = vpop.f32.mrb[0].mxu0
      %v6054 = vadd.f32 0.0, %v6053
      %v6055 = vpop.f32.mrb[0].mxu0
      %6056 = vmatprep.mubr.f32.mxu0 0.0
      %6057 = vmatmul.mubr.f32.gmra.mrb[0].mxu0 %v5855
      %v6058 = vpop.f32.mrb[0].mxu0
      %v6059 = vadd.f32 0.0, %v6058
      %v6060 = vpop.f32.mrb[0].mxu0
      %6061 = vmatprep.mubr.f32.mxu0 0.0
      %6062 = vmatmul.mubr.f32.gmra.mrb[0].mxu0 %v5858
      %v6063 = vpop.f32.mrb[0].mxu0
      %v6064 = vadd.f32 0.0, %v6063
      %v6065 = vpop.f32.mrb[0].mxu0
      %6066 = vmatprep.mubr.f32.mxu0 0.0
      %6067 = vmatmul.mubr.f32.gmra.mrb[0].mxu0 %v5861
      %v6068 = vpop.f32.mrb[0].mxu0
      %v6069 = vadd.f32 0.0, %v6068
      %v6070 = vpop.f32.mrb[0].mxu0
      %6071 = vmatprep.mubr.f32.mxu0 0.0
      %6072 = vmatmul.mubr.f32.gmra.mrb[0].mxu0 %v5864
      %v6073 = vpop.f32.mrb[0].mxu0
      %v6074 = vadd.f32 0.0, %v6073
      %v6075 = vpop.f32.mrb[0].mxu0
      %6076 = vmatprep.mubr.f32.mxu0 0.0
      %6077 = vmatmul.mubr.f32.gmra.mrb[0].mxu0 %v5867
      %v6078 = vpop.f32.mrb[0].mxu0
      %v6079 = vadd.f32 0.0, %v6078
      %v6080 = vpop.f32.mrb[0].mxu0
      %6081 = vmatprep.mubr.f32.mxu0 0.0
      %6082 = vmatmul.mubr.f32.gmra.mrb[0].mxu0 %v5870
      %v6083 = vpop.f32.mrb[0].mxu0
      %v6084 = vadd.f32 0.0, %v6083
      %v6085 = vpop.f32.mrb[0].mxu0
      %6086 = vmatprep.mubr.f32.mxu0 0.0
      %6087 = vmatmul.mubr.f32.gmra.mrb[0].mxu0 %v5873
      %v6088 = vpop.f32.mrb[0].mxu0
      %v6089 = vadd.f32 0.0, %v6088
      %v6090 = vpop.f32.mrb[0].mxu0
      %6091 = vmatprep.mubr.f32.mxu0 0.0
      %6092 = vmatmul.mubr.f32.gmra.mrb[0].mxu0 %v5876
      %v6093 = vpop.f32.mrb[0].mxu0
      %v6094 = vadd.f32 0.0, %v6093
      %v6095 = vpop.f32.mrb[0].mxu0
      %6096 = vmatprep.mubr.f32.mxu0 0.0
      %6097 = vmatmul.mubr.f32.gmra.mrb[0].mxu0 %v5879
      %v6098 = vpop.f32.mrb[0].mxu0
      %v6099 = vadd.f32 0.0, %v6098
      %v6100 = vpop.f32.mrb[0].mxu0
      %6101 = vmatprep.mubr.f32.mxu0 0.0
      %6102 = vmatmul.mubr.f32.gmra.mrb[0].mxu0 %v5882
      %v6103 = vpop.f32.mrb[0].mxu0
      %v6104 = vadd.f32 0.0, %v6103
      %v6105 = vpop.f32.mrb[0].mxu0
      %6106 = vmatprep.mubr.f32.mxu0 0.0
      %6107 = vmatmul.mubr.f32.gmra.mrb[0].mxu0 %v5885
      %v6108 = vpop.f32.mrb[0].mxu0
      %v6109 = vadd.f32 0.0, %v6108
      %v6110 = vpop.f32.mrb[0].mxu0
      %6111 = vdwg.mxu0
      %v6112 = vadd.f32 %v5726, %v5954
      %v6113 = vadd.f32 %v5727, %v5959
      %v6114 = vadd.f32 %v5728, %v5964
      %v6115 = vadd.f32 %v5729, %v5969
      %v6116 = vadd.f32 %v5730, %v5974
      %v6117 = vadd.f32 %v5731, %v5979
      %v6118 = vadd.f32 %v5732, %v5984
      %v6119 = vadd.f32 %v5733, %v5989
      %v6120 = vadd.f32 %v5734, %v5994
      %v6121 = vadd.f32 %v5735, %v5999
      %v6122 = vadd.f32 %v5736, %v6004
      %v6123 = vadd.f32 %v5737, %v6009
      %v6124 = vadd.f32 %v5738, %v6014
      %v6125 = vadd.f32 %v5739, %v6019
      %v6126 = vadd.f32 %v5740, %v6024
      %v6127 = vadd.f32 %v5741, %v6029
      %v6128 = vadd.f32 %v5742, %v6034
      %v6129 = vadd.f32 %v5743, %v6039
      %v6130 = vadd.f32 %v5744, %v6044
      %v6131 = vadd.f32 %v5745, %v6049
      %v6132 = vadd.f32 %v5746, %v6054
      %v6133 = vadd.f32 %v5747, %v6059
      %v6134 = vadd.f32 %v5748, %v6064
      %v6135 = vadd.f32 %v5749, %v6069
      %v6136 = vadd.f32 %v5750, %v6074
      %v6137 = vadd.f32 %v5751, %v6079
      %v6138 = vadd.f32 %v5752, %v6084
      %v6139 = vadd.f32 %v5753, %v6089
      %v6140 = vadd.f32 %v5754, %v6094
      %v6141 = vadd.f32 %v5755, %v6099
      %v6142 = vadd.f32 %v5756, %v6104
      %v6143 = vadd.f32 %v5757, %v6109
      %s6144 = scalar_lea.vmem [#allocation2], 48
      %v6145 = vld [vmem:[%s6144] sm:$0xff]
      %v6146 = vld [vmem:[%s6144 + $0x8] sm:$0xff]
      %v6147 = vld [vmem:[%s6144 + $0x18] sm:$0xff]
      %v6148 = vld [vmem:[%s6144 + $0x20] sm:$0xff]
      %v6149 = vld [vmem:[%s6144 + $0x30] sm:$0xff]
      %v6150 = vld [vmem:[%s6144 + $0x38] sm:$0xff]
      %v6151 = vld [vmem:[%s6144 + $0x48] sm:$0xff]
      %v6152 = vld [vmem:[%s6144 + $0x50] sm:$0xff]
      %v6153 = vld [vmem:[%s6144 + $0x60] sm:$0xff]
      %v6154 = vld [vmem:[%s6144 + $0x68] sm:$0xff]
      %v6155 = vld [vmem:[%s6144 + $0x78] sm:$0xff]
      %v6156 = vld [vmem:[%s6144 + $0x80] sm:$0xff]
      %v6157 = vld [vmem:[%s6144 + $0x90] sm:$0xff]
      %v6158 = vld [vmem:[%s6144 + $0x98] sm:$0xff]
      %v6159 = vld [vmem:[%s6144 + $0xa8] sm:$0xff]
      %v6160 = vld [vmem:[%s6144 + $0xb0] sm:$0xff]
      %v6161 = vld [vmem:[%s6144 + $0xc0] sm:$0xff]
      %v6162 = vld [vmem:[%s6144 + $0xc8] sm:$0xff]
      %v6163 = vld [vmem:[%s6144 + $0xd8] sm:$0xff]
      %v6164 = vld [vmem:[%s6144 + $0xe0] sm:$0xff]
      %v6165 = vld [vmem:[%s6144 + $0xf0] sm:$0xff]
      %v6166 = vld [vmem:[%s6144 + $0xf8] sm:$0xff]
      %v6167 = vld [vmem:[%s6144 + $0x108] sm:$0xff]
      %v6168 = vld [vmem:[%s6144 + $0x110] sm:$0xff]
      %v6169 = vld [vmem:[%s6144 + $0x120] sm:$0xff]
      %v6170 = vld [vmem:[%s6144 + $0x128] sm:$0xff]
      %v6171 = vld [vmem:[%s6144 + $0x138] sm:$0xff]
      %v6172 = vld [vmem:[%s6144 + $0x140] sm:$0xff]
      %v6173 = vld [vmem:[%s6144 + $0x150] sm:$0xff]
      %v6174 = vld [vmem:[%s6144 + $0x158] sm:$0xff]
      %v6175 = vld [vmem:[%s6144 + $0x168] sm:$0xff]
      %v6176 = vld [vmem:[%s6144 + $0x170] sm:$0xff]
      %v6177 = vld [vmem:[%s4 + $0x30] sm:$0xff]
      %v6179 = vsel %vm349, %v6145, 0
      %v6182 = vsel %vm349, %v6146, 0
      %v6185 = vsel %vm349, %v6147, 0
      %v6188 = vsel %vm349, %v6148, 0
      %v6191 = vsel %vm349, %v6149, 0
      %v6194 = vsel %vm349, %v6150, 0
      %v6197 = vsel %vm349, %v6151, 0
      %v6200 = vsel %vm349, %v6152, 0
      %v6203 = vsel %vm349, %v6153, 0
      %v6206 = vsel %vm349, %v6154, 0
      %v6209 = vsel %vm349, %v6155, 0
      %v6212 = vsel %vm349, %v6156, 0
      %v6215 = vsel %vm349, %v6157, 0
      %v6218 = vsel %vm349, %v6158, 0
      %v6221 = vsel %vm349, %v6159, 0
      %v6224 = vsel %vm349, %v6160, 0
      %v6227 = vsel %vm349, %v6161, 0
      %v6230 = vsel %vm349, %v6162, 0
      %v6233 = vsel %vm349, %v6163, 0
      %v6236 = vsel %vm349, %v6164, 0
      %v6239 = vsel %vm349, %v6165, 0
      %v6242 = vsel %vm349, %v6166, 0
      %v6245 = vsel %vm349, %v6167, 0
      %v6248 = vsel %vm349, %v6168, 0
      %v6251 = vsel %vm349, %v6169, 0
      %v6254 = vsel %vm349, %v6170, 0
      %v6257 = vsel %vm349, %v6171, 0
      %v6260 = vsel %vm349, %v6172, 0
      %v6263 = vsel %vm349, %v6173, 0
      %v6266 = vsel %vm349, %v6174, 0
      %v6269 = vsel %vm349, %v6175, 0
      %v6272 = vsel %vm349, %v6176, 0
      %6274 = vmatprep.subr.mxu0 0.0
      %6275 = vmatpush1.msra.mxu0 %v6177
      %6276 = vmatprep.subr.mxu0 0.0
      %6277 = vmatpush1.msra.mxu0 0.0
      %6278 = vmatprep.subr.mxu0 0.0
      %6279 = vmatpush1.msra.mxu0 0.0
      %6280 = vmatprep.subr.mxu0 0.0
      %6281 = vmatpush1.msra.mxu0 0.0
      %6282 = vmatprep.subr.mxu0 0.0
      %6283 = vmatpush1.msra.mxu0 0.0
      %6284 = vmatprep.subr.mxu0 0.0
      %6285 = vmatpush1.msra.mxu0 0.0
      %6286 = vmatprep.subr.mxu0 0.0
      %6287 = vmatpush1.msra.mxu0 0.0
      %6288 = vmatprep.subr.mxu0 0.0
      %6289 = vmatpush1.msra.mxu0 0.0
      %6290 = vmatprep.subr.mxu0 0.0
      %6291 = vmatpush1.msra.mxu0 0.0
      %6292 = vmatprep.subr.mxu0 0.0
      %6293 = vmatpush1.msra.mxu0 0.0
      %6294 = vmatprep.subr.mxu0 0.0
      %6295 = vmatpush1.msra.mxu0 0.0
      %6296 = vmatprep.subr.mxu0 0.0
      %6297 = vmatpush1.msra.mxu0 0.0
      %6298 = vmatprep.subr.mxu0 0.0
      %6299 = vmatpush1.msra.mxu0 0.0
      %6300 = vmatprep.subr.mxu0 0.0
      %6301 = vmatpush1.msra.mxu0 0.0
      %6302 = vmatprep.subr.mxu0 0.0
      %6303 = vmatpush1.msra.mxu0 0.0
      %6304 = vmatprep.subr.mxu0 0.0
      %6305 = vmatpush1.msra.mxu0 0.0
      %6306 = vmatprep.subr.mxu0 0.0
      %6307 = vmatpush1.msra.mxu0 0.0
      %6308 = vmatprep.subr.mxu0 0.0
      %6309 = vmatpush1.msra.mxu0 0.0
      %6310 = vmatprep.subr.mxu0 0.0
      %6311 = vmatpush1.msra.mxu0 0.0
      %6312 = vmatprep.subr.mxu0 0.0
      %6313 = vmatpush1.msra.mxu0 0.0
      %6314 = vmatprep.subr.mxu0 0.0
      %6315 = vmatpush1.msra.mxu0 0.0
      %6316 = vmatprep.subr.mxu0 0.0
      %6317 = vmatpush1.msra.mxu0 0.0
      %6318 = vmatprep.subr.mxu0 0.0
      %6319 = vmatpush1.msra.mxu0 0.0
      %6320 = vmatprep.subr.mxu0 0.0
      %6321 = vmatpush1.msra.mxu0 0.0
      %6322 = vmatprep.subr.mxu0 0.0
      %6323 = vmatpush1.msra.mxu0 0.0
      %6324 = vmatprep.subr.mxu0 0.0
      %6325 = vmatpush1.msra.mxu0 0.0
      %6326 = vmatprep.subr.mxu0 0.0
      %6327 = vmatpush1.msra.mxu0 0.0
      %6328 = vmatprep.subr.mxu0 0.0
      %6329 = vmatpush1.msra.mxu0 0.0
      %6330 = vmatprep.subr.mxu0 0.0
      %6331 = vmatpush1.msra.mxu0 0.0
      %6332 = vmatprep.subr.mxu0 0.0
      %6333 = vmatpush1.msra.mxu0 0.0
      %6334 = vmatprep.subr.mxu0 0.0
      %6335 = vmatpush1.msra.mxu0 0.0
      %6336 = vmatprep.subr.mxu0 0.0
      %6337 = vmatpush1.msra.mxu0 0.0
      %6338 = vmatprep.mubr.f32.mxu0 0.0
      %6339 = vmatmul.mubr.f32.gmra.mrb[0].mxu0 %v6179
      %v6340 = vpop.f32.mrb[0].mxu0
      %v6341 = vadd.f32 0.0, %v6340
      %v6342 = vpop.f32.mrb[0].mxu0
      %6343 = vmatprep.mubr.f32.mxu0 0.0
      %6344 = vmatmul.mubr.f32.gmra.mrb[0].mxu0 %v6182
      %v6345 = vpop.f32.mrb[0].mxu0
      %v6346 = vadd.f32 0.0, %v6345
      %v6347 = vpop.f32.mrb[0].mxu0
      %6348 = vmatprep.mubr.f32.mxu0 0.0
      %6349 = vmatmul.mubr.f32.gmra.mrb[0].mxu0 %v6185
      %v6350 = vpop.f32.mrb[0].mxu0
      %v6351 = vadd.f32 0.0, %v6350
      %v6352 = vpop.f32.mrb[0].mxu0
      %6353 = vmatprep.mubr.f32.mxu0 0.0
      %6354 = vmatmul.mubr.f32.gmra.mrb[0].mxu0 %v6188
      %v6355 = vpop.f32.mrb[0].mxu0
      %v6356 = vadd.f32 0.0, %v6355
      %v6357 = vpop.f32.mrb[0].mxu0
      %6358 = vmatprep.mubr.f32.mxu0 0.0
      %6359 = vmatmul.mubr.f32.gmra.mrb[0].mxu0 %v6191
      %v6360 = vpop.f32.mrb[0].mxu0
      %v6361 = vadd.f32 0.0, %v6360
      %v6362 = vpop.f32.mrb[0].mxu0
      %6363 = vmatprep.mubr.f32.mxu0 0.0
      %6364 = vmatmul.mubr.f32.gmra.mrb[0].mxu0 %v6194
      %v6365 = vpop.f32.mrb[0].mxu0
      %v6366 = vadd.f32 0.0, %v6365
      %v6367 = vpop.f32.mrb[0].mxu0
      %6368 = vmatprep.mubr.f32.mxu0 0.0
      %6369 = vmatmul.mubr.f32.gmra.mrb[0].mxu0 %v6197
      %v6370 = vpop.f32.mrb[0].mxu0
      %v6371 = vadd.f32 0.0, %v6370
      %v6372 = vpop.f32.mrb[0].mxu0
      %6373 = vmatprep.mubr.f32.mxu0 0.0
      %6374 = vmatmul.mubr.f32.gmra.mrb[0].mxu0 %v6200
      %v6375 = vpop.f32.mrb[0].mxu0
      %v6376 = vadd.f32 0.0, %v6375
      %v6377 = vpop.f32.mrb[0].mxu0
      %6378 = vmatprep.mubr.f32.mxu0 0.0
      %6379 = vmatmul.mubr.f32.gmra.mrb[0].mxu0 %v6203
      %v6380 = vpop.f32.mrb[0].mxu0
      %v6381 = vadd.f32 0.0, %v6380
      %v6382 = vpop.f32.mrb[0].mxu0
      %6383 = vmatprep.mubr.f32.mxu0 0.0
      %6384 = vmatmul.mubr.f32.gmra.mrb[0].mxu0 %v6206
      %v6385 = vpop.f32.mrb[0].mxu0
      %v6386 = vadd.f32 0.0, %v6385
      %v6387 = vpop.f32.mrb[0].mxu0
      %6388 = vmatprep.mubr.f32.mxu0 0.0
      %6389 = vmatmul.mubr.f32.gmra.mrb[0].mxu0 %v6209
      %v6390 = vpop.f32.mrb[0].mxu0
      %v6391 = vadd.f32 0.0, %v6390
      %v6392 = vpop.f32.mrb[0].mxu0
      %6393 = vmatprep.mubr.f32.mxu0 0.0
      %6394 = vmatmul.mubr.f32.gmra.mrb[0].mxu0 %v6212
      %v6395 = vpop.f32.mrb[0].mxu0
      %v6396 = vadd.f32 0.0, %v6395
      %v6397 = vpop.f32.mrb[0].mxu0
      %6398 = vmatprep.mubr.f32.mxu0 0.0
      %6399 = vmatmul.mubr.f32.gmra.mrb[0].mxu0 %v6215
      %v6400 = vpop.f32.mrb[0].mxu0
      %v6401 = vadd.f32 0.0, %v6400
      %v6402 = vpop.f32.mrb[0].mxu0
      %6403 = vmatprep.mubr.f32.mxu0 0.0
      %6404 = vmatmul.mubr.f32.gmra.mrb[0].mxu0 %v6218
      %v6405 = vpop.f32.mrb[0].mxu0
      %v6406 = vadd.f32 0.0, %v6405
      %v6407 = vpop.f32.mrb[0].mxu0
      %6408 = vmatprep.mubr.f32.mxu0 0.0
      %6409 = vmatmul.mubr.f32.gmra.mrb[0].mxu0 %v6221
      %v6410 = vpop.f32.mrb[0].mxu0
      %v6411 = vadd.f32 0.0, %v6410
      %v6412 = vpop.f32.mrb[0].mxu0
      %6413 = vmatprep.mubr.f32.mxu0 0.0
      %6414 = vmatmul.mubr.f32.gmra.mrb[0].mxu0 %v6224
      %v6415 = vpop.f32.mrb[0].mxu0
      %v6416 = vadd.f32 0.0, %v6415
      %v6417 = vpop.f32.mrb[0].mxu0
      %6418 = vmatprep.mubr.f32.mxu0 0.0
      %6419 = vmatmul.mubr.f32.gmra.mrb[0].mxu0 %v6227
      %v6420 = vpop.f32.mrb[0].mxu0
      %v6421 = vadd.f32 0.0, %v6420
      %v6422 = vpop.f32.mrb[0].mxu0
      %6423 = vmatprep.mubr.f32.mxu0 0.0
      %6424 = vmatmul.mubr.f32.gmra.mrb[0].mxu0 %v6230
      %v6425 = vpop.f32.mrb[0].mxu0
      %v6426 = vadd.f32 0.0, %v6425
      %v6427 = vpop.f32.mrb[0].mxu0
      %6428 = vmatprep.mubr.f32.mxu0 0.0
      %6429 = vmatmul.mubr.f32.gmra.mrb[0].mxu0 %v6233
      %v6430 = vpop.f32.mrb[0].mxu0
      %v6431 = vadd.f32 0.0, %v6430
      %v6432 = vpop.f32.mrb[0].mxu0
      %6433 = vmatprep.mubr.f32.mxu0 0.0
      %6434 = vmatmul.mubr.f32.gmra.mrb[0].mxu0 %v6236
      %v6435 = vpop.f32.mrb[0].mxu0
      %v6436 = vadd.f32 0.0, %v6435
      %v6437 = vpop.f32.mrb[0].mxu0
      %6438 = vmatprep.mubr.f32.mxu0 0.0
      %6439 = vmatmul.mubr.f32.gmra.mrb[0].mxu0 %v6239
      %v6440 = vpop.f32.mrb[0].mxu0
      %v6441 = vadd.f32 0.0, %v6440
      %v6442 = vpop.f32.mrb[0].mxu0
      %6443 = vmatprep.mubr.f32.mxu0 0.0
      %6444 = vmatmul.mubr.f32.gmra.mrb[0].mxu0 %v6242
      %v6445 = vpop.f32.mrb[0].mxu0
      %v6446 = vadd.f32 0.0, %v6445
      %v6447 = vpop.f32.mrb[0].mxu0
      %6448 = vmatprep.mubr.f32.mxu0 0.0
      %6449 = vmatmul.mubr.f32.gmra.mrb[0].mxu0 %v6245
      %v6450 = vpop.f32.mrb[0].mxu0
      %v6451 = vadd.f32 0.0, %v6450
      %v6452 = vpop.f32.mrb[0].mxu0
      %6453 = vmatprep.mubr.f32.mxu0 0.0
      %6454 = vmatmul.mubr.f32.gmra.mrb[0].mxu0 %v6248
      %v6455 = vpop.f32.mrb[0].mxu0
      %v6456 = vadd.f32 0.0, %v6455
      %v6457 = vpop.f32.mrb[0].mxu0
      %6458 = vmatprep.mubr.f32.mxu0 0.0
      %6459 = vmatmul.mubr.f32.gmra.mrb[0].mxu0 %v6251
      %v6460 = vpop.f32.mrb[0].mxu0
      %v6461 = vadd.f32 0.0, %v6460
      %v6462 = vpop.f32.mrb[0].mxu0
      %6463 = vmatprep.mubr.f32.mxu0 0.0
      %6464 = vmatmul.mubr.f32.gmra.mrb[0].mxu0 %v6254
      %v6465 = vpop.f32.mrb[0].mxu0
      %v6466 = vadd.f32 0.0, %v6465
      %v6467 = vpop.f32.mrb[0].mxu0
      %6468 = vmatprep.mubr.f32.mxu0 0.0
      %6469 = vmatmul.mubr.f32.gmra.mrb[0].mxu0 %v6257
      %v6470 = vpop.f32.mrb[0].mxu0
      %v6471 = vadd.f32 0.0, %v6470
      %v6472 = vpop.f32.mrb[0].mxu0
      %6473 = vmatprep.mubr.f32.mxu0 0.0
      %6474 = vmatmul.mubr.f32.gmra.mrb[0].mxu0 %v6260
      %v6475 = vpop.f32.mrb[0].mxu0
      %v6476 = vadd.f32 0.0, %v6475
      %v6477 = vpop.f32.mrb[0].mxu0
      %6478 = vmatprep.mubr.f32.mxu0 0.0
      %6479 = vmatmul.mubr.f32.gmra.mrb[0].mxu0 %v6263
      %v6480 = vpop.f32.mrb[0].mxu0
      %v6481 = vadd.f32 0.0, %v6480
      %v6482 = vpop.f32.mrb[0].mxu0
      %6483 = vmatprep.mubr.f32.mxu0 0.0
      %6484 = vmatmul.mubr.f32.gmra.mrb[0].mxu0 %v6266
      %v6485 = vpop.f32.mrb[0].mxu0
      %v6486 = vadd.f32 0.0, %v6485
      %v6487 = vpop.f32.mrb[0].mxu0
      %6488 = vmatprep.mubr.f32.mxu0 0.0
      %6489 = vmatmul.mubr.f32.gmra.mrb[0].mxu0 %v6269
      %v6490 = vpop.f32.mrb[0].mxu0
      %v6491 = vadd.f32 0.0, %v6490
      %v6492 = vpop.f32.mrb[0].mxu0
      %6493 = vmatprep.mubr.f32.mxu0 0.0
      %6494 = vmatmul.mubr.f32.gmra.mrb[0].mxu0 %v6272
      %v6495 = vpop.f32.mrb[0].mxu0
      %v6496 = vadd.f32 0.0, %v6495
      %v6497 = vpop.f32.mrb[0].mxu0
      %6498 = vdwg.mxu0
      %v6499 = vadd.f32 %v6112, %v6341
      %v6500 = vadd.f32 %v6113, %v6346
      %v6501 = vadd.f32 %v6114, %v6351
      %v6502 = vadd.f32 %v6115, %v6356
      %v6503 = vadd.f32 %v6116, %v6361
      %v6504 = vadd.f32 %v6117, %v6366
      %v6505 = vadd.f32 %v6118, %v6371
      %v6506 = vadd.f32 %v6119, %v6376
      %v6507 = vadd.f32 %v6120, %v6381
      %v6508 = vadd.f32 %v6121, %v6386
      %v6509 = vadd.f32 %v6122, %v6391
      %v6510 = vadd.f32 %v6123, %v6396
      %v6511 = vadd.f32 %v6124, %v6401
      %v6512 = vadd.f32 %v6125, %v6406
      %v6513 = vadd.f32 %v6126, %v6411
      %v6514 = vadd.f32 %v6127, %v6416
      %v6515 = vadd.f32 %v6128, %v6421
      %v6516 = vadd.f32 %v6129, %v6426
      %v6517 = vadd.f32 %v6130, %v6431
      %v6518 = vadd.f32 %v6131, %v6436
      %v6519 = vadd.f32 %v6132, %v6441
      %v6520 = vadd.f32 %v6133, %v6446
      %v6521 = vadd.f32 %v6134, %v6451
      %v6522 = vadd.f32 %v6135, %v6456
      %v6523 = vadd.f32 %v6136, %v6461
      %v6524 = vadd.f32 %v6137, %v6466
      %v6525 = vadd.f32 %v6138, %v6471
      %v6526 = vadd.f32 %v6139, %v6476
      %v6527 = vadd.f32 %v6140, %v6481
      %v6528 = vadd.f32 %v6141, %v6486
      %v6529 = vadd.f32 %v6142, %v6491
      %v6530 = vadd.f32 %v6143, %v6496
      %v6531 = vld [vmem:[%s6144 + $0x1] sm:$0xff]
      %v6532 = vld [vmem:[%s6144 + $0x9] sm:$0xff]
      %v6533 = vld [vmem:[%s6144 + $0x19] sm:$0xff]
      %v6534 = vld [vmem:[%s6144 + $0x21] sm:$0xff]
      %v6535 = vld [vmem:[%s6144 + $0x31] sm:$0xff]
      %v6536 = vld [vmem:[%s6144 + $0x39] sm:$0xff]
      %v6537 = vld [vmem:[%s6144 + $0x49] sm:$0xff]
      %v6538 = vld [vmem:[%s6144 + $0x51] sm:$0xff]
      %v6539 = vld [vmem:[%s6144 + $0x61] sm:$0xff]
      %v6540 = vld [vmem:[%s6144 + $0x69] sm:$0xff]
      %v6541 = vld [vmem:[%s6144 + $0x79] sm:$0xff]
      %v6542 = vld [vmem:[%s6144 + $0x81] sm:$0xff]
      %v6543 = vld [vmem:[%s6144 + $0x91] sm:$0xff]
      %v6544 = vld [vmem:[%s6144 + $0x99] sm:$0xff]
      %v6545 = vld [vmem:[%s6144 + $0xa9] sm:$0xff]
      %v6546 = vld [vmem:[%s6144 + $0xb1] sm:$0xff]
      %v6547 = vld [vmem:[%s6144 + $0xc1] sm:$0xff]
      %v6548 = vld [vmem:[%s6144 + $0xc9] sm:$0xff]
      %v6549 = vld [vmem:[%s6144 + $0xd9] sm:$0xff]
      %v6550 = vld [vmem:[%s6144 + $0xe1] sm:$0xff]
      %v6551 = vld [vmem:[%s6144 + $0xf1] sm:$0xff]
      %v6552 = vld [vmem:[%s6144 + $0xf9] sm:$0xff]
      %v6553 = vld [vmem:[%s6144 + $0x109] sm:$0xff]
      %v6554 = vld [vmem:[%s6144 + $0x111] sm:$0xff]
      %v6555 = vld [vmem:[%s6144 + $0x121] sm:$0xff]
      %v6556 = vld [vmem:[%s6144 + $0x129] sm:$0xff]
      %v6557 = vld [vmem:[%s6144 + $0x139] sm:$0xff]
      %v6558 = vld [vmem:[%s6144 + $0x141] sm:$0xff]
      %v6559 = vld [vmem:[%s6144 + $0x151] sm:$0xff]
      %v6560 = vld [vmem:[%s6144 + $0x159] sm:$0xff]
      %v6561 = vld [vmem:[%s6144 + $0x169] sm:$0xff]
      %v6562 = vld [vmem:[%s6144 + $0x171] sm:$0xff]
      %v6563 = vld [vmem:[%s4 + $0x38] sm:$0xff]
      %v6565 = vsel %vm349, %v6531, 0
      %v6568 = vsel %vm349, %v6532, 0
      %v6571 = vsel %vm349, %v6533, 0
      %v6574 = vsel %vm349, %v6534, 0
      %v6577 = vsel %vm349, %v6535, 0
      %v6580 = vsel %vm349, %v6536, 0
      %v6583 = vsel %vm349, %v6537, 0
      %v6586 = vsel %vm349, %v6538, 0
      %v6589 = vsel %vm349, %v6539, 0
      %v6592 = vsel %vm349, %v6540, 0
      %v6595 = vsel %vm349, %v6541, 0
      %v6598 = vsel %vm349, %v6542, 0
      %v6601 = vsel %vm349, %v6543, 0
      %v6604 = vsel %vm349, %v6544, 0
      %v6607 = vsel %vm349, %v6545, 0
      %v6610 = vsel %vm349, %v6546, 0
      %v6613 = vsel %vm349, %v6547, 0
      %v6616 = vsel %vm349, %v6548, 0
      %v6619 = vsel %vm349, %v6549, 0
      %v6622 = vsel %vm349, %v6550, 0
      %v6625 = vsel %vm349, %v6551, 0
      %v6628 = vsel %vm349, %v6552, 0
      %v6631 = vsel %vm349, %v6553, 0
      %v6634 = vsel %vm349, %v6554, 0
      %v6637 = vsel %vm349, %v6555, 0
      %v6640 = vsel %vm349, %v6556, 0
      %v6643 = vsel %vm349, %v6557, 0
      %v6646 = vsel %vm349, %v6558, 0
      %v6649 = vsel %vm349, %v6559, 0
      %v6652 = vsel %vm349, %v6560, 0
      %v6655 = vsel %vm349, %v6561, 0
      %v6658 = vsel %vm349, %v6562, 0
      %6660 = vmatprep.subr.mxu0 0.0
      %6661 = vmatpush1.msra.mxu0 %v6563
      %6662 = vmatprep.subr.mxu0 0.0
      %6663 = vmatpush1.msra.mxu0 0.0
      %6664 = vmatprep.subr.mxu0 0.0
      %6665 = vmatpush1.msra.mxu0 0.0
      %6666 = vmatprep.subr.mxu0 0.0
      %6667 = vmatpush1.msra.mxu0 0.0
      %6668 = vmatprep.subr.mxu0 0.0
      %6669 = vmatpush1.msra.mxu0 0.0
      %6670 = vmatprep.subr.mxu0 0.0
      %6671 = vmatpush1.msra.mxu0 0.0
      %6672 = vmatprep.subr.mxu0 0.0
      %6673 = vmatpush1.msra.mxu0 0.0
      %6674 = vmatprep.subr.mxu0 0.0
      %6675 = vmatpush1.msra.mxu0 0.0
      %6676 = vmatprep.subr.mxu0 0.0
      %6677 = vmatpush1.msra.mxu0 0.0
      %6678 = vmatprep.subr.mxu0 0.0
      %6679 = vmatpush1.msra.mxu0 0.0
      %6680 = vmatprep.subr.mxu0 0.0
      %6681 = vmatpush1.msra.mxu0 0.0
      %6682 = vmatprep.subr.mxu0 0.0
      %6683 = vmatpush1.msra.mxu0 0.0
      %6684 = vmatprep.subr.mxu0 0.0
      %6685 = vmatpush1.msra.mxu0 0.0
      %6686 = vmatprep.subr.mxu0 0.0
      %6687 = vmatpush1.msra.mxu0 0.0
      %6688 = vmatprep.subr.mxu0 0.0
      %6689 = vmatpush1.msra.mxu0 0.0
      %6690 = vmatprep.subr.mxu0 0.0
      %6691 = vmatpush1.msra.mxu0 0.0
      %6692 = vmatprep.subr.mxu0 0.0
      %6693 = vmatpush1.msra.mxu0 0.0
      %6694 = vmatprep.subr.mxu0 0.0
      %6695 = vmatpush1.msra.mxu0 0.0
      %6696 = vmatprep.subr.mxu0 0.0
      %6697 = vmatpush1.msra.mxu0 0.0
      %6698 = vmatprep.subr.mxu0 0.0
      %6699 = vmatpush1.msra.mxu0 0.0
      %6700 = vmatprep.subr.mxu0 0.0
      %6701 = vmatpush1.msra.mxu0 0.0
      %6702 = vmatprep.subr.mxu0 0.0
      %6703 = vmatpush1.msra.mxu0 0.0
      %6704 = vmatprep.subr.mxu0 0.0
      %6705 = vmatpush1.msra.mxu0 0.0
      %6706 = vmatprep.subr.mxu0 0.0
      %6707 = vmatpush1.msra.mxu0 0.0
      %6708 = vmatprep.subr.mxu0 0.0
      %6709 = vmatpush1.msra.mxu0 0.0
      %6710 = vmatprep.subr.mxu0 0.0
      %6711 = vmatpush1.msra.mxu0 0.0
      %6712 = vmatprep.subr.mxu0 0.0
      %6713 = vmatpush1.msra.mxu0 0.0
      %6714 = vmatprep.subr.mxu0 0.0
      %6715 = vmatpush1.msra.mxu0 0.0
      %6716 = vmatprep.subr.mxu0 0.0
      %6717 = vmatpush1.msra.mxu0 0.0
      %6718 = vmatprep.subr.mxu0 0.0
      %6719 = vmatpush1.msra.mxu0 0.0
      %6720 = vmatprep.subr.mxu0 0.0
      %6721 = vmatpush1.msra.mxu0 0.0
      %6722 = vmatprep.subr.mxu0 0.0
      %6723 = vmatpush1.msra.mxu0 0.0
      %6724 = vmatprep.mubr.f32.mxu0 0.0
      %6725 = vmatmul.mubr.f32.gmra.mrb[0].mxu0 %v6565
      %v6726 = vpop.f32.mrb[0].mxu0
      %v6727 = vadd.f32 0.0, %v6726
      %v6728 = vpop.f32.mrb[0].mxu0
      %6729 = vmatprep.mubr.f32.mxu0 0.0
      %6730 = vmatmul.mubr.f32.gmra.mrb[0].mxu0 %v6568
      %v6731 = vpop.f32.mrb[0].mxu0
      %v6732 = vadd.f32 0.0, %v6731
      %v6733 = vpop.f32.mrb[0].mxu0
      %6734 = vmatprep.mubr.f32.mxu0 0.0
      %6735 = vmatmul.mubr.f32.gmra.mrb[0].mxu0 %v6571
      %v6736 = vpop.f32.mrb[0].mxu0
      %v6737 = vadd.f32 0.0, %v6736
      %v6738 = vpop.f32.mrb[0].mxu0
      %6739 = vmatprep.mubr.f32.mxu0 0.0
      %6740 = vmatmul.mubr.f32.gmra.mrb[0].mxu0 %v6574
      %v6741 = vpop.f32.mrb[0].mxu0
      %v6742 = vadd.f32 0.0, %v6741
      %v6743 = vpop.f32.mrb[0].mxu0
      %6744 = vmatprep.mubr.f32.mxu0 0.0
      %6745 = vmatmul.mubr.f32.gmra.mrb[0].mxu0 %v6577
      %v6746 = vpop.f32.mrb[0].mxu0
      %v6747 = vadd.f32 0.0, %v6746
      %v6748 = vpop.f32.mrb[0].mxu0
      %6749 = vmatprep.mubr.f32.mxu0 0.0
      %6750 = vmatmul.mubr.f32.gmra.mrb[0].mxu0 %v6580
      %v6751 = vpop.f32.mrb[0].mxu0
      %v6752 = vadd.f32 0.0, %v6751
      %v6753 = vpop.f32.mrb[0].mxu0
      %6754 = vmatprep.mubr.f32.mxu0 0.0
      %6755 = vmatmul.mubr.f32.gmra.mrb[0].mxu0 %v6583
      %v6756 = vpop.f32.mrb[0].mxu0
      %v6757 = vadd.f32 0.0, %v6756
      %v6758 = vpop.f32.mrb[0].mxu0
      %6759 = vmatprep.mubr.f32.mxu0 0.0
      %6760 = vmatmul.mubr.f32.gmra.mrb[0].mxu0 %v6586
      %v6761 = vpop.f32.mrb[0].mxu0
      %v6762 = vadd.f32 0.0, %v6761
      %v6763 = vpop.f32.mrb[0].mxu0
      %6764 = vmatprep.mubr.f32.mxu0 0.0
      %6765 = vmatmul.mubr.f32.gmra.mrb[0].mxu0 %v6589
      %v6766 = vpop.f32.mrb[0].mxu0
      %v6767 = vadd.f32 0.0, %v6766
      %v6768 = vpop.f32.mrb[0].mxu0
      %6769 = vmatprep.mubr.f32.mxu0 0.0
      %6770 = vmatmul.mubr.f32.gmra.mrb[0].mxu0 %v6592
      %v6771 = vpop.f32.mrb[0].mxu0
      %v6772 = vadd.f32 0.0, %v6771
      %v6773 = vpop.f32.mrb[0].mxu0
      %6774 = vmatprep.mubr.f32.mxu0 0.0
      %6775 = vmatmul.mubr.f32.gmra.mrb[0].mxu0 %v6595
      %v6776 = vpop.f32.mrb[0].mxu0
      %v6777 = vadd.f32 0.0, %v6776
      %v6778 = vpop.f32.mrb[0].mxu0
      %6779 = vmatprep.mubr.f32.mxu0 0.0
      %6780 = vmatmul.mubr.f32.gmra.mrb[0].mxu0 %v6598
      %v6781 = vpop.f32.mrb[0].mxu0
      %v6782 = vadd.f32 0.0, %v6781
      %v6783 = vpop.f32.mrb[0].mxu0
      %6784 = vmatprep.mubr.f32.mxu0 0.0
      %6785 = vmatmul.mubr.f32.gmra.mrb[0].mxu0 %v6601
      %v6786 = vpop.f32.mrb[0].mxu0
      %v6787 = vadd.f32 0.0, %v6786
      %v6788 = vpop.f32.mrb[0].mxu0
      %6789 = vmatprep.mubr.f32.mxu0 0.0
      %6790 = vmatmul.mubr.f32.gmra.mrb[0].mxu0 %v6604
      %v6791 = vpop.f32.mrb[0].mxu0
      %v6792 = vadd.f32 0.0, %v6791
      %v6793 = vpop.f32.mrb[0].mxu0
      %6794 = vmatprep.mubr.f32.mxu0 0.0
      %6795 = vmatmul.mubr.f32.gmra.mrb[0].mxu0 %v6607
      %v6796 = vpop.f32.mrb[0].mxu0
      %v6797 = vadd.f32 0.0, %v6796
      %v6798 = vpop.f32.mrb[0].mxu0
      %6799 = vmatprep.mubr.f32.mxu0 0.0
      %6800 = vmatmul.mubr.f32.gmra.mrb[0].mxu0 %v6610
      %v6801 = vpop.f32.mrb[0].mxu0
      %v6802 = vadd.f32 0.0, %v6801
      %v6803 = vpop.f32.mrb[0].mxu0
      %6804 = vmatprep.mubr.f32.mxu0 0.0
      %6805 = vmatmul.mubr.f32.gmra.mrb[0].mxu0 %v6613
      %v6806 = vpop.f32.mrb[0].mxu0
      %v6807 = vadd.f32 0.0, %v6806
      %v6808 = vpop.f32.mrb[0].mxu0
      %6809 = vmatprep.mubr.f32.mxu0 0.0
      %6810 = vmatmul.mubr.f32.gmra.mrb[0].mxu0 %v6616
      %v6811 = vpop.f32.mrb[0].mxu0
      %v6812 = vadd.f32 0.0, %v6811
      %v6813 = vpop.f32.mrb[0].mxu0
      %6814 = vmatprep.mubr.f32.mxu0 0.0
      %6815 = vmatmul.mubr.f32.gmra.mrb[0].mxu0 %v6619
      %v6816 = vpop.f32.mrb[0].mxu0
      %v6817 = vadd.f32 0.0, %v6816
      %v6818 = vpop.f32.mrb[0].mxu0
      %6819 = vmatprep.mubr.f32.mxu0 0.0
      %6820 = vmatmul.mubr.f32.gmra.mrb[0].mxu0 %v6622
      %v6821 = vpop.f32.mrb[0].mxu0
      %v6822 = vadd.f32 0.0, %v6821
      %v6823 = vpop.f32.mrb[0].mxu0
      %6824 = vmatprep.mubr.f32.mxu0 0.0
      %6825 = vmatmul.mubr.f32.gmra.mrb[0].mxu0 %v6625
      %v6826 = vpop.f32.mrb[0].mxu0
      %v6827 = vadd.f32 0.0, %v6826
      %v6828 = vpop.f32.mrb[0].mxu0
      %6829 = vmatprep.mubr.f32.mxu0 0.0
      %6830 = vmatmul.mubr.f32.gmra.mrb[0].mxu0 %v6628
      %v6831 = vpop.f32.mrb[0].mxu0
      %v6832 = vadd.f32 0.0, %v6831
      %v6833 = vpop.f32.mrb[0].mxu0
      %6834 = vmatprep.mubr.f32.mxu0 0.0
      %6835 = vmatmul.mubr.f32.gmra.mrb[0].mxu0 %v6631
      %v6836 = vpop.f32.mrb[0].mxu0
      %v6837 = vadd.f32 0.0, %v6836
      %v6838 = vpop.f32.mrb[0].mxu0
      %6839 = vmatprep.mubr.f32.mxu0 0.0
      %6840 = vmatmul.mubr.f32.gmra.mrb[0].mxu0 %v6634
      %v6841 = vpop.f32.mrb[0].mxu0
      %v6842 = vadd.f32 0.0, %v6841
      %v6843 = vpop.f32.mrb[0].mxu0
      %6844 = vmatprep.mubr.f32.mxu0 0.0
      %6845 = vmatmul.mubr.f32.gmra.mrb[0].mxu0 %v6637
      %v6846 = vpop.f32.mrb[0].mxu0
      %v6847 = vadd.f32 0.0, %v6846
      %v6848 = vpop.f32.mrb[0].mxu0
      %6849 = vmatprep.mubr.f32.mxu0 0.0
      %6850 = vmatmul.mubr.f32.gmra.mrb[0].mxu0 %v6640
      %v6851 = vpop.f32.mrb[0].mxu0
      %v6852 = vadd.f32 0.0, %v6851
      %v6853 = vpop.f32.mrb[0].mxu0
      %6854 = vmatprep.mubr.f32.mxu0 0.0
      %6855 = vmatmul.mubr.f32.gmra.mrb[0].mxu0 %v6643
      %v6856 = vpop.f32.mrb[0].mxu0
      %v6857 = vadd.f32 0.0, %v6856
      %v6858 = vpop.f32.mrb[0].mxu0
      %6859 = vmatprep.mubr.f32.mxu0 0.0
      %6860 = vmatmul.mubr.f32.gmra.mrb[0].mxu0 %v6646
      %v6861 = vpop.f32.mrb[0].mxu0
      %v6862 = vadd.f32 0.0, %v6861
      %v6863 = vpop.f32.mrb[0].mxu0
      %6864 = vmatprep.mubr.f32.mxu0 0.0
      %6865 = vmatmul.mubr.f32.gmra.mrb[0].mxu0 %v6649
      %v6866 = vpop.f32.mrb[0].mxu0
      %v6867 = vadd.f32 0.0, %v6866
      %v6868 = vpop.f32.mrb[0].mxu0
      %6869 = vmatprep.mubr.f32.mxu0 0.0
      %6870 = vmatmul.mubr.f32.gmra.mrb[0].mxu0 %v6652
      %v6871 = vpop.f32.mrb[0].mxu0
      %v6872 = vadd.f32 0.0, %v6871
      %v6873 = vpop.f32.mrb[0].mxu0
      %6874 = vmatprep.mubr.f32.mxu0 0.0
      %6875 = vmatmul.mubr.f32.gmra.mrb[0].mxu0 %v6655
      %v6876 = vpop.f32.mrb[0].mxu0
      %v6877 = vadd.f32 0.0, %v6876
      %v6878 = vpop.f32.mrb[0].mxu0
      %6879 = vmatprep.mubr.f32.mxu0 0.0
      %6880 = vmatmul.mubr.f32.gmra.mrb[0].mxu0 %v6658
      %v6881 = vpop.f32.mrb[0].mxu0
      %v6882 = vadd.f32 0.0, %v6881
      %v6883 = vpop.f32.mrb[0].mxu0
      %6884 = vdwg.mxu0
      %v6885 = vadd.f32 %v6499, %v6727
      %v6886 = vadd.f32 %v6500, %v6732
      %v6887 = vadd.f32 %v6501, %v6737
      %v6888 = vadd.f32 %v6502, %v6742
      %v6889 = vadd.f32 %v6503, %v6747
      %v6890 = vadd.f32 %v6504, %v6752
      %v6891 = vadd.f32 %v6505, %v6757
      %v6892 = vadd.f32 %v6506, %v6762
      %v6893 = vadd.f32 %v6507, %v6767
      %v6894 = vadd.f32 %v6508, %v6772
      %v6895 = vadd.f32 %v6509, %v6777
      %v6896 = vadd.f32 %v6510, %v6782
      %v6897 = vadd.f32 %v6511, %v6787
      %v6898 = vadd.f32 %v6512, %v6792
      %v6899 = vadd.f32 %v6513, %v6797
      %v6900 = vadd.f32 %v6514, %v6802
      %v6901 = vadd.f32 %v6515, %v6807
      %v6902 = vadd.f32 %v6516, %v6812
      %v6903 = vadd.f32 %v6517, %v6817
      %v6904 = vadd.f32 %v6518, %v6822
      %v6905 = vadd.f32 %v6519, %v6827
      %v6906 = vadd.f32 %v6520, %v6832
      %v6907 = vadd.f32 %v6521, %v6837
      %v6908 = vadd.f32 %v6522, %v6842
      %v6909 = vadd.f32 %v6523, %v6847
      %v6910 = vadd.f32 %v6524, %v6852
      %v6911 = vadd.f32 %v6525, %v6857
      %v6912 = vadd.f32 %v6526, %v6862
      %v6913 = vadd.f32 %v6527, %v6867
      %v6914 = vadd.f32 %v6528, %v6872
      %v6915 = vadd.f32 %v6529, %v6877
      %v6916 = vadd.f32 %v6530, %v6882
      %v6917 = vld [vmem:[%s6144 + $0x2] sm:$0xff]
      %v6918 = vld [vmem:[%s6144 + $0xa] sm:$0xff]
      %v6919 = vld [vmem:[%s6144 + $0x1a] sm:$0xff]
      %v6920 = vld [vmem:[%s6144 + $0x22] sm:$0xff]
      %v6921 = vld [vmem:[%s6144 + $0x32] sm:$0xff]
      %v6922 = vld [vmem:[%s6144 + $0x3a] sm:$0xff]
      %v6923 = vld [vmem:[%s6144 + $0x4a] sm:$0xff]
      %v6924 = vld [vmem:[%s6144 + $0x52] sm:$0xff]
      %v6925 = vld [vmem:[%s6144 + $0x62] sm:$0xff]
      %v6926 = vld [vmem:[%s6144 + $0x6a] sm:$0xff]
      %v6927 = vld [vmem:[%s6144 + $0x7a] sm:$0xff]
      %v6928 = vld [vmem:[%s6144 + $0x82] sm:$0xff]
      %v6929 = vld [vmem:[%s6144 + $0x92] sm:$0xff]
      %v6930 = vld [vmem:[%s6144 + $0x9a] sm:$0xff]
      %v6931 = vld [vmem:[%s6144 + $0xaa] sm:$0xff]
      %v6932 = vld [vmem:[%s6144 + $0xb2] sm:$0xff]
      %v6933 = vld [vmem:[%s6144 + $0xc2] sm:$0xff]
      %v6934 = vld [vmem:[%s6144 + $0xca] sm:$0xff]
      %v6935 = vld [vmem:[%s6144 + $0xda] sm:$0xff]
      %v6936 = vld [vmem:[%s6144 + $0xe2] sm:$0xff]
      %v6937 = vld [vmem:[%s6144 + $0xf2] sm:$0xff]
      %v6938 = vld [vmem:[%s6144 + $0xfa] sm:$0xff]
      %v6939 = vld [vmem:[%s6144 + $0x10a] sm:$0xff]
      %v6940 = vld [vmem:[%s6144 + $0x112] sm:$0xff]
      %v6941 = vld [vmem:[%s6144 + $0x122] sm:$0xff]
      %v6942 = vld [vmem:[%s6144 + $0x12a] sm:$0xff]
      %v6943 = vld [vmem:[%s6144 + $0x13a] sm:$0xff]
      %v6944 = vld [vmem:[%s6144 + $0x142] sm:$0xff]
      %v6945 = vld [vmem:[%s6144 + $0x152] sm:$0xff]
      %v6946 = vld [vmem:[%s6144 + $0x15a] sm:$0xff]
      %v6947 = vld [vmem:[%s6144 + $0x16a] sm:$0xff]
      %v6948 = vld [vmem:[%s6144 + $0x172] sm:$0xff]
      %v6949 = vld [vmem:[%s4 + $0x40] sm:$0xff]
      %v6951 = vsel %vm349, %v6917, 0
      %v6954 = vsel %vm349, %v6918, 0
      %v6957 = vsel %vm349, %v6919, 0
      %v6960 = vsel %vm349, %v6920, 0
      %v6963 = vsel %vm349, %v6921, 0
      %v6966 = vsel %vm349, %v6922, 0
      %v6969 = vsel %vm349, %v6923, 0
      %v6972 = vsel %vm349, %v6924, 0
      %v6975 = vsel %vm349, %v6925, 0
      %v6978 = vsel %vm349, %v6926, 0
      %v6981 = vsel %vm349, %v6927, 0
      %v6984 = vsel %vm349, %v6928, 0
      %v6987 = vsel %vm349, %v6929, 0
      %v6990 = vsel %vm349, %v6930, 0
      %v6993 = vsel %vm349, %v6931, 0
      %v6996 = vsel %vm349, %v6932, 0
      %v6999 = vsel %vm349, %v6933, 0
      %v7002 = vsel %vm349, %v6934, 0
      %v7005 = vsel %vm349, %v6935, 0
      %v7008 = vsel %vm349, %v6936, 0
      %v7011 = vsel %vm349, %v6937, 0
      %v7014 = vsel %vm349, %v6938, 0
      %v7017 = vsel %vm349, %v6939, 0
      %v7020 = vsel %vm349, %v6940, 0
      %v7023 = vsel %vm349, %v6941, 0
      %v7026 = vsel %vm349, %v6942, 0
      %v7029 = vsel %vm349, %v6943, 0
      %v7032 = vsel %vm349, %v6944, 0
      %v7035 = vsel %vm349, %v6945, 0
      %v7038 = vsel %vm349, %v6946, 0
      %v7041 = vsel %vm349, %v6947, 0
      %v7044 = vsel %vm349, %v6948, 0
      %7046 = vmatprep.subr.mxu0 0.0
      %7047 = vmatpush1.msra.mxu0 %v6949
      %7048 = vmatprep.subr.mxu0 0.0
      %7049 = vmatpush1.msra.mxu0 0.0
      %7050 = vmatprep.subr.mxu0 0.0
      %7051 = vmatpush1.msra.mxu0 0.0
      %7052 = vmatprep.subr.mxu0 0.0
      %7053 = vmatpush1.msra.mxu0 0.0
      %7054 = vmatprep.subr.mxu0 0.0
      %7055 = vmatpush1.msra.mxu0 0.0
      %7056 = vmatprep.subr.mxu0 0.0
      %7057 = vmatpush1.msra.mxu0 0.0
      %7058 = vmatprep.subr.mxu0 0.0
      %7059 = vmatpush1.msra.mxu0 0.0
      %7060 = vmatprep.subr.mxu0 0.0
      %7061 = vmatpush1.msra.mxu0 0.0
      %7062 = vmatprep.subr.mxu0 0.0
      %7063 = vmatpush1.msra.mxu0 0.0
      %7064 = vmatprep.subr.mxu0 0.0
      %7065 = vmatpush1.msra.mxu0 0.0
      %7066 = vmatprep.subr.mxu0 0.0
      %7067 = vmatpush1.msra.mxu0 0.0
      %7068 = vmatprep.subr.mxu0 0.0
      %7069 = vmatpush1.msra.mxu0 0.0
      %7070 = vmatprep.subr.mxu0 0.0
      %7071 = vmatpush1.msra.mxu0 0.0
      %7072 = vmatprep.subr.mxu0 0.0
      %7073 = vmatpush1.msra.mxu0 0.0
      %7074 = vmatprep.subr.mxu0 0.0
      %7075 = vmatpush1.msra.mxu0 0.0
      %7076 = vmatprep.subr.mxu0 0.0
      %7077 = vmatpush1.msra.mxu0 0.0
      %7078 = vmatprep.subr.mxu0 0.0
      %7079 = vmatpush1.msra.mxu0 0.0
      %7080 = vmatprep.subr.mxu0 0.0
      %7081 = vmatpush1.msra.mxu0 0.0
      %7082 = vmatprep.subr.mxu0 0.0
      %7083 = vmatpush1.msra.mxu0 0.0
      %7084 = vmatprep.subr.mxu0 0.0
      %7085 = vmatpush1.msra.mxu0 0.0
      %7086 = vmatprep.subr.mxu0 0.0
      %7087 = vmatpush1.msra.mxu0 0.0
      %7088 = vmatprep.subr.mxu0 0.0
      %7089 = vmatpush1.msra.mxu0 0.0
      %7090 = vmatprep.subr.mxu0 0.0
      %7091 = vmatpush1.msra.mxu0 0.0
      %7092 = vmatprep.subr.mxu0 0.0
      %7093 = vmatpush1.msra.mxu0 0.0
      %7094 = vmatprep.subr.mxu0 0.0
      %7095 = vmatpush1.msra.mxu0 0.0
      %7096 = vmatprep.subr.mxu0 0.0
      %7097 = vmatpush1.msra.mxu0 0.0
      %7098 = vmatprep.subr.mxu0 0.0
      %7099 = vmatpush1.msra.mxu0 0.0
      %7100 = vmatprep.subr.mxu0 0.0
      %7101 = vmatpush1.msra.mxu0 0.0
      %7102 = vmatprep.subr.mxu0 0.0
      %7103 = vmatpush1.msra.mxu0 0.0
      %7104 = vmatprep.subr.mxu0 0.0
      %7105 = vmatpush1.msra.mxu0 0.0
      %7106 = vmatprep.subr.mxu0 0.0
      %7107 = vmatpush1.msra.mxu0 0.0
      %7108 = vmatprep.subr.mxu0 0.0
      %7109 = vmatpush1.msra.mxu0 0.0
      %7110 = vmatprep.mubr.f32.mxu0 0.0
      %7111 = vmatmul.mubr.f32.gmra.mrb[0].mxu0 %v6951
      %v7112 = vpop.f32.mrb[0].mxu0
      %v7113 = vadd.f32 0.0, %v7112
      %v7114 = vpop.f32.mrb[0].mxu0
      %7115 = vmatprep.mubr.f32.mxu0 0.0
      %7116 = vmatmul.mubr.f32.gmra.mrb[0].mxu0 %v6954
      %v7117 = vpop.f32.mrb[0].mxu0
      %v7118 = vadd.f32 0.0, %v7117
      %v7119 = vpop.f32.mrb[0].mxu0
      %7120 = vmatprep.mubr.f32.mxu0 0.0
      %7121 = vmatmul.mubr.f32.gmra.mrb[0].mxu0 %v6957
      %v7122 = vpop.f32.mrb[0].mxu0
      %v7123 = vadd.f32 0.0, %v7122
      %v7124 = vpop.f32.mrb[0].mxu0
      %7125 = vmatprep.mubr.f32.mxu0 0.0
      %7126 = vmatmul.mubr.f32.gmra.mrb[0].mxu0 %v6960
      %v7127 = vpop.f32.mrb[0].mxu0
      %v7128 = vadd.f32 0.0, %v7127
      %v7129 = vpop.f32.mrb[0].mxu0
      %7130 = vmatprep.mubr.f32.mxu0 0.0
      %7131 = vmatmul.mubr.f32.gmra.mrb[0].mxu0 %v6963
      %v7132 = vpop.f32.mrb[0].mxu0
      %v7133 = vadd.f32 0.0, %v7132
      %v7134 = vpop.f32.mrb[0].mxu0
      %7135 = vmatprep.mubr.f32.mxu0 0.0
      %7136 = vmatmul.mubr.f32.gmra.mrb[0].mxu0 %v6966
      %v7137 = vpop.f32.mrb[0].mxu0
      %v7138 = vadd.f32 0.0, %v7137
      %v7139 = vpop.f32.mrb[0].mxu0
      %7140 = vmatprep.mubr.f32.mxu0 0.0
      %7141 = vmatmul.mubr.f32.gmra.mrb[0].mxu0 %v6969
      %v7142 = vpop.f32.mrb[0].mxu0
      %v7143 = vadd.f32 0.0, %v7142
      %v7144 = vpop.f32.mrb[0].mxu0
      %7145 = vmatprep.mubr.f32.mxu0 0.0
      %7146 = vmatmul.mubr.f32.gmra.mrb[0].mxu0 %v6972
      %v7147 = vpop.f32.mrb[0].mxu0
      %v7148 = vadd.f32 0.0, %v7147
      %v7149 = vpop.f32.mrb[0].mxu0
      %7150 = vmatprep.mubr.f32.mxu0 0.0
      %7151 = vmatmul.mubr.f32.gmra.mrb[0].mxu0 %v6975
      %v7152 = vpop.f32.mrb[0].mxu0
      %v7153 = vadd.f32 0.0, %v7152
      %v7154 = vpop.f32.mrb[0].mxu0
      %7155 = vmatprep.mubr.f32.mxu0 0.0
      %7156 = vmatmul.mubr.f32.gmra.mrb[0].mxu0 %v6978
      %v7157 = vpop.f32.mrb[0].mxu0
      %v7158 = vadd.f32 0.0, %v7157
      %v7159 = vpop.f32.mrb[0].mxu0
      %7160 = vmatprep.mubr.f32.mxu0 0.0
      %7161 = vmatmul.mubr.f32.gmra.mrb[0].mxu0 %v6981
      %v7162 = vpop.f32.mrb[0].mxu0
      %v7163 = vadd.f32 0.0, %v7162
      %v7164 = vpop.f32.mrb[0].mxu0
      %7165 = vmatprep.mubr.f32.mxu0 0.0
      %7166 = vmatmul.mubr.f32.gmra.mrb[0].mxu0 %v6984
      %v7167 = vpop.f32.mrb[0].mxu0
      %v7168 = vadd.f32 0.0, %v7167
      %v7169 = vpop.f32.mrb[0].mxu0
      %7170 = vmatprep.mubr.f32.mxu0 0.0
      %7171 = vmatmul.mubr.f32.gmra.mrb[0].mxu0 %v6987
      %v7172 = vpop.f32.mrb[0].mxu0
      %v7173 = vadd.f32 0.0, %v7172
      %v7174 = vpop.f32.mrb[0].mxu0
      %7175 = vmatprep.mubr.f32.mxu0 0.0
      %7176 = vmatmul.mubr.f32.gmra.mrb[0].mxu0 %v6990
      %v7177 = vpop.f32.mrb[0].mxu0
      %v7178 = vadd.f32 0.0, %v7177
      %v7179 = vpop.f32.mrb[0].mxu0
      %7180 = vmatprep.mubr.f32.mxu0 0.0
      %7181 = vmatmul.mubr.f32.gmra.mrb[0].mxu0 %v6993
      %v7182 = vpop.f32.mrb[0].mxu0
      %v7183 = vadd.f32 0.0, %v7182
      %v7184 = vpop.f32.mrb[0].mxu0
      %7185 = vmatprep.mubr.f32.mxu0 0.0
      %7186 = vmatmul.mubr.f32.gmra.mrb[0].mxu0 %v6996
      %v7187 = vpop.f32.mrb[0].mxu0
      %v7188 = vadd.f32 0.0, %v7187
      %v7189 = vpop.f32.mrb[0].mxu0
      %7190 = vmatprep.mubr.f32.mxu0 0.0
      %7191 = vmatmul.mubr.f32.gmra.mrb[0].mxu0 %v6999
      %v7192 = vpop.f32.mrb[0].mxu0
      %v7193 = vadd.f32 0.0, %v7192
      %v7194 = vpop.f32.mrb[0].mxu0
      %7195 = vmatprep.mubr.f32.mxu0 0.0
      %7196 = vmatmul.mubr.f32.gmra.mrb[0].mxu0 %v7002
      %v7197 = vpop.f32.mrb[0].mxu0
      %v7198 = vadd.f32 0.0, %v7197
      %v7199 = vpop.f32.mrb[0].mxu0
      %7200 = vmatprep.mubr.f32.mxu0 0.0
      %7201 = vmatmul.mubr.f32.gmra.mrb[0].mxu0 %v7005
      %v7202 = vpop.f32.mrb[0].mxu0
      %v7203 = vadd.f32 0.0, %v7202
      %v7204 = vpop.f32.mrb[0].mxu0
      %7205 = vmatprep.mubr.f32.mxu0 0.0
      %7206 = vmatmul.mubr.f32.gmra.mrb[0].mxu0 %v7008
      %v7207 = vpop.f32.mrb[0].mxu0
      %v7208 = vadd.f32 0.0, %v7207
      %v7209 = vpop.f32.mrb[0].mxu0
      %7210 = vmatprep.mubr.f32.mxu0 0.0
      %7211 = vmatmul.mubr.f32.gmra.mrb[0].mxu0 %v7011
      %v7212 = vpop.f32.mrb[0].mxu0
      %v7213 = vadd.f32 0.0, %v7212
      %v7214 = vpop.f32.mrb[0].mxu0
      %7215 = vmatprep.mubr.f32.mxu0 0.0
      %7216 = vmatmul.mubr.f32.gmra.mrb[0].mxu0 %v7014
      %v7217 = vpop.f32.mrb[0].mxu0
      %v7218 = vadd.f32 0.0, %v7217
      %v7219 = vpop.f32.mrb[0].mxu0
      %7220 = vmatprep.mubr.f32.mxu0 0.0
      %7221 = vmatmul.mubr.f32.gmra.mrb[0].mxu0 %v7017
      %v7222 = vpop.f32.mrb[0].mxu0
      %v7223 = vadd.f32 0.0, %v7222
      %v7224 = vpop.f32.mrb[0].mxu0
      %7225 = vmatprep.mubr.f32.mxu0 0.0
      %7226 = vmatmul.mubr.f32.gmra.mrb[0].mxu0 %v7020
      %v7227 = vpop.f32.mrb[0].mxu0
      %v7228 = vadd.f32 0.0, %v7227
      %v7229 = vpop.f32.mrb[0].mxu0
      %7230 = vmatprep.mubr.f32.mxu0 0.0
      %7231 = vmatmul.mubr.f32.gmra.mrb[0].mxu0 %v7023
      %v7232 = vpop.f32.mrb[0].mxu0
      %v7233 = vadd.f32 0.0, %v7232
      %v7234 = vpop.f32.mrb[0].mxu0
      %7235 = vmatprep.mubr.f32.mxu0 0.0
      %7236 = vmatmul.mubr.f32.gmra.mrb[0].mxu0 %v7026
      %v7237 = vpop.f32.mrb[0].mxu0
      %v7238 = vadd.f32 0.0, %v7237
      %v7239 = vpop.f32.mrb[0].mxu0
      %7240 = vmatprep.mubr.f32.mxu0 0.0
      %7241 = vmatmul.mubr.f32.gmra.mrb[0].mxu0 %v7029
      %v7242 = vpop.f32.mrb[0].mxu0
      %v7243 = vadd.f32 0.0, %v7242
      %v7244 = vpop.f32.mrb[0].mxu0
      %7245 = vmatprep.mubr.f32.mxu0 0.0
      %7246 = vmatmul.mubr.f32.gmra.mrb[0].mxu0 %v7032
      %v7247 = vpop.f32.mrb[0].mxu0
      %v7248 = vadd.f32 0.0, %v7247
      %v7249 = vpop.f32.mrb[0].mxu0
      %7250 = vmatprep.mubr.f32.mxu0 0.0
      %7251 = vmatmul.mubr.f32.gmra.mrb[0].mxu0 %v7035
      %v7252 = vpop.f32.mrb[0].mxu0
      %v7253 = vadd.f32 0.0, %v7252
      %v7254 = vpop.f32.mrb[0].mxu0
      %7255 = vmatprep.mubr.f32.mxu0 0.0
      %7256 = vmatmul.mubr.f32.gmra.mrb[0].mxu0 %v7038
      %v7257 = vpop.f32.mrb[0].mxu0
      %v7258 = vadd.f32 0.0, %v7257
      %v7259 = vpop.f32.mrb[0].mxu0
      %7260 = vmatprep.mubr.f32.mxu0 0.0
      %7261 = vmatmul.mubr.f32.gmra.mrb[0].mxu0 %v7041
      %v7262 = vpop.f32.mrb[0].mxu0
      %v7263 = vadd.f32 0.0, %v7262
      %v7264 = vpop.f32.mrb[0].mxu0
      %7265 = vmatprep.mubr.f32.mxu0 0.0
      %7266 = vmatmul.mubr.f32.gmra.mrb[0].mxu0 %v7044
      %v7267 = vpop.f32.mrb[0].mxu0
      %v7268 = vadd.f32 0.0, %v7267
      %v7269 = vpop.f32.mrb[0].mxu0
      %7270 = vdwg.mxu0
      %v7271 = vadd.f32 %v6885, %v7113
      %v7272 = vadd.f32 %v6886, %v7118
      %v7273 = vadd.f32 %v6887, %v7123
      %v7274 = vadd.f32 %v6888, %v7128
      %v7275 = vadd.f32 %v6889, %v7133
      %v7276 = vadd.f32 %v6890, %v7138
      %v7277 = vadd.f32 %v6891, %v7143
      %v7278 = vadd.f32 %v6892, %v7148
      %v7279 = vadd.f32 %v6893, %v7153
      %v7280 = vadd.f32 %v6894, %v7158
      %v7281 = vadd.f32 %v6895, %v7163
      %v7282 = vadd.f32 %v6896, %v7168
      %v7283 = vadd.f32 %v6897, %v7173
      %v7284 = vadd.f32 %v6898, %v7178
      %v7285 = vadd.f32 %v6899, %v7183
      %v7286 = vadd.f32 %v6900, %v7188
      %v7287 = vadd.f32 %v6901, %v7193
      %v7288 = vadd.f32 %v6902, %v7198
      %v7289 = vadd.f32 %v6903, %v7203
      %v7290 = vadd.f32 %v6904, %v7208
      %v7291 = vadd.f32 %v6905, %v7213
      %v7292 = vadd.f32 %v6906, %v7218
      %v7293 = vadd.f32 %v6907, %v7223
      %v7294 = vadd.f32 %v6908, %v7228
      %v7295 = vadd.f32 %v6909, %v7233
      %v7296 = vadd.f32 %v6910, %v7238
      %v7297 = vadd.f32 %v6911, %v7243
      %v7298 = vadd.f32 %v6912, %v7248
      %v7299 = vadd.f32 %v6913, %v7253
      %v7300 = vadd.f32 %v6914, %v7258
      %v7301 = vadd.f32 %v6915, %v7263
      %v7302 = vadd.f32 %v6916, %v7268
      %v7303 = vld [vmem:[%s1378 + $0x1] sm:$0xff]
      %v7304 = vld [vmem:[%s1378 + $0x9] sm:$0xff]
      %v7305 = vld [vmem:[%s1378 + $0x19] sm:$0xff]
      %v7306 = vld [vmem:[%s1378 + $0x21] sm:$0xff]
      %v7307 = vld [vmem:[%s1378 + $0x31] sm:$0xff]
      %v7308 = vld [vmem:[%s1378 + $0x39] sm:$0xff]
      %v7309 = vld [vmem:[%s1378 + $0x49] sm:$0xff]
      %v7310 = vld [vmem:[%s1378 + $0x51] sm:$0xff]
      %v7311 = vld [vmem:[%s1378 + $0x61] sm:$0xff]
      %v7312 = vld [vmem:[%s1378 + $0x69] sm:$0xff]
      %v7313 = vld [vmem:[%s1378 + $0x79] sm:$0xff]
      %v7314 = vld [vmem:[%s1378 + $0x81] sm:$0xff]
      %v7315 = vld [vmem:[%s1378 + $0x91] sm:$0xff]
      %v7316 = vld [vmem:[%s1378 + $0x99] sm:$0xff]
      %v7317 = vld [vmem:[%s1378 + $0xa9] sm:$0xff]
      %v7318 = vld [vmem:[%s1378 + $0xb1] sm:$0xff]
      %v7319 = vld [vmem:[%s1378 + $0xc1] sm:$0xff]
      %v7320 = vld [vmem:[%s1378 + $0xc9] sm:$0xff]
      %v7321 = vld [vmem:[%s1378 + $0xd9] sm:$0xff]
      %v7322 = vld [vmem:[%s1378 + $0xe1] sm:$0xff]
      %v7323 = vld [vmem:[%s1378 + $0xf1] sm:$0xff]
      %v7324 = vld [vmem:[%s1378 + $0xf9] sm:$0xff]
      %v7325 = vld [vmem:[%s1378 + $0x109] sm:$0xff]
      %v7326 = vld [vmem:[%s1378 + $0x111] sm:$0xff]
      %v7327 = vld [vmem:[%s1378 + $0x121] sm:$0xff]
      %v7328 = vld [vmem:[%s1378 + $0x129] sm:$0xff]
      %v7329 = vld [vmem:[%s1378 + $0x139] sm:$0xff]
      %v7330 = vld [vmem:[%s1378 + $0x141] sm:$0xff]
      %v7331 = vld [vmem:[%s1378 + $0x151] sm:$0xff]
      %v7332 = vld [vmem:[%s1378 + $0x159] sm:$0xff]
      %v7333 = vld [vmem:[%s1378 + $0x169] sm:$0xff]
      %v7334 = vld [vmem:[%s1378 + $0x171] sm:$0xff]
      %v7336 = vlaneseq
      %v7337 = vshrl.u32 %v7336, 7
      %v7338 = vsub.s32 0, %v7337
      %v7339 = vrot.slane %v281, %v7338
      %v7341 = vmul.f32 %v7271, %v7339
      %v7342 = vmul.f32 %v7272, %v7339
      %v7343 = vmul.f32 %v7273, %v7339
      %v7344 = vmul.f32 %v7274, %v7339
      %v7345 = vmul.f32 %v7275, %v7339
      %v7346 = vmul.f32 %v7276, %v7339
      %v7347 = vmul.f32 %v7277, %v7339
      %v7348 = vmul.f32 %v7278, %v7339
      %v7349 = vmul.f32 %v7279, %v7339
      %v7350 = vmul.f32 %v7280, %v7339
      %v7351 = vmul.f32 %v7281, %v7339
      %v7352 = vmul.f32 %v7282, %v7339
      %v7353 = vmul.f32 %v7283, %v7339
      %v7354 = vmul.f32 %v7284, %v7339
      %v7355 = vmul.f32 %v7285, %v7339
      %v7356 = vmul.f32 %v7286, %v7339
      %v7357 = vmul.f32 %v7287, %v7339
      %v7358 = vmul.f32 %v7288, %v7339
      %v7359 = vmul.f32 %v7289, %v7339
      %v7360 = vmul.f32 %v7290, %v7339
      %v7361 = vmul.f32 %v7291, %v7339
      %v7362 = vmul.f32 %v7292, %v7339
      %v7363 = vmul.f32 %v7293, %v7339
      %v7364 = vmul.f32 %v7294, %v7339
      %v7365 = vmul.f32 %v7295, %v7339
      %v7366 = vmul.f32 %v7296, %v7339
      %v7367 = vmul.f32 %v7297, %v7339
      %v7368 = vmul.f32 %v7298, %v7339
      %v7369 = vmul.f32 %v7299, %v7339
      %v7370 = vmul.f32 %v7300, %v7339
      %v7371 = vmul.f32 %v7301, %v7339
      %v7372 = vmul.f32 %v7302, %v7339
      %v7374 = vlaneseq
      %v7375 = vshrl.u32 %v7374, 7
      %v7376 = vsub.s32 0, %v7375
      %v7377 = vrot.slane %v282, %v7376
      %v7379 = vadd.f32 %v7341, %v7377
      %v7380 = vadd.f32 %v7342, %v7377
      %v7381 = vadd.f32 %v7343, %v7377
      %v7382 = vadd.f32 %v7344, %v7377
      %v7383 = vadd.f32 %v7345, %v7377
      %v7384 = vadd.f32 %v7346, %v7377
      %v7385 = vadd.f32 %v7347, %v7377
      %v7386 = vadd.f32 %v7348, %v7377
      %v7387 = vadd.f32 %v7349, %v7377
      %v7388 = vadd.f32 %v7350, %v7377
      %v7389 = vadd.f32 %v7351, %v7377
      %v7390 = vadd.f32 %v7352, %v7377
      %v7391 = vadd.f32 %v7353, %v7377
      %v7392 = vadd.f32 %v7354, %v7377
      %v7393 = vadd.f32 %v7355, %v7377
      %v7394 = vadd.f32 %v7356, %v7377
      %v7395 = vadd.f32 %v7357, %v7377
      %v7396 = vadd.f32 %v7358, %v7377
      %v7397 = vadd.f32 %v7359, %v7377
      %v7398 = vadd.f32 %v7360, %v7377
      %v7399 = vadd.f32 %v7361, %v7377
      %v7400 = vadd.f32 %v7362, %v7377
      %v7401 = vadd.f32 %v7363, %v7377
      %v7402 = vadd.f32 %v7364, %v7377
      %v7403 = vadd.f32 %v7365, %v7377
      %v7404 = vadd.f32 %v7366, %v7377
      %v7405 = vadd.f32 %v7367, %v7377
      %v7406 = vadd.f32 %v7368, %v7377
      %v7407 = vadd.f32 %v7369, %v7377
      %v7408 = vadd.f32 %v7370, %v7377
      %v7409 = vadd.f32 %v7371, %v7377
      %v7410 = vadd.f32 %v7372, %v7377
      %v7411 = vadd.f32 %v7379, %v7303
      %v7412 = vadd.f32 %v7380, %v7304
      %v7413 = vadd.f32 %v7381, %v7305
      %v7414 = vadd.f32 %v7382, %v7306
      %v7415 = vadd.f32 %v7383, %v7307
      %v7416 = vadd.f32 %v7384, %v7308
      %v7417 = vadd.f32 %v7385, %v7309
      %v7418 = vadd.f32 %v7386, %v7310
      %v7419 = vadd.f32 %v7387, %v7311
      %v7420 = vadd.f32 %v7388, %v7312
      %v7421 = vadd.f32 %v7389, %v7313
      %v7422 = vadd.f32 %v7390, %v7314
      %v7423 = vadd.f32 %v7391, %v7315
      %v7424 = vadd.f32 %v7392, %v7316
      %v7425 = vadd.f32 %v7393, %v7317
      %v7426 = vadd.f32 %v7394, %v7318
      %v7427 = vadd.f32 %v7395, %v7319
      %v7428 = vadd.f32 %v7396, %v7320
      %v7429 = vadd.f32 %v7397, %v7321
      %v7430 = vadd.f32 %v7398, %v7322
      %v7431 = vadd.f32 %v7399, %v7323
      %v7432 = vadd.f32 %v7400, %v7324
      %v7433 = vadd.f32 %v7401, %v7325
      %v7434 = vadd.f32 %v7402, %v7326
      %v7435 = vadd.f32 %v7403, %v7327
      %v7436 = vadd.f32 %v7404, %v7328
      %v7437 = vadd.f32 %v7405, %v7329
      %v7438 = vadd.f32 %v7406, %v7330
      %v7439 = vadd.f32 %v7407, %v7331
      %v7440 = vadd.f32 %v7408, %v7332
      %v7441 = vadd.f32 %v7409, %v7333
      %v7442 = vadd.f32 %v7410, %v7334
      %v7443 = vmax.f32 %v7411, 0.0
      %v7444 = vmax.f32 %v7412, 0.0
      %v7445 = vmax.f32 %v7413, 0.0
      %v7446 = vmax.f32 %v7414, 0.0
      %v7447 = vmax.f32 %v7415, 0.0
      %v7448 = vmax.f32 %v7416, 0.0
      %v7449 = vmax.f32 %v7417, 0.0
      %v7450 = vmax.f32 %v7418, 0.0
      %v7451 = vmax.f32 %v7419, 0.0
      %v7452 = vmax.f32 %v7420, 0.0
      %v7453 = vmax.f32 %v7421, 0.0
      %v7454 = vmax.f32 %v7422, 0.0
      %v7455 = vmax.f32 %v7423, 0.0
      %v7456 = vmax.f32 %v7424, 0.0
      %v7457 = vmax.f32 %v7425, 0.0
      %v7458 = vmax.f32 %v7426, 0.0
      %v7459 = vmax.f32 %v7427, 0.0
      %v7460 = vmax.f32 %v7428, 0.0
      %v7461 = vmax.f32 %v7429, 0.0
      %v7462 = vmax.f32 %v7430, 0.0
      %v7463 = vmax.f32 %v7431, 0.0
      %v7464 = vmax.f32 %v7432, 0.0
      %v7465 = vmax.f32 %v7433, 0.0
      %v7466 = vmax.f32 %v7434, 0.0
      %v7467 = vmax.f32 %v7435, 0.0
      %v7468 = vmax.f32 %v7436, 0.0
      %v7469 = vmax.f32 %v7437, 0.0
      %v7470 = vmax.f32 %v7438, 0.0
      %v7471 = vmax.f32 %v7439, 0.0
      %v7472 = vmax.f32 %v7440, 0.0
      %v7473 = vmax.f32 %v7441, 0.0
      %v7474 = vmax.f32 %v7442, 0.0
      %7475 = vst.msk [vmem:[%s278] sm:$0xff] %vm349, %v7443
      %7476 = vst.msk [vmem:[%s278 + $0x8] sm:$0xff] %vm349, %v7444
      %7477 = vst.msk [vmem:[%s278 + $0x10] sm:$0xff] %vm349, %v7445
      %7478 = vst.msk [vmem:[%s278 + $0x18] sm:$0xff] %vm349, %v7446
      %7479 = vst.msk [vmem:[%s278 + $0x20] sm:$0xff] %vm349, %v7447
      %7480 = vst.msk [vmem:[%s278 + $0x28] sm:$0xff] %vm349, %v7448
      %7481 = vst.msk [vmem:[%s278 + $0x30] sm:$0xff] %vm349, %v7449
      %7482 = vst.msk [vmem:[%s278 + $0x38] sm:$0xff] %vm349, %v7450
      %7483 = vst.msk [vmem:[%s278 + $0x40] sm:$0xff] %vm349, %v7451
      %7484 = vst.msk [vmem:[%s278 + $0x48] sm:$0xff] %vm349, %v7452
      %7485 = vst.msk [vmem:[%s278 + $0x50] sm:$0xff] %vm349, %v7453
      %7486 = vst.msk [vmem:[%s278 + $0x58] sm:$0xff] %vm349, %v7454
      %7487 = vst.msk [vmem:[%s278 + $0x60] sm:$0xff] %vm349, %v7455
      %7488 = vst.msk [vmem:[%s278 + $0x68] sm:$0xff] %vm349, %v7456
      %7489 = vst.msk [vmem:[%s278 + $0x70] sm:$0xff] %vm349, %v7457
      %7490 = vst.msk [vmem:[%s278 + $0x78] sm:$0xff] %vm349, %v7458
      %7491 = vst.msk [vmem:[%s278 + $0x80] sm:$0xff] %vm349, %v7459
      %7492 = vst.msk [vmem:[%s278 + $0x88] sm:$0xff] %vm349, %v7460
      %7493 = vst.msk [vmem:[%s278 + $0x90] sm:$0xff] %vm349, %v7461
      %7494 = vst.msk [vmem:[%s278 + $0x98] sm:$0xff] %vm349, %v7462
      %7495 = vst.msk [vmem:[%s278 + $0xa0] sm:$0xff] %vm349, %v7463
      %7496 = vst.msk [vmem:[%s278 + $0xa8] sm:$0xff] %vm349, %v7464
      %7497 = vst.msk [vmem:[%s278 + $0xb0] sm:$0xff] %vm349, %v7465
      %7498 = vst.msk [vmem:[%s278 + $0xb8] sm:$0xff] %vm349, %v7466
      %7499 = vst.msk [vmem:[%s278 + $0xc0] sm:$0xff] %vm349, %v7467
      %7500 = vst.msk [vmem:[%s278 + $0xc8] sm:$0xff] %vm349, %v7468
      %7501 = vst.msk [vmem:[%s278 + $0xd0] sm:$0xff] %vm349, %v7469
      %7502 = vst.msk [vmem:[%s278 + $0xd8] sm:$0xff] %vm349, %v7470
      %7503 = vst.msk [vmem:[%s278 + $0xe0] sm:$0xff] %vm349, %v7471
      %7504 = vst.msk [vmem:[%s278 + $0xe8] sm:$0xff] %vm349, %v7472
      %7505 = vst.msk [vmem:[%s278 + $0xf0] sm:$0xff] %vm349, %v7473
      %7506 = vst.msk [vmem:[%s278 + $0xf8] sm:$0xff] %vm349, %v7474
      %p7507 = scmp.lt.s32.totalorder %s18, 1
      %s7508 = scalar_select %p7507, %s18, 1
      %s7509 = smul.addr %s7508, 32
      %s7510 = smul.addr %s7509, 8
      %s7511 = scalar_lea.vmem %s7, %s7510
      // Predicated region
      $region49: #{tpu_custom_call.1} parent=47 // pred_check
        %p7512 = pneg %p188
      $region50: #{tpu_custom_call.1} parent=47 // pred_check_branch
        %7514 = sbr.rel (%p7512) target = $region52
      $region51: #{tpu_custom_call.1} parent=47 // pred_region
        _
      $region52: #{tpu_custom_call.1} parent=47 // pred_fallthru
        _
    $region48: #{tpu_custom_call.1} parent=5 // pred_fallthru
      _
    %p7515 = scmp.le.s32.totalorder 2, %s13
    // Predicated region
    $region53: #{tpu_custom_call.1} parent=5 // pred_check
      %p7516 = pneg %p7515
    $region54: #{tpu_custom_call.1} parent=5 // pred_check_branch
      %7518 = sbr.rel (%p7516) target = $region56
    $region55: #{tpu_custom_call.1} parent=5 // pred_region
      %s7519 = ssub.s32 %s13, 2
      // Predicated region
      $region57: #{tpu_custom_call.1} parent=55 // pred_check
        %p7520 = pneg %p194
      $region58: #{tpu_custom_call.1} parent=55 // pred_check_branch
        %7522 = sbr.rel (%p7520) target = $region60
      $region59: #{tpu_custom_call.1} parent=55 // pred_region
        %p7523 = scmp.lt.s32.totalorder %s19, 1
        %s7524 = scalar_select %p7523, %s19, 1
        %s7525 = smul.addr %s7524, 32
        %s7526 = smul.addr %s7525, 8
        %s7527 = scalar_lea.vmem %s7, %s7526
      $region60: #{tpu_custom_call.1} parent=55 // pred_fallthru
        _
    $region56: #{tpu_custom_call.1} parent=5 // pred_fallthru
      _
  $region6: #{tpu_custom_call.1} parent=0 // loop_footer
    %s17 = sadd.s32 1, %s13
  $region7: #{tpu_custom_call.1} parent=0 // loop_footer_branch
    %12 = sbr.rel target = $region3
  $region8: #{tpu_custom_call.1} parent=0 // loop_exit
    _

</llo_original>
